<compile_context>
chip_gen: v5e
topology: v5e:2x2
jax: 0.10.0
libtpu: 0.0.40
codegen_flags: <defaults>
</compile_context>

<pallas_src>
import math
import numpy as np
import jax
import jax.numpy as jnp
from jax import lax
from jax.experimental import pallas as pl
from jax.experimental.pallas import tpu as pltpu

F32 = jnp.float32
EPS = 1e-5          # PyTorch LayerNorm default eps
CLAMP = 10.0        # QueryBasedAttention clamp_value
NEG_BIG = -1e30     # finite "-inf" for masking (avoids NaN when fully masked)


# --------------------------------------------------------------------------
# init-time helper: fold a stride-1 Conv2d into a dense matrix M so that
#   y_flat(1, Cout*Hout*Wout) = x_flat(1, Cin*Hin*Win) @ M
# with row-major (c, h, w) flattening on both sides — identical to PyTorch's
# .view(-1) ordering.  Pure numpy, runs once at parameter-construction time.
# --------------------------------------------------------------------------
def _conv_to_dense(w, h_in, w_in, pad):
    w = np.asarray(w)
    c_out, c_in, kh, kw = w.shape
    h_out = h_in + 2 * pad - kh + 1
    w_out = w_in + 2 * pad - kw + 1
    m = np.zeros((c_in, h_in, w_in, c_out, h_out, w_out), np.float32)
    wt = np.transpose(w, (1, 0, 2, 3))                     # (Cin, Cout, kh, kw)
    for di in range(kh):
        for dj in range(kw):
            for oi in range(h_out):
                ii = oi + di - pad
                if ii < 0 or ii >= h_in:
                    continue
                for oj in range(w_out):
                    jj = oj + dj - pad
                    if jj < 0 or jj >= w_in:
                        continue
                    m[:, ii, jj, :, oi, oj] = wt[:, :, di, dj]
    return jnp.asarray(m.reshape(c_in * h_in * w_in, c_out * h_out * w_out))


# --------------------------------------------------------------------------
# The single fused kernel.
# --------------------------------------------------------------------------
def make_fused_kernel(cfg):
    D = cfg["embedding_dim"]
    heads = cfg["num_heads"]
    hd = D // heads
    L = cfg["num_attn_layers"]

    def _ln(v, g, b):                      # LayerNorm over the last axis
        mu = jnp.mean(v, axis=-1, keepdims=True)
        var = jnp.mean((v - mu) ** 2, axis=-1, keepdims=True)
        return (v - mu) * lax.rsqrt(var + EPS) * g + b

    def _softmax(s):                       # stable softmax over last axis
        p = jnp.exp(s - jnp.max(s, axis=-1, keepdims=True))
        return p * pl.reciprocal(jnp.sum(p, axis=-1, keepdims=True), approx=True)

    def kernel(boxes_ref, mask_ref, front_ref,
               embw_ref, embb_ref,
               ln1g_ref, ln1b_ref, wqkv_ref, bqkv_ref, wo_ref, bo_ref,
               ln2g_ref, ln2b_ref, wf1_ref, bf1_ref, wf2_ref, bf2_ref,
               m1_ref, cb1_ref, cg1_ref, cbeta1_ref,
               m2_ref, cb2_ref, cg2_ref, cbeta2_ref,
               fcw_ref, fcb_ref, fg_ref, fb_ref,
               pwqk_ref, pwvo_ref,
               out_ref):

        # ---------------- case encoder (AttentionEncoder) ----------------
        x = jnp.dot(boxes_ref[...], embw_ref[...],
                    preferred_element_type=F32) + embb_ref[...]          # (N, D)

        for l in range(L):                                               # unrolled
            xn = _ln(x, ln1g_ref[l], ln1b_ref[l])
            # fused QKV projection: one (N,D)x(D,3D) MXU push
            # (the 1/sqrt(hd) attention scale is pre-folded into the Q block)
            qkv = jnp.dot(xn, wqkv_ref[l],
                          preferred_element_type=F32) + bqkv_ref[l]      # (N, 3D)
            q = qkv[:, 0:D]
            k = qkv[:, D:2 * D]
            v = qkv[:, 2 * D:3 * D]

            head_ctx = []
            for h in range(heads):
                sl = slice(h * hd, (h + 1) * hd)
                s = lax.dot_general(q[:, sl], k[:, sl], (((1,), (1,)), ((), ())),
                                    preferred_element_type=F32)          # (N, N)
                p = _softmax(s)
                head_ctx.append(jnp.dot(p, v[:, sl], preferred_element_type=F32))
            ctx = jnp.concatenate(head_ctx, axis=-1)                     # (N, D)
            # single output projection
            attn = jnp.dot(ctx, wo_ref[l],
                           preferred_element_type=F32) + bo_ref[l]
            y = attn + x                                                 # residual 1

            yn = _ln(y, ln2g_ref[l], ln2b_ref[l])
            h1 = jnp.maximum(
                jnp.dot(yn, wf1_ref[l], preferred_element_type=F32) + bf1_ref[l],
                0.0)
            x = y + jnp.dot(h1, wf2_ref[l],
                            preferred_element_type=F32) + bf2_ref[l]     # residual 2
        box_emb = x                                                      # (N, D)

        # ---------------- frontier encoder (convs folded to matmuls) ----
        c1 = jnp.maximum(
            jnp.dot(front_ref[...], m1_ref[...],
                    preferred_element_type=F32) + cb1_ref[...], 0.0)     # (1, C*H1*W1)
        c1 = _ln(c1, cg1_ref[...], cbeta1_ref[...])      # LN over all (C,H1,W1)
        c2 = jnp.maximum(
            jnp.dot(c1, m2_ref[...],
                    preferred_element_type=F32) + cb2_ref[...], 0.0)     # (1, C*H2*W2)
        c2 = _ln(c2, cg2_ref[...], cbeta2_ref[...])
        f = jnp.maximum(
            jnp.dot(c2, fcw_ref[...],
                    preferred_element_type=F32) + fcb_ref[...], 0.0)     # (1, D)
        f_emb = _ln(f, fg_ref[...], fb_ref[...])

        # ---------------- sequence policy (QueryBasedAttention) ---------
        # W_q W_k^T / sqrt(H)  and  W_out W_v^T  are pre-folded at init time,
        # so the K/V projections never have to be materialized here.
        qbar = (jnp.mean(box_emb, axis=0, keepdims=True) + f_emb) * 0.5  # (1, D)
        t = jnp.dot(qbar, pwqk_ref[...], preferred_element_type=F32)     # (1, D)
        scores = lax.dot_general(t, box_emb, (((1,), (1,)), ((), ())),
                                 preferred_element_type=F32)             # (1, N)
        scores = jnp.where(mask_ref[...] == 0.0, NEG_BIG, scores)
        pw = _softmax(scores)                                            # (1, N)

        vproj = lax.dot_general(pwvo_ref[...], box_emb, (((1,), (1,)), ((), ())),
                                preferred_element_type=F32)              # (1, N)
        out_ref[...] = CLAMP * jnp.tanh(pw * vproj)                      # lane-dense

    return kernel


# --------------------------------------------------------------------------
# parameter construction (random weights in the layouts the kernel expects)
# --------------------------------------------------------------------------
def init_params(key, cfg):
    D = cfg["embedding_dim"]
    H = cfg["hidden_dim"]
    F = 4 * H
    ins = cfg["input_size"]
    L = cfg["num_attn_layers"]
    heads = cfg["num_heads"]
    co, ci = cfg["c_out"], cfg["c_in"]
    k1, p1, k2, p2 = cfg["k1"], cfg["p1"], cfg["k2"], cfg["p2"]
    H0, W0 = cfg["bin_w"], cfg["bin_h"]
    H1, W1 = H0 + 2 * p1 - k1 + 1, W0 + 2 * p1 - k1 + 1
    H2, W2 = H1 + 2 * p2 - k2 + 1, W1 + 2 * p2 - k2 + 1

    keys = iter(jax.random.split(key, 128))

    def w(shape, s=0.05):
        return (s * jax.random.normal(next(keys), shape)).astype(F32)

    def g(shape):
        return (1.0 + 0.05 * jax.random.normal(next(keys), shape)).astype(F32)

    def stack(fn):
        return jnp.stack([fn() for _ in range(L)], axis=0)

    params = dict(
        emb_w=w((ins, D)), emb_b=w((1, D), 0.02),
        # per-layer weights stacked along a leading layer axis (indexed ref[l])
        ln1_g=stack(lambda: g((1, D))), ln1_b=stack(lambda: w((1, D), 0.02)),
        w_qkv=stack(lambda: w((D, 3 * D))),            # in_proj_weight.T (fused)
        b_qkv=stack(lambda: w((1, 3 * D), 0.02)),
        w_o=stack(lambda: w((D, D))), b_o=stack(lambda: w((1, D), 0.02)),
        ln2_g=stack(lambda: g((1, D))), ln2_b=stack(lambda: w((1, D), 0.02)),
        w_f1=stack(lambda: w((D, F))), b_f1=stack(lambda: w((1, F), 0.02)),
        w_f2=stack(lambda: w((F, D))), b_f2=stack(lambda: w((1, D), 0.02)),
    )

    # fold the 1/sqrt(head_dim) attention scale into the Q projection (exact)
    attn_scale = 1.0 / math.sqrt(D // heads)
    q_scale = jnp.concatenate(
        [jnp.full((D,), attn_scale, F32), jnp.ones((2 * D,), F32)])
    params["w_qkv"] = params["w_qkv"] * q_scale
    params["b_qkv"] = params["b_qkv"] * q_scale

    conv1_w = w((co, ci, k1, k1))
    conv2_w = w((co, co, k2, k2))
    conv1_b = w((co,), 0.02)
    conv2_b = w((co,), 0.02)
    params.update(
        m1=_conv_to_dense(conv1_w, H0, W0, p1),                   # (ci*H0*W0, co*H1*W1)
        c1_b=jnp.repeat(conv1_b, H1 * W1).reshape(1, co * H1 * W1),
        c1_g=g((1, co * H1 * W1)), c1_beta=w((1, co * H1 * W1), 0.02),
        m2=_conv_to_dense(conv2_w, H1, W1, p2),                   # (co*H1*W1, co*H2*W2)
        c2_b=jnp.repeat(conv2_b, H2 * W2).reshape(1, co * H2 * W2),
        c2_g=g((1, co * H2 * W2)), c2_beta=w((1, co * H2 * W2), 0.02),
        fc_w=w((co * H2 * W2, D)), fc_b=w((1, D), 0.02),
        f_g=g((1, D)), f_b=w((1, D), 0.02),
    )

    # policy head: fold  W_q W_k^T / sqrt(H)  and  W_out W_v^T  (exact algebra),
    # so the kernel never materializes the (N,H) K and V projections.
    pol_scale = 1.0 / math.sqrt(H)
    p_wq, p_wk, p_wv, p_wo = w((D, H)), w((D, H)), w((D, H)), w((1, H))
    params.update(
        p_wqk=(p_wq @ p_wk.T) * pol_scale,     # (D, D)
        p_wvo=p_wo @ p_wv.T,                   # (1, D)
    )
    return params


# --------------------------------------------------------------------------
# forward wrapper: one pallas_call for the whole network
# --------------------------------------------------------------------------
def attend2pack_forward(params, boxes, mask, observation, cfg):
    N = boxes.shape[0]

    # TODO(synk): previous_frontier is mutable module state; first call uses zeros.
    prev = jnp.zeros((cfg["bin_w"], cfg["bin_h"]), F32)
    front_vec = jnp.concatenate(
        [prev.reshape(1, -1), observation.astype(F32).reshape(1, -1)],
        axis=1)                                                    # (1, c_in*W*H)

    operands = (
        boxes.astype(F32), mask.astype(F32).reshape(1, N), front_vec,
        params["emb_w"], params["emb_b"],
        params["ln1_g"], params["ln1_b"], params["w_qkv"], params["b_qkv"],
        params["w_o"], params["b_o"], params["ln2_g"], params["ln2_b"],
        params["w_f1"], params["b_f1"], params["w_f2"], params["b_f2"],
        params["m1"], params["c1_b"], params["c1_g"], params["c1_beta"],
        params["m2"], params["c2_b"], params["c2_g"], params["c2_beta"],
        params["fc_w"], params["fc_b"], params["f_g"], params["f_b"],
        params["p_wqk"], params["p_wvo"],
    )

    logits = pl.pallas_call(
        make_fused_kernel(cfg),
        out_shape=jax.ShapeDtypeStruct((1, N), F32),
        in_specs=[pl.BlockSpec(memory_space=pltpu.MemorySpace.VMEM)
                  for _ in operands],
        out_specs=pl.BlockSpec(memory_space=pltpu.MemorySpace.VMEM),
    )(*operands)
    return logits.reshape(N)


# --------------------------------------------------------------------------
if __name__ == "__main__":
    cfg = dict(
        input_size=6,        # per-box descriptor dim
        num_cases=8,         # N boxes
        embedding_dim=128,
        num_heads=8,
        hidden_dim=128,      # -> FFN dim 512, policy hidden 128
        num_attn_layers=2,
        bin_w=10, bin_h=10,  # bin_size[:2]
        c_in=2, c_out=8, k1=3, p1=1, k2=5, p2=1,
    )
    key = jax.random.PRNGKey(0)
    pkey, bkey, okey = jax.random.split(key, 3)

    params = init_params(pkey, cfg)
    boxes = jax.random.uniform(bkey, (cfg["num_cases"], cfg["input_size"]), F32)
    observation = jax.random.uniform(okey, (cfg["bin_w"], cfg["bin_h"]), F32)
    mask = jnp.array([1, 1, 0, 1, 1, 0, 1, 1], dtype=F32)

    logits = attend2pack_forward(params, boxes, mask, observation, cfg)
    logits = jax.block_until_ready(logits)

    assert logits.shape == (cfg["num_cases"],)
    assert bool(jnp.all(jnp.isfinite(logits)))
    assert bool(jnp.all(jnp.abs(logits) <= 10.0 + 1e-4))   # clamp = 10 * tanh(.)
    print("KERNEL_OK")
</pallas_src>

<mosaic_0001>
module attributes {stable_mosaic.version = 11 : i64} {
  func.func @kernel(%arg0: memref<8x6xf32, #tpu.memory_space<vmem>>, %arg1: memref<1x8xf32, #tpu.memory_space<vmem>>, %arg2: memref<1x200xf32, #tpu.memory_space<vmem>>, %arg3: memref<6x128xf32, #tpu.memory_space<vmem>>, %arg4: memref<1x128xf32, #tpu.memory_space<vmem>>, %arg5: memref<2x1x128xf32, #tpu.memory_space<vmem>>, %arg6: memref<2x1x128xf32, #tpu.memory_space<vmem>>, %arg7: memref<2x128x384xf32, #tpu.memory_space<vmem>>, %arg8: memref<2x1x384xf32, #tpu.memory_space<vmem>>, %arg9: memref<2x128x128xf32, #tpu.memory_space<vmem>>, %arg10: memref<2x1x128xf32, #tpu.memory_space<vmem>>, %arg11: memref<2x1x128xf32, #tpu.memory_space<vmem>>, %arg12: memref<2x1x128xf32, #tpu.memory_space<vmem>>, %arg13: memref<2x128x512xf32, #tpu.memory_space<vmem>>, %arg14: memref<2x1x512xf32, #tpu.memory_space<vmem>>, %arg15: memref<2x512x128xf32, #tpu.memory_space<vmem>>, %arg16: memref<2x1x128xf32, #tpu.memory_space<vmem>>, %arg17: memref<200x800xf32, #tpu.memory_space<vmem>>, %arg18: memref<1x800xf32, #tpu.memory_space<vmem>>, %arg19: memref<1x800xf32, #tpu.memory_space<vmem>>, %arg20: memref<1x800xf32, #tpu.memory_space<vmem>>, %arg21: memref<800x512xf32, #tpu.memory_space<vmem>>, %arg22: memref<1x512xf32, #tpu.memory_space<vmem>>, %arg23: memref<1x512xf32, #tpu.memory_space<vmem>>, %arg24: memref<1x512xf32, #tpu.memory_space<vmem>>, %arg25: memref<512x128xf32, #tpu.memory_space<vmem>>, %arg26: memref<1x128xf32, #tpu.memory_space<vmem>>, %arg27: memref<1x128xf32, #tpu.memory_space<vmem>>, %arg28: memref<1x128xf32, #tpu.memory_space<vmem>>, %arg29: memref<128x128xf32, #tpu.memory_space<vmem>>, %arg30: memref<1x128xf32, #tpu.memory_space<vmem>>, %arg31: memref<1x8xf32, #tpu.memory_space<vmem>>) attributes {dimension_semantics = [], scalar_prefetch = 0 : i64, scratch_operands = 0 : i64, tpu.core_type = #tpu.core_type<tc>} {
    %c0 = arith.constant 0 : index
    %c0_0 = arith.constant 0 : index
    %0 = vector.load %arg0[%c0, %c0_0] : memref<8x6xf32, #tpu.memory_space<vmem>>, vector<8x6xf32>
    %c0_1 = arith.constant 0 : index
    %c0_2 = arith.constant 0 : index
    %1 = vector.load %arg3[%c0_1, %c0_2] : memref<6x128xf32, #tpu.memory_space<vmem>>, vector<6x128xf32>
    %cst = arith.constant dense<0.000000e+00> : vector<8x128xf32>
    %2 = tpu.matmul %0, %1, %cst {dimension_numbers = #tpu.dot_dimension_numbers<[1], [0], [0], [1], [0, 0, 1, 1], [], []>} : vector<8x6xf32>, vector<6x128xf32>, vector<8x128xf32> -> vector<8x128xf32>
    %c0_3 = arith.constant 0 : index
    %c0_4 = arith.constant 0 : index
    %3 = vector.load %arg4[%c0_3, %c0_4] : memref<1x128xf32, #tpu.memory_space<vmem>>, vector<1x128xf32>
    %4 = vector.broadcast %3 : vector<1x128xf32> to vector<8x128xf32>
    %5 = arith.addf %2, %4 : vector<8x128xf32>
    %c0_5 = arith.constant 0 : index
    %c0_6 = arith.constant 0 : index
    %c0_7 = arith.constant 0 : index
    %6 = vector.load %arg5[%c0_5, %c0_6, %c0_7] : memref<2x1x128xf32, #tpu.memory_space<vmem>>, vector<1x1x128xf32>
    %7 = vector.shape_cast %6 : vector<1x1x128xf32> to vector<1x128xf32>
    %c0_8 = arith.constant 0 : index
    %c0_9 = arith.constant 0 : index
    %c0_10 = arith.constant 0 : index
    %8 = vector.load %arg6[%c0_8, %c0_9, %c0_10] : memref<2x1x128xf32, #tpu.memory_space<vmem>>, vector<1x1x128xf32>
    %9 = vector.shape_cast %8 : vector<1x1x128xf32> to vector<1x128xf32>
    %cst_11 = arith.constant dense<0.000000e+00> : vector<8xf32>
    %10 = vector.multi_reduction <add>, %5, %cst_11 [1] : vector<8x128xf32> to vector<8xf32>
    %11 = vector.shape_cast %10 : vector<8xf32> to vector<8x1xf32>
    %cst_12 = arith.constant 1.280000e+02 : f32
    %12 = vector.broadcast %cst_12 : f32 to vector<8x1xf32>
    %13 = arith.divf %11, %12 : vector<8x1xf32>
    %14 = vector.broadcast %13 : vector<8x1xf32> to vector<8x128xf32>
    %15 = arith.subf %5, %14 : vector<8x128xf32>
    %16 = arith.mulf %15, %15 : vector<8x128xf32>
    %cst_13 = arith.constant dense<0.000000e+00> : vector<8xf32>
    %17 = vector.multi_reduction <add>, %16, %cst_13 [1] : vector<8x128xf32> to vector<8xf32>
    %18 = vector.shape_cast %17 : vector<8xf32> to vector<8x1xf32>
    %cst_14 = arith.constant 1.280000e+02 : f32
    %19 = vector.broadcast %cst_14 : f32 to vector<8x1xf32>
    %20 = arith.divf %18, %19 : vector<8x1xf32>
    %21 = vector.broadcast %13 : vector<8x1xf32> to vector<8x128xf32>
    %22 = arith.subf %5, %21 : vector<8x128xf32>
    %cst_15 = arith.constant 9.99999974E-6 : f32
    %23 = vector.broadcast %cst_15 : f32 to vector<8x1xf32>
    %24 = arith.addf %20, %23 : vector<8x1xf32>
    %25 = math.rsqrt %24 : vector<8x1xf32>
    %26 = vector.broadcast %25 : vector<8x1xf32> to vector<8x128xf32>
    %27 = arith.mulf %22, %26 : vector<8x128xf32>
    %28 = vector.broadcast %7 : vector<1x128xf32> to vector<8x128xf32>
    %29 = arith.mulf %27, %28 : vector<8x128xf32>
    %30 = vector.broadcast %9 : vector<1x128xf32> to vector<8x128xf32>
    %31 = arith.addf %29, %30 : vector<8x128xf32>
    %c0_16 = arith.constant 0 : index
    %c0_17 = arith.constant 0 : index
    %c0_18 = arith.constant 0 : index
    %32 = vector.load %arg7[%c0_16, %c0_17, %c0_18] : memref<2x128x384xf32, #tpu.memory_space<vmem>>, vector<1x128x384xf32>
    %33 = vector.shape_cast %32 : vector<1x128x384xf32> to vector<128x384xf32>
    %cst_19 = arith.constant dense<0.000000e+00> : vector<8x384xf32>
    %34 = tpu.matmul %31, %33, %cst_19 {dimension_numbers = #tpu.dot_dimension_numbers<[1], [0], [0], [1], [0, 0, 1, 1], [], []>} : vector<8x128xf32>, vector<128x384xf32>, vector<8x384xf32> -> vector<8x384xf32>
    %c0_20 = arith.constant 0 : index
    %c0_21 = arith.constant 0 : index
    %c0_22 = arith.constant 0 : index
    %35 = vector.load %arg8[%c0_20, %c0_21, %c0_22] : memref<2x1x384xf32, #tpu.memory_space<vmem>>, vector<1x1x384xf32>
    %36 = vector.shape_cast %35 : vector<1x1x384xf32> to vector<1x384xf32>
    %37 = vector.broadcast %36 : vector<1x384xf32> to vector<8x384xf32>
    %38 = arith.addf %34, %37 : vector<8x384xf32>
    %39 = vector.extract_strided_slice %38 {offsets = [0, 0], sizes = [8, 128], strides = [1, 1]} : vector<8x384xf32> to vector<8x128xf32>
    %40 = vector.extract_strided_slice %38 {offsets = [0, 128], sizes = [8, 128], strides = [1, 1]} : vector<8x384xf32> to vector<8x128xf32>
    %41 = vector.extract_strided_slice %38 {offsets = [0, 256], sizes = [8, 128], strides = [1, 1]} : vector<8x384xf32> to vector<8x128xf32>
    %42 = vector.extract_strided_slice %39 {offsets = [0, 0], sizes = [8, 16], strides = [1, 1]} : vector<8x128xf32> to vector<8x16xf32>
    %43 = vector.extract_strided_slice %40 {offsets = [0, 0], sizes = [8, 16], strides = [1, 1]} : vector<8x128xf32> to vector<8x16xf32>
    %cst_23 = arith.constant dense<0.000000e+00> : vector<8x8xf32>
    %44 = tpu.matmul %42, %43, %cst_23 {dimension_numbers = #tpu.dot_dimension_numbers<[1], [1], [0], [0], [0, 0, 1, 0], [], []>} : vector<8x16xf32>, vector<8x16xf32>, vector<8x8xf32> -> vector<8x8xf32>
    %cst_24 = arith.constant dense<0xFF800000> : vector<8xf32>
    %45 = vector.multi_reduction <maximumf>, %44, %cst_24 [1] : vector<8x8xf32> to vector<8xf32>
    %46 = vector.shape_cast %45 : vector<8xf32> to vector<8x1xf32>
    %47 = vector.broadcast %46 : vector<8x1xf32> to vector<8x8xf32>
    %48 = arith.subf %44, %47 : vector<8x8xf32>
    %49 = math.exp %48 : vector<8x8xf32>
    %cst_25 = arith.constant dense<0.000000e+00> : vector<8xf32>
    %50 = vector.multi_reduction <add>, %49, %cst_25 [1] : vector<8x8xf32> to vector<8xf32>
    %51 = vector.shape_cast %50 : vector<8xf32> to vector<8x1xf32>
    %52 = tpu.reciprocal %51 {approx = true} : vector<8x1xf32> -> vector<8x1xf32>
    %53 = vector.broadcast %52 : vector<8x1xf32> to vector<8x8xf32>
    %54 = arith.mulf %49, %53 : vector<8x8xf32>
    %55 = vector.extract_strided_slice %41 {offsets = [0, 0], sizes = [8, 16], strides = [1, 1]} : vector<8x128xf32> to vector<8x16xf32>
    %cst_26 = arith.constant dense<0.000000e+00> : vector<8x16xf32>
    %56 = tpu.matmul %54, %55, %cst_26 {dimension_numbers = #tpu.dot_dimension_numbers<[1], [0], [0], [1], [0, 0, 1, 1], [], []>} : vector<8x8xf32>, vector<8x16xf32>, vector<8x16xf32> -> vector<8x16xf32>
    %57 = vector.extract_strided_slice %39 {offsets = [0, 16], sizes = [8, 16], strides = [1, 1]} : vector<8x128xf32> to vector<8x16xf32>
    %58 = vector.extract_strided_slice %40 {offsets = [0, 16], sizes = [8, 16], strides = [1, 1]} : vector<8x128xf32> to vector<8x16xf32>
    %cst_27 = arith.constant dense<0.000000e+00> : vector<8x8xf32>
    %59 = tpu.matmul %57, %58, %cst_27 {dimension_numbers = #tpu.dot_dimension_numbers<[1], [1], [0], [0], [0, 0, 1, 0], [], []>} : vector<8x16xf32>, vector<8x16xf32>, vector<8x8xf32> -> vector<8x8xf32>
    %cst_28 = arith.constant dense<0xFF800000> : vector<8xf32>
    %60 = vector.multi_reduction <maximumf>, %59, %cst_28 [1] : vector<8x8xf32> to vector<8xf32>
    %61 = vector.shape_cast %60 : vector<8xf32> to vector<8x1xf32>
    %62 = vector.broadcast %61 : vector<8x1xf32> to vector<8x8xf32>
    %63 = arith.subf %59, %62 : vector<8x8xf32>
    %64 = math.exp %63 : vector<8x8xf32>
    %cst_29 = arith.constant dense<0.000000e+00> : vector<8xf32>
    %65 = vector.multi_reduction <add>, %64, %cst_29 [1] : vector<8x8xf32> to vector<8xf32>
    %66 = vector.shape_cast %65 : vector<8xf32> to vector<8x1xf32>
    %67 = tpu.reciprocal %66 {approx = true} : vector<8x1xf32> -> vector<8x1xf32>
    %68 = vector.broadcast %67 : vector<8x1xf32> to vector<8x8xf32>
    %69 = arith.mulf %64, %68 : vector<8x8xf32>
    %70 = vector.extract_strided_slice %41 {offsets = [0, 16], sizes = [8, 16], strides = [1, 1]} : vector<8x128xf32> to vector<8x16xf32>
    %cst_30 = arith.constant dense<0.000000e+00> : vector<8x16xf32>
    %71 = tpu.matmul %69, %70, %cst_30 {dimension_numbers = #tpu.dot_dimension_numbers<[1], [0], [0], [1], [0, 0, 1, 1], [], []>} : vector<8x8xf32>, vector<8x16xf32>, vector<8x16xf32> -> vector<8x16xf32>
    %72 = vector.extract_strided_slice %39 {offsets = [0, 32], sizes = [8, 16], strides = [1, 1]} : vector<8x128xf32> to vector<8x16xf32>
    %73 = vector.extract_strided_slice %40 {offsets = [0, 32], sizes = [8, 16], strides = [1, 1]} : vector<8x128xf32> to vector<8x16xf32>
    %cst_31 = arith.constant dense<0.000000e+00> : vector<8x8xf32>
    %74 = tpu.matmul %72, %73, %cst_31 {dimension_numbers = #tpu.dot_dimension_numbers<[1], [1], [0], [0], [0, 0, 1, 0], [], []>} : vector<8x16xf32>, vector<8x16xf32>, vector<8x8xf32> -> vector<8x8xf32>
    %cst_32 = arith.constant dense<0xFF800000> : vector<8xf32>
    %75 = vector.multi_reduction <maximumf>, %74, %cst_32 [1] : vector<8x8xf32> to vector<8xf32>
    %76 = vector.shape_cast %75 : vector<8xf32> to vector<8x1xf32>
    %77 = vector.broadcast %76 : vector<8x1xf32> to vector<8x8xf32>
    %78 = arith.subf %74, %77 : vector<8x8xf32>
    %79 = math.exp %78 : vector<8x8xf32>
    %cst_33 = arith.constant dense<0.000000e+00> : vector<8xf32>
    %80 = vector.multi_reduction <add>, %79, %cst_33 [1] : vector<8x8xf32> to vector<8xf32>
    %81 = vector.shape_cast %80 : vector<8xf32> to vector<8x1xf32>
    %82 = tpu.reciprocal %81 {approx = true} : vector<8x1xf32> -> vector<8x1xf32>
    %83 = vector.broadcast %82 : vector<8x1xf32> to vector<8x8xf32>
    %84 = arith.mulf %79, %83 : vector<8x8xf32>
    %85 = vector.extract_strided_slice %41 {offsets = [0, 32], sizes = [8, 16], strides = [1, 1]} : vector<8x128xf32> to vector<8x16xf32>
    %cst_34 = arith.constant dense<0.000000e+00> : vector<8x16xf32>
    %86 = tpu.matmul %84, %85, %cst_34 {dimension_numbers = #tpu.dot_dimension_numbers<[1], [0], [0], [1], [0, 0, 1, 1], [], []>} : vector<8x8xf32>, vector<8x16xf32>, vector<8x16xf32> -> vector<8x16xf32>
    %87 = vector.extract_strided_slice %39 {offsets = [0, 48], sizes = [8, 16], strides = [1, 1]} : vector<8x128xf32> to vector<8x16xf32>
    %88 = vector.extract_strided_slice %40 {offsets = [0, 48], sizes = [8, 16], strides = [1, 1]} : vector<8x128xf32> to vector<8x16xf32>
    %cst_35 = arith.constant dense<0.000000e+00> : vector<8x8xf32>
    %89 = tpu.matmul %87, %88, %cst_35 {dimension_numbers = #tpu.dot_dimension_numbers<[1], [1], [0], [0], [0, 0, 1, 0], [], []>} : vector<8x16xf32>, vector<8x16xf32>, vector<8x8xf32> -> vector<8x8xf32>
    %cst_36 = arith.constant dense<0xFF800000> : vector<8xf32>
    %90 = vector.multi_reduction <maximumf>, %89, %cst_36 [1] : vector<8x8xf32> to vector<8xf32>
    %91 = vector.shape_cast %90 : vector<8xf32> to vector<8x1xf32>
    %92 = vector.broadcast %91 : vector<8x1xf32> to vector<8x8xf32>
    %93 = arith.subf %89, %92 : vector<8x8xf32>
    %94 = math.exp %93 : vector<8x8xf32>
    %cst_37 = arith.constant dense<0.000000e+00> : vector<8xf32>
    %95 = vector.multi_reduction <add>, %94, %cst_37 [1] : vector<8x8xf32> to vector<8xf32>
    %96 = vector.shape_cast %95 : vector<8xf32> to vector<8x1xf32>
    %97 = tpu.reciprocal %96 {approx = true} : vector<8x1xf32> -> vector<8x1xf32>
    %98 = vector.broadcast %97 : vector<8x1xf32> to vector<8x8xf32>
    %99 = arith.mulf %94, %98 : vector<8x8xf32>
    %100 = vector.extract_strided_slice %41 {offsets = [0, 48], sizes = [8, 16], strides = [1, 1]} : vector<8x128xf32> to vector<8x16xf32>
    %cst_38 = arith.constant dense<0.000000e+00> : vector<8x16xf32>
    %101 = tpu.matmul %99, %100, %cst_38 {dimension_numbers = #tpu.dot_dimension_numbers<[1], [0], [0], [1], [0, 0, 1, 1], [], []>} : vector<8x8xf32>, vector<8x16xf32>, vector<8x16xf32> -> vector<8x16xf32>
    %102 = vector.extract_strided_slice %39 {offsets = [0, 64], sizes = [8, 16], strides = [1, 1]} : vector<8x128xf32> to vector<8x16xf32>
    %103 = vector.extract_strided_slice %40 {offsets = [0, 64], sizes = [8, 16], strides = [1, 1]} : vector<8x128xf32> to vector<8x16xf32>
    %cst_39 = arith.constant dense<0.000000e+00> : vector<8x8xf32>
    %104 = tpu.matmul %102, %103, %cst_39 {dimension_numbers = #tpu.dot_dimension_numbers<[1], [1], [0], [0], [0, 0, 1, 0], [], []>} : vector<8x16xf32>, vector<8x16xf32>, vector<8x8xf32> -> vector<8x8xf32>
    %cst_40 = arith.constant dense<0xFF800000> : vector<8xf32>
    %105 = vector.multi_reduction <maximumf>, %104, %cst_40 [1] : vector<8x8xf32> to vector<8xf32>
    %106 = vector.shape_cast %105 : vector<8xf32> to vector<8x1xf32>
    %107 = vector.broadcast %106 : vector<8x1xf32> to vector<8x8xf32>
    %108 = arith.subf %104, %107 : vector<8x8xf32>
    %109 = math.exp %108 : vector<8x8xf32>
    %cst_41 = arith.constant dense<0.000000e+00> : vector<8xf32>
    %110 = vector.multi_reduction <add>, %109, %cst_41 [1] : vector<8x8xf32> to vector<8xf32>
    %111 = vector.shape_cast %110 : vector<8xf32> to vector<8x1xf32>
    %112 = tpu.reciprocal %111 {approx = true} : vector<8x1xf32> -> vector<8x1xf32>
    %113 = vector.broadcast %112 : vector<8x1xf32> to vector<8x8xf32>
    %114 = arith.mulf %109, %113 : vector<8x8xf32>
    %115 = vector.extract_strided_slice %41 {offsets = [0, 64], sizes = [8, 16], strides = [1, 1]} : vector<8x128xf32> to vector<8x16xf32>
    %cst_42 = arith.constant dense<0.000000e+00> : vector<8x16xf32>
    %116 = tpu.matmul %114, %115, %cst_42 {dimension_numbers = #tpu.dot_dimension_numbers<[1], [0], [0], [1], [0, 0, 1, 1], [], []>} : vector<8x8xf32>, vector<8x16xf32>, vector<8x16xf32> -> vector<8x16xf32>
    %117 = vector.extract_strided_slice %39 {offsets = [0, 80], sizes = [8, 16], strides = [1, 1]} : vector<8x128xf32> to vector<8x16xf32>
    %118 = vector.extract_strided_slice %40 {offsets = [0, 80], sizes = [8, 16], strides = [1, 1]} : vector<8x128xf32> to vector<8x16xf32>
    %cst_43 = arith.constant dense<0.000000e+00> : vector<8x8xf32>
    %119 = tpu.matmul %117, %118, %cst_43 {dimension_numbers = #tpu.dot_dimension_numbers<[1], [1], [0], [0], [0, 0, 1, 0], [], []>} : vector<8x16xf32>, vector<8x16xf32>, vector<8x8xf32> -> vector<8x8xf32>
    %cst_44 = arith.constant dense<0xFF800000> : vector<8xf32>
    %120 = vector.multi_reduction <maximumf>, %119, %cst_44 [1] : vector<8x8xf32> to vector<8xf32>
    %121 = vector.shape_cast %120 : vector<8xf32> to vector<8x1xf32>
    %122 = vector.broadcast %121 : vector<8x1xf32> to vector<8x8xf32>
    %123 = arith.subf %119, %122 : vector<8x8xf32>
    %124 = math.exp %123 : vector<8x8xf32>
    %cst_45 = arith.constant dense<0.000000e+00> : vector<8xf32>
    %125 = vector.multi_reduction <add>, %124, %cst_45 [1] : vector<8x8xf32> to vector<8xf32>
    %126 = vector.shape_cast %125 : vector<8xf32> to vector<8x1xf32>
    %127 = tpu.reciprocal %126 {approx = true} : vector<8x1xf32> -> vector<8x1xf32>
    %128 = vector.broadcast %127 : vector<8x1xf32> to vector<8x8xf32>
    %129 = arith.mulf %124, %128 : vector<8x8xf32>
    %130 = vector.extract_strided_slice %41 {offsets = [0, 80], sizes = [8, 16], strides = [1, 1]} : vector<8x128xf32> to vector<8x16xf32>
    %cst_46 = arith.constant dense<0.000000e+00> : vector<8x16xf32>
    %131 = tpu.matmul %129, %130, %cst_46 {dimension_numbers = #tpu.dot_dimension_numbers<[1], [0], [0], [1], [0, 0, 1, 1], [], []>} : vector<8x8xf32>, vector<8x16xf32>, vector<8x16xf32> -> vector<8x16xf32>
    %132 = vector.extract_strided_slice %39 {offsets = [0, 96], sizes = [8, 16], strides = [1, 1]} : vector<8x128xf32> to vector<8x16xf32>
    %133 = vector.extract_strided_slice %40 {offsets = [0, 96], sizes = [8, 16], strides = [1, 1]} : vector<8x128xf32> to vector<8x16xf32>
    %cst_47 = arith.constant dense<0.000000e+00> : vector<8x8xf32>
    %134 = tpu.matmul %132, %133, %cst_47 {dimension_numbers = #tpu.dot_dimension_numbers<[1], [1], [0], [0], [0, 0, 1, 0], [], []>} : vector<8x16xf32>, vector<8x16xf32>, vector<8x8xf32> -> vector<8x8xf32>
    %cst_48 = arith.constant dense<0xFF800000> : vector<8xf32>
    %135 = vector.multi_reduction <maximumf>, %134, %cst_48 [1] : vector<8x8xf32> to vector<8xf32>
    %136 = vector.shape_cast %135 : vector<8xf32> to vector<8x1xf32>
    %137 = vector.broadcast %136 : vector<8x1xf32> to vector<8x8xf32>
    %138 = arith.subf %134, %137 : vector<8x8xf32>
    %139 = math.exp %138 : vector<8x8xf32>
    %cst_49 = arith.constant dense<0.000000e+00> : vector<8xf32>
    %140 = vector.multi_reduction <add>, %139, %cst_49 [1] : vector<8x8xf32> to vector<8xf32>
    %141 = vector.shape_cast %140 : vector<8xf32> to vector<8x1xf32>
    %142 = tpu.reciprocal %141 {approx = true} : vector<8x1xf32> -> vector<8x1xf32>
    %143 = vector.broadcast %142 : vector<8x1xf32> to vector<8x8xf32>
    %144 = arith.mulf %139, %143 : vector<8x8xf32>
    %145 = vector.extract_strided_slice %41 {offsets = [0, 96], sizes = [8, 16], strides = [1, 1]} : vector<8x128xf32> to vector<8x16xf32>
    %cst_50 = arith.constant dense<0.000000e+00> : vector<8x16xf32>
    %146 = tpu.matmul %144, %145, %cst_50 {dimension_numbers = #tpu.dot_dimension_numbers<[1], [0], [0], [1], [0, 0, 1, 1], [], []>} : vector<8x8xf32>, vector<8x16xf32>, vector<8x16xf32> -> vector<8x16xf32>
    %147 = vector.extract_strided_slice %39 {offsets = [0, 112], sizes = [8, 16], strides = [1, 1]} : vector<8x128xf32> to vector<8x16xf32>
    %148 = vector.extract_strided_slice %40 {offsets = [0, 112], sizes = [8, 16], strides = [1, 1]} : vector<8x128xf32> to vector<8x16xf32>
    %cst_51 = arith.constant dense<0.000000e+00> : vector<8x8xf32>
    %149 = tpu.matmul %147, %148, %cst_51 {dimension_numbers = #tpu.dot_dimension_numbers<[1], [1], [0], [0], [0, 0, 1, 0], [], []>} : vector<8x16xf32>, vector<8x16xf32>, vector<8x8xf32> -> vector<8x8xf32>
    %cst_52 = arith.constant dense<0xFF800000> : vector<8xf32>
    %150 = vector.multi_reduction <maximumf>, %149, %cst_52 [1] : vector<8x8xf32> to vector<8xf32>
    %151 = vector.shape_cast %150 : vector<8xf32> to vector<8x1xf32>
    %152 = vector.broadcast %151 : vector<8x1xf32> to vector<8x8xf32>
    %153 = arith.subf %149, %152 : vector<8x8xf32>
    %154 = math.exp %153 : vector<8x8xf32>
    %cst_53 = arith.constant dense<0.000000e+00> : vector<8xf32>
    %155 = vector.multi_reduction <add>, %154, %cst_53 [1] : vector<8x8xf32> to vector<8xf32>
    %156 = vector.shape_cast %155 : vector<8xf32> to vector<8x1xf32>
    %157 = tpu.reciprocal %156 {approx = true} : vector<8x1xf32> -> vector<8x1xf32>
    %158 = vector.broadcast %157 : vector<8x1xf32> to vector<8x8xf32>
    %159 = arith.mulf %154, %158 : vector<8x8xf32>
    %160 = vector.extract_strided_slice %41 {offsets = [0, 112], sizes = [8, 16], strides = [1, 1]} : vector<8x128xf32> to vector<8x16xf32>
    %cst_54 = arith.constant dense<0.000000e+00> : vector<8x16xf32>
    %161 = tpu.matmul %159, %160, %cst_54 {dimension_numbers = #tpu.dot_dimension_numbers<[1], [0], [0], [1], [0, 0, 1, 1], [], []>} : vector<8x8xf32>, vector<8x16xf32>, vector<8x16xf32> -> vector<8x16xf32>
    %162 = tpu.concatenate %56, %71, %86, %101, %116, %131, %146, %161 in 1 : vector<8x16xf32>, vector<8x16xf32>, vector<8x16xf32>, vector<8x16xf32>, vector<8x16xf32>, vector<8x16xf32>, vector<8x16xf32>, vector<8x16xf32> -> vector<8x128xf32>
    %c0_55 = arith.constant 0 : index
    %c0_56 = arith.constant 0 : index
    %c0_57 = arith.constant 0 : index
    %163 = vector.load %arg9[%c0_55, %c0_56, %c0_57] : memref<2x128x128xf32, #tpu.memory_space<vmem>>, vector<1x128x128xf32>
    %164 = vector.shape_cast %163 : vector<1x128x128xf32> to vector<128x128xf32>
    %cst_58 = arith.constant dense<0.000000e+00> : vector<8x128xf32>
    %165 = tpu.matmul %162, %164, %cst_58 {dimension_numbers = #tpu.dot_dimension_numbers<[1], [0], [0], [1], [0, 0, 1, 1], [], []>} : vector<8x128xf32>, vector<128x128xf32>, vector<8x128xf32> -> vector<8x128xf32>
    %c0_59 = arith.constant 0 : index
    %c0_60 = arith.constant 0 : index
    %c0_61 = arith.constant 0 : index
    %166 = vector.load %arg10[%c0_59, %c0_60, %c0_61] : memref<2x1x128xf32, #tpu.memory_space<vmem>>, vector<1x1x128xf32>
    %167 = vector.shape_cast %166 : vector<1x1x128xf32> to vector<1x128xf32>
    %168 = vector.broadcast %167 : vector<1x128xf32> to vector<8x128xf32>
    %169 = arith.addf %165, %168 : vector<8x128xf32>
    %170 = arith.addf %169, %5 : vector<8x128xf32>
    %c0_62 = arith.constant 0 : index
    %c0_63 = arith.constant 0 : index
    %c0_64 = arith.constant 0 : index
    %171 = vector.load %arg11[%c0_62, %c0_63, %c0_64] : memref<2x1x128xf32, #tpu.memory_space<vmem>>, vector<1x1x128xf32>
    %172 = vector.shape_cast %171 : vector<1x1x128xf32> to vector<1x128xf32>
    %c0_65 = arith.constant 0 : index
    %c0_66 = arith.constant 0 : index
    %c0_67 = arith.constant 0 : index
    %173 = vector.load %arg12[%c0_65, %c0_66, %c0_67] : memref<2x1x128xf32, #tpu.memory_space<vmem>>, vector<1x1x128xf32>
    %174 = vector.shape_cast %173 : vector<1x1x128xf32> to vector<1x128xf32>
    %cst_68 = arith.constant dense<0.000000e+00> : vector<8xf32>
    %175 = vector.multi_reduction <add>, %170, %cst_68 [1] : vector<8x128xf32> to vector<8xf32>
    %176 = vector.shape_cast %175 : vector<8xf32> to vector<8x1xf32>
    %cst_69 = arith.constant 1.280000e+02 : f32
    %177 = vector.broadcast %cst_69 : f32 to vector<8x1xf32>
    %178 = arith.divf %176, %177 : vector<8x1xf32>
    %179 = vector.broadcast %178 : vector<8x1xf32> to vector<8x128xf32>
    %180 = arith.subf %170, %179 : vector<8x128xf32>
    %181 = arith.mulf %180, %180 : vector<8x128xf32>
    %cst_70 = arith.constant dense<0.000000e+00> : vector<8xf32>
    %182 = vector.multi_reduction <add>, %181, %cst_70 [1] : vector<8x128xf32> to vector<8xf32>
    %183 = vector.shape_cast %182 : vector<8xf32> to vector<8x1xf32>
    %cst_71 = arith.constant 1.280000e+02 : f32
    %184 = vector.broadcast %cst_71 : f32 to vector<8x1xf32>
    %185 = arith.divf %183, %184 : vector<8x1xf32>
    %186 = vector.broadcast %178 : vector<8x1xf32> to vector<8x128xf32>
    %187 = arith.subf %170, %186 : vector<8x128xf32>
    %cst_72 = arith.constant 9.99999974E-6 : f32
    %188 = vector.broadcast %cst_72 : f32 to vector<8x1xf32>
    %189 = arith.addf %185, %188 : vector<8x1xf32>
    %190 = math.rsqrt %189 : vector<8x1xf32>
    %191 = vector.broadcast %190 : vector<8x1xf32> to vector<8x128xf32>
    %192 = arith.mulf %187, %191 : vector<8x128xf32>
    %193 = vector.broadcast %172 : vector<1x128xf32> to vector<8x128xf32>
    %194 = arith.mulf %192, %193 : vector<8x128xf32>
    %195 = vector.broadcast %174 : vector<1x128xf32> to vector<8x128xf32>
    %196 = arith.addf %194, %195 : vector<8x128xf32>
    %c0_73 = arith.constant 0 : index
    %c0_74 = arith.constant 0 : index
    %c0_75 = arith.constant 0 : index
    %197 = vector.load %arg13[%c0_73, %c0_74, %c0_75] : memref<2x128x512xf32, #tpu.memory_space<vmem>>, vector<1x128x512xf32>
    %198 = vector.shape_cast %197 : vector<1x128x512xf32> to vector<128x512xf32>
    %cst_76 = arith.constant dense<0.000000e+00> : vector<8x512xf32>
    %199 = tpu.matmul %196, %198, %cst_76 {dimension_numbers = #tpu.dot_dimension_numbers<[1], [0], [0], [1], [0, 0, 1, 1], [], []>} : vector<8x128xf32>, vector<128x512xf32>, vector<8x512xf32> -> vector<8x512xf32>
    %c0_77 = arith.constant 0 : index
    %c0_78 = arith.constant 0 : index
    %c0_79 = arith.constant 0 : index
    %200 = vector.load %arg14[%c0_77, %c0_78, %c0_79] : memref<2x1x512xf32, #tpu.memory_space<vmem>>, vector<1x1x512xf32>
    %201 = vector.shape_cast %200 : vector<1x1x512xf32> to vector<1x512xf32>
    %202 = vector.broadcast %201 : vector<1x512xf32> to vector<8x512xf32>
    %203 = arith.addf %199, %202 : vector<8x512xf32>
    %cst_80 = arith.constant 0.000000e+00 : f32
    %204 = vector.broadcast %cst_80 : f32 to vector<8x512xf32>
    %205 = arith.maximumf %203, %204 : vector<8x512xf32>
    %c0_81 = arith.constant 0 : index
    %c0_82 = arith.constant 0 : index
    %c0_83 = arith.constant 0 : index
    %206 = vector.load %arg15[%c0_81, %c0_82, %c0_83] : memref<2x512x128xf32, #tpu.memory_space<vmem>>, vector<1x512x128xf32>
    %207 = vector.shape_cast %206 : vector<1x512x128xf32> to vector<512x128xf32>
    %cst_84 = arith.constant dense<0.000000e+00> : vector<8x128xf32>
    %208 = tpu.matmul %205, %207, %cst_84 {dimension_numbers = #tpu.dot_dimension_numbers<[1], [0], [0], [1], [0, 0, 1, 1], [], []>} : vector<8x512xf32>, vector<512x128xf32>, vector<8x128xf32> -> vector<8x128xf32>
    %209 = arith.addf %170, %208 : vector<8x128xf32>
    %c0_85 = arith.constant 0 : index
    %c0_86 = arith.constant 0 : index
    %c0_87 = arith.constant 0 : index
    %210 = vector.load %arg16[%c0_85, %c0_86, %c0_87] : memref<2x1x128xf32, #tpu.memory_space<vmem>>, vector<1x1x128xf32>
    %211 = vector.shape_cast %210 : vector<1x1x128xf32> to vector<1x128xf32>
    %212 = vector.broadcast %211 : vector<1x128xf32> to vector<8x128xf32>
    %213 = arith.addf %209, %212 : vector<8x128xf32>
    %c1 = arith.constant 1 : index
    %c0_88 = arith.constant 0 : index
    %c0_89 = arith.constant 0 : index
    %214 = vector.load %arg5[%c1, %c0_88, %c0_89] : memref<2x1x128xf32, #tpu.memory_space<vmem>>, vector<1x1x128xf32>
    %215 = vector.shape_cast %214 : vector<1x1x128xf32> to vector<1x128xf32>
    %c1_90 = arith.constant 1 : index
    %c0_91 = arith.constant 0 : index
    %c0_92 = arith.constant 0 : index
    %216 = vector.load %arg6[%c1_90, %c0_91, %c0_92] : memref<2x1x128xf32, #tpu.memory_space<vmem>>, vector<1x1x128xf32>
    %217 = vector.shape_cast %216 : vector<1x1x128xf32> to vector<1x128xf32>
    %cst_93 = arith.constant dense<0.000000e+00> : vector<8xf32>
    %218 = vector.multi_reduction <add>, %213, %cst_93 [1] : vector<8x128xf32> to vector<8xf32>
    %219 = vector.shape_cast %218 : vector<8xf32> to vector<8x1xf32>
    %cst_94 = arith.constant 1.280000e+02 : f32
    %220 = vector.broadcast %cst_94 : f32 to vector<8x1xf32>
    %221 = arith.divf %219, %220 : vector<8x1xf32>
    %222 = vector.broadcast %221 : vector<8x1xf32> to vector<8x128xf32>
    %223 = arith.subf %213, %222 : vector<8x128xf32>
    %224 = arith.mulf %223, %223 : vector<8x128xf32>
    %cst_95 = arith.constant dense<0.000000e+00> : vector<8xf32>
    %225 = vector.multi_reduction <add>, %224, %cst_95 [1] : vector<8x128xf32> to vector<8xf32>
    %226 = vector.shape_cast %225 : vector<8xf32> to vector<8x1xf32>
    %cst_96 = arith.constant 1.280000e+02 : f32
    %227 = vector.broadcast %cst_96 : f32 to vector<8x1xf32>
    %228 = arith.divf %226, %227 : vector<8x1xf32>
    %229 = vector.broadcast %221 : vector<8x1xf32> to vector<8x128xf32>
    %230 = arith.subf %213, %229 : vector<8x128xf32>
    %cst_97 = arith.constant 9.99999974E-6 : f32
    %231 = vector.broadcast %cst_97 : f32 to vector<8x1xf32>
    %232 = arith.addf %228, %231 : vector<8x1xf32>
    %233 = math.rsqrt %232 : vector<8x1xf32>
    %234 = vector.broadcast %233 : vector<8x1xf32> to vector<8x128xf32>
    %235 = arith.mulf %230, %234 : vector<8x128xf32>
    %236 = vector.broadcast %215 : vector<1x128xf32> to vector<8x128xf32>
    %237 = arith.mulf %235, %236 : vector<8x128xf32>
    %238 = vector.broadcast %217 : vector<1x128xf32> to vector<8x128xf32>
    %239 = arith.addf %237, %238 : vector<8x128xf32>
    %c1_98 = arith.constant 1 : index
    %c0_99 = arith.constant 0 : index
    %c0_100 = arith.constant 0 : index
    %240 = vector.load %arg7[%c1_98, %c0_99, %c0_100] : memref<2x128x384xf32, #tpu.memory_space<vmem>>, vector<1x128x384xf32>
    %241 = vector.shape_cast %240 : vector<1x128x384xf32> to vector<128x384xf32>
    %cst_101 = arith.constant dense<0.000000e+00> : vector<8x384xf32>
    %242 = tpu.matmul %239, %241, %cst_101 {dimension_numbers = #tpu.dot_dimension_numbers<[1], [0], [0], [1], [0, 0, 1, 1], [], []>} : vector<8x128xf32>, vector<128x384xf32>, vector<8x384xf32> -> vector<8x384xf32>
    %c1_102 = arith.constant 1 : index
    %c0_103 = arith.constant 0 : index
    %c0_104 = arith.constant 0 : index
    %243 = vector.load %arg8[%c1_102, %c0_103, %c0_104] : memref<2x1x384xf32, #tpu.memory_space<vmem>>, vector<1x1x384xf32>
    %244 = vector.shape_cast %243 : vector<1x1x384xf32> to vector<1x384xf32>
    %245 = vector.broadcast %244 : vector<1x384xf32> to vector<8x384xf32>
    %246 = arith.addf %242, %245 : vector<8x384xf32>
    %247 = vector.extract_strided_slice %246 {offsets = [0, 0], sizes = [8, 128], strides = [1, 1]} : vector<8x384xf32> to vector<8x128xf32>
    %248 = vector.extract_strided_slice %246 {offsets = [0, 128], sizes = [8, 128], strides = [1, 1]} : vector<8x384xf32> to vector<8x128xf32>
    %249 = vector.extract_strided_slice %246 {offsets = [0, 256], sizes = [8, 128], strides = [1, 1]} : vector<8x384xf32> to vector<8x128xf32>
    %250 = vector.extract_strided_slice %247 {offsets = [0, 0], sizes = [8, 16], strides = [1, 1]} : vector<8x128xf32> to vector<8x16xf32>
    %251 = vector.extract_strided_slice %248 {offsets = [0, 0], sizes = [8, 16], strides = [1, 1]} : vector<8x128xf32> to vector<8x16xf32>
    %cst_105 = arith.constant dense<0.000000e+00> : vector<8x8xf32>
    %252 = tpu.matmul %250, %251, %cst_105 {dimension_numbers = #tpu.dot_dimension_numbers<[1], [1], [0], [0], [0, 0, 1, 0], [], []>} : vector<8x16xf32>, vector<8x16xf32>, vector<8x8xf32> -> vector<8x8xf32>
    %cst_106 = arith.constant dense<0xFF800000> : vector<8xf32>
    %253 = vector.multi_reduction <maximumf>, %252, %cst_106 [1] : vector<8x8xf32> to vector<8xf32>
    %254 = vector.shape_cast %253 : vector<8xf32> to vector<8x1xf32>
    %255 = vector.broadcast %254 : vector<8x1xf32> to vector<8x8xf32>
    %256 = arith.subf %252, %255 : vector<8x8xf32>
    %257 = math.exp %256 : vector<8x8xf32>
    %cst_107 = arith.constant dense<0.000000e+00> : vector<8xf32>
    %258 = vector.multi_reduction <add>, %257, %cst_107 [1] : vector<8x8xf32> to vector<8xf32>
    %259 = vector.shape_cast %258 : vector<8xf32> to vector<8x1xf32>
    %260 = tpu.reciprocal %259 {approx = true} : vector<8x1xf32> -> vector<8x1xf32>
    %261 = vector.broadcast %260 : vector<8x1xf32> to vector<8x8xf32>
    %262 = arith.mulf %257, %261 : vector<8x8xf32>
    %263 = vector.extract_strided_slice %249 {offsets = [0, 0], sizes = [8, 16], strides = [1, 1]} : vector<8x128xf32> to vector<8x16xf32>
    %cst_108 = arith.constant dense<0.000000e+00> : vector<8x16xf32>
    %264 = tpu.matmul %262, %263, %cst_108 {dimension_numbers = #tpu.dot_dimension_numbers<[1], [0], [0], [1], [0, 0, 1, 1], [], []>} : vector<8x8xf32>, vector<8x16xf32>, vector<8x16xf32> -> vector<8x16xf32>
    %265 = vector.extract_strided_slice %247 {offsets = [0, 16], sizes = [8, 16], strides = [1, 1]} : vector<8x128xf32> to vector<8x16xf32>
    %266 = vector.extract_strided_slice %248 {offsets = [0, 16], sizes = [8, 16], strides = [1, 1]} : vector<8x128xf32> to vector<8x16xf32>
    %cst_109 = arith.constant dense<0.000000e+00> : vector<8x8xf32>
    %267 = tpu.matmul %265, %266, %cst_109 {dimension_numbers = #tpu.dot_dimension_numbers<[1], [1], [0], [0], [0, 0, 1, 0], [], []>} : vector<8x16xf32>, vector<8x16xf32>, vector<8x8xf32> -> vector<8x8xf32>
    %cst_110 = arith.constant dense<0xFF800000> : vector<8xf32>
    %268 = vector.multi_reduction <maximumf>, %267, %cst_110 [1] : vector<8x8xf32> to vector<8xf32>
    %269 = vector.shape_cast %268 : vector<8xf32> to vector<8x1xf32>
    %270 = vector.broadcast %269 : vector<8x1xf32> to vector<8x8xf32>
    %271 = arith.subf %267, %270 : vector<8x8xf32>
    %272 = math.exp %271 : vector<8x8xf32>
    %cst_111 = arith.constant dense<0.000000e+00> : vector<8xf32>
    %273 = vector.multi_reduction <add>, %272, %cst_111 [1] : vector<8x8xf32> to vector<8xf32>
    %274 = vector.shape_cast %273 : vector<8xf32> to vector<8x1xf32>
    %275 = tpu.reciprocal %274 {approx = true} : vector<8x1xf32> -> vector<8x1xf32>
    %276 = vector.broadcast %275 : vector<8x1xf32> to vector<8x8xf32>
    %277 = arith.mulf %272, %276 : vector<8x8xf32>
    %278 = vector.extract_strided_slice %249 {offsets = [0, 16], sizes = [8, 16], strides = [1, 1]} : vector<8x128xf32> to vector<8x16xf32>
    %cst_112 = arith.constant dense<0.000000e+00> : vector<8x16xf32>
    %279 = tpu.matmul %277, %278, %cst_112 {dimension_numbers = #tpu.dot_dimension_numbers<[1], [0], [0], [1], [0, 0, 1, 1], [], []>} : vector<8x8xf32>, vector<8x16xf32>, vector<8x16xf32> -> vector<8x16xf32>
    %280 = vector.extract_strided_slice %247 {offsets = [0, 32], sizes = [8, 16], strides = [1, 1]} : vector<8x128xf32> to vector<8x16xf32>
    %281 = vector.extract_strided_slice %248 {offsets = [0, 32], sizes = [8, 16], strides = [1, 1]} : vector<8x128xf32> to vector<8x16xf32>
    %cst_113 = arith.constant dense<0.000000e+00> : vector<8x8xf32>
    %282 = tpu.matmul %280, %281, %cst_113 {dimension_numbers = #tpu.dot_dimension_numbers<[1], [1], [0], [0], [0, 0, 1, 0], [], []>} : vector<8x16xf32>, vector<8x16xf32>, vector<8x8xf32> -> vector<8x8xf32>
    %cst_114 = arith.constant dense<0xFF800000> : vector<8xf32>
    %283 = vector.multi_reduction <maximumf>, %282, %cst_114 [1] : vector<8x8xf32> to vector<8xf32>
    %284 = vector.shape_cast %283 : vector<8xf32> to vector<8x1xf32>
    %285 = vector.broadcast %284 : vector<8x1xf32> to vector<8x8xf32>
    %286 = arith.subf %282, %285 : vector<8x8xf32>
    %287 = math.exp %286 : vector<8x8xf32>
    %cst_115 = arith.constant dense<0.000000e+00> : vector<8xf32>
    %288 = vector.multi_reduction <add>, %287, %cst_115 [1] : vector<8x8xf32> to vector<8xf32>
    %289 = vector.shape_cast %288 : vector<8xf32> to vector<8x1xf32>
    %290 = tpu.reciprocal %289 {approx = true} : vector<8x1xf32> -> vector<8x1xf32>
    %291 = vector.broadcast %290 : vector<8x1xf32> to vector<8x8xf32>
    %292 = arith.mulf %287, %291 : vector<8x8xf32>
    %293 = vector.extract_strided_slice %249 {offsets = [0, 32], sizes = [8, 16], strides = [1, 1]} : vector<8x128xf32> to vector<8x16xf32>
    %cst_116 = arith.constant dense<0.000000e+00> : vector<8x16xf32>
    %294 = tpu.matmul %292, %293, %cst_116 {dimension_numbers = #tpu.dot_dimension_numbers<[1], [0], [0], [1], [0, 0, 1, 1], [], []>} : vector<8x8xf32>, vector<8x16xf32>, vector<8x16xf32> -> vector<8x16xf32>
    %295 = vector.extract_strided_slice %247 {offsets = [0, 48], sizes = [8, 16], strides = [1, 1]} : vector<8x128xf32> to vector<8x16xf32>
    %296 = vector.extract_strided_slice %248 {offsets = [0, 48], sizes = [8, 16], strides = [1, 1]} : vector<8x128xf32> to vector<8x16xf32>
    %cst_117 = arith.constant dense<0.000000e+00> : vector<8x8xf32>
    %297 = tpu.matmul %295, %296, %cst_117 {dimension_numbers = #tpu.dot_dimension_numbers<[1], [1], [0], [0], [0, 0, 1, 0], [], []>} : vector<8x16xf32>, vector<8x16xf32>, vector<8x8xf32> -> vector<8x8xf32>
    %cst_118 = arith.constant dense<0xFF800000> : vector<8xf32>
    %298 = vector.multi_reduction <maximumf>, %297, %cst_118 [1] : vector<8x8xf32> to vector<8xf32>
    %299 = vector.shape_cast %298 : vector<8xf32> to vector<8x1xf32>
    %300 = vector.broadcast %299 : vector<8x1xf32> to vector<8x8xf32>
    %301 = arith.subf %297, %300 : vector<8x8xf32>
    %302 = math.exp %301 : vector<8x8xf32>
    %cst_119 = arith.constant dense<0.000000e+00> : vector<8xf32>
    %303 = vector.multi_reduction <add>, %302, %cst_119 [1] : vector<8x8xf32> to vector<8xf32>
    %304 = vector.shape_cast %303 : vector<8xf32> to vector<8x1xf32>
    %305 = tpu.reciprocal %304 {approx = true} : vector<8x1xf32> -> vector<8x1xf32>
    %306 = vector.broadcast %305 : vector<8x1xf32> to vector<8x8xf32>
    %307 = arith.mulf %302, %306 : vector<8x8xf32>
    %308 = vector.extract_strided_slice %249 {offsets = [0, 48], sizes = [8, 16], strides = [1, 1]} : vector<8x128xf32> to vector<8x16xf32>
    %cst_120 = arith.constant dense<0.000000e+00> : vector<8x16xf32>
    %309 = tpu.matmul %307, %308, %cst_120 {dimension_numbers = #tpu.dot_dimension_numbers<[1], [0], [0], [1], [0, 0, 1, 1], [], []>} : vector<8x8xf32>, vector<8x16xf32>, vector<8x16xf32> -> vector<8x16xf32>
    %310 = vector.extract_strided_slice %247 {offsets = [0, 64], sizes = [8, 16], strides = [1, 1]} : vector<8x128xf32> to vector<8x16xf32>
    %311 = vector.extract_strided_slice %248 {offsets = [0, 64], sizes = [8, 16], strides = [1, 1]} : vector<8x128xf32> to vector<8x16xf32>
    %cst_121 = arith.constant dense<0.000000e+00> : vector<8x8xf32>
    %312 = tpu.matmul %310, %311, %cst_121 {dimension_numbers = #tpu.dot_dimension_numbers<[1], [1], [0], [0], [0, 0, 1, 0], [], []>} : vector<8x16xf32>, vector<8x16xf32>, vector<8x8xf32> -> vector<8x8xf32>
    %cst_122 = arith.constant dense<0xFF800000> : vector<8xf32>
    %313 = vector.multi_reduction <maximumf>, %312, %cst_122 [1] : vector<8x8xf32> to vector<8xf32>
    %314 = vector.shape_cast %313 : vector<8xf32> to vector<8x1xf32>
    %315 = vector.broadcast %314 : vector<8x1xf32> to vector<8x8xf32>
    %316 = arith.subf %312, %315 : vector<8x8xf32>
    %317 = math.exp %316 : vector<8x8xf32>
    %cst_123 = arith.constant dense<0.000000e+00> : vector<8xf32>
    %318 = vector.multi_reduction <add>, %317, %cst_123 [1] : vector<8x8xf32> to vector<8xf32>
    %319 = vector.shape_cast %318 : vector<8xf32> to vector<8x1xf32>
    %320 = tpu.reciprocal %319 {approx = true} : vector<8x1xf32> -> vector<8x1xf32>
    %321 = vector.broadcast %320 : vector<8x1xf32> to vector<8x8xf32>
    %322 = arith.mulf %317, %321 : vector<8x8xf32>
    %323 = vector.extract_strided_slice %249 {offsets = [0, 64], sizes = [8, 16], strides = [1, 1]} : vector<8x128xf32> to vector<8x16xf32>
    %cst_124 = arith.constant dense<0.000000e+00> : vector<8x16xf32>
    %324 = tpu.matmul %322, %323, %cst_124 {dimension_numbers = #tpu.dot_dimension_numbers<[1], [0], [0], [1], [0, 0, 1, 1], [], []>} : vector<8x8xf32>, vector<8x16xf32>, vector<8x16xf32> -> vector<8x16xf32>
    %325 = vector.extract_strided_slice %247 {offsets = [0, 80], sizes = [8, 16], strides = [1, 1]} : vector<8x128xf32> to vector<8x16xf32>
    %326 = vector.extract_strided_slice %248 {offsets = [0, 80], sizes = [8, 16], strides = [1, 1]} : vector<8x128xf32> to vector<8x16xf32>
    %cst_125 = arith.constant dense<0.000000e+00> : vector<8x8xf32>
    %327 = tpu.matmul %325, %326, %cst_125 {dimension_numbers = #tpu.dot_dimension_numbers<[1], [1], [0], [0], [0, 0, 1, 0], [], []>} : vector<8x16xf32>, vector<8x16xf32>, vector<8x8xf32> -> vector<8x8xf32>
    %cst_126 = arith.constant dense<0xFF800000> : vector<8xf32>
    %328 = vector.multi_reduction <maximumf>, %327, %cst_126 [1] : vector<8x8xf32> to vector<8xf32>
    %329 = vector.shape_cast %328 : vector<8xf32> to vector<8x1xf32>
    %330 = vector.broadcast %329 : vector<8x1xf32> to vector<8x8xf32>
    %331 = arith.subf %327, %330 : vector<8x8xf32>
    %332 = math.exp %331 : vector<8x8xf32>
    %cst_127 = arith.constant dense<0.000000e+00> : vector<8xf32>
    %333 = vector.multi_reduction <add>, %332, %cst_127 [1] : vector<8x8xf32> to vector<8xf32>
    %334 = vector.shape_cast %333 : vector<8xf32> to vector<8x1xf32>
    %335 = tpu.reciprocal %334 {approx = true} : vector<8x1xf32> -> vector<8x1xf32>
    %336 = vector.broadcast %335 : vector<8x1xf32> to vector<8x8xf32>
    %337 = arith.mulf %332, %336 : vector<8x8xf32>
    %338 = vector.extract_strided_slice %249 {offsets = [0, 80], sizes = [8, 16], strides = [1, 1]} : vector<8x128xf32> to vector<8x16xf32>
    %cst_128 = arith.constant dense<0.000000e+00> : vector<8x16xf32>
    %339 = tpu.matmul %337, %338, %cst_128 {dimension_numbers = #tpu.dot_dimension_numbers<[1], [0], [0], [1], [0, 0, 1, 1], [], []>} : vector<8x8xf32>, vector<8x16xf32>, vector<8x16xf32> -> vector<8x16xf32>
    %340 = vector.extract_strided_slice %247 {offsets = [0, 96], sizes = [8, 16], strides = [1, 1]} : vector<8x128xf32> to vector<8x16xf32>
    %341 = vector.extract_strided_slice %248 {offsets = [0, 96], sizes = [8, 16], strides = [1, 1]} : vector<8x128xf32> to vector<8x16xf32>
    %cst_129 = arith.constant dense<0.000000e+00> : vector<8x8xf32>
    %342 = tpu.matmul %340, %341, %cst_129 {dimension_numbers = #tpu.dot_dimension_numbers<[1], [1], [0], [0], [0, 0, 1, 0], [], []>} : vector<8x16xf32>, vector<8x16xf32>, vector<8x8xf32> -> vector<8x8xf32>
    %cst_130 = arith.constant dense<0xFF800000> : vector<8xf32>
    %343 = vector.multi_reduction <maximumf>, %342, %cst_130 [1] : vector<8x8xf32> to vector<8xf32>
    %344 = vector.shape_cast %343 : vector<8xf32> to vector<8x1xf32>
    %345 = vector.broadcast %344 : vector<8x1xf32> to vector<8x8xf32>
    %346 = arith.subf %342, %345 : vector<8x8xf32>
    %347 = math.exp %346 : vector<8x8xf32>
    %cst_131 = arith.constant dense<0.000000e+00> : vector<8xf32>
    %348 = vector.multi_reduction <add>, %347, %cst_131 [1] : vector<8x8xf32> to vector<8xf32>
    %349 = vector.shape_cast %348 : vector<8xf32> to vector<8x1xf32>
    %350 = tpu.reciprocal %349 {approx = true} : vector<8x1xf32> -> vector<8x1xf32>
    %351 = vector.broadcast %350 : vector<8x1xf32> to vector<8x8xf32>
    %352 = arith.mulf %347, %351 : vector<8x8xf32>
    %353 = vector.extract_strided_slice %249 {offsets = [0, 96], sizes = [8, 16], strides = [1, 1]} : vector<8x128xf32> to vector<8x16xf32>
    %cst_132 = arith.constant dense<0.000000e+00> : vector<8x16xf32>
    %354 = tpu.matmul %352, %353, %cst_132 {dimension_numbers = #tpu.dot_dimension_numbers<[1], [0], [0], [1], [0, 0, 1, 1], [], []>} : vector<8x8xf32>, vector<8x16xf32>, vector<8x16xf32> -> vector<8x16xf32>
    %355 = vector.extract_strided_slice %247 {offsets = [0, 112], sizes = [8, 16], strides = [1, 1]} : vector<8x128xf32> to vector<8x16xf32>
    %356 = vector.extract_strided_slice %248 {offsets = [0, 112], sizes = [8, 16], strides = [1, 1]} : vector<8x128xf32> to vector<8x16xf32>
    %cst_133 = arith.constant dense<0.000000e+00> : vector<8x8xf32>
    %357 = tpu.matmul %355, %356, %cst_133 {dimension_numbers = #tpu.dot_dimension_numbers<[1], [1], [0], [0], [0, 0, 1, 0], [], []>} : vector<8x16xf32>, vector<8x16xf32>, vector<8x8xf32> -> vector<8x8xf32>
    %cst_134 = arith.constant dense<0xFF800000> : vector<8xf32>
    %358 = vector.multi_reduction <maximumf>, %357, %cst_134 [1] : vector<8x8xf32> to vector<8xf32>
    %359 = vector.shape_cast %358 : vector<8xf32> to vector<8x1xf32>
    %360 = vector.broadcast %359 : vector<8x1xf32> to vector<8x8xf32>
    %361 = arith.subf %357, %360 : vector<8x8xf32>
    %362 = math.exp %361 : vector<8x8xf32>
    %cst_135 = arith.constant dense<0.000000e+00> : vector<8xf32>
    %363 = vector.multi_reduction <add>, %362, %cst_135 [1] : vector<8x8xf32> to vector<8xf32>
    %364 = vector.shape_cast %363 : vector<8xf32> to vector<8x1xf32>
    %365 = tpu.reciprocal %364 {approx = true} : vector<8x1xf32> -> vector<8x1xf32>
    %366 = vector.broadcast %365 : vector<8x1xf32> to vector<8x8xf32>
    %367 = arith.mulf %362, %366 : vector<8x8xf32>
    %368 = vector.extract_strided_slice %249 {offsets = [0, 112], sizes = [8, 16], strides = [1, 1]} : vector<8x128xf32> to vector<8x16xf32>
    %cst_136 = arith.constant dense<0.000000e+00> : vector<8x16xf32>
    %369 = tpu.matmul %367, %368, %cst_136 {dimension_numbers = #tpu.dot_dimension_numbers<[1], [0], [0], [1], [0, 0, 1, 1], [], []>} : vector<8x8xf32>, vector<8x16xf32>, vector<8x16xf32> -> vector<8x16xf32>
    %370 = tpu.concatenate %264, %279, %294, %309, %324, %339, %354, %369 in 1 : vector<8x16xf32>, vector<8x16xf32>, vector<8x16xf32>, vector<8x16xf32>, vector<8x16xf32>, vector<8x16xf32>, vector<8x16xf32>, vector<8x16xf32> -> vector<8x128xf32>
    %c1_137 = arith.constant 1 : index
    %c0_138 = arith.constant 0 : index
    %c0_139 = arith.constant 0 : index
    %371 = vector.load %arg9[%c1_137, %c0_138, %c0_139] : memref<2x128x128xf32, #tpu.memory_space<vmem>>, vector<1x128x128xf32>
    %372 = vector.shape_cast %371 : vector<1x128x128xf32> to vector<128x128xf32>
    %cst_140 = arith.constant dense<0.000000e+00> : vector<8x128xf32>
    %373 = tpu.matmul %370, %372, %cst_140 {dimension_numbers = #tpu.dot_dimension_numbers<[1], [0], [0], [1], [0, 0, 1, 1], [], []>} : vector<8x128xf32>, vector<128x128xf32>, vector<8x128xf32> -> vector<8x128xf32>
    %c1_141 = arith.constant 1 : index
    %c0_142 = arith.constant 0 : index
    %c0_143 = arith.constant 0 : index
    %374 = vector.load %arg10[%c1_141, %c0_142, %c0_143] : memref<2x1x128xf32, #tpu.memory_space<vmem>>, vector<1x1x128xf32>
    %375 = vector.shape_cast %374 : vector<1x1x128xf32> to vector<1x128xf32>
    %376 = vector.broadcast %375 : vector<1x128xf32> to vector<8x128xf32>
    %377 = arith.addf %373, %376 : vector<8x128xf32>
    %378 = arith.addf %377, %213 : vector<8x128xf32>
    %c1_144 = arith.constant 1 : index
    %c0_145 = arith.constant 0 : index
    %c0_146 = arith.constant 0 : index
    %379 = vector.load %arg11[%c1_144, %c0_145, %c0_146] : memref<2x1x128xf32, #tpu.memory_space<vmem>>, vector<1x1x128xf32>
    %380 = vector.shape_cast %379 : vector<1x1x128xf32> to vector<1x128xf32>
    %c1_147 = arith.constant 1 : index
    %c0_148 = arith.constant 0 : index
    %c0_149 = arith.constant 0 : index
    %381 = vector.load %arg12[%c1_147, %c0_148, %c0_149] : memref<2x1x128xf32, #tpu.memory_space<vmem>>, vector<1x1x128xf32>
    %382 = vector.shape_cast %381 : vector<1x1x128xf32> to vector<1x128xf32>
    %cst_150 = arith.constant dense<0.000000e+00> : vector<8xf32>
    %383 = vector.multi_reduction <add>, %378, %cst_150 [1] : vector<8x128xf32> to vector<8xf32>
    %384 = vector.shape_cast %383 : vector<8xf32> to vector<8x1xf32>
    %cst_151 = arith.constant 1.280000e+02 : f32
    %385 = vector.broadcast %cst_151 : f32 to vector<8x1xf32>
    %386 = arith.divf %384, %385 : vector<8x1xf32>
    %387 = vector.broadcast %386 : vector<8x1xf32> to vector<8x128xf32>
    %388 = arith.subf %378, %387 : vector<8x128xf32>
    %389 = arith.mulf %388, %388 : vector<8x128xf32>
    %cst_152 = arith.constant dense<0.000000e+00> : vector<8xf32>
    %390 = vector.multi_reduction <add>, %389, %cst_152 [1] : vector<8x128xf32> to vector<8xf32>
    %391 = vector.shape_cast %390 : vector<8xf32> to vector<8x1xf32>
    %cst_153 = arith.constant 1.280000e+02 : f32
    %392 = vector.broadcast %cst_153 : f32 to vector<8x1xf32>
    %393 = arith.divf %391, %392 : vector<8x1xf32>
    %394 = vector.broadcast %386 : vector<8x1xf32> to vector<8x128xf32>
    %395 = arith.subf %378, %394 : vector<8x128xf32>
    %cst_154 = arith.constant 9.99999974E-6 : f32
    %396 = vector.broadcast %cst_154 : f32 to vector<8x1xf32>
    %397 = arith.addf %393, %396 : vector<8x1xf32>
    %398 = math.rsqrt %397 : vector<8x1xf32>
    %399 = vector.broadcast %398 : vector<8x1xf32> to vector<8x128xf32>
    %400 = arith.mulf %395, %399 : vector<8x128xf32>
    %401 = vector.broadcast %380 : vector<1x128xf32> to vector<8x128xf32>
    %402 = arith.mulf %400, %401 : vector<8x128xf32>
    %403 = vector.broadcast %382 : vector<1x128xf32> to vector<8x128xf32>
    %404 = arith.addf %402, %403 : vector<8x128xf32>
    %c1_155 = arith.constant 1 : index
    %c0_156 = arith.constant 0 : index
    %c0_157 = arith.constant 0 : index
    %405 = vector.load %arg13[%c1_155, %c0_156, %c0_157] : memref<2x128x512xf32, #tpu.memory_space<vmem>>, vector<1x128x512xf32>
    %406 = vector.shape_cast %405 : vector<1x128x512xf32> to vector<128x512xf32>
    %cst_158 = arith.constant dense<0.000000e+00> : vector<8x512xf32>
    %407 = tpu.matmul %404, %406, %cst_158 {dimension_numbers = #tpu.dot_dimension_numbers<[1], [0], [0], [1], [0, 0, 1, 1], [], []>} : vector<8x128xf32>, vector<128x512xf32>, vector<8x512xf32> -> vector<8x512xf32>
    %c1_159 = arith.constant 1 : index
    %c0_160 = arith.constant 0 : index
    %c0_161 = arith.constant 0 : index
    %408 = vector.load %arg14[%c1_159, %c0_160, %c0_161] : memref<2x1x512xf32, #tpu.memory_space<vmem>>, vector<1x1x512xf32>
    %409 = vector.shape_cast %408 : vector<1x1x512xf32> to vector<1x512xf32>
    %410 = vector.broadcast %409 : vector<1x512xf32> to vector<8x512xf32>
    %411 = arith.addf %407, %410 : vector<8x512xf32>
    %cst_162 = arith.constant 0.000000e+00 : f32
    %412 = vector.broadcast %cst_162 : f32 to vector<8x512xf32>
    %413 = arith.maximumf %411, %412 : vector<8x512xf32>
    %c1_163 = arith.constant 1 : index
    %c0_164 = arith.constant 0 : index
    %c0_165 = arith.constant 0 : index
    %414 = vector.load %arg15[%c1_163, %c0_164, %c0_165] : memref<2x512x128xf32, #tpu.memory_space<vmem>>, vector<1x512x128xf32>
    %415 = vector.shape_cast %414 : vector<1x512x128xf32> to vector<512x128xf32>
    %cst_166 = arith.constant dense<0.000000e+00> : vector<8x128xf32>
    %416 = tpu.matmul %413, %415, %cst_166 {dimension_numbers = #tpu.dot_dimension_numbers<[1], [0], [0], [1], [0, 0, 1, 1], [], []>} : vector<8x512xf32>, vector<512x128xf32>, vector<8x128xf32> -> vector<8x128xf32>
    %417 = arith.addf %378, %416 : vector<8x128xf32>
    %c1_167 = arith.constant 1 : index
    %c0_168 = arith.constant 0 : index
    %c0_169 = arith.constant 0 : index
    %418 = vector.load %arg16[%c1_167, %c0_168, %c0_169] : memref<2x1x128xf32, #tpu.memory_space<vmem>>, vector<1x1x128xf32>
    %419 = vector.shape_cast %418 : vector<1x1x128xf32> to vector<1x128xf32>
    %420 = vector.broadcast %419 : vector<1x128xf32> to vector<8x128xf32>
    %421 = arith.addf %417, %420 : vector<8x128xf32>
    %c0_170 = arith.constant 0 : index
    %c0_171 = arith.constant 0 : index
    %422 = vector.load %arg2[%c0_170, %c0_171] : memref<1x200xf32, #tpu.memory_space<vmem>>, vector<1x200xf32>
    %c0_172 = arith.constant 0 : index
    %c0_173 = arith.constant 0 : index
    %423 = vector.load %arg17[%c0_172, %c0_173] : memref<200x800xf32, #tpu.memory_space<vmem>>, vector<200x800xf32>
    %cst_174 = arith.constant dense<0.000000e+00> : vector<1x800xf32>
    %424 = tpu.matmul %422, %423, %cst_174 {dimension_numbers = #tpu.dot_dimension_numbers<[1], [0], [0], [1], [0, 0, 1, 1], [], []>} : vector<1x200xf32>, vector<200x800xf32>, vector<1x800xf32> -> vector<1x800xf32>
    %c0_175 = arith.constant 0 : index
    %c0_176 = arith.constant 0 : index
    %425 = vector.load %arg18[%c0_175, %c0_176] : memref<1x800xf32, #tpu.memory_space<vmem>>, vector<1x800xf32>
    %426 = arith.addf %424, %425 : vector<1x800xf32>
    %cst_177 = arith.constant 0.000000e+00 : f32
    %427 = vector.broadcast %cst_177 : f32 to vector<1x800xf32>
    %428 = arith.maximumf %426, %427 : vector<1x800xf32>
    %c0_178 = arith.constant 0 : index
    %c0_179 = arith.constant 0 : index
    %429 = vector.load %arg19[%c0_178, %c0_179] : memref<1x800xf32, #tpu.memory_space<vmem>>, vector<1x800xf32>
    %c0_180 = arith.constant 0 : index
    %c0_181 = arith.constant 0 : index
    %430 = vector.load %arg20[%c0_180, %c0_181] : memref<1x800xf32, #tpu.memory_space<vmem>>, vector<1x800xf32>
    %cst_182 = arith.constant dense<0.000000e+00> : vector<1xf32>
    %431 = vector.multi_reduction <add>, %428, %cst_182 [1] : vector<1x800xf32> to vector<1xf32>
    %432 = vector.shape_cast %431 : vector<1xf32> to vector<1x1xf32>
    %cst_183 = arith.constant 8.000000e+02 : f32
    %433 = vector.broadcast %cst_183 : f32 to vector<1x1xf32>
    %434 = arith.divf %432, %433 : vector<1x1xf32>
    %435 = vector.broadcast %434 : vector<1x1xf32> to vector<1x800xf32>
    %436 = arith.subf %428, %435 : vector<1x800xf32>
    %437 = arith.mulf %436, %436 : vector<1x800xf32>
    %cst_184 = arith.constant dense<0.000000e+00> : vector<1xf32>
    %438 = vector.multi_reduction <add>, %437, %cst_184 [1] : vector<1x800xf32> to vector<1xf32>
    %439 = vector.shape_cast %438 : vector<1xf32> to vector<1x1xf32>
    %cst_185 = arith.constant 8.000000e+02 : f32
    %440 = vector.broadcast %cst_185 : f32 to vector<1x1xf32>
    %441 = arith.divf %439, %440 : vector<1x1xf32>
    %442 = vector.broadcast %434 : vector<1x1xf32> to vector<1x800xf32>
    %443 = arith.subf %428, %442 : vector<1x800xf32>
    %cst_186 = arith.constant 9.99999974E-6 : f32
    %444 = vector.broadcast %cst_186 : f32 to vector<1x1xf32>
    %445 = arith.addf %441, %444 : vector<1x1xf32>
    %446 = math.rsqrt %445 : vector<1x1xf32>
    %447 = vector.broadcast %446 : vector<1x1xf32> to vector<1x800xf32>
    %448 = arith.mulf %443, %447 : vector<1x800xf32>
    %449 = arith.mulf %448, %429 : vector<1x800xf32>
    %450 = arith.addf %449, %430 : vector<1x800xf32>
    %c0_187 = arith.constant 0 : index
    %c0_188 = arith.constant 0 : index
    %451 = vector.load %arg21[%c0_187, %c0_188] : memref<800x512xf32, #tpu.memory_space<vmem>>, vector<800x512xf32>
    %cst_189 = arith.constant dense<0.000000e+00> : vector<1x512xf32>
    %452 = tpu.matmul %450, %451, %cst_189 {dimension_numbers = #tpu.dot_dimension_numbers<[1], [0], [0], [1], [0, 0, 1, 1], [], []>} : vector<1x800xf32>, vector<800x512xf32>, vector<1x512xf32> -> vector<1x512xf32>
    %c0_190 = arith.constant 0 : index
    %c0_191 = arith.constant 0 : index
    %453 = vector.load %arg22[%c0_190, %c0_191] : memref<1x512xf32, #tpu.memory_space<vmem>>, vector<1x512xf32>
    %454 = arith.addf %452, %453 : vector<1x512xf32>
    %cst_192 = arith.constant 0.000000e+00 : f32
    %455 = vector.broadcast %cst_192 : f32 to vector<1x512xf32>
    %456 = arith.maximumf %454, %455 : vector<1x512xf32>
    %c0_193 = arith.constant 0 : index
    %c0_194 = arith.constant 0 : index
    %457 = vector.load %arg23[%c0_193, %c0_194] : memref<1x512xf32, #tpu.memory_space<vmem>>, vector<1x512xf32>
    %c0_195 = arith.constant 0 : index
    %c0_196 = arith.constant 0 : index
    %458 = vector.load %arg24[%c0_195, %c0_196] : memref<1x512xf32, #tpu.memory_space<vmem>>, vector<1x512xf32>
    %cst_197 = arith.constant dense<0.000000e+00> : vector<1xf32>
    %459 = vector.multi_reduction <add>, %456, %cst_197 [1] : vector<1x512xf32> to vector<1xf32>
    %460 = vector.shape_cast %459 : vector<1xf32> to vector<1x1xf32>
    %cst_198 = arith.constant 5.120000e+02 : f32
    %461 = vector.broadcast %cst_198 : f32 to vector<1x1xf32>
    %462 = arith.divf %460, %461 : vector<1x1xf32>
    %463 = vector.broadcast %462 : vector<1x1xf32> to vector<1x512xf32>
    %464 = arith.subf %456, %463 : vector<1x512xf32>
    %465 = arith.mulf %464, %464 : vector<1x512xf32>
    %cst_199 = arith.constant dense<0.000000e+00> : vector<1xf32>
    %466 = vector.multi_reduction <add>, %465, %cst_199 [1] : vector<1x512xf32> to vector<1xf32>
    %467 = vector.shape_cast %466 : vector<1xf32> to vector<1x1xf32>
    %cst_200 = arith.constant 5.120000e+02 : f32
    %468 = vector.broadcast %cst_200 : f32 to vector<1x1xf32>
    %469 = arith.divf %467, %468 : vector<1x1xf32>
    %470 = vector.broadcast %462 : vector<1x1xf32> to vector<1x512xf32>
    %471 = arith.subf %456, %470 : vector<1x512xf32>
    %cst_201 = arith.constant 9.99999974E-6 : f32
    %472 = vector.broadcast %cst_201 : f32 to vector<1x1xf32>
    %473 = arith.addf %469, %472 : vector<1x1xf32>
    %474 = math.rsqrt %473 : vector<1x1xf32>
    %475 = vector.broadcast %474 : vector<1x1xf32> to vector<1x512xf32>
    %476 = arith.mulf %471, %475 : vector<1x512xf32>
    %477 = arith.mulf %476, %457 : vector<1x512xf32>
    %478 = arith.addf %477, %458 : vector<1x512xf32>
    %c0_202 = arith.constant 0 : index
    %c0_203 = arith.constant 0 : index
    %479 = vector.load %arg25[%c0_202, %c0_203] : memref<512x128xf32, #tpu.memory_space<vmem>>, vector<512x128xf32>
    %cst_204 = arith.constant dense<0.000000e+00> : vector<1x128xf32>
    %480 = tpu.matmul %478, %479, %cst_204 {dimension_numbers = #tpu.dot_dimension_numbers<[1], [0], [0], [1], [0, 0, 1, 1], [], []>} : vector<1x512xf32>, vector<512x128xf32>, vector<1x128xf32> -> vector<1x128xf32>
    %c0_205 = arith.constant 0 : index
    %c0_206 = arith.constant 0 : index
    %481 = vector.load %arg26[%c0_205, %c0_206] : memref<1x128xf32, #tpu.memory_space<vmem>>, vector<1x128xf32>
    %482 = arith.addf %480, %481 : vector<1x128xf32>
    %cst_207 = arith.constant 0.000000e+00 : f32
    %483 = vector.broadcast %cst_207 : f32 to vector<1x128xf32>
    %484 = arith.maximumf %482, %483 : vector<1x128xf32>
    %c0_208 = arith.constant 0 : index
    %c0_209 = arith.constant 0 : index
    %485 = vector.load %arg27[%c0_208, %c0_209] : memref<1x128xf32, #tpu.memory_space<vmem>>, vector<1x128xf32>
    %c0_210 = arith.constant 0 : index
    %c0_211 = arith.constant 0 : index
    %486 = vector.load %arg28[%c0_210, %c0_211] : memref<1x128xf32, #tpu.memory_space<vmem>>, vector<1x128xf32>
    %cst_212 = arith.constant dense<0.000000e+00> : vector<1xf32>
    %487 = vector.multi_reduction <add>, %484, %cst_212 [1] : vector<1x128xf32> to vector<1xf32>
    %488 = vector.shape_cast %487 : vector<1xf32> to vector<1x1xf32>
    %cst_213 = arith.constant 1.280000e+02 : f32
    %489 = vector.broadcast %cst_213 : f32 to vector<1x1xf32>
    %490 = arith.divf %488, %489 : vector<1x1xf32>
    %491 = vector.broadcast %490 : vector<1x1xf32> to vector<1x128xf32>
    %492 = arith.subf %484, %491 : vector<1x128xf32>
    %493 = arith.mulf %492, %492 : vector<1x128xf32>
    %cst_214 = arith.constant dense<0.000000e+00> : vector<1xf32>
    %494 = vector.multi_reduction <add>, %493, %cst_214 [1] : vector<1x128xf32> to vector<1xf32>
    %495 = vector.shape_cast %494 : vector<1xf32> to vector<1x1xf32>
    %cst_215 = arith.constant 1.280000e+02 : f32
    %496 = vector.broadcast %cst_215 : f32 to vector<1x1xf32>
    %497 = arith.divf %495, %496 : vector<1x1xf32>
    %498 = vector.broadcast %490 : vector<1x1xf32> to vector<1x128xf32>
    %499 = arith.subf %484, %498 : vector<1x128xf32>
    %cst_216 = arith.constant 9.99999974E-6 : f32
    %500 = vector.broadcast %cst_216 : f32 to vector<1x1xf32>
    %501 = arith.addf %497, %500 : vector<1x1xf32>
    %502 = math.rsqrt %501 : vector<1x1xf32>
    %503 = vector.broadcast %502 : vector<1x1xf32> to vector<1x128xf32>
    %504 = arith.mulf %499, %503 : vector<1x128xf32>
    %505 = arith.mulf %504, %485 : vector<1x128xf32>
    %506 = arith.addf %505, %486 : vector<1x128xf32>
    %cst_217 = arith.constant dense<0.000000e+00> : vector<128xf32>
    %507 = vector.multi_reduction <add>, %421, %cst_217 [0] : vector<8x128xf32> to vector<128xf32>
    %508 = vector.shape_cast %507 : vector<128xf32> to vector<1x128xf32>
    %cst_218 = arith.constant 8.000000e+00 : f32
    %509 = vector.broadcast %cst_218 : f32 to vector<1x128xf32>
    %510 = arith.divf %508, %509 : vector<1x128xf32>
    %511 = arith.addf %510, %506 : vector<1x128xf32>
    %cst_219 = arith.constant 5.000000e-01 : f32
    %512 = vector.broadcast %cst_219 : f32 to vector<1x128xf32>
    %513 = arith.mulf %511, %512 : vector<1x128xf32>
    %c0_220 = arith.constant 0 : index
    %c0_221 = arith.constant 0 : index
    %514 = vector.load %arg29[%c0_220, %c0_221] : memref<128x128xf32, #tpu.memory_space<vmem>>, vector<128x128xf32>
    %cst_222 = arith.constant dense<0.000000e+00> : vector<1x128xf32>
    %515 = tpu.matmul %513, %514, %cst_222 {dimension_numbers = #tpu.dot_dimension_numbers<[1], [0], [0], [1], [0, 0, 1, 1], [], []>} : vector<1x128xf32>, vector<128x128xf32>, vector<1x128xf32> -> vector<1x128xf32>
    %cst_223 = arith.constant dense<0.000000e+00> : vector<1x8xf32>
    %516 = tpu.matmul %515, %421, %cst_223 {dimension_numbers = #tpu.dot_dimension_numbers<[1], [1], [0], [0], [0, 0, 1, 0], [], []>} : vector<1x128xf32>, vector<8x128xf32>, vector<1x8xf32> -> vector<1x8xf32>
    %c0_224 = arith.constant 0 : index
    %c0_225 = arith.constant 0 : index
    %517 = vector.load %arg1[%c0_224, %c0_225] : memref<1x8xf32, #tpu.memory_space<vmem>>, vector<1x8xf32>
    %cst_226 = arith.constant 0.000000e+00 : f32
    %518 = vector.broadcast %cst_226 : f32 to vector<1x8xf32>
    %519 = arith.cmpf oeq, %517, %518 : vector<1x8xf32>
    %cst_227 = arith.constant -1.000000e+30 : f32
    %520 = vector.broadcast %cst_227 : f32 to vector<1x8xf32>
    %521 = arith.select %519, %520, %516 : vector<1x8xi1>, vector<1x8xf32>
    %cst_228 = arith.constant dense<0xFF800000> : vector<1xf32>
    %522 = vector.multi_reduction <maximumf>, %521, %cst_228 [1] : vector<1x8xf32> to vector<1xf32>
    %523 = vector.shape_cast %522 : vector<1xf32> to vector<1x1xf32>
    %524 = vector.broadcast %523 : vector<1x1xf32> to vector<1x8xf32>
    %525 = arith.subf %521, %524 : vector<1x8xf32>
    %526 = math.exp %525 : vector<1x8xf32>
    %cst_229 = arith.constant dense<0.000000e+00> : vector<1xf32>
    %527 = vector.multi_reduction <add>, %526, %cst_229 [1] : vector<1x8xf32> to vector<1xf32>
    %528 = vector.shape_cast %527 : vector<1xf32> to vector<1x1xf32>
    %529 = tpu.reciprocal %528 {approx = true} : vector<1x1xf32> -> vector<1x1xf32>
    %530 = vector.broadcast %529 : vector<1x1xf32> to vector<1x8xf32>
    %531 = arith.mulf %526, %530 : vector<1x8xf32>
    %c0_230 = arith.constant 0 : index
    %c0_231 = arith.constant 0 : index
    %532 = vector.load %arg30[%c0_230, %c0_231] : memref<1x128xf32, #tpu.memory_space<vmem>>, vector<1x128xf32>
    %cst_232 = arith.constant dense<0.000000e+00> : vector<1x8xf32>
    %533 = tpu.matmul %532, %421, %cst_232 {dimension_numbers = #tpu.dot_dimension_numbers<[1], [1], [0], [0], [0, 0, 1, 0], [], []>} : vector<1x128xf32>, vector<8x128xf32>, vector<1x8xf32> -> vector<1x8xf32>
    %534 = arith.mulf %531, %533 : vector<1x8xf32>
    %535 = math.tanh %534 : vector<1x8xf32>
    %cst_233 = arith.constant 1.000000e+01 : f32
    %536 = vector.broadcast %cst_233 : f32 to vector<1x8xf32>
    %537 = arith.mulf %536, %535 : vector<1x8xf32>
    %c0_234 = arith.constant 0 : index
    %c0_235 = arith.constant 0 : index
    %538 = vector.load %arg31[%c0_234, %c0_235] : memref<1x8xf32, #tpu.memory_space<vmem>>, vector<1x8xf32>
    tpu.vector_store %arg31[%c0_234, %c0_235], %537 {strides = array<i32>} : memref<1x8xf32, #tpu.memory_space<vmem>>, vector<1x8xf32>,
    return
  }
}

</mosaic_0001>

<llo_original>
// kernel: tpu_custom_call.1
$region0: #{tpu_custom_call.1}
  #allocation0 [shape = 'u32[]', space=smem, size = 0x4, offset = 0x4, fixed_abs, tag = 'smem constant byte address 0x4 - core index']
  #allocation1 [shape = 'u32[72,128]{1,0:T(1,128)}', space=vmem, size = 0x9000, scoped, tag = 'internal scratch']
  %s0 = inlined_call_operand.smem [shape: u32[32], index: -1, kind: input, shape index: {}]
  %s1 = sld [smem:[%s0]]
  %s2 = scalar_lea.smem %s0, 1
  %s3 = sld [smem:[%s2]]
  %s4 = scalar_lea.smem %s0, 2
  %s5 = sld [smem:[%s4]]
  %s6 = scalar_lea.smem %s0, 3
  %s7 = sld [smem:[%s6]]
  %s8 = scalar_lea.smem %s0, 4
  %s9 = sld [smem:[%s8]]
  %s10 = scalar_lea.smem %s0, 5
  %s11 = sld [smem:[%s10]]
  %s12 = scalar_lea.smem %s0, 6
  %s13 = sld [smem:[%s12]]
  %s14 = scalar_lea.smem %s0, 7
  %s15 = sld [smem:[%s14]]
  %s16 = scalar_lea.smem %s0, 8
  %s17 = sld [smem:[%s16]]
  %s18 = scalar_lea.smem %s0, 9
  %s19 = sld [smem:[%s18]]
  %s20 = scalar_lea.smem %s0, 10
  %s21 = sld [smem:[%s20]]
  %s22 = scalar_lea.smem %s0, 11
  %s23 = sld [smem:[%s22]]
  %s24 = scalar_lea.smem %s0, 12
  %s25 = sld [smem:[%s24]]
  %s26 = scalar_lea.smem %s0, 13
  %s27 = sld [smem:[%s26]]
  %s28 = scalar_lea.smem %s0, 14
  %s29 = sld [smem:[%s28]]
  %s30 = scalar_lea.smem %s0, 15
  %s31 = sld [smem:[%s30]]
  %s32 = scalar_lea.smem %s0, 16
  %s33 = sld [smem:[%s32]]
  %s34 = scalar_lea.smem %s0, 17
  %s35 = sld [smem:[%s34]]
  %s36 = scalar_lea.smem %s0, 18
  %s37 = sld [smem:[%s36]]
  %s38 = scalar_lea.smem %s0, 19
  %s39 = sld [smem:[%s38]]
  %s40 = scalar_lea.smem %s0, 20
  %s41 = sld [smem:[%s40]]
  %s42 = scalar_lea.smem %s0, 21
  %s43 = sld [smem:[%s42]]
  %s44 = scalar_lea.smem %s0, 22
  %s45 = sld [smem:[%s44]]
  %s46 = scalar_lea.smem %s0, 23
  %s47 = sld [smem:[%s46]]
  %s48 = scalar_lea.smem %s0, 24
  %s49 = sld [smem:[%s48]]
  %s50 = scalar_lea.smem %s0, 25
  %s51 = sld [smem:[%s50]]
  %s52 = scalar_lea.smem %s0, 26
  %s53 = sld [smem:[%s52]]
  %s54 = scalar_lea.smem %s0, 27
  %s55 = sld [smem:[%s54]]
  %s56 = scalar_lea.smem %s0, 28
  %s57 = sld [smem:[%s56]]
  %s58 = scalar_lea.smem %s0, 29
  %s59 = sld [smem:[%s58]]
  %s60 = scalar_lea.smem %s0, 30
  %s61 = sld [smem:[%s60]]
  %s62 = scalar_lea.smem %s0, 31
  %s63 = sld [smem:[%s62]]
  %s64 = sld [smem:[#allocation0]]
  $region258: #{tpu_custom_call.1} parent=0
    _
  %s66 = ssub.s32 1, %s64
  %s67 = scalar_select 0, %s66, %s64
  $region1: #{tpu_custom_call.1} parent=0
    #allocation2 [shape = 'u8[4096]{0}', space=vmem, size = 0x1000, scoped, tag = 'input window, operand 0, single buffered']
    #allocation3 [shape = 's32[1]{0}', space=sflag, size = 0x4, scoped, tag = 'scoped memory for tpu_custom_call.1']
    #allocation4 [shape = 's32[1]{0}', space=sflag, size = 0x4, scoped, tag = 'scoped memory for tpu_custom_call.1']
    #allocation5 [shape = 'u8[512]{0}', space=vmem, size = 0x400, scoped, tag = 'input window, operand 1, single buffered']
    #allocation6 [shape = 's32[1]{0}', space=sflag, size = 0x4, scoped, tag = 'scoped memory for tpu_custom_call.1']
    #allocation7 [shape = 'u8[1024]{0}', space=vmem, size = 0x400, scoped, tag = 'input window, operand 2, single buffered']
    #allocation8 [shape = 'u8[4096]{0}', space=vmem, size = 0x1000, scoped, tag = 'input window, operand 3, single buffered']
    #allocation9 [shape = 's32[1]{0}', space=sflag, size = 0x4, scoped, tag = 'scoped memory for tpu_custom_call.1']
    #allocation10 [shape = 'u8[512]{0}', space=vmem, size = 0x400, scoped, tag = 'input window, operand 4, single buffered']
    #allocation11 [shape = 'u8[1024]{0}', space=vmem, size = 0x400, scoped, tag = 'input window, operand 5, single buffered']
    #allocation12 [shape = 's32[1]{0}', space=sflag, size = 0x4, scoped, tag = 'scoped memory for tpu_custom_call.1']
    #allocation13 [shape = 'u8[1024]{0}', space=vmem, size = 0x400, scoped, tag = 'input window, operand 6, single buffered']
    #allocation14 [shape = 'u8[393216]{0}', space=vmem, size = 0x60000, scoped, tag = 'input window, operand 7, single buffered']
    #allocation15 [shape = 's32[1]{0}', space=sflag, size = 0x4, scoped, tag = 'scoped memory for tpu_custom_call.1']
    #allocation16 [shape = 'u8[3072]{0}', space=vmem, size = 0xc00, scoped, tag = 'input window, operand 8, single buffered']
    #allocation17 [shape = 'u8[131072]{0}', space=vmem, size = 0x20000, scoped, tag = 'input window, operand 9, single buffered']
    #allocation18 [shape = 's32[1]{0}', space=sflag, size = 0x4, scoped, tag = 'scoped memory for tpu_custom_call.1']
    #allocation19 [shape = 'u8[1024]{0}', space=vmem, size = 0x400, scoped, tag = 'input window, operand 10, single buffered']
    #allocation20 [shape = 'u8[1024]{0}', space=vmem, size = 0x400, scoped, tag = 'input window, operand 11, single buffered']
    #allocation21 [shape = 's32[1]{0}', space=sflag, size = 0x4, scoped, tag = 'scoped memory for tpu_custom_call.1']
    #allocation22 [shape = 'u8[1024]{0}', space=vmem, size = 0x400, scoped, tag = 'input window, operand 12, single buffered']
    #allocation23 [shape = 'u8[524288]{0}', space=vmem, size = 0x80000, scoped, tag = 'input window, operand 13, single buffered']
    #allocation24 [shape = 's32[1]{0}', space=sflag, size = 0x4, scoped, tag = 'scoped memory for tpu_custom_call.1']
    #allocation25 [shape = 'u8[4096]{0}', space=vmem, size = 0x1000, scoped, tag = 'input window, operand 14, single buffered']
    #allocation26 [shape = 'u8[524288]{0}', space=vmem, size = 0x80000, scoped, tag = 'input window, operand 15, single buffered']
    #allocation27 [shape = 's32[1]{0}', space=sflag, size = 0x4, scoped, tag = 'scoped memory for tpu_custom_call.1']
    #allocation28 [shape = 'u8[1024]{0}', space=vmem, size = 0x400, scoped, tag = 'input window, operand 16, single buffered']
    #allocation29 [shape = 'u8[716800]{0}', space=vmem, size = 0xaf000, scoped, tag = 'input window, operand 17, single buffered']
    #allocation30 [shape = 's32[1]{0}', space=sflag, size = 0x4, scoped, tag = 'scoped memory for tpu_custom_call.1']
    #allocation31 [shape = 'u8[3584]{0}', space=vmem, size = 0x1000, scoped, tag = 'input window, operand 18, single buffered']
    #allocation32 [shape = 'u8[3584]{0}', space=vmem, size = 0x1000, scoped, tag = 'input window, operand 19, single buffered']
    #allocation33 [shape = 's32[1]{0}', space=sflag, size = 0x4, scoped, tag = 'scoped memory for tpu_custom_call.1']
    #allocation34 [shape = 'u8[3584]{0}', space=vmem, size = 0x1000, scoped, tag = 'input window, operand 20, single buffered']
    #allocation35 [shape = 'u8[1638400]{0}', space=vmem, size = 0x190000, scoped, tag = 'input window, operand 21, single buffered']
    #allocation36 [shape = 's32[1]{0}', space=sflag, size = 0x4, scoped, tag = 'scoped memory for tpu_custom_call.1']
    #allocation37 [shape = 'u8[2048]{0}', space=vmem, size = 0x800, scoped, tag = 'input window, operand 22, single buffered']
    #allocation38 [shape = 'u8[2048]{0}', space=vmem, size = 0x800, scoped, tag = 'input window, operand 23, single buffered']
    #allocation39 [shape = 's32[1]{0}', space=sflag, size = 0x4, scoped, tag = 'scoped memory for tpu_custom_call.1']
    #allocation40 [shape = 'u8[2048]{0}', space=vmem, size = 0x800, scoped, tag = 'input window, operand 24, single buffered']
    #allocation41 [shape = 'u8[262144]{0}', space=vmem, size = 0x40000, scoped, tag = 'input window, operand 25, single buffered']
    #allocation42 [shape = 's32[1]{0}', space=sflag, size = 0x4, scoped, tag = 'scoped memory for tpu_custom_call.1']
    #allocation43 [shape = 'u8[512]{0}', space=vmem, size = 0x400, scoped, tag = 'input window, operand 26, single buffered']
    #allocation44 [shape = 'u8[512]{0}', space=vmem, size = 0x400, scoped, tag = 'input window, operand 27, single buffered']
    #allocation45 [shape = 's32[1]{0}', space=sflag, size = 0x4, scoped, tag = 'scoped memory for tpu_custom_call.1']
    #allocation46 [shape = 'u8[512]{0}', space=vmem, size = 0x400, scoped, tag = 'input window, operand 28, single buffered']
    #allocation47 [shape = 'u8[65536]{0}', space=vmem, size = 0x10000, scoped, tag = 'input window, operand 29, single buffered']
    #allocation48 [shape = 's32[1]{0}', space=sflag, size = 0x4, scoped, tag = 'scoped memory for tpu_custom_call.1']
    #allocation49 [shape = 'u8[512]{0}', space=vmem, size = 0x400, scoped, tag = 'input window, operand 30, single buffered']
    #allocation50 [shape = 'u8[512]{0}', space=vmem, size = 0x400, scoped, tag = 'output window, operand 0, single buffered']
    %68 = vsyncpa [#allocation3], 0
    %69 = vsyncpa [#allocation6], 0
    %70 = vsyncpa [#allocation9], 0
    %71 = vsyncpa [#allocation12], 0
    %72 = vsyncpa [#allocation15], 0
    %73 = vsyncpa [#allocation18], 0
    %74 = vsyncpa [#allocation21], 0
    %75 = vsyncpa [#allocation24], 0
    %76 = vsyncpa [#allocation27], 0
    %77 = vsyncpa [#allocation30], 0
    %78 = vsyncpa [#allocation33], 0
    %79 = vsyncpa [#allocation36], 0
    %80 = vsyncpa [#allocation39], 0
    %81 = vsyncpa [#allocation42], 0
    %82 = vsyncpa [#allocation45], 0
    %83 = vsyncpa [#allocation48], 0
    %84 = vsyncpa [#allocation4], 0
    // Predicated region
    $region2: #{tpu_custom_call.1} parent=1 // pred_check
      _
    $region3: #{tpu_custom_call.1} parent=1 // pred_check_branch
      %86 = sbr.rel (0) target = $region5
    $region4: #{tpu_custom_call.1} parent=1 // pred_region
      %88 = vsyncadd [#allocation3], 0
      %s90 = sshll.u32 %s1, 4
      %s91 = int_to_ptr.hbm [resolvable:$true] %s90
      %s92 = sshll.u32 [#allocation2], 4
      %s93 = int_to_ptr.vmem [resolvable:$true] %s92
      %95 = dma.hbm_to_vmem [thread:$0]  %s91, 128, %s93, [#allocation3]
    $region5: #{tpu_custom_call.1} parent=1 // pred_fallthru
      _
    // Predicated region
    $region6: #{tpu_custom_call.1} parent=1 // pred_check
      _
    $region7: #{tpu_custom_call.1} parent=1 // pred_check_branch
      %97 = sbr.rel (0) target = $region9
    $region8: #{tpu_custom_call.1} parent=1 // pred_region
      %99 = vsyncadd [#allocation6], 0
      %s101 = sshll.u32 %s3, 4
      %s102 = int_to_ptr.hbm [resolvable:$true] %s101
      %s103 = sshll.u32 [#allocation5], 4
      %s104 = int_to_ptr.vmem [resolvable:$true] %s103
      %106 = dma.hbm_to_vmem [thread:$0]  %s102, 16, %s104, [#allocation6]
    $region9: #{tpu_custom_call.1} parent=1 // pred_fallthru
      _
    // Predicated region
    $region10: #{tpu_custom_call.1} parent=1 // pred_check
      _
    $region11: #{tpu_custom_call.1} parent=1 // pred_check_branch
      %108 = sbr.rel (0) target = $region13
    $region12: #{tpu_custom_call.1} parent=1 // pred_region
      %110 = vsyncadd [#allocation6], 0
      %s112 = sshll.u32 %s5, 4
      %s113 = int_to_ptr.hbm [resolvable:$true] %s112
      %s114 = sshll.u32 [#allocation7], 4
      %s115 = int_to_ptr.vmem [resolvable:$true] %s114
      %117 = dma.hbm_to_vmem [thread:$0]  %s113, 32, %s115, [#allocation6]
    $region13: #{tpu_custom_call.1} parent=1 // pred_fallthru
      _
    // Predicated region
    $region14: #{tpu_custom_call.1} parent=1 // pred_check
      _
    $region15: #{tpu_custom_call.1} parent=1 // pred_check_branch
      %119 = sbr.rel (0) target = $region17
    $region16: #{tpu_custom_call.1} parent=1 // pred_region
      %121 = vsyncadd [#allocation9], 0
      %s123 = sshll.u32 %s7, 4
      %s124 = int_to_ptr.hbm [resolvable:$true] %s123
      %s125 = sshll.u32 [#allocation8], 4
      %s126 = int_to_ptr.vmem [resolvable:$true] %s125
      %128 = dma.hbm_to_vmem [thread:$0]  %s124, 128, %s126, [#allocation9]
    $region17: #{tpu_custom_call.1} parent=1 // pred_fallthru
      _
    // Predicated region
    $region18: #{tpu_custom_call.1} parent=1 // pred_check
      _
    $region19: #{tpu_custom_call.1} parent=1 // pred_check_branch
      %130 = sbr.rel (0) target = $region21
    $region20: #{tpu_custom_call.1} parent=1 // pred_region
      %132 = vsyncadd [#allocation9], 0
      %s134 = sshll.u32 %s9, 4
      %s135 = int_to_ptr.hbm [resolvable:$true] %s134
      %s136 = sshll.u32 [#allocation10], 4
      %s137 = int_to_ptr.vmem [resolvable:$true] %s136
      %139 = dma.hbm_to_vmem [thread:$0]  %s135, 16, %s137, [#allocation9]
    $region21: #{tpu_custom_call.1} parent=1 // pred_fallthru
      _
    // Predicated region
    $region22: #{tpu_custom_call.1} parent=1 // pred_check
      _
    $region23: #{tpu_custom_call.1} parent=1 // pred_check_branch
      %141 = sbr.rel (0) target = $region25
    $region24: #{tpu_custom_call.1} parent=1 // pred_region
      %143 = vsyncadd [#allocation12], 0
      %s144 = sshll.u32 %s11, 4
      %s145 = int_to_ptr.hbm [resolvable:$true] %s144
      %s146 = sshll.u32 [#allocation11], 4
      %s147 = int_to_ptr.vmem [resolvable:$true] %s146
      %152 = dma.hbm_to_vmem [thread:$0]  %s145, 32, %s147, [#allocation12], 16, 16, 1
    $region25: #{tpu_custom_call.1} parent=1 // pred_fallthru
      _
    // Predicated region
    $region26: #{tpu_custom_call.1} parent=1 // pred_check
      _
    $region27: #{tpu_custom_call.1} parent=1 // pred_check_branch
      %154 = sbr.rel (0) target = $region29
    $region28: #{tpu_custom_call.1} parent=1 // pred_region
      %156 = vsyncadd [#allocation12], 0
      %s157 = sshll.u32 %s13, 4
      %s158 = int_to_ptr.hbm [resolvable:$true] %s157
      %s159 = sshll.u32 [#allocation13], 4
      %s160 = int_to_ptr.vmem [resolvable:$true] %s159
      %165 = dma.hbm_to_vmem [thread:$0]  %s158, 32, %s160, [#allocation12], 16, 16, 1
    $region29: #{tpu_custom_call.1} parent=1 // pred_fallthru
      _
    // Predicated region
    $region30: #{tpu_custom_call.1} parent=1 // pred_check
      _
    $region31: #{tpu_custom_call.1} parent=1 // pred_check_branch
      %167 = sbr.rel (0) target = $region33
    $region32: #{tpu_custom_call.1} parent=1 // pred_region
      %169 = vsyncadd [#allocation15], 0
      %s170 = sshll.u32 %s15, 4
      %s171 = int_to_ptr.hbm [resolvable:$true] %s170
      %s172 = sshll.u32 [#allocation14], 4
      %s173 = int_to_ptr.vmem [resolvable:$true] %s172
      %178 = dma.hbm_to_vmem [thread:$0]  %s171, 12288, %s173, [#allocation15], 384, 384, 24
    $region33: #{tpu_custom_call.1} parent=1 // pred_fallthru
      _
    // Predicated region
    $region34: #{tpu_custom_call.1} parent=1 // pred_check
      _
    $region35: #{tpu_custom_call.1} parent=1 // pred_check_branch
      %180 = sbr.rel (0) target = $region37
    $region36: #{tpu_custom_call.1} parent=1 // pred_region
      %182 = vsyncadd [#allocation15], 0
      %s183 = sshll.u32 %s17, 4
      %s184 = int_to_ptr.hbm [resolvable:$true] %s183
      %s185 = sshll.u32 [#allocation16], 4
      %s186 = int_to_ptr.vmem [resolvable:$true] %s185
      %191 = dma.hbm_to_vmem [thread:$0]  %s184, 96, %s186, [#allocation15], 48, 48, 3
    $region37: #{tpu_custom_call.1} parent=1 // pred_fallthru
      _
    // Predicated region
    $region38: #{tpu_custom_call.1} parent=1 // pred_check
      _
    $region39: #{tpu_custom_call.1} parent=1 // pred_check_branch
      %193 = sbr.rel (0) target = $region41
    $region40: #{tpu_custom_call.1} parent=1 // pred_region
      %195 = vsyncadd [#allocation18], 0
      %s196 = sshll.u32 %s19, 4
      %s197 = int_to_ptr.hbm [resolvable:$true] %s196
      %s198 = sshll.u32 [#allocation17], 4
      %s199 = int_to_ptr.vmem [resolvable:$true] %s198
      %204 = dma.hbm_to_vmem [thread:$0]  %s197, 4096, %s199, [#allocation18], 128, 128, 8
    $region41: #{tpu_custom_call.1} parent=1 // pred_fallthru
      _
    // Predicated region
    $region42: #{tpu_custom_call.1} parent=1 // pred_check
      _
    $region43: #{tpu_custom_call.1} parent=1 // pred_check_branch
      %206 = sbr.rel (0) target = $region45
    $region44: #{tpu_custom_call.1} parent=1 // pred_region
      %208 = vsyncadd [#allocation18], 0
      %s209 = sshll.u32 %s21, 4
      %s210 = int_to_ptr.hbm [resolvable:$true] %s209
      %s211 = sshll.u32 [#allocation19], 4
      %s212 = int_to_ptr.vmem [resolvable:$true] %s211
      %217 = dma.hbm_to_vmem [thread:$0]  %s210, 32, %s212, [#allocation18], 16, 16, 1
    $region45: #{tpu_custom_call.1} parent=1 // pred_fallthru
      _
    // Predicated region
    $region46: #{tpu_custom_call.1} parent=1 // pred_check
      _
    $region47: #{tpu_custom_call.1} parent=1 // pred_check_branch
      %219 = sbr.rel (0) target = $region49
    $region48: #{tpu_custom_call.1} parent=1 // pred_region
      %221 = vsyncadd [#allocation21], 0
      %s222 = sshll.u32 %s23, 4
      %s223 = int_to_ptr.hbm [resolvable:$true] %s222
      %s224 = sshll.u32 [#allocation20], 4
      %s225 = int_to_ptr.vmem [resolvable:$true] %s224
      %230 = dma.hbm_to_vmem [thread:$0]  %s223, 32, %s225, [#allocation21], 16, 16, 1
    $region49: #{tpu_custom_call.1} parent=1 // pred_fallthru
      _
    // Predicated region
    $region50: #{tpu_custom_call.1} parent=1 // pred_check
      _
    $region51: #{tpu_custom_call.1} parent=1 // pred_check_branch
      %232 = sbr.rel (0) target = $region53
    $region52: #{tpu_custom_call.1} parent=1 // pred_region
      %234 = vsyncadd [#allocation21], 0
      %s235 = sshll.u32 %s25, 4
      %s236 = int_to_ptr.hbm [resolvable:$true] %s235
      %s237 = sshll.u32 [#allocation22], 4
      %s238 = int_to_ptr.vmem [resolvable:$true] %s237
      %243 = dma.hbm_to_vmem [thread:$0]  %s236, 32, %s238, [#allocation21], 16, 16, 1
    $region53: #{tpu_custom_call.1} parent=1 // pred_fallthru
      _
    // Predicated region
    $region54: #{tpu_custom_call.1} parent=1 // pred_check
      _
    $region55: #{tpu_custom_call.1} parent=1 // pred_check_branch
      %245 = sbr.rel (0) target = $region57
    $region56: #{tpu_custom_call.1} parent=1 // pred_region
      %247 = vsyncadd [#allocation24], 0
      %s248 = sshll.u32 %s27, 4
      %s249 = int_to_ptr.hbm [resolvable:$true] %s248
      %s250 = sshll.u32 [#allocation23], 4
      %s251 = int_to_ptr.vmem [resolvable:$true] %s250
      %256 = dma.hbm_to_vmem [thread:$0]  %s249, 16384, %s251, [#allocation24], 512, 512, 32
    $region57: #{tpu_custom_call.1} parent=1 // pred_fallthru
      _
    // Predicated region
    $region58: #{tpu_custom_call.1} parent=1 // pred_check
      _
    $region59: #{tpu_custom_call.1} parent=1 // pred_check_branch
      %258 = sbr.rel (0) target = $region61
    $region60: #{tpu_custom_call.1} parent=1 // pred_region
      %260 = vsyncadd [#allocation24], 0
      %s261 = sshll.u32 %s29, 4
      %s262 = int_to_ptr.hbm [resolvable:$true] %s261
      %s263 = sshll.u32 [#allocation25], 4
      %s264 = int_to_ptr.vmem [resolvable:$true] %s263
      %269 = dma.hbm_to_vmem [thread:$0]  %s262, 128, %s264, [#allocation24], 64, 64, 4
    $region61: #{tpu_custom_call.1} parent=1 // pred_fallthru
      _
    // Predicated region
    $region62: #{tpu_custom_call.1} parent=1 // pred_check
      _
    $region63: #{tpu_custom_call.1} parent=1 // pred_check_branch
      %271 = sbr.rel (0) target = $region65
    $region64: #{tpu_custom_call.1} parent=1 // pred_region
      %273 = vsyncadd [#allocation27], 0
      %s274 = sshll.u32 %s31, 4
      %s275 = int_to_ptr.hbm [resolvable:$true] %s274
      %s276 = sshll.u32 [#allocation26], 4
      %s277 = int_to_ptr.vmem [resolvable:$true] %s276
      %282 = dma.hbm_to_vmem [thread:$0]  %s275, 16384, %s277, [#allocation27], 128, 128, 8
    $region65: #{tpu_custom_call.1} parent=1 // pred_fallthru
      _
    // Predicated region
    $region66: #{tpu_custom_call.1} parent=1 // pred_check
      _
    $region67: #{tpu_custom_call.1} parent=1 // pred_check_branch
      %284 = sbr.rel (0) target = $region69
    $region68: #{tpu_custom_call.1} parent=1 // pred_region
      %286 = vsyncadd [#allocation27], 0
      %s287 = sshll.u32 %s33, 4
      %s288 = int_to_ptr.hbm [resolvable:$true] %s287
      %s289 = sshll.u32 [#allocation28], 4
      %s290 = int_to_ptr.vmem [resolvable:$true] %s289
      %295 = dma.hbm_to_vmem [thread:$0]  %s288, 32, %s290, [#allocation27], 16, 16, 1
    $region69: #{tpu_custom_call.1} parent=1 // pred_fallthru
      _
    // Predicated region
    $region70: #{tpu_custom_call.1} parent=1 // pred_check
      _
    $region71: #{tpu_custom_call.1} parent=1 // pred_check_branch
      %297 = sbr.rel (0) target = $region73
    $region72: #{tpu_custom_call.1} parent=1 // pred_region
      %299 = vsyncadd [#allocation30], 0
      %s300 = sshll.u32 %s35, 4
      %s301 = int_to_ptr.hbm [resolvable:$true] %s300
      %s302 = sshll.u32 [#allocation29], 4
      %s303 = int_to_ptr.vmem [resolvable:$true] %s302
      %308 = dma.hbm_to_vmem [thread:$0]  %s301, 22400, %s303, [#allocation30], 896, 896, 56
    $region73: #{tpu_custom_call.1} parent=1 // pred_fallthru
      _
    // Predicated region
    $region74: #{tpu_custom_call.1} parent=1 // pred_check
      _
    $region75: #{tpu_custom_call.1} parent=1 // pred_check_branch
      %310 = sbr.rel (0) target = $region77
    $region76: #{tpu_custom_call.1} parent=1 // pred_region
      %312 = vsyncadd [#allocation30], 0
      %s314 = sshll.u32 %s37, 4
      %s315 = int_to_ptr.hbm [resolvable:$true] %s314
      %s316 = sshll.u32 [#allocation31], 4
      %s317 = int_to_ptr.vmem [resolvable:$true] %s316
      %319 = dma.hbm_to_vmem [thread:$0]  %s315, 112, %s317, [#allocation30]
    $region77: #{tpu_custom_call.1} parent=1 // pred_fallthru
      _
    // Predicated region
    $region78: #{tpu_custom_call.1} parent=1 // pred_check
      _
    $region79: #{tpu_custom_call.1} parent=1 // pred_check_branch
      %321 = sbr.rel (0) target = $region81
    $region80: #{tpu_custom_call.1} parent=1 // pred_region
      %323 = vsyncadd [#allocation33], 0
      %s325 = sshll.u32 %s39, 4
      %s326 = int_to_ptr.hbm [resolvable:$true] %s325
      %s327 = sshll.u32 [#allocation32], 4
      %s328 = int_to_ptr.vmem [resolvable:$true] %s327
      %330 = dma.hbm_to_vmem [thread:$0]  %s326, 112, %s328, [#allocation33]
    $region81: #{tpu_custom_call.1} parent=1 // pred_fallthru
      _
    // Predicated region
    $region82: #{tpu_custom_call.1} parent=1 // pred_check
      _
    $region83: #{tpu_custom_call.1} parent=1 // pred_check_branch
      %332 = sbr.rel (0) target = $region85
    $region84: #{tpu_custom_call.1} parent=1 // pred_region
      %334 = vsyncadd [#allocation33], 0
      %s336 = sshll.u32 %s41, 4
      %s337 = int_to_ptr.hbm [resolvable:$true] %s336
      %s338 = sshll.u32 [#allocation34], 4
      %s339 = int_to_ptr.vmem [resolvable:$true] %s338
      %341 = dma.hbm_to_vmem [thread:$0]  %s337, 112, %s339, [#allocation33]
    $region85: #{tpu_custom_call.1} parent=1 // pred_fallthru
      _
    // Predicated region
    $region86: #{tpu_custom_call.1} parent=1 // pred_check
      _
    $region87: #{tpu_custom_call.1} parent=1 // pred_check_branch
      %343 = sbr.rel (0) target = $region89
    $region88: #{tpu_custom_call.1} parent=1 // pred_region
      %345 = vsyncadd [#allocation36], 0
      %s346 = sshll.u32 %s43, 4
      %s347 = int_to_ptr.hbm [resolvable:$true] %s346
      %s348 = sshll.u32 [#allocation35], 4
      %s349 = int_to_ptr.vmem [resolvable:$true] %s348
      %354 = dma.hbm_to_vmem [thread:$0]  %s347, 51200, %s349, [#allocation36], 512, 512, 32
    $region89: #{tpu_custom_call.1} parent=1 // pred_fallthru
      _
    // Predicated region
    $region90: #{tpu_custom_call.1} parent=1 // pred_check
      _
    $region91: #{tpu_custom_call.1} parent=1 // pred_check_branch
      %356 = sbr.rel (0) target = $region93
    $region92: #{tpu_custom_call.1} parent=1 // pred_region
      %358 = vsyncadd [#allocation36], 0
      %s360 = sshll.u32 %s45, 4
      %s361 = int_to_ptr.hbm [resolvable:$true] %s360
      %s362 = sshll.u32 [#allocation37], 4
      %s363 = int_to_ptr.vmem [resolvable:$true] %s362
      %365 = dma.hbm_to_vmem [thread:$0]  %s361, 64, %s363, [#allocation36]
    $region93: #{tpu_custom_call.1} parent=1 // pred_fallthru
      _
    // Predicated region
    $region94: #{tpu_custom_call.1} parent=1 // pred_check
      _
    $region95: #{tpu_custom_call.1} parent=1 // pred_check_branch
      %367 = sbr.rel (0) target = $region97
    $region96: #{tpu_custom_call.1} parent=1 // pred_region
      %369 = vsyncadd [#allocation39], 0
      %s371 = sshll.u32 %s47, 4
      %s372 = int_to_ptr.hbm [resolvable:$true] %s371
      %s373 = sshll.u32 [#allocation38], 4
      %s374 = int_to_ptr.vmem [resolvable:$true] %s373
      %376 = dma.hbm_to_vmem [thread:$0]  %s372, 64, %s374, [#allocation39]
    $region97: #{tpu_custom_call.1} parent=1 // pred_fallthru
      _
    // Predicated region
    $region98: #{tpu_custom_call.1} parent=1 // pred_check
      _
    $region99: #{tpu_custom_call.1} parent=1 // pred_check_branch
      %378 = sbr.rel (0) target = $region101
    $region100: #{tpu_custom_call.1} parent=1 // pred_region
      %380 = vsyncadd [#allocation39], 0
      %s382 = sshll.u32 %s49, 4
      %s383 = int_to_ptr.hbm [resolvable:$true] %s382
      %s384 = sshll.u32 [#allocation40], 4
      %s385 = int_to_ptr.vmem [resolvable:$true] %s384
      %387 = dma.hbm_to_vmem [thread:$0]  %s383, 64, %s385, [#allocation39]
    $region101: #{tpu_custom_call.1} parent=1 // pred_fallthru
      _
    // Predicated region
    $region102: #{tpu_custom_call.1} parent=1 // pred_check
      _
    $region103: #{tpu_custom_call.1} parent=1 // pred_check_branch
      %389 = sbr.rel (0) target = $region105
    $region104: #{tpu_custom_call.1} parent=1 // pred_region
      %391 = vsyncadd [#allocation42], 0
      %s392 = sshll.u32 %s51, 4
      %s393 = int_to_ptr.hbm [resolvable:$true] %s392
      %s394 = sshll.u32 [#allocation41], 4
      %s395 = int_to_ptr.vmem [resolvable:$true] %s394
      %400 = dma.hbm_to_vmem [thread:$0]  %s393, 8192, %s395, [#allocation42], 128, 128, 8
    $region105: #{tpu_custom_call.1} parent=1 // pred_fallthru
      _
    // Predicated region
    $region106: #{tpu_custom_call.1} parent=1 // pred_check
      _
    $region107: #{tpu_custom_call.1} parent=1 // pred_check_branch
      %402 = sbr.rel (0) target = $region109
    $region108: #{tpu_custom_call.1} parent=1 // pred_region
      %404 = vsyncadd [#allocation42], 0
      %s406 = sshll.u32 %s53, 4
      %s407 = int_to_ptr.hbm [resolvable:$true] %s406
      %s408 = sshll.u32 [#allocation43], 4
      %s409 = int_to_ptr.vmem [resolvable:$true] %s408
      %411 = dma.hbm_to_vmem [thread:$0]  %s407, 16, %s409, [#allocation42]
    $region109: #{tpu_custom_call.1} parent=1 // pred_fallthru
      _
    // Predicated region
    $region110: #{tpu_custom_call.1} parent=1 // pred_check
      _
    $region111: #{tpu_custom_call.1} parent=1 // pred_check_branch
      %413 = sbr.rel (0) target = $region113
    $region112: #{tpu_custom_call.1} parent=1 // pred_region
      %415 = vsyncadd [#allocation45], 0
      %s417 = sshll.u32 %s55, 4
      %s418 = int_to_ptr.hbm [resolvable:$true] %s417
      %s419 = sshll.u32 [#allocation44], 4
      %s420 = int_to_ptr.vmem [resolvable:$true] %s419
      %422 = dma.hbm_to_vmem [thread:$0]  %s418, 16, %s420, [#allocation45]
    $region113: #{tpu_custom_call.1} parent=1 // pred_fallthru
      _
    // Predicated region
    $region114: #{tpu_custom_call.1} parent=1 // pred_check
      _
    $region115: #{tpu_custom_call.1} parent=1 // pred_check_branch
      %424 = sbr.rel (0) target = $region117
    $region116: #{tpu_custom_call.1} parent=1 // pred_region
      %426 = vsyncadd [#allocation45], 0
      %s428 = sshll.u32 %s57, 4
      %s429 = int_to_ptr.hbm [resolvable:$true] %s428
      %s430 = sshll.u32 [#allocation46], 4
      %s431 = int_to_ptr.vmem [resolvable:$true] %s430
      %433 = dma.hbm_to_vmem [thread:$0]  %s429, 16, %s431, [#allocation45]
    $region117: #{tpu_custom_call.1} parent=1 // pred_fallthru
      _
    // Predicated region
    $region118: #{tpu_custom_call.1} parent=1 // pred_check
      _
    $region119: #{tpu_custom_call.1} parent=1 // pred_check_branch
      %435 = sbr.rel (0) target = $region121
    $region120: #{tpu_custom_call.1} parent=1 // pred_region
      %437 = vsyncadd [#allocation48], 0
      %s438 = sshll.u32 %s59, 4
      %s439 = int_to_ptr.hbm [resolvable:$true] %s438
      %s440 = sshll.u32 [#allocation47], 4
      %s441 = int_to_ptr.vmem [resolvable:$true] %s440
      %446 = dma.hbm_to_vmem [thread:$0]  %s439, 2048, %s441, [#allocation48], 128, 128, 8
    $region121: #{tpu_custom_call.1} parent=1 // pred_fallthru
      _
    // Predicated region
    $region122: #{tpu_custom_call.1} parent=1 // pred_check
      _
    $region123: #{tpu_custom_call.1} parent=1 // pred_check_branch
      %448 = sbr.rel (0) target = $region125
    $region124: #{tpu_custom_call.1} parent=1 // pred_region
      %450 = vsyncadd [#allocation48], 0
      %s452 = sshll.u32 %s61, 4
      %s453 = int_to_ptr.hbm [resolvable:$true] %s452
      %s454 = sshll.u32 [#allocation49], 4
      %s455 = int_to_ptr.vmem [resolvable:$true] %s454
      %457 = dma.hbm_to_vmem [thread:$0]  %s453, 16, %s455, [#allocation48]
    $region125: #{tpu_custom_call.1} parent=1 // pred_fallthru
      _
    // Predicated region
    $region126: #{tpu_custom_call.1} parent=1 // pred_check
      _
    $region127: #{tpu_custom_call.1} parent=1 // pred_check_branch
      %459 = sbr.rel (0) target = $region129
    $region128: #{tpu_custom_call.1} parent=1 // pred_region
      %461 = dma.done [#allocation3], 128
    $region129: #{tpu_custom_call.1} parent=1 // pred_fallthru
      _
    // Predicated region
    $region130: #{tpu_custom_call.1} parent=1 // pred_check
      _
    $region131: #{tpu_custom_call.1} parent=1 // pred_check_branch
      %463 = sbr.rel (0) target = $region133
    $region132: #{tpu_custom_call.1} parent=1 // pred_region
      %465 = dma.done [#allocation6], 16
    $region133: #{tpu_custom_call.1} parent=1 // pred_fallthru
      _
    // Predicated region
    $region134: #{tpu_custom_call.1} parent=1 // pred_check
      _
    $region135: #{tpu_custom_call.1} parent=1 // pred_check_branch
      %467 = sbr.rel (0) target = $region137
    $region136: #{tpu_custom_call.1} parent=1 // pred_region
      %469 = dma.done [#allocation6], 32
    $region137: #{tpu_custom_call.1} parent=1 // pred_fallthru
      _
    // Predicated region
    $region138: #{tpu_custom_call.1} parent=1 // pred_check
      _
    $region139: #{tpu_custom_call.1} parent=1 // pred_check_branch
      %471 = sbr.rel (0) target = $region141
    $region140: #{tpu_custom_call.1} parent=1 // pred_region
      %473 = dma.done [#allocation9], 128
    $region141: #{tpu_custom_call.1} parent=1 // pred_fallthru
      _
    // Predicated region
    $region142: #{tpu_custom_call.1} parent=1 // pred_check
      _
    $region143: #{tpu_custom_call.1} parent=1 // pred_check_branch
      %475 = sbr.rel (0) target = $region145
    $region144: #{tpu_custom_call.1} parent=1 // pred_region
      %477 = dma.done [#allocation9], 16
    $region145: #{tpu_custom_call.1} parent=1 // pred_fallthru
      _
    // Predicated region
    $region146: #{tpu_custom_call.1} parent=1 // pred_check
      _
    $region147: #{tpu_custom_call.1} parent=1 // pred_check_branch
      %479 = sbr.rel (0) target = $region149
    $region148: #{tpu_custom_call.1} parent=1 // pred_region
      %481 = dma.done [#allocation12], 32
    $region149: #{tpu_custom_call.1} parent=1 // pred_fallthru
      _
    // Predicated region
    $region150: #{tpu_custom_call.1} parent=1 // pred_check
      _
    $region151: #{tpu_custom_call.1} parent=1 // pred_check_branch
      %483 = sbr.rel (0) target = $region153
    $region152: #{tpu_custom_call.1} parent=1 // pred_region
      %485 = dma.done [#allocation12], 32
    $region153: #{tpu_custom_call.1} parent=1 // pred_fallthru
      _
    // Predicated region
    $region154: #{tpu_custom_call.1} parent=1 // pred_check
      _
    $region155: #{tpu_custom_call.1} parent=1 // pred_check_branch
      %487 = sbr.rel (0) target = $region157
    $region156: #{tpu_custom_call.1} parent=1 // pred_region
      %489 = dma.done [#allocation15], 12288
    $region157: #{tpu_custom_call.1} parent=1 // pred_fallthru
      _
    // Predicated region
    $region158: #{tpu_custom_call.1} parent=1 // pred_check
      _
    $region159: #{tpu_custom_call.1} parent=1 // pred_check_branch
      %491 = sbr.rel (0) target = $region161
    $region160: #{tpu_custom_call.1} parent=1 // pred_region
      %493 = dma.done [#allocation15], 96
    $region161: #{tpu_custom_call.1} parent=1 // pred_fallthru
      _
    // Predicated region
    $region162: #{tpu_custom_call.1} parent=1 // pred_check
      _
    $region163: #{tpu_custom_call.1} parent=1 // pred_check_branch
      %495 = sbr.rel (0) target = $region165
    $region164: #{tpu_custom_call.1} parent=1 // pred_region
      %497 = dma.done [#allocation18], 4096
    $region165: #{tpu_custom_call.1} parent=1 // pred_fallthru
      _
    // Predicated region
    $region166: #{tpu_custom_call.1} parent=1 // pred_check
      _
    $region167: #{tpu_custom_call.1} parent=1 // pred_check_branch
      %499 = sbr.rel (0) target = $region169
    $region168: #{tpu_custom_call.1} parent=1 // pred_region
      %501 = dma.done [#allocation18], 32
    $region169: #{tpu_custom_call.1} parent=1 // pred_fallthru
      _
    // Predicated region
    $region170: #{tpu_custom_call.1} parent=1 // pred_check
      _
    $region171: #{tpu_custom_call.1} parent=1 // pred_check_branch
      %503 = sbr.rel (0) target = $region173
    $region172: #{tpu_custom_call.1} parent=1 // pred_region
      %505 = dma.done [#allocation21], 32
    $region173: #{tpu_custom_call.1} parent=1 // pred_fallthru
      _
    // Predicated region
    $region174: #{tpu_custom_call.1} parent=1 // pred_check
      _
    $region175: #{tpu_custom_call.1} parent=1 // pred_check_branch
      %507 = sbr.rel (0) target = $region177
    $region176: #{tpu_custom_call.1} parent=1 // pred_region
      %509 = dma.done [#allocation21], 32
    $region177: #{tpu_custom_call.1} parent=1 // pred_fallthru
      _
    // Predicated region
    $region178: #{tpu_custom_call.1} parent=1 // pred_check
      _
    $region179: #{tpu_custom_call.1} parent=1 // pred_check_branch
      %511 = sbr.rel (0) target = $region181
    $region180: #{tpu_custom_call.1} parent=1 // pred_region
      %513 = dma.done [#allocation24], 16384
    $region181: #{tpu_custom_call.1} parent=1 // pred_fallthru
      _
    // Predicated region
    $region182: #{tpu_custom_call.1} parent=1 // pred_check
      _
    $region183: #{tpu_custom_call.1} parent=1 // pred_check_branch
      %515 = sbr.rel (0) target = $region185
    $region184: #{tpu_custom_call.1} parent=1 // pred_region
      %517 = dma.done [#allocation24], 128
    $region185: #{tpu_custom_call.1} parent=1 // pred_fallthru
      _
    // Predicated region
    $region186: #{tpu_custom_call.1} parent=1 // pred_check
      _
    $region187: #{tpu_custom_call.1} parent=1 // pred_check_branch
      %519 = sbr.rel (0) target = $region189
    $region188: #{tpu_custom_call.1} parent=1 // pred_region
      %521 = dma.done [#allocation27], 16384
    $region189: #{tpu_custom_call.1} parent=1 // pred_fallthru
      _
    // Predicated region
    $region190: #{tpu_custom_call.1} parent=1 // pred_check
      _
    $region191: #{tpu_custom_call.1} parent=1 // pred_check_branch
      %523 = sbr.rel (0) target = $region193
    $region192: #{tpu_custom_call.1} parent=1 // pred_region
      %525 = dma.done [#allocation27], 32
    $region193: #{tpu_custom_call.1} parent=1 // pred_fallthru
      _
    // Predicated region
    $region194: #{tpu_custom_call.1} parent=1 // pred_check
      _
    $region195: #{tpu_custom_call.1} parent=1 // pred_check_branch
      %527 = sbr.rel (0) target = $region197
    $region196: #{tpu_custom_call.1} parent=1 // pred_region
      %529 = dma.done [#allocation30], 22400
    $region197: #{tpu_custom_call.1} parent=1 // pred_fallthru
      _
    // Predicated region
    $region198: #{tpu_custom_call.1} parent=1 // pred_check
      _
    $region199: #{tpu_custom_call.1} parent=1 // pred_check_branch
      %531 = sbr.rel (0) target = $region201
    $region200: #{tpu_custom_call.1} parent=1 // pred_region
      %533 = dma.done [#allocation30], 112
    $region201: #{tpu_custom_call.1} parent=1 // pred_fallthru
      _
    // Predicated region
    $region202: #{tpu_custom_call.1} parent=1 // pred_check
      _
    $region203: #{tpu_custom_call.1} parent=1 // pred_check_branch
      %535 = sbr.rel (0) target = $region205
    $region204: #{tpu_custom_call.1} parent=1 // pred_region
      %537 = dma.done [#allocation33], 112
    $region205: #{tpu_custom_call.1} parent=1 // pred_fallthru
      _
    // Predicated region
    $region206: #{tpu_custom_call.1} parent=1 // pred_check
      _
    $region207: #{tpu_custom_call.1} parent=1 // pred_check_branch
      %539 = sbr.rel (0) target = $region209
    $region208: #{tpu_custom_call.1} parent=1 // pred_region
      %541 = dma.done [#allocation33], 112
    $region209: #{tpu_custom_call.1} parent=1 // pred_fallthru
      _
    // Predicated region
    $region210: #{tpu_custom_call.1} parent=1 // pred_check
      _
    $region211: #{tpu_custom_call.1} parent=1 // pred_check_branch
      %543 = sbr.rel (0) target = $region213
    $region212: #{tpu_custom_call.1} parent=1 // pred_region
      %545 = dma.done [#allocation36], 51200
    $region213: #{tpu_custom_call.1} parent=1 // pred_fallthru
      _
    // Predicated region
    $region214: #{tpu_custom_call.1} parent=1 // pred_check
      _
    $region215: #{tpu_custom_call.1} parent=1 // pred_check_branch
      %547 = sbr.rel (0) target = $region217
    $region216: #{tpu_custom_call.1} parent=1 // pred_region
      %549 = dma.done [#allocation36], 64
    $region217: #{tpu_custom_call.1} parent=1 // pred_fallthru
      _
    // Predicated region
    $region218: #{tpu_custom_call.1} parent=1 // pred_check
      _
    $region219: #{tpu_custom_call.1} parent=1 // pred_check_branch
      %551 = sbr.rel (0) target = $region221
    $region220: #{tpu_custom_call.1} parent=1 // pred_region
      %553 = dma.done [#allocation39], 64
    $region221: #{tpu_custom_call.1} parent=1 // pred_fallthru
      _
    // Predicated region
    $region222: #{tpu_custom_call.1} parent=1 // pred_check
      _
    $region223: #{tpu_custom_call.1} parent=1 // pred_check_branch
      %555 = sbr.rel (0) target = $region225
    $region224: #{tpu_custom_call.1} parent=1 // pred_region
      %557 = dma.done [#allocation39], 64
    $region225: #{tpu_custom_call.1} parent=1 // pred_fallthru
      _
    // Predicated region
    $region226: #{tpu_custom_call.1} parent=1 // pred_check
      _
    $region227: #{tpu_custom_call.1} parent=1 // pred_check_branch
      %559 = sbr.rel (0) target = $region229
    $region228: #{tpu_custom_call.1} parent=1 // pred_region
      %561 = dma.done [#allocation42], 8192
    $region229: #{tpu_custom_call.1} parent=1 // pred_fallthru
      _
    // Predicated region
    $region230: #{tpu_custom_call.1} parent=1 // pred_check
      _
    $region231: #{tpu_custom_call.1} parent=1 // pred_check_branch
      %563 = sbr.rel (0) target = $region233
    $region232: #{tpu_custom_call.1} parent=1 // pred_region
      %565 = dma.done [#allocation42], 16
    $region233: #{tpu_custom_call.1} parent=1 // pred_fallthru
      _
    // Predicated region
    $region234: #{tpu_custom_call.1} parent=1 // pred_check
      _
    $region235: #{tpu_custom_call.1} parent=1 // pred_check_branch
      %567 = sbr.rel (0) target = $region237
    $region236: #{tpu_custom_call.1} parent=1 // pred_region
      %569 = dma.done [#allocation45], 16
    $region237: #{tpu_custom_call.1} parent=1 // pred_fallthru
      _
    // Predicated region
    $region238: #{tpu_custom_call.1} parent=1 // pred_check
      _
    $region239: #{tpu_custom_call.1} parent=1 // pred_check_branch
      %571 = sbr.rel (0) target = $region241
    $region240: #{tpu_custom_call.1} parent=1 // pred_region
      %573 = dma.done [#allocation45], 16
    $region241: #{tpu_custom_call.1} parent=1 // pred_fallthru
      _
    // Predicated region
    $region242: #{tpu_custom_call.1} parent=1 // pred_check
      _
    $region243: #{tpu_custom_call.1} parent=1 // pred_check_branch
      %575 = sbr.rel (0) target = $region245
    $region244: #{tpu_custom_call.1} parent=1 // pred_region
      %577 = dma.done [#allocation48], 2048
    $region245: #{tpu_custom_call.1} parent=1 // pred_fallthru
      _
    // Predicated region
    $region246: #{tpu_custom_call.1} parent=1 // pred_check
      _
    $region247: #{tpu_custom_call.1} parent=1 // pred_check_branch
      %579 = sbr.rel (0) target = $region249
    $region248: #{tpu_custom_call.1} parent=1 // pred_region
      %581 = dma.done [#allocation48], 16
    $region249: #{tpu_custom_call.1} parent=1 // pred_fallthru
      _
    %v582 = vld [vmem:[#allocation2] sm:$0xff]
    %v583 = vld [vmem:[#allocation8] sm:$0x3f]
    %v584 = vld [vmem:[#allocation10] sm:$0x1]
    %v586 = vperm.slane %v584, 0
    %vm588 = vcmask 48128
    %v590 = vsel %vm588, %v582, 0
    %vm592 = vcmask 1045504
    %v594 = vsel %vm592, %v583, 0
    %596 = vmatpush.msra.mxu0 0.0
    %597 = vmatpush.msra.mxu0 0.0
    %598 = vmatpush.msra.mxu0 0.0
    %599 = vmatpush.msra.mxu0 0.0
    %600 = vmatpush.msra.mxu0 0.0
    %601 = vmatpush.msra.mxu0 0.0
    %602 = vmatpush.msra.mxu0 0.0
    %603 = vmatpush.msra.mxu0 0.0
    %604 = vmatpush.msra.mxu0 0.0
    %605 = vmatpush.msra.mxu0 0.0
    %606 = vmatpush.msra.mxu0 0.0
    %607 = vmatpush.msra.mxu0 0.0
    %608 = vmatpush.msra.mxu0 0.0
    %609 = vmatpush.msra.mxu0 0.0
    %610 = vmatpush.msra.mxu0 0.0
    %611 = vmatpush.msra.mxu0 %v594
    %612 = vmatmul.f32.gmra.mxu0 %v590
    %v613 = vpop.f32.mrf.mxu0
    %v614 = vadd.f32 %v586, %v613
    %615 = vdwg.mxu0
    %v616 = vld [vmem:[#allocation11] sm:$0x1]
    %v617 = vld [vmem:[#allocation13] sm:$0x1]
    %618 = vadd.xlane.f32.xlu0 %v614
    %v619 = vpop.xlane.xlu0 %618
    %v620 = vrcp.pop 128.0
    %v621 = vmul.f32 128.0, %v620
    %v622 = vsub.f32 1.0, %v621
    %v623 = vmul.f32 %v620, %v622
    %v624 = vadd.f32 %v620, %v623
    %vm625 = vweird.f32 %v620
    %v626 = vsel %vm625, %v620, %v624
    %v627 = vmul.f32 %v619, %v626
    %v628 = vsub.f32 %v614, %v627
    %v629 = vmul.f32 %v628, %v628
    %630 = vadd.xlane.f32.xlu0 %v629
    %v631 = vpop.xlane.xlu0 %630
    %v632 = vmul.f32 %v631, %v626
    %v633 = vadd.f32 %v632, 1e-05
    %v634 = vrsqrt.pop %v633
    %v635 = vmul.f32 %v634, %v633
    %v636 = vmul.f32 %v635, %v634
    %v637 = vmul.f32 0.5, %v636
    %v638 = vsub.f32 1.5, %v637
    %v639 = vmul.f32 %v634, %v638
    %vm640 = vweird.f32 %v633
    %vm641 = vweird.f32 %v634
    %vm642 = vmor %vm640, %vm641
    %v643 = vsel %vm642, %v634, %v639
    %v644 = vmul.f32 %v628, %v643
    %v646 = vperm.slane %v616, 0
    %v648 = vmul.f32 %v644, %v646
    %v650 = vperm.slane %v617, 0
    %v652 = vadd.f32 %v648, %v650
    %v653 = vld [vmem:[#allocation14] sm:$0xff]
    %v654 = vld [vmem:[#allocation14 + $0x8] sm:$0xff]
    %v655 = vld [vmem:[#allocation14 + $0x10] sm:$0xff]
    %v656 = vld [vmem:[#allocation14 + $0x18] sm:$0xff]
    %v657 = vld [vmem:[#allocation14 + $0x20] sm:$0xff]
    %v658 = vld [vmem:[#allocation14 + $0x28] sm:$0xff]
    %v659 = vld [vmem:[#allocation14 + $0x30] sm:$0xff]
    %v660 = vld [vmem:[#allocation14 + $0x38] sm:$0xff]
    %v661 = vld [vmem:[#allocation14 + $0x40] sm:$0xff]
    %v662 = vld [vmem:[#allocation14 + $0x48] sm:$0xff]
    %v663 = vld [vmem:[#allocation14 + $0x50] sm:$0xff]
    %v664 = vld [vmem:[#allocation14 + $0x58] sm:$0xff]
    %v665 = vld [vmem:[#allocation14 + $0x60] sm:$0xff]
    %v666 = vld [vmem:[#allocation14 + $0x68] sm:$0xff]
    %v667 = vld [vmem:[#allocation14 + $0x70] sm:$0xff]
    %v668 = vld [vmem:[#allocation14 + $0x78] sm:$0xff]
    %v669 = vld [vmem:[#allocation14 + $0x80] sm:$0xff]
    %v670 = vld [vmem:[#allocation14 + $0x88] sm:$0xff]
    %v671 = vld [vmem:[#allocation14 + $0x90] sm:$0xff]
    %v672 = vld [vmem:[#allocation14 + $0x98] sm:$0xff]
    %v673 = vld [vmem:[#allocation14 + $0xa0] sm:$0xff]
    %v674 = vld [vmem:[#allocation14 + $0xa8] sm:$0xff]
    %v675 = vld [vmem:[#allocation14 + $0xb0] sm:$0xff]
    %v676 = vld [vmem:[#allocation14 + $0xb8] sm:$0xff]
    %v677 = vld [vmem:[#allocation14 + $0xc0] sm:$0xff]
    %v678 = vld [vmem:[#allocation14 + $0xc8] sm:$0xff]
    %v679 = vld [vmem:[#allocation14 + $0xd0] sm:$0xff]
    %v680 = vld [vmem:[#allocation14 + $0xd8] sm:$0xff]
    %v681 = vld [vmem:[#allocation14 + $0xe0] sm:$0xff]
    %v682 = vld [vmem:[#allocation14 + $0xe8] sm:$0xff]
    %v683 = vld [vmem:[#allocation14 + $0xf0] sm:$0xff]
    %v684 = vld [vmem:[#allocation14 + $0xf8] sm:$0xff]
    %v685 = vld [vmem:[#allocation14 + $0x100] sm:$0xff]
    %v686 = vld [vmem:[#allocation14 + $0x108] sm:$0xff]
    %v687 = vld [vmem:[#allocation14 + $0x110] sm:$0xff]
    %v688 = vld [vmem:[#allocation14 + $0x118] sm:$0xff]
    %v689 = vld [vmem:[#allocation14 + $0x120] sm:$0xff]
    %v690 = vld [vmem:[#allocation14 + $0x128] sm:$0xff]
    %v691 = vld [vmem:[#allocation14 + $0x130] sm:$0xff]
    %v692 = vld [vmem:[#allocation14 + $0x138] sm:$0xff]
    %v693 = vld [vmem:[#allocation14 + $0x140] sm:$0xff]
    %v694 = vld [vmem:[#allocation14 + $0x148] sm:$0xff]
    %v695 = vld [vmem:[#allocation14 + $0x150] sm:$0xff]
    %v696 = vld [vmem:[#allocation14 + $0x158] sm:$0xff]
    %v697 = vld [vmem:[#allocation14 + $0x160] sm:$0xff]
    %v698 = vld [vmem:[#allocation14 + $0x168] sm:$0xff]
    %v699 = vld [vmem:[#allocation14 + $0x170] sm:$0xff]
    %v700 = vld [vmem:[#allocation14 + $0x178] sm:$0xff]
    %v701 = vld [vmem:[#allocation16] sm:$0x7]
    %v703 = vperm.slane %v701, 0
    %v704 = vperm.slane %v701, 1
    %v705 = vperm.slane %v701, 2
    %709 = vmatpush.msra.mxu0 %v698
    %710 = vmatpush.msra.mxu0 %v695
    %711 = vmatpush.msra.mxu0 %v692
    %712 = vmatpush.msra.mxu0 %v689
    %713 = vmatpush.msra.mxu0 %v686
    %714 = vmatpush.msra.mxu0 %v683
    %715 = vmatpush.msra.mxu0 %v680
    %716 = vmatpush.msra.mxu0 %v677
    %717 = vmatpush.msra.mxu0 %v674
    %718 = vmatpush.msra.mxu0 %v671
    %719 = vmatpush.msra.mxu0 %v668
    %720 = vmatpush.msra.mxu0 %v665
    %721 = vmatpush.msra.mxu0 %v662
    %722 = vmatpush.msra.mxu0 %v659
    %723 = vmatpush.msra.mxu0 %v656
    %724 = vmatpush.msra.mxu0 %v653
    %725 = vmatmul.f32.gmra.mxu0 %v652
    %v726 = vpop.f32.mrf.mxu0
    %v727 = vadd.f32 %v703, %v726
    %728 = vdwg.mxu0
    %729 = vmatpush.msra.mxu0 %v699
    %730 = vmatpush.msra.mxu0 %v696
    %731 = vmatpush.msra.mxu0 %v693
    %732 = vmatpush.msra.mxu0 %v690
    %733 = vmatpush.msra.mxu0 %v687
    %734 = vmatpush.msra.mxu0 %v684
    %735 = vmatpush.msra.mxu0 %v681
    %736 = vmatpush.msra.mxu0 %v678
    %737 = vmatpush.msra.mxu0 %v675
    %738 = vmatpush.msra.mxu0 %v672
    %739 = vmatpush.msra.mxu0 %v669
    %740 = vmatpush.msra.mxu0 %v666
    %741 = vmatpush.msra.mxu0 %v663
    %742 = vmatpush.msra.mxu0 %v660
    %743 = vmatpush.msra.mxu0 %v657
    %744 = vmatpush.msra.mxu0 %v654
    %745 = vmatmul.f32.gmra.mxu0 %v652
    %v746 = vpop.f32.mrf.mxu0
    %v747 = vadd.f32 %v704, %v746
    %748 = vdwg.mxu0
    %749 = vmatpush.msra.mxu0 %v700
    %750 = vmatpush.msra.mxu0 %v697
    %751 = vmatpush.msra.mxu0 %v694
    %752 = vmatpush.msra.mxu0 %v691
    %753 = vmatpush.msra.mxu0 %v688
    %754 = vmatpush.msra.mxu0 %v685
    %755 = vmatpush.msra.mxu0 %v682
    %756 = vmatpush.msra.mxu0 %v679
    %757 = vmatpush.msra.mxu0 %v676
    %758 = vmatpush.msra.mxu0 %v673
    %759 = vmatpush.msra.mxu0 %v670
    %760 = vmatpush.msra.mxu0 %v667
    %761 = vmatpush.msra.mxu0 %v664
    %762 = vmatpush.msra.mxu0 %v661
    %763 = vmatpush.msra.mxu0 %v658
    %764 = vmatpush.msra.mxu0 %v655
    %765 = vmatmul.f32.gmra.mxu0 %v652
    %v766 = vpop.f32.mrf.mxu0
    %v767 = vadd.f32 %v705, %v766
    %768 = vdwg.mxu0
    %vm769 = vcmask 130048
    %v771 = vsel %vm769, %v727, 0
    %v774 = vsel %vm769, %v747, 0
    %776 = vmatpush.xpose.msra.mxu0 0.0
    %777 = vmatpush.xpose.msra.mxu0 0.0
    %778 = vmatpush.xpose.msra.mxu0 0.0
    %779 = vmatpush.xpose.msra.mxu0 0.0
    %780 = vmatpush.xpose.msra.mxu0 0.0
    %781 = vmatpush.xpose.msra.mxu0 0.0
    %782 = vmatpush.xpose.msra.mxu0 0.0
    %783 = vmatpush.xpose.msra.mxu0 0.0
    %784 = vmatpush.xpose.msra.mxu0 0.0
    %785 = vmatpush.xpose.msra.mxu0 0.0
    %786 = vmatpush.xpose.msra.mxu0 0.0
    %787 = vmatpush.xpose.msra.mxu0 0.0
    %788 = vmatpush.xpose.msra.mxu0 0.0
    %789 = vmatpush.xpose.msra.mxu0 0.0
    %790 = vmatpush.xpose.msra.mxu0 0.0
    %791 = vmatpush.xpose.msra.mxu0 %v774
    %792 = vmatmul.f32.gmra.mxu0 %v771
    %v793 = vpop.f32.mrf.mxu0
    %v794 = vadd.f32 0.0, %v793
    %795 = vdwg.mxu0
    %vm796 = vcmask 64512
    %v797 = vsel %vm796, %v794, -inf
    %798 = vmax.xlane.f32.xlu0 %v797
    %v799 = vpop.xlane.xlu0 %798
    %v800 = vsub.f32 %v794, %v799
    %v801 = vmul.f32 %v800, 1.442695
    %v802 = vpow.pop %v801
    %v803 = vsel %vm796, %v802, 0.0
    %804 = vadd.xlane.f32.xlu0 %v803
    %v805 = vpop.xlane.xlu0 %804
    %v806 = vrcp.pop %v805
    %v807 = vmul.f32 %v802, %v806
    %v809 = vsel %vm796, %v807, 0
    %811 = vmatpush.msra.mxu0 0.0
    %812 = vmatpush.msra.mxu0 0.0
    %813 = vmatpush.msra.mxu0 0.0
    %814 = vmatpush.msra.mxu0 0.0
    %815 = vmatpush.msra.mxu0 0.0
    %816 = vmatpush.msra.mxu0 0.0
    %817 = vmatpush.msra.mxu0 0.0
    %818 = vmatpush.msra.mxu0 0.0
    %819 = vmatpush.msra.mxu0 0.0
    %820 = vmatpush.msra.mxu0 0.0
    %821 = vmatpush.msra.mxu0 0.0
    %822 = vmatpush.msra.mxu0 0.0
    %823 = vmatpush.msra.mxu0 0.0
    %824 = vmatpush.msra.mxu0 0.0
    %825 = vmatpush.msra.mxu0 0.0
    %826 = vmatpush.msra.mxu0 %v767
    %827 = vmatmul.f32.gmra.mxu0 %v809
    %v828 = vpop.f32.mrf.mxu0
    %v829 = vadd.f32 0.0, %v828
    %830 = vdwg.mxu0
    %831 = vrot.lane.b32.xlu0 %v727, 112
    %v832 = vpop.permute.xlu0 %831
    %833 = vrot.lane.b32.xlu0 %v747, 112
    %v834 = vpop.permute.xlu0 %833
    %v835 = vsel %vm769, %v832, 0
    %v837 = vsel %vm769, %v834, 0
    %839 = vmatpush.xpose.msra.mxu0 0.0
    %840 = vmatpush.xpose.msra.mxu0 0.0
    %841 = vmatpush.xpose.msra.mxu0 0.0
    %842 = vmatpush.xpose.msra.mxu0 0.0
    %843 = vmatpush.xpose.msra.mxu0 0.0
    %844 = vmatpush.xpose.msra.mxu0 0.0
    %845 = vmatpush.xpose.msra.mxu0 0.0
    %846 = vmatpush.xpose.msra.mxu0 0.0
    %847 = vmatpush.xpose.msra.mxu0 0.0
    %848 = vmatpush.xpose.msra.mxu0 0.0
    %849 = vmatpush.xpose.msra.mxu0 0.0
    %850 = vmatpush.xpose.msra.mxu0 0.0
    %851 = vmatpush.xpose.msra.mxu0 0.0
    %852 = vmatpush.xpose.msra.mxu0 0.0
    %853 = vmatpush.xpose.msra.mxu0 0.0
    %854 = vmatpush.xpose.msra.mxu0 %v837
    %855 = vmatmul.f32.gmra.mxu0 %v835
    %v856 = vpop.f32.mrf.mxu0
    %v857 = vadd.f32 0.0, %v856
    %858 = vdwg.mxu0
    %v859 = vsel %vm796, %v857, -inf
    %860 = vmax.xlane.f32.xlu0 %v859
    %v861 = vpop.xlane.xlu0 %860
    %v862 = vsub.f32 %v857, %v861
    %v863 = vmul.f32 %v862, 1.442695
    %v864 = vpow.pop %v863
    %v865 = vsel %vm796, %v864, 0.0
    %866 = vadd.xlane.f32.xlu0 %v865
    %v867 = vpop.xlane.xlu0 %866
    %v868 = vrcp.pop %v867
    %v869 = vmul.f32 %v864, %v868
    %871 = vrot.lane.b32.xlu0 %v767, 112
    %v872 = vpop.permute.xlu0 %871
    %v875 = vsel %vm796, %v869, 0
    %877 = vmatpush.msra.mxu0 0.0
    %878 = vmatpush.msra.mxu0 0.0
    %879 = vmatpush.msra.mxu0 0.0
    %880 = vmatpush.msra.mxu0 0.0
    %881 = vmatpush.msra.mxu0 0.0
    %882 = vmatpush.msra.mxu0 0.0
    %883 = vmatpush.msra.mxu0 0.0
    %884 = vmatpush.msra.mxu0 0.0
    %885 = vmatpush.msra.mxu0 0.0
    %886 = vmatpush.msra.mxu0 0.0
    %887 = vmatpush.msra.mxu0 0.0
    %888 = vmatpush.msra.mxu0 0.0
    %889 = vmatpush.msra.mxu0 0.0
    %890 = vmatpush.msra.mxu0 0.0
    %891 = vmatpush.msra.mxu0 0.0
    %892 = vmatpush.msra.mxu0 %v872
    %893 = vmatmul.f32.gmra.mxu0 %v875
    %v894 = vpop.f32.mrf.mxu0
    %v895 = vadd.f32 0.0, %v894
    %896 = vdwg.mxu0
    %897 = vrot.lane.b32.xlu0 %v727, 96
    %v898 = vpop.permute.xlu0 %897
    %899 = vrot.lane.b32.xlu0 %v747, 96
    %v900 = vpop.permute.xlu0 %899
    %v901 = vsel %vm769, %v898, 0
    %v903 = vsel %vm769, %v900, 0
    %905 = vmatpush.xpose.msra.mxu0 0.0
    %906 = vmatpush.xpose.msra.mxu0 0.0
    %907 = vmatpush.xpose.msra.mxu0 0.0
    %908 = vmatpush.xpose.msra.mxu0 0.0
    %909 = vmatpush.xpose.msra.mxu0 0.0
    %910 = vmatpush.xpose.msra.mxu0 0.0
    %911 = vmatpush.xpose.msra.mxu0 0.0
    %912 = vmatpush.xpose.msra.mxu0 0.0
    %913 = vmatpush.xpose.msra.mxu0 0.0
    %914 = vmatpush.xpose.msra.mxu0 0.0
    %915 = vmatpush.xpose.msra.mxu0 0.0
    %916 = vmatpush.xpose.msra.mxu0 0.0
    %917 = vmatpush.xpose.msra.mxu0 0.0
    %918 = vmatpush.xpose.msra.mxu0 0.0
    %919 = vmatpush.xpose.msra.mxu0 0.0
    %920 = vmatpush.xpose.msra.mxu0 %v903
    %921 = vmatmul.f32.gmra.mxu0 %v901
    %v922 = vpop.f32.mrf.mxu0
    %v923 = vadd.f32 0.0, %v922
    %924 = vdwg.mxu0
    %v925 = vsel %vm796, %v923, -inf
    %926 = vmax.xlane.f32.xlu0 %v925
    %v927 = vpop.xlane.xlu0 %926
    %v928 = vsub.f32 %v923, %v927
    %v929 = vmul.f32 %v928, 1.442695
    %v930 = vpow.pop %v929
    %v931 = vsel %vm796, %v930, 0.0
    %932 = vadd.xlane.f32.xlu0 %v931
    %v933 = vpop.xlane.xlu0 %932
    %v934 = vrcp.pop %v933
    %v935 = vmul.f32 %v930, %v934
    %936 = vrot.lane.b32.xlu0 %v767, 96
    %v937 = vpop.permute.xlu0 %936
    %v940 = vsel %vm796, %v935, 0
    %942 = vmatpush.msra.mxu0 0.0
    %943 = vmatpush.msra.mxu0 0.0
    %944 = vmatpush.msra.mxu0 0.0
    %945 = vmatpush.msra.mxu0 0.0
    %946 = vmatpush.msra.mxu0 0.0
    %947 = vmatpush.msra.mxu0 0.0
    %948 = vmatpush.msra.mxu0 0.0
    %949 = vmatpush.msra.mxu0 0.0
    %950 = vmatpush.msra.mxu0 0.0
    %951 = vmatpush.msra.mxu0 0.0
    %952 = vmatpush.msra.mxu0 0.0
    %953 = vmatpush.msra.mxu0 0.0
    %954 = vmatpush.msra.mxu0 0.0
    %955 = vmatpush.msra.mxu0 0.0
    %956 = vmatpush.msra.mxu0 0.0
    %957 = vmatpush.msra.mxu0 %v937
    %958 = vmatmul.f32.gmra.mxu0 %v940
    %v959 = vpop.f32.mrf.mxu0
    %v960 = vadd.f32 0.0, %v959
    %961 = vdwg.mxu0
    %962 = vrot.lane.b32.xlu0 %v727, 80
    %v963 = vpop.permute.xlu0 %962
    %964 = vrot.lane.b32.xlu0 %v747, 80
    %v965 = vpop.permute.xlu0 %964
    %v966 = vsel %vm769, %v963, 0
    %v968 = vsel %vm769, %v965, 0
    %970 = vmatpush.xpose.msra.mxu0 0.0
    %971 = vmatpush.xpose.msra.mxu0 0.0
    %972 = vmatpush.xpose.msra.mxu0 0.0
    %973 = vmatpush.xpose.msra.mxu0 0.0
    %974 = vmatpush.xpose.msra.mxu0 0.0
    %975 = vmatpush.xpose.msra.mxu0 0.0
    %976 = vmatpush.xpose.msra.mxu0 0.0
    %977 = vmatpush.xpose.msra.mxu0 0.0
    %978 = vmatpush.xpose.msra.mxu0 0.0
    %979 = vmatpush.xpose.msra.mxu0 0.0
    %980 = vmatpush.xpose.msra.mxu0 0.0
    %981 = vmatpush.xpose.msra.mxu0 0.0
    %982 = vmatpush.xpose.msra.mxu0 0.0
    %983 = vmatpush.xpose.msra.mxu0 0.0
    %984 = vmatpush.xpose.msra.mxu0 0.0
    %985 = vmatpush.xpose.msra.mxu0 %v968
    %986 = vmatmul.f32.gmra.mxu0 %v966
    %v987 = vpop.f32.mrf.mxu0
    %v988 = vadd.f32 0.0, %v987
    %989 = vdwg.mxu0
    %v990 = vsel %vm796, %v988, -inf
    %991 = vmax.xlane.f32.xlu0 %v990
    %v992 = vpop.xlane.xlu0 %991
    %v993 = vsub.f32 %v988, %v992
    %v994 = vmul.f32 %v993, 1.442695
    %v995 = vpow.pop %v994
    %v996 = vsel %vm796, %v995, 0.0
    %997 = vadd.xlane.f32.xlu0 %v996
    %v998 = vpop.xlane.xlu0 %997
    %v999 = vrcp.pop %v998
    %v1000 = vmul.f32 %v995, %v999
    %1001 = vrot.lane.b32.xlu0 %v767, 80
    %v1002 = vpop.permute.xlu0 %1001
    %v1005 = vsel %vm796, %v1000, 0
    %1007 = vmatpush.msra.mxu0 0.0
    %1008 = vmatpush.msra.mxu0 0.0
    %1009 = vmatpush.msra.mxu0 0.0
    %1010 = vmatpush.msra.mxu0 0.0
    %1011 = vmatpush.msra.mxu0 0.0
    %1012 = vmatpush.msra.mxu0 0.0
    %1013 = vmatpush.msra.mxu0 0.0
    %1014 = vmatpush.msra.mxu0 0.0
    %1015 = vmatpush.msra.mxu0 0.0
    %1016 = vmatpush.msra.mxu0 0.0
    %1017 = vmatpush.msra.mxu0 0.0
    %1018 = vmatpush.msra.mxu0 0.0
    %1019 = vmatpush.msra.mxu0 0.0
    %1020 = vmatpush.msra.mxu0 0.0
    %1021 = vmatpush.msra.mxu0 0.0
    %1022 = vmatpush.msra.mxu0 %v1002
    %1023 = vmatmul.f32.gmra.mxu0 %v1005
    %v1024 = vpop.f32.mrf.mxu0
    %v1025 = vadd.f32 0.0, %v1024
    %1026 = vdwg.mxu0
    %1027 = vrot.lane.b32.xlu0 %v727, 64
    %v1028 = vpop.permute.xlu0 %1027
    %1029 = vrot.lane.b32.xlu0 %v747, 64
    %v1030 = vpop.permute.xlu0 %1029
    %v1031 = vsel %vm769, %v1028, 0
    %v1033 = vsel %vm769, %v1030, 0
    %1035 = vmatpush.xpose.msra.mxu0 0.0
    %1036 = vmatpush.xpose.msra.mxu0 0.0
    %1037 = vmatpush.xpose.msra.mxu0 0.0
    %1038 = vmatpush.xpose.msra.mxu0 0.0
    %1039 = vmatpush.xpose.msra.mxu0 0.0
    %1040 = vmatpush.xpose.msra.mxu0 0.0
    %1041 = vmatpush.xpose.msra.mxu0 0.0
    %1042 = vmatpush.xpose.msra.mxu0 0.0
    %1043 = vmatpush.xpose.msra.mxu0 0.0
    %1044 = vmatpush.xpose.msra.mxu0 0.0
    %1045 = vmatpush.xpose.msra.mxu0 0.0
    %1046 = vmatpush.xpose.msra.mxu0 0.0
    %1047 = vmatpush.xpose.msra.mxu0 0.0
    %1048 = vmatpush.xpose.msra.mxu0 0.0
    %1049 = vmatpush.xpose.msra.mxu0 0.0
    %1050 = vmatpush.xpose.msra.mxu0 %v1033
    %1051 = vmatmul.f32.gmra.mxu0 %v1031
    %v1052 = vpop.f32.mrf.mxu0
    %v1053 = vadd.f32 0.0, %v1052
    %1054 = vdwg.mxu0
    %v1055 = vsel %vm796, %v1053, -inf
    %1056 = vmax.xlane.f32.xlu0 %v1055
    %v1057 = vpop.xlane.xlu0 %1056
    %v1058 = vsub.f32 %v1053, %v1057
    %v1059 = vmul.f32 %v1058, 1.442695
    %v1060 = vpow.pop %v1059
    %v1061 = vsel %vm796, %v1060, 0.0
    %1062 = vadd.xlane.f32.xlu0 %v1061
    %v1063 = vpop.xlane.xlu0 %1062
    %v1064 = vrcp.pop %v1063
    %v1065 = vmul.f32 %v1060, %v1064
    %1066 = vrot.lane.b32.xlu0 %v767, 64
    %v1067 = vpop.permute.xlu0 %1066
    %v1070 = vsel %vm796, %v1065, 0
    %1072 = vmatpush.msra.mxu0 0.0
    %1073 = vmatpush.msra.mxu0 0.0
    %1074 = vmatpush.msra.mxu0 0.0
    %1075 = vmatpush.msra.mxu0 0.0
    %1076 = vmatpush.msra.mxu0 0.0
    %1077 = vmatpush.msra.mxu0 0.0
    %1078 = vmatpush.msra.mxu0 0.0
    %1079 = vmatpush.msra.mxu0 0.0
    %1080 = vmatpush.msra.mxu0 0.0
    %1081 = vmatpush.msra.mxu0 0.0
    %1082 = vmatpush.msra.mxu0 0.0
    %1083 = vmatpush.msra.mxu0 0.0
    %1084 = vmatpush.msra.mxu0 0.0
    %1085 = vmatpush.msra.mxu0 0.0
    %1086 = vmatpush.msra.mxu0 0.0
    %1087 = vmatpush.msra.mxu0 %v1067
    %1088 = vmatmul.f32.gmra.mxu0 %v1070
    %v1089 = vpop.f32.mrf.mxu0
    %v1090 = vadd.f32 0.0, %v1089
    %1091 = vdwg.mxu0
    %1092 = vrot.lane.b32.xlu0 %v727, 48
    %v1093 = vpop.permute.xlu0 %1092
    %1094 = vrot.lane.b32.xlu0 %v747, 48
    %v1095 = vpop.permute.xlu0 %1094
    %v1096 = vsel %vm769, %v1093, 0
    %v1098 = vsel %vm769, %v1095, 0
    %1100 = vmatpush.xpose.msra.mxu0 0.0
    %1101 = vmatpush.xpose.msra.mxu0 0.0
    %1102 = vmatpush.xpose.msra.mxu0 0.0
    %1103 = vmatpush.xpose.msra.mxu0 0.0
    %1104 = vmatpush.xpose.msra.mxu0 0.0
    %1105 = vmatpush.xpose.msra.mxu0 0.0
    %1106 = vmatpush.xpose.msra.mxu0 0.0
    %1107 = vmatpush.xpose.msra.mxu0 0.0
    %1108 = vmatpush.xpose.msra.mxu0 0.0
    %1109 = vmatpush.xpose.msra.mxu0 0.0
    %1110 = vmatpush.xpose.msra.mxu0 0.0
    %1111 = vmatpush.xpose.msra.mxu0 0.0
    %1112 = vmatpush.xpose.msra.mxu0 0.0
    %1113 = vmatpush.xpose.msra.mxu0 0.0
    %1114 = vmatpush.xpose.msra.mxu0 0.0
    %1115 = vmatpush.xpose.msra.mxu0 %v1098
    %1116 = vmatmul.f32.gmra.mxu0 %v1096
    %v1117 = vpop.f32.mrf.mxu0
    %v1118 = vadd.f32 0.0, %v1117
    %1119 = vdwg.mxu0
    %v1120 = vsel %vm796, %v1118, -inf
    %1121 = vmax.xlane.f32.xlu0 %v1120
    %v1122 = vpop.xlane.xlu0 %1121
    %v1123 = vsub.f32 %v1118, %v1122
    %v1124 = vmul.f32 %v1123, 1.442695
    %v1125 = vpow.pop %v1124
    %v1126 = vsel %vm796, %v1125, 0.0
    %1127 = vadd.xlane.f32.xlu0 %v1126
    %v1128 = vpop.xlane.xlu0 %1127
    %v1129 = vrcp.pop %v1128
    %v1130 = vmul.f32 %v1125, %v1129
    %1131 = vrot.lane.b32.xlu0 %v767, 48
    %v1132 = vpop.permute.xlu0 %1131
    %v1135 = vsel %vm796, %v1130, 0
    %1137 = vmatpush.msra.mxu0 0.0
    %1138 = vmatpush.msra.mxu0 0.0
    %1139 = vmatpush.msra.mxu0 0.0
    %1140 = vmatpush.msra.mxu0 0.0
    %1141 = vmatpush.msra.mxu0 0.0
    %1142 = vmatpush.msra.mxu0 0.0
    %1143 = vmatpush.msra.mxu0 0.0
    %1144 = vmatpush.msra.mxu0 0.0
    %1145 = vmatpush.msra.mxu0 0.0
    %1146 = vmatpush.msra.mxu0 0.0
    %1147 = vmatpush.msra.mxu0 0.0
    %1148 = vmatpush.msra.mxu0 0.0
    %1149 = vmatpush.msra.mxu0 0.0
    %1150 = vmatpush.msra.mxu0 0.0
    %1151 = vmatpush.msra.mxu0 0.0
    %1152 = vmatpush.msra.mxu0 %v1132
    %1153 = vmatmul.f32.gmra.mxu0 %v1135
    %v1154 = vpop.f32.mrf.mxu0
    %v1155 = vadd.f32 0.0, %v1154
    %1156 = vdwg.mxu0
    %1157 = vrot.lane.b32.xlu0 %v727, 32
    %v1158 = vpop.permute.xlu0 %1157
    %1159 = vrot.lane.b32.xlu0 %v747, 32
    %v1160 = vpop.permute.xlu0 %1159
    %v1161 = vsel %vm769, %v1158, 0
    %v1163 = vsel %vm769, %v1160, 0
    %1165 = vmatpush.xpose.msra.mxu0 0.0
    %1166 = vmatpush.xpose.msra.mxu0 0.0
    %1167 = vmatpush.xpose.msra.mxu0 0.0
    %1168 = vmatpush.xpose.msra.mxu0 0.0
    %1169 = vmatpush.xpose.msra.mxu0 0.0
    %1170 = vmatpush.xpose.msra.mxu0 0.0
    %1171 = vmatpush.xpose.msra.mxu0 0.0
    %1172 = vmatpush.xpose.msra.mxu0 0.0
    %1173 = vmatpush.xpose.msra.mxu0 0.0
    %1174 = vmatpush.xpose.msra.mxu0 0.0
    %1175 = vmatpush.xpose.msra.mxu0 0.0
    %1176 = vmatpush.xpose.msra.mxu0 0.0
    %1177 = vmatpush.xpose.msra.mxu0 0.0
    %1178 = vmatpush.xpose.msra.mxu0 0.0
    %1179 = vmatpush.xpose.msra.mxu0 0.0
    %1180 = vmatpush.xpose.msra.mxu0 %v1163
    %1181 = vmatmul.f32.gmra.mxu0 %v1161
    %v1182 = vpop.f32.mrf.mxu0
    %v1183 = vadd.f32 0.0, %v1182
    %1184 = vdwg.mxu0
    %v1185 = vsel %vm796, %v1183, -inf
    %1186 = vmax.xlane.f32.xlu0 %v1185
    %v1187 = vpop.xlane.xlu0 %1186
    %v1188 = vsub.f32 %v1183, %v1187
    %v1189 = vmul.f32 %v1188, 1.442695
    %v1190 = vpow.pop %v1189
    %v1191 = vsel %vm796, %v1190, 0.0
    %1192 = vadd.xlane.f32.xlu0 %v1191
    %v1193 = vpop.xlane.xlu0 %1192
    %v1194 = vrcp.pop %v1193
    %v1195 = vmul.f32 %v1190, %v1194
    %1196 = vrot.lane.b32.xlu0 %v767, 32
    %v1197 = vpop.permute.xlu0 %1196
    %v1200 = vsel %vm796, %v1195, 0
    %1202 = vmatpush.msra.mxu0 0.0
    %1203 = vmatpush.msra.mxu0 0.0
    %1204 = vmatpush.msra.mxu0 0.0
    %1205 = vmatpush.msra.mxu0 0.0
    %1206 = vmatpush.msra.mxu0 0.0
    %1207 = vmatpush.msra.mxu0 0.0
    %1208 = vmatpush.msra.mxu0 0.0
    %1209 = vmatpush.msra.mxu0 0.0
    %1210 = vmatpush.msra.mxu0 0.0
    %1211 = vmatpush.msra.mxu0 0.0
    %1212 = vmatpush.msra.mxu0 0.0
    %1213 = vmatpush.msra.mxu0 0.0
    %1214 = vmatpush.msra.mxu0 0.0
    %1215 = vmatpush.msra.mxu0 0.0
    %1216 = vmatpush.msra.mxu0 0.0
    %1217 = vmatpush.msra.mxu0 %v1197
    %1218 = vmatmul.f32.gmra.mxu0 %v1200
    %v1219 = vpop.f32.mrf.mxu0
    %v1220 = vadd.f32 0.0, %v1219
    %1221 = vdwg.mxu0
    %1222 = vrot.lane.b32.xlu0 %v727, 16
    %v1223 = vpop.permute.xlu0 %1222
    %1224 = vrot.lane.b32.xlu0 %v747, 16
    %v1225 = vpop.permute.xlu0 %1224
    %v1226 = vsel %vm769, %v1223, 0
    %v1228 = vsel %vm769, %v1225, 0
    %1230 = vmatpush.xpose.msra.mxu0 0.0
    %1231 = vmatpush.xpose.msra.mxu0 0.0
    %1232 = vmatpush.xpose.msra.mxu0 0.0
    %1233 = vmatpush.xpose.msra.mxu0 0.0
    %1234 = vmatpush.xpose.msra.mxu0 0.0
    %1235 = vmatpush.xpose.msra.mxu0 0.0
    %1236 = vmatpush.xpose.msra.mxu0 0.0
    %1237 = vmatpush.xpose.msra.mxu0 0.0
    %1238 = vmatpush.xpose.msra.mxu0 0.0
    %1239 = vmatpush.xpose.msra.mxu0 0.0
    %1240 = vmatpush.xpose.msra.mxu0 0.0
    %1241 = vmatpush.xpose.msra.mxu0 0.0
    %1242 = vmatpush.xpose.msra.mxu0 0.0
    %1243 = vmatpush.xpose.msra.mxu0 0.0
    %1244 = vmatpush.xpose.msra.mxu0 0.0
    %1245 = vmatpush.xpose.msra.mxu0 %v1228
    %1246 = vmatmul.f32.gmra.mxu0 %v1226
    %v1247 = vpop.f32.mrf.mxu0
    %v1248 = vadd.f32 0.0, %v1247
    %1249 = vdwg.mxu0
    %v1250 = vsel %vm796, %v1248, -inf
    %1251 = vmax.xlane.f32.xlu0 %v1250
    %v1252 = vpop.xlane.xlu0 %1251
    %v1253 = vsub.f32 %v1248, %v1252
    %v1254 = vmul.f32 %v1253, 1.442695
    %v1255 = vpow.pop %v1254
    %v1256 = vsel %vm796, %v1255, 0.0
    %1257 = vadd.xlane.f32.xlu0 %v1256
    %v1258 = vpop.xlane.xlu0 %1257
    %v1259 = vrcp.pop %v1258
    %v1260 = vmul.f32 %v1255, %v1259
    %1261 = vrot.lane.b32.xlu0 %v767, 16
    %v1262 = vpop.permute.xlu0 %1261
    %v1265 = vsel %vm796, %v1260, 0
    %1267 = vmatpush.msra.mxu0 0.0
    %1268 = vmatpush.msra.mxu0 0.0
    %1269 = vmatpush.msra.mxu0 0.0
    %1270 = vmatpush.msra.mxu0 0.0
    %1271 = vmatpush.msra.mxu0 0.0
    %1272 = vmatpush.msra.mxu0 0.0
    %1273 = vmatpush.msra.mxu0 0.0
    %1274 = vmatpush.msra.mxu0 0.0
    %1275 = vmatpush.msra.mxu0 0.0
    %1276 = vmatpush.msra.mxu0 0.0
    %1277 = vmatpush.msra.mxu0 0.0
    %1278 = vmatpush.msra.mxu0 0.0
    %1279 = vmatpush.msra.mxu0 0.0
    %1280 = vmatpush.msra.mxu0 0.0
    %1281 = vmatpush.msra.mxu0 0.0
    %1282 = vmatpush.msra.mxu0 %v1262
    %1283 = vmatmul.f32.gmra.mxu0 %v1265
    %v1284 = vpop.f32.mrf.mxu0
    %v1285 = vadd.f32 0.0, %v1284
    %1286 = vdwg.mxu0
    %1288 = vrot.lane.b32.xlu0 %v895, 16
    %v1289 = vpop.permute.xlu0 %1288
    %1292 = vrot.lane.b32.xlu0 %v960, 32
    %v1293 = vpop.permute.xlu0 %1292
    %1296 = vrot.lane.b32.xlu0 %v1025, 48
    %v1297 = vpop.permute.xlu0 %1296
    %1300 = vrot.lane.b32.xlu0 %v1090, 64
    %v1301 = vpop.permute.xlu0 %1300
    %1304 = vrot.lane.b32.xlu0 %v1155, 80
    %v1305 = vpop.permute.xlu0 %1304
    %1308 = vrot.lane.b32.xlu0 %v1220, 96
    %v1309 = vpop.permute.xlu0 %1308
    %1312 = vrot.lane.b32.xlu0 %v1285, 112
    %v1313 = vpop.permute.xlu0 %1312
    %v1315 = vsel %vm769, %v829, %v1289
    %vm1316 = vcmask 261120
    %v1317 = vsel %vm1316, %v1315, %v1293
    %vm1318 = vcmask 392192
    %v1319 = vsel %vm1318, %v1317, %v1297
    %vm1320 = vcmask 523264
    %v1321 = vsel %vm1320, %v1319, %v1301
    %vm1322 = vcmask 654336
    %v1323 = vsel %vm1322, %v1321, %v1305
    %vm1324 = vcmask 785408
    %v1325 = vsel %vm1324, %v1323, %v1309
    %vm1326 = vcmask 916480
    %v1327 = vsel %vm1326, %v1325, %v1313
    %v1328 = vld [vmem:[#allocation17] sm:$0xff]
    %v1329 = vld [vmem:[#allocation17 + $0x8] sm:$0xff]
    %v1330 = vld [vmem:[#allocation17 + $0x10] sm:$0xff]
    %v1331 = vld [vmem:[#allocation17 + $0x18] sm:$0xff]
    %v1332 = vld [vmem:[#allocation17 + $0x20] sm:$0xff]
    %v1333 = vld [vmem:[#allocation17 + $0x28] sm:$0xff]
    %v1334 = vld [vmem:[#allocation17 + $0x30] sm:$0xff]
    %v1335 = vld [vmem:[#allocation17 + $0x38] sm:$0xff]
    %v1336 = vld [vmem:[#allocation17 + $0x40] sm:$0xff]
    %v1337 = vld [vmem:[#allocation17 + $0x48] sm:$0xff]
    %v1338 = vld [vmem:[#allocation17 + $0x50] sm:$0xff]
    %v1339 = vld [vmem:[#allocation17 + $0x58] sm:$0xff]
    %v1340 = vld [vmem:[#allocation17 + $0x60] sm:$0xff]
    %v1341 = vld [vmem:[#allocation17 + $0x68] sm:$0xff]
    %v1342 = vld [vmem:[#allocation17 + $0x70] sm:$0xff]
    %v1343 = vld [vmem:[#allocation17 + $0x78] sm:$0xff]
    %v1344 = vld [vmem:[#allocation19] sm:$0x1]
    %v1346 = vperm.slane %v1344, 0
    %1348 = vmatpush.msra.mxu0 %v1343
    %1349 = vmatpush.msra.mxu0 %v1342
    %1350 = vmatpush.msra.mxu0 %v1341
    %1351 = vmatpush.msra.mxu0 %v1340
    %1352 = vmatpush.msra.mxu0 %v1339
    %1353 = vmatpush.msra.mxu0 %v1338
    %1354 = vmatpush.msra.mxu0 %v1337
    %1355 = vmatpush.msra.mxu0 %v1336
    %1356 = vmatpush.msra.mxu0 %v1335
    %1357 = vmatpush.msra.mxu0 %v1334
    %1358 = vmatpush.msra.mxu0 %v1333
    %1359 = vmatpush.msra.mxu0 %v1332
    %1360 = vmatpush.msra.mxu0 %v1331
    %1361 = vmatpush.msra.mxu0 %v1330
    %1362 = vmatpush.msra.mxu0 %v1329
    %1363 = vmatpush.msra.mxu0 %v1328
    %1364 = vmatmul.f32.gmra.mxu0 %v1327
    %v1365 = vpop.f32.mrf.mxu0
    %v1366 = vadd.f32 %v1346, %v1365
    %1367 = vdwg.mxu0
    %v1368 = vadd.f32 %v1366, %v614
    %v1369 = vld [vmem:[#allocation20] sm:$0x1]
    %v1370 = vld [vmem:[#allocation22] sm:$0x1]
    %1371 = vadd.xlane.f32.xlu0 %v1368
    %v1372 = vpop.xlane.xlu0 %1371
    %v1373 = vmul.f32 %v1372, %v626
    %v1374 = vsub.f32 %v1368, %v1373
    %v1375 = vmul.f32 %v1374, %v1374
    %1376 = vadd.xlane.f32.xlu0 %v1375
    %v1377 = vpop.xlane.xlu0 %1376
    %v1378 = vmul.f32 %v1377, %v626
    %v1379 = vadd.f32 %v1378, 1e-05
    %v1380 = vrsqrt.pop %v1379
    %v1381 = vmul.f32 %v1380, %v1379
    %v1382 = vmul.f32 %v1381, %v1380
    %v1383 = vmul.f32 0.5, %v1382
    %v1384 = vsub.f32 1.5, %v1383
    %v1385 = vmul.f32 %v1380, %v1384
    %vm1386 = vweird.f32 %v1379
    %vm1387 = vweird.f32 %v1380
    %vm1388 = vmor %vm1386, %vm1387
    %v1389 = vsel %vm1388, %v1380, %v1385
    %v1390 = vmul.f32 %v1374, %v1389
    %v1392 = vperm.slane %v1369, 0
    %v1394 = vmul.f32 %v1390, %v1392
    %v1396 = vperm.slane %v1370, 0
    %v1398 = vadd.f32 %v1394, %v1396
    %v1399 = vld [vmem:[#allocation23] sm:$0xff]
    %v1400 = vld [vmem:[#allocation23 + $0x8] sm:$0xff]
    %v1401 = vld [vmem:[#allocation23 + $0x10] sm:$0xff]
    %v1402 = vld [vmem:[#allocation23 + $0x18] sm:$0xff]
    %v1403 = vld [vmem:[#allocation23 + $0x20] sm:$0xff]
    %v1404 = vld [vmem:[#allocation23 + $0x28] sm:$0xff]
    %v1405 = vld [vmem:[#allocation23 + $0x30] sm:$0xff]
    %v1406 = vld [vmem:[#allocation23 + $0x38] sm:$0xff]
    %v1407 = vld [vmem:[#allocation23 + $0x40] sm:$0xff]
    %v1408 = vld [vmem:[#allocation23 + $0x48] sm:$0xff]
    %v1409 = vld [vmem:[#allocation23 + $0x50] sm:$0xff]
    %v1410 = vld [vmem:[#allocation23 + $0x58] sm:$0xff]
    %v1411 = vld [vmem:[#allocation23 + $0x60] sm:$0xff]
    %v1412 = vld [vmem:[#allocation23 + $0x68] sm:$0xff]
    %v1413 = vld [vmem:[#allocation23 + $0x70] sm:$0xff]
    %v1414 = vld [vmem:[#allocation23 + $0x78] sm:$0xff]
    %v1415 = vld [vmem:[#allocation23 + $0x80] sm:$0xff]
    %v1416 = vld [vmem:[#allocation23 + $0x88] sm:$0xff]
    %v1417 = vld [vmem:[#allocation23 + $0x90] sm:$0xff]
    %v1418 = vld [vmem:[#allocation23 + $0x98] sm:$0xff]
    %v1419 = vld [vmem:[#allocation23 + $0xa0] sm:$0xff]
    %v1420 = vld [vmem:[#allocation23 + $0xa8] sm:$0xff]
    %v1421 = vld [vmem:[#allocation23 + $0xb0] sm:$0xff]
    %v1422 = vld [vmem:[#allocation23 + $0xb8] sm:$0xff]
    %v1423 = vld [vmem:[#allocation23 + $0xc0] sm:$0xff]
    %v1424 = vld [vmem:[#allocation23 + $0xc8] sm:$0xff]
    %v1425 = vld [vmem:[#allocation23 + $0xd0] sm:$0xff]
    %v1426 = vld [vmem:[#allocation23 + $0xd8] sm:$0xff]
    %v1427 = vld [vmem:[#allocation23 + $0xe0] sm:$0xff]
    %v1428 = vld [vmem:[#allocation23 + $0xe8] sm:$0xff]
    %v1429 = vld [vmem:[#allocation23 + $0xf0] sm:$0xff]
    %v1430 = vld [vmem:[#allocation23 + $0xf8] sm:$0xff]
    %v1431 = vld [vmem:[#allocation23 + $0x100] sm:$0xff]
    %v1432 = vld [vmem:[#allocation23 + $0x108] sm:$0xff]
    %v1433 = vld [vmem:[#allocation23 + $0x110] sm:$0xff]
    %v1434 = vld [vmem:[#allocation23 + $0x118] sm:$0xff]
    %v1435 = vld [vmem:[#allocation23 + $0x120] sm:$0xff]
    %v1436 = vld [vmem:[#allocation23 + $0x128] sm:$0xff]
    %v1437 = vld [vmem:[#allocation23 + $0x130] sm:$0xff]
    %v1438 = vld [vmem:[#allocation23 + $0x138] sm:$0xff]
    %v1439 = vld [vmem:[#allocation23 + $0x140] sm:$0xff]
    %v1440 = vld [vmem:[#allocation23 + $0x148] sm:$0xff]
    %v1441 = vld [vmem:[#allocation23 + $0x150] sm:$0xff]
    %v1442 = vld [vmem:[#allocation23 + $0x158] sm:$0xff]
    %v1443 = vld [vmem:[#allocation23 + $0x160] sm:$0xff]
    %v1444 = vld [vmem:[#allocation23 + $0x168] sm:$0xff]
    %v1445 = vld [vmem:[#allocation23 + $0x170] sm:$0xff]
    %v1446 = vld [vmem:[#allocation23 + $0x178] sm:$0xff]
    %v1447 = vld [vmem:[#allocation23 + $0x180] sm:$0xff]
    %v1448 = vld [vmem:[#allocation23 + $0x188] sm:$0xff]
    %v1449 = vld [vmem:[#allocation23 + $0x190] sm:$0xff]
    %v1450 = vld [vmem:[#allocation23 + $0x198] sm:$0xff]
    %v1451 = vld [vmem:[#allocation23 + $0x1a0] sm:$0xff]
    %v1452 = vld [vmem:[#allocation23 + $0x1a8] sm:$0xff]
    %v1453 = vld [vmem:[#allocation23 + $0x1b0] sm:$0xff]
    %v1454 = vld [vmem:[#allocation23 + $0x1b8] sm:$0xff]
    %v1455 = vld [vmem:[#allocation23 + $0x1c0] sm:$0xff]
    %v1456 = vld [vmem:[#allocation23 + $0x1c8] sm:$0xff]
    %v1457 = vld [vmem:[#allocation23 + $0x1d0] sm:$0xff]
    %v1458 = vld [vmem:[#allocation23 + $0x1d8] sm:$0xff]
    %v1459 = vld [vmem:[#allocation23 + $0x1e0] sm:$0xff]
    %v1460 = vld [vmem:[#allocation23 + $0x1e8] sm:$0xff]
    %v1461 = vld [vmem:[#allocation23 + $0x1f0] sm:$0xff]
    %v1462 = vld [vmem:[#allocation23 + $0x1f8] sm:$0xff]
    %v1463 = vld [vmem:[#allocation25] sm:$0xf]
    %v1465 = vperm.slane %v1463, 0
    %v1466 = vperm.slane %v1463, 1
    %v1467 = vperm.slane %v1463, 2
    %v1468 = vperm.slane %v1463, 3
    %1473 = vmatpush.msra.mxu0 %v1459
    %1474 = vmatpush.msra.mxu0 %v1455
    %1475 = vmatpush.msra.mxu0 %v1451
    %1476 = vmatpush.msra.mxu0 %v1447
    %1477 = vmatpush.msra.mxu0 %v1443
    %1478 = vmatpush.msra.mxu0 %v1439
    %1479 = vmatpush.msra.mxu0 %v1435
    %1480 = vmatpush.msra.mxu0 %v1431
    %1481 = vmatpush.msra.mxu0 %v1427
    %1482 = vmatpush.msra.mxu0 %v1423
    %1483 = vmatpush.msra.mxu0 %v1419
    %1484 = vmatpush.msra.mxu0 %v1415
    %1485 = vmatpush.msra.mxu0 %v1411
    %1486 = vmatpush.msra.mxu0 %v1407
    %1487 = vmatpush.msra.mxu0 %v1403
    %1488 = vmatpush.msra.mxu0 %v1399
    %1489 = vmatmul.f32.gmra.mxu0 %v1398
    %v1490 = vpop.f32.mrf.mxu0
    %v1491 = vadd.f32 %v1465, %v1490
    %1492 = vdwg.mxu0
    %1493 = vmatpush.msra.mxu0 %v1460
    %1494 = vmatpush.msra.mxu0 %v1456
    %1495 = vmatpush.msra.mxu0 %v1452
    %1496 = vmatpush.msra.mxu0 %v1448
    %1497 = vmatpush.msra.mxu0 %v1444
    %1498 = vmatpush.msra.mxu0 %v1440
    %1499 = vmatpush.msra.mxu0 %v1436
    %1500 = vmatpush.msra.mxu0 %v1432
    %1501 = vmatpush.msra.mxu0 %v1428
    %1502 = vmatpush.msra.mxu0 %v1424
    %1503 = vmatpush.msra.mxu0 %v1420
    %1504 = vmatpush.msra.mxu0 %v1416
    %1505 = vmatpush.msra.mxu0 %v1412
    %1506 = vmatpush.msra.mxu0 %v1408
    %1507 = vmatpush.msra.mxu0 %v1404
    %1508 = vmatpush.msra.mxu0 %v1400
    %1509 = vmatmul.f32.gmra.mxu0 %v1398
    %v1510 = vpop.f32.mrf.mxu0
    %v1511 = vadd.f32 %v1466, %v1510
    %1512 = vdwg.mxu0
    %1513 = vmatpush.msra.mxu0 %v1461
    %1514 = vmatpush.msra.mxu0 %v1457
    %1515 = vmatpush.msra.mxu0 %v1453
    %1516 = vmatpush.msra.mxu0 %v1449
    %1517 = vmatpush.msra.mxu0 %v1445
    %1518 = vmatpush.msra.mxu0 %v1441
    %1519 = vmatpush.msra.mxu0 %v1437
    %1520 = vmatpush.msra.mxu0 %v1433
    %1521 = vmatpush.msra.mxu0 %v1429
    %1522 = vmatpush.msra.mxu0 %v1425
    %1523 = vmatpush.msra.mxu0 %v1421
    %1524 = vmatpush.msra.mxu0 %v1417
    %1525 = vmatpush.msra.mxu0 %v1413
    %1526 = vmatpush.msra.mxu0 %v1409
    %1527 = vmatpush.msra.mxu0 %v1405
    %1528 = vmatpush.msra.mxu0 %v1401
    %1529 = vmatmul.f32.gmra.mxu0 %v1398
    %v1530 = vpop.f32.mrf.mxu0
    %v1531 = vadd.f32 %v1467, %v1530
    %1532 = vdwg.mxu0
    %1533 = vmatpush.msra.mxu0 %v1462
    %1534 = vmatpush.msra.mxu0 %v1458
    %1535 = vmatpush.msra.mxu0 %v1454
    %1536 = vmatpush.msra.mxu0 %v1450
    %1537 = vmatpush.msra.mxu0 %v1446
    %1538 = vmatpush.msra.mxu0 %v1442
    %1539 = vmatpush.msra.mxu0 %v1438
    %1540 = vmatpush.msra.mxu0 %v1434
    %1541 = vmatpush.msra.mxu0 %v1430
    %1542 = vmatpush.msra.mxu0 %v1426
    %1543 = vmatpush.msra.mxu0 %v1422
    %1544 = vmatpush.msra.mxu0 %v1418
    %1545 = vmatpush.msra.mxu0 %v1414
    %1546 = vmatpush.msra.mxu0 %v1410
    %1547 = vmatpush.msra.mxu0 %v1406
    %1548 = vmatpush.msra.mxu0 %v1402
    %1549 = vmatmul.f32.gmra.mxu0 %v1398
    %v1550 = vpop.f32.mrf.mxu0
    %v1551 = vadd.f32 %v1468, %v1550
    %1552 = vdwg.mxu0
    %v1553 = vmax.f32 %v1491, 0.0
    %v1554 = vmax.f32 %v1511, 0.0
    %v1555 = vmax.f32 %v1531, 0.0
    %v1556 = vmax.f32 %v1551, 0.0
    %v1557 = vld [vmem:[#allocation26] sm:$0xff]
    %v1558 = vld [vmem:[#allocation26 + $0x8] sm:$0xff]
    %v1559 = vld [vmem:[#allocation26 + $0x10] sm:$0xff]
    %v1560 = vld [vmem:[#allocation26 + $0x18] sm:$0xff]
    %v1561 = vld [vmem:[#allocation26 + $0x20] sm:$0xff]
    %v1562 = vld [vmem:[#allocation26 + $0x28] sm:$0xff]
    %v1563 = vld [vmem:[#allocation26 + $0x30] sm:$0xff]
    %v1564 = vld [vmem:[#allocation26 + $0x38] sm:$0xff]
    %v1565 = vld [vmem:[#allocation26 + $0x40] sm:$0xff]
    %v1566 = vld [vmem:[#allocation26 + $0x48] sm:$0xff]
    %v1567 = vld [vmem:[#allocation26 + $0x50] sm:$0xff]
    %v1568 = vld [vmem:[#allocation26 + $0x58] sm:$0xff]
    %v1569 = vld [vmem:[#allocation26 + $0x60] sm:$0xff]
    %v1570 = vld [vmem:[#allocation26 + $0x68] sm:$0xff]
    %v1571 = vld [vmem:[#allocation26 + $0x70] sm:$0xff]
    %v1572 = vld [vmem:[#allocation26 + $0x78] sm:$0xff]
    %v1573 = vld [vmem:[#allocation26 + $0x80] sm:$0xff]
    %v1574 = vld [vmem:[#allocation26 + $0x88] sm:$0xff]
    %v1575 = vld [vmem:[#allocation26 + $0x90] sm:$0xff]
    %v1576 = vld [vmem:[#allocation26 + $0x98] sm:$0xff]
    %v1577 = vld [vmem:[#allocation26 + $0xa0] sm:$0xff]
    %v1578 = vld [vmem:[#allocation26 + $0xa8] sm:$0xff]
    %v1579 = vld [vmem:[#allocation26 + $0xb0] sm:$0xff]
    %v1580 = vld [vmem:[#allocation26 + $0xb8] sm:$0xff]
    %v1581 = vld [vmem:[#allocation26 + $0xc0] sm:$0xff]
    %v1582 = vld [vmem:[#allocation26 + $0xc8] sm:$0xff]
    %v1583 = vld [vmem:[#allocation26 + $0xd0] sm:$0xff]
    %v1584 = vld [vmem:[#allocation26 + $0xd8] sm:$0xff]
    %v1585 = vld [vmem:[#allocation26 + $0xe0] sm:$0xff]
    %v1586 = vld [vmem:[#allocation26 + $0xe8] sm:$0xff]
    %v1587 = vld [vmem:[#allocation26 + $0xf0] sm:$0xff]
    %v1588 = vld [vmem:[#allocation26 + $0xf8] sm:$0xff]
    %v1589 = vld [vmem:[#allocation26 + $0x100] sm:$0xff]
    %v1590 = vld [vmem:[#allocation26 + $0x108] sm:$0xff]
    %v1591 = vld [vmem:[#allocation26 + $0x110] sm:$0xff]
    %v1592 = vld [vmem:[#allocation26 + $0x118] sm:$0xff]
    %v1593 = vld [vmem:[#allocation26 + $0x120] sm:$0xff]
    %v1594 = vld [vmem:[#allocation26 + $0x128] sm:$0xff]
    %v1595 = vld [vmem:[#allocation26 + $0x130] sm:$0xff]
    %v1596 = vld [vmem:[#allocation26 + $0x138] sm:$0xff]
    %v1597 = vld [vmem:[#allocation26 + $0x140] sm:$0xff]
    %v1598 = vld [vmem:[#allocation26 + $0x148] sm:$0xff]
    %v1599 = vld [vmem:[#allocation26 + $0x150] sm:$0xff]
    %v1600 = vld [vmem:[#allocation26 + $0x158] sm:$0xff]
    %v1601 = vld [vmem:[#allocation26 + $0x160] sm:$0xff]
    %v1602 = vld [vmem:[#allocation26 + $0x168] sm:$0xff]
    %v1603 = vld [vmem:[#allocation26 + $0x170] sm:$0xff]
    %v1604 = vld [vmem:[#allocation26 + $0x178] sm:$0xff]
    %v1605 = vld [vmem:[#allocation26 + $0x180] sm:$0xff]
    %v1606 = vld [vmem:[#allocation26 + $0x188] sm:$0xff]
    %v1607 = vld [vmem:[#allocation26 + $0x190] sm:$0xff]
    %v1608 = vld [vmem:[#allocation26 + $0x198] sm:$0xff]
    %v1609 = vld [vmem:[#allocation26 + $0x1a0] sm:$0xff]
    %v1610 = vld [vmem:[#allocation26 + $0x1a8] sm:$0xff]
    %v1611 = vld [vmem:[#allocation26 + $0x1b0] sm:$0xff]
    %v1612 = vld [vmem:[#allocation26 + $0x1b8] sm:$0xff]
    %v1613 = vld [vmem:[#allocation26 + $0x1c0] sm:$0xff]
    %v1614 = vld [vmem:[#allocation26 + $0x1c8] sm:$0xff]
    %v1615 = vld [vmem:[#allocation26 + $0x1d0] sm:$0xff]
    %v1616 = vld [vmem:[#allocation26 + $0x1d8] sm:$0xff]
    %v1617 = vld [vmem:[#allocation26 + $0x1e0] sm:$0xff]
    %v1618 = vld [vmem:[#allocation26 + $0x1e8] sm:$0xff]
    %v1619 = vld [vmem:[#allocation26 + $0x1f0] sm:$0xff]
    %v1620 = vld [vmem:[#allocation26 + $0x1f8] sm:$0xff]
    %1621 = vmatpush.msra.mxu0 %v1572
    %1622 = vmatpush.msra.mxu0 %v1571
    %1623 = vmatpush.msra.mxu0 %v1570
    %1624 = vmatpush.msra.mxu0 %v1569
    %1625 = vmatpush.msra.mxu0 %v1568
    %1626 = vmatpush.msra.mxu0 %v1567
    %1627 = vmatpush.msra.mxu0 %v1566
    %1628 = vmatpush.msra.mxu0 %v1565
    %1629 = vmatpush.msra.mxu0 %v1564
    %1630 = vmatpush.msra.mxu0 %v1563
    %1631 = vmatpush.msra.mxu0 %v1562
    %1632 = vmatpush.msra.mxu0 %v1561
    %1633 = vmatpush.msra.mxu0 %v1560
    %1634 = vmatpush.msra.mxu0 %v1559
    %1635 = vmatpush.msra.mxu0 %v1558
    %1636 = vmatpush.msra.mxu0 %v1557
    %1637 = vmatmul.f32.gmra.mxu0 %v1553
    %v1638 = vpop.f32.mrf.mxu0
    %v1639 = vadd.f32 0.0, %v1638
    %1640 = vdwg.mxu0
    %1641 = vmatpush.msra.mxu0 %v1588
    %1642 = vmatpush.msra.mxu0 %v1587
    %1643 = vmatpush.msra.mxu0 %v1586
    %1644 = vmatpush.msra.mxu0 %v1585
    %1645 = vmatpush.msra.mxu0 %v1584
    %1646 = vmatpush.msra.mxu0 %v1583
    %1647 = vmatpush.msra.mxu0 %v1582
    %1648 = vmatpush.msra.mxu0 %v1581
    %1649 = vmatpush.msra.mxu0 %v1580
    %1650 = vmatpush.msra.mxu0 %v1579
    %1651 = vmatpush.msra.mxu0 %v1578
    %1652 = vmatpush.msra.mxu0 %v1577
    %1653 = vmatpush.msra.mxu0 %v1576
    %1654 = vmatpush.msra.mxu0 %v1575
    %1655 = vmatpush.msra.mxu0 %v1574
    %1656 = vmatpush.msra.mxu0 %v1573
    %1657 = vmatmul.f32.gmra.mxu0 %v1554
    %v1658 = vpop.f32.mrf.mxu0
    %v1659 = vadd.f32 %v1639, %v1658
    %1660 = vdwg.mxu0
    %1661 = vmatpush.msra.mxu0 %v1604
    %1662 = vmatpush.msra.mxu0 %v1603
    %1663 = vmatpush.msra.mxu0 %v1602
    %1664 = vmatpush.msra.mxu0 %v1601
    %1665 = vmatpush.msra.mxu0 %v1600
    %1666 = vmatpush.msra.mxu0 %v1599
    %1667 = vmatpush.msra.mxu0 %v1598
    %1668 = vmatpush.msra.mxu0 %v1597
    %1669 = vmatpush.msra.mxu0 %v1596
    %1670 = vmatpush.msra.mxu0 %v1595
    %1671 = vmatpush.msra.mxu0 %v1594
    %1672 = vmatpush.msra.mxu0 %v1593
    %1673 = vmatpush.msra.mxu0 %v1592
    %1674 = vmatpush.msra.mxu0 %v1591
    %1675 = vmatpush.msra.mxu0 %v1590
    %1676 = vmatpush.msra.mxu0 %v1589
    %1677 = vmatmul.f32.gmra.mxu0 %v1555
    %v1678 = vpop.f32.mrf.mxu0
    %v1679 = vadd.f32 %v1659, %v1678
    %1680 = vdwg.mxu0
    %1681 = vmatpush.msra.mxu0 %v1620
    %1682 = vmatpush.msra.mxu0 %v1619
    %1683 = vmatpush.msra.mxu0 %v1618
    %1684 = vmatpush.msra.mxu0 %v1617
    %1685 = vmatpush.msra.mxu0 %v1616
    %1686 = vmatpush.msra.mxu0 %v1615
    %1687 = vmatpush.msra.mxu0 %v1614
    %1688 = vmatpush.msra.mxu0 %v1613
    %1689 = vmatpush.msra.mxu0 %v1612
    %1690 = vmatpush.msra.mxu0 %v1611
    %1691 = vmatpush.msra.mxu0 %v1610
    %1692 = vmatpush.msra.mxu0 %v1609
    %1693 = vmatpush.msra.mxu0 %v1608
    %1694 = vmatpush.msra.mxu0 %v1607
    %1695 = vmatpush.msra.mxu0 %v1606
    %1696 = vmatpush.msra.mxu0 %v1605
    %1697 = vmatmul.f32.gmra.mxu0 %v1556
    %v1698 = vpop.f32.mrf.mxu0
    %v1699 = vadd.f32 %v1679, %v1698
    %1700 = vdwg.mxu0
    %v1701 = vadd.f32 %v1368, %v1699
    %v1702 = vld [vmem:[#allocation28] sm:$0x1]
    %v1704 = vperm.slane %v1702, 0
    %v1706 = vadd.f32 %v1701, %v1704
    %s1707 = scalar_lea.vmem [#allocation11], 1
    %v1708 = vld [vmem:[%s1707] sm:$0x1]
    %s1709 = scalar_lea.vmem [#allocation13], 1
    %v1710 = vld [vmem:[%s1709] sm:$0x1]
    %1711 = vadd.xlane.f32.xlu0 %v1706
    %v1712 = vpop.xlane.xlu0 %1711
    %v1713 = vmul.f32 %v1712, %v626
    %v1714 = vsub.f32 %v1706, %v1713
    %v1715 = vmul.f32 %v1714, %v1714
    %1716 = vadd.xlane.f32.xlu0 %v1715
    %v1717 = vpop.xlane.xlu0 %1716
    %v1718 = vmul.f32 %v1717, %v626
    %v1719 = vadd.f32 %v1718, 1e-05
    %v1720 = vrsqrt.pop %v1719
    %v1721 = vmul.f32 %v1720, %v1719
    %v1722 = vmul.f32 %v1721, %v1720
    %v1723 = vmul.f32 0.5, %v1722
    %v1724 = vsub.f32 1.5, %v1723
    %v1725 = vmul.f32 %v1720, %v1724
    %vm1726 = vweird.f32 %v1719
    %vm1727 = vweird.f32 %v1720
    %vm1728 = vmor %vm1726, %vm1727
    %v1729 = vsel %vm1728, %v1720, %v1725
    %v1730 = vmul.f32 %v1714, %v1729
    %v1732 = vperm.slane %v1708, 0
    %v1734 = vmul.f32 %v1730, %v1732
    %v1736 = vperm.slane %v1710, 0
    %v1738 = vadd.f32 %v1734, %v1736
    %s1739 = scalar_lea.vmem [#allocation14], 384
    %v1740 = vld [vmem:[%s1739] sm:$0xff]
    %v1741 = vld [vmem:[%s1739 + $0x8] sm:$0xff]
    %v1742 = vld [vmem:[%s1739 + $0x10] sm:$0xff]
    %v1743 = vld [vmem:[%s1739 + $0x18] sm:$0xff]
    %v1744 = vld [vmem:[%s1739 + $0x20] sm:$0xff]
    %v1745 = vld [vmem:[%s1739 + $0x28] sm:$0xff]
    %v1746 = vld [vmem:[%s1739 + $0x30] sm:$0xff]
    %v1747 = vld [vmem:[%s1739 + $0x38] sm:$0xff]
    %v1748 = vld [vmem:[%s1739 + $0x40] sm:$0xff]
    %v1749 = vld [vmem:[%s1739 + $0x48] sm:$0xff]
    %v1750 = vld [vmem:[%s1739 + $0x50] sm:$0xff]
    %v1751 = vld [vmem:[%s1739 + $0x58] sm:$0xff]
    %v1752 = vld [vmem:[%s1739 + $0x60] sm:$0xff]
    %v1753 = vld [vmem:[%s1739 + $0x68] sm:$0xff]
    %v1754 = vld [vmem:[%s1739 + $0x70] sm:$0xff]
    %v1755 = vld [vmem:[%s1739 + $0x78] sm:$0xff]
    %v1756 = vld [vmem:[%s1739 + $0x80] sm:$0xff]
    %v1757 = vld [vmem:[%s1739 + $0x88] sm:$0xff]
    %v1758 = vld [vmem:[%s1739 + $0x90] sm:$0xff]
    %v1759 = vld [vmem:[%s1739 + $0x98] sm:$0xff]
    %v1760 = vld [vmem:[%s1739 + $0xa0] sm:$0xff]
    %v1761 = vld [vmem:[%s1739 + $0xa8] sm:$0xff]
    %v1762 = vld [vmem:[%s1739 + $0xb0] sm:$0xff]
    %v1763 = vld [vmem:[%s1739 + $0xb8] sm:$0xff]
    %v1764 = vld [vmem:[%s1739 + $0xc0] sm:$0xff]
    %v1765 = vld [vmem:[%s1739 + $0xc8] sm:$0xff]
    %v1766 = vld [vmem:[%s1739 + $0xd0] sm:$0xff]
    %v1767 = vld [vmem:[%s1739 + $0xd8] sm:$0xff]
    %v1768 = vld [vmem:[%s1739 + $0xe0] sm:$0xff]
    %v1769 = vld [vmem:[%s1739 + $0xe8] sm:$0xff]
    %v1770 = vld [vmem:[%s1739 + $0xf0] sm:$0xff]
    %v1771 = vld [vmem:[%s1739 + $0xf8] sm:$0xff]
    %v1772 = vld [vmem:[%s1739 + $0x100] sm:$0xff]
    %v1773 = vld [vmem:[%s1739 + $0x108] sm:$0xff]
    %v1774 = vld [vmem:[%s1739 + $0x110] sm:$0xff]
    %v1775 = vld [vmem:[%s1739 + $0x118] sm:$0xff]
    %v1776 = vld [vmem:[%s1739 + $0x120] sm:$0xff]
    %v1777 = vld [vmem:[%s1739 + $0x128] sm:$0xff]
    %v1778 = vld [vmem:[%s1739 + $0x130] sm:$0xff]
    %v1779 = vld [vmem:[%s1739 + $0x138] sm:$0xff]
    %v1780 = vld [vmem:[%s1739 + $0x140] sm:$0xff]
    %v1781 = vld [vmem:[%s1739 + $0x148] sm:$0xff]
    %v1782 = vld [vmem:[%s1739 + $0x150] sm:$0xff]
    %v1783 = vld [vmem:[%s1739 + $0x158] sm:$0xff]
    %v1784 = vld [vmem:[%s1739 + $0x160] sm:$0xff]
    %v1785 = vld [vmem:[%s1739 + $0x168] sm:$0xff]
    %v1786 = vld [vmem:[%s1739 + $0x170] sm:$0xff]
    %v1787 = vld [vmem:[%s1739 + $0x178] sm:$0xff]
    %s1788 = scalar_lea.vmem [#allocation16], 3
    %v1789 = vld [vmem:[%s1788] sm:$0x7]
    %v1791 = vperm.slane %v1789, 0
    %v1792 = vperm.slane %v1789, 1
    %v1793 = vperm.slane %v1789, 2
    %1797 = vmatpush.msra.mxu0 %v1785
    %1798 = vmatpush.msra.mxu0 %v1782
    %1799 = vmatpush.msra.mxu0 %v1779
    %1800 = vmatpush.msra.mxu0 %v1776
    %1801 = vmatpush.msra.mxu0 %v1773
    %1802 = vmatpush.msra.mxu0 %v1770
    %1803 = vmatpush.msra.mxu0 %v1767
    %1804 = vmatpush.msra.mxu0 %v1764
    %1805 = vmatpush.msra.mxu0 %v1761
    %1806 = vmatpush.msra.mxu0 %v1758
    %1807 = vmatpush.msra.mxu0 %v1755
    %1808 = vmatpush.msra.mxu0 %v1752
    %1809 = vmatpush.msra.mxu0 %v1749
    %1810 = vmatpush.msra.mxu0 %v1746
    %1811 = vmatpush.msra.mxu0 %v1743
    %1812 = vmatpush.msra.mxu0 %v1740
    %1813 = vmatmul.f32.gmra.mxu0 %v1738
    %v1814 = vpop.f32.mrf.mxu0
    %v1815 = vadd.f32 %v1791, %v1814
    %1816 = vdwg.mxu0
    %1817 = vmatpush.msra.mxu0 %v1786
    %1818 = vmatpush.msra.mxu0 %v1783
    %1819 = vmatpush.msra.mxu0 %v1780
    %1820 = vmatpush.msra.mxu0 %v1777
    %1821 = vmatpush.msra.mxu0 %v1774
    %1822 = vmatpush.msra.mxu0 %v1771
    %1823 = vmatpush.msra.mxu0 %v1768
    %1824 = vmatpush.msra.mxu0 %v1765
    %1825 = vmatpush.msra.mxu0 %v1762
    %1826 = vmatpush.msra.mxu0 %v1759
    %1827 = vmatpush.msra.mxu0 %v1756
    %1828 = vmatpush.msra.mxu0 %v1753
    %1829 = vmatpush.msra.mxu0 %v1750
    %1830 = vmatpush.msra.mxu0 %v1747
    %1831 = vmatpush.msra.mxu0 %v1744
    %1832 = vmatpush.msra.mxu0 %v1741
    %1833 = vmatmul.f32.gmra.mxu0 %v1738
    %v1834 = vpop.f32.mrf.mxu0
    %v1835 = vadd.f32 %v1792, %v1834
    %1836 = vdwg.mxu0
    %1837 = vmatpush.msra.mxu0 %v1787
    %1838 = vmatpush.msra.mxu0 %v1784
    %1839 = vmatpush.msra.mxu0 %v1781
    %1840 = vmatpush.msra.mxu0 %v1778
    %1841 = vmatpush.msra.mxu0 %v1775
    %1842 = vmatpush.msra.mxu0 %v1772
    %1843 = vmatpush.msra.mxu0 %v1769
    %1844 = vmatpush.msra.mxu0 %v1766
    %1845 = vmatpush.msra.mxu0 %v1763
    %1846 = vmatpush.msra.mxu0 %v1760
    %1847 = vmatpush.msra.mxu0 %v1757
    %1848 = vmatpush.msra.mxu0 %v1754
    %1849 = vmatpush.msra.mxu0 %v1751
    %1850 = vmatpush.msra.mxu0 %v1748
    %1851 = vmatpush.msra.mxu0 %v1745
    %1852 = vmatpush.msra.mxu0 %v1742
    %1853 = vmatmul.f32.gmra.mxu0 %v1738
    %v1854 = vpop.f32.mrf.mxu0
    %v1855 = vadd.f32 %v1793, %v1854
    %1856 = vdwg.mxu0
    %v1858 = vsel %vm769, %v1815, 0
    %v1861 = vsel %vm769, %v1835, 0
    %1863 = vmatpush.xpose.msra.mxu0 0.0
    %1864 = vmatpush.xpose.msra.mxu0 0.0
    %1865 = vmatpush.xpose.msra.mxu0 0.0
    %1866 = vmatpush.xpose.msra.mxu0 0.0
    %1867 = vmatpush.xpose.msra.mxu0 0.0
    %1868 = vmatpush.xpose.msra.mxu0 0.0
    %1869 = vmatpush.xpose.msra.mxu0 0.0
    %1870 = vmatpush.xpose.msra.mxu0 0.0
    %1871 = vmatpush.xpose.msra.mxu0 0.0
    %1872 = vmatpush.xpose.msra.mxu0 0.0
    %1873 = vmatpush.xpose.msra.mxu0 0.0
    %1874 = vmatpush.xpose.msra.mxu0 0.0
    %1875 = vmatpush.xpose.msra.mxu0 0.0
    %1876 = vmatpush.xpose.msra.mxu0 0.0
    %1877 = vmatpush.xpose.msra.mxu0 0.0
    %1878 = vmatpush.xpose.msra.mxu0 %v1861
    %1879 = vmatmul.f32.gmra.mxu0 %v1858
    %v1880 = vpop.f32.mrf.mxu0
    %v1881 = vadd.f32 0.0, %v1880
    %1882 = vdwg.mxu0
    %v1883 = vsel %vm796, %v1881, -inf
    %1884 = vmax.xlane.f32.xlu0 %v1883
    %v1885 = vpop.xlane.xlu0 %1884
    %v1886 = vsub.f32 %v1881, %v1885
    %v1887 = vmul.f32 %v1886, 1.442695
    %v1888 = vpow.pop %v1887
    %v1889 = vsel %vm796, %v1888, 0.0
    %1890 = vadd.xlane.f32.xlu0 %v1889
    %v1891 = vpop.xlane.xlu0 %1890
    %v1892 = vrcp.pop %v1891
    %v1893 = vmul.f32 %v1888, %v1892
    %v1895 = vsel %vm796, %v1893, 0
    %1897 = vmatpush.msra.mxu0 0.0
    %1898 = vmatpush.msra.mxu0 0.0
    %1899 = vmatpush.msra.mxu0 0.0
    %1900 = vmatpush.msra.mxu0 0.0
    %1901 = vmatpush.msra.mxu0 0.0
    %1902 = vmatpush.msra.mxu0 0.0
    %1903 = vmatpush.msra.mxu0 0.0
    %1904 = vmatpush.msra.mxu0 0.0
    %1905 = vmatpush.msra.mxu0 0.0
    %1906 = vmatpush.msra.mxu0 0.0
    %1907 = vmatpush.msra.mxu0 0.0
    %1908 = vmatpush.msra.mxu0 0.0
    %1909 = vmatpush.msra.mxu0 0.0
    %1910 = vmatpush.msra.mxu0 0.0
    %1911 = vmatpush.msra.mxu0 0.0
    %1912 = vmatpush.msra.mxu0 %v1855
    %1913 = vmatmul.f32.gmra.mxu0 %v1895
    %v1914 = vpop.f32.mrf.mxu0
    %v1915 = vadd.f32 0.0, %v1914
    %1916 = vdwg.mxu0
    %1917 = vrot.lane.b32.xlu0 %v1815, 112
    %v1918 = vpop.permute.xlu0 %1917
    %1919 = vrot.lane.b32.xlu0 %v1835, 112
    %v1920 = vpop.permute.xlu0 %1919
    %v1921 = vsel %vm769, %v1918, 0
    %v1923 = vsel %vm769, %v1920, 0
    %1925 = vmatpush.xpose.msra.mxu0 0.0
    %1926 = vmatpush.xpose.msra.mxu0 0.0
    %1927 = vmatpush.xpose.msra.mxu0 0.0
    %1928 = vmatpush.xpose.msra.mxu0 0.0
    %1929 = vmatpush.xpose.msra.mxu0 0.0
    %1930 = vmatpush.xpose.msra.mxu0 0.0
    %1931 = vmatpush.xpose.msra.mxu0 0.0
    %1932 = vmatpush.xpose.msra.mxu0 0.0
    %1933 = vmatpush.xpose.msra.mxu0 0.0
    %1934 = vmatpush.xpose.msra.mxu0 0.0
    %1935 = vmatpush.xpose.msra.mxu0 0.0
    %1936 = vmatpush.xpose.msra.mxu0 0.0
    %1937 = vmatpush.xpose.msra.mxu0 0.0
    %1938 = vmatpush.xpose.msra.mxu0 0.0
    %1939 = vmatpush.xpose.msra.mxu0 0.0
    %1940 = vmatpush.xpose.msra.mxu0 %v1923
    %1941 = vmatmul.f32.gmra.mxu0 %v1921
    %v1942 = vpop.f32.mrf.mxu0
    %v1943 = vadd.f32 0.0, %v1942
    %1944 = vdwg.mxu0
    %v1945 = vsel %vm796, %v1943, -inf
    %1946 = vmax.xlane.f32.xlu0 %v1945
    %v1947 = vpop.xlane.xlu0 %1946
    %v1948 = vsub.f32 %v1943, %v1947
    %v1949 = vmul.f32 %v1948, 1.442695
    %v1950 = vpow.pop %v1949
    %v1951 = vsel %vm796, %v1950, 0.0
    %1952 = vadd.xlane.f32.xlu0 %v1951
    %v1953 = vpop.xlane.xlu0 %1952
    %v1954 = vrcp.pop %v1953
    %v1955 = vmul.f32 %v1950, %v1954
    %1957 = vrot.lane.b32.xlu0 %v1855, 112
    %v1958 = vpop.permute.xlu0 %1957
    %v1961 = vsel %vm796, %v1955, 0
    %1963 = vmatpush.msra.mxu0 0.0
    %1964 = vmatpush.msra.mxu0 0.0
    %1965 = vmatpush.msra.mxu0 0.0
    %1966 = vmatpush.msra.mxu0 0.0
    %1967 = vmatpush.msra.mxu0 0.0
    %1968 = vmatpush.msra.mxu0 0.0
    %1969 = vmatpush.msra.mxu0 0.0
    %1970 = vmatpush.msra.mxu0 0.0
    %1971 = vmatpush.msra.mxu0 0.0
    %1972 = vmatpush.msra.mxu0 0.0
    %1973 = vmatpush.msra.mxu0 0.0
    %1974 = vmatpush.msra.mxu0 0.0
    %1975 = vmatpush.msra.mxu0 0.0
    %1976 = vmatpush.msra.mxu0 0.0
    %1977 = vmatpush.msra.mxu0 0.0
    %1978 = vmatpush.msra.mxu0 %v1958
    %1979 = vmatmul.f32.gmra.mxu0 %v1961
    %v1980 = vpop.f32.mrf.mxu0
    %v1981 = vadd.f32 0.0, %v1980
    %1982 = vdwg.mxu0
    %1983 = vrot.lane.b32.xlu0 %v1815, 96
    %v1984 = vpop.permute.xlu0 %1983
    %1985 = vrot.lane.b32.xlu0 %v1835, 96
    %v1986 = vpop.permute.xlu0 %1985
    %v1987 = vsel %vm769, %v1984, 0
    %v1989 = vsel %vm769, %v1986, 0
    %1991 = vmatpush.xpose.msra.mxu0 0.0
    %1992 = vmatpush.xpose.msra.mxu0 0.0
    %1993 = vmatpush.xpose.msra.mxu0 0.0
    %1994 = vmatpush.xpose.msra.mxu0 0.0
    %1995 = vmatpush.xpose.msra.mxu0 0.0
    %1996 = vmatpush.xpose.msra.mxu0 0.0
    %1997 = vmatpush.xpose.msra.mxu0 0.0
    %1998 = vmatpush.xpose.msra.mxu0 0.0
    %1999 = vmatpush.xpose.msra.mxu0 0.0
    %2000 = vmatpush.xpose.msra.mxu0 0.0
    %2001 = vmatpush.xpose.msra.mxu0 0.0
    %2002 = vmatpush.xpose.msra.mxu0 0.0
    %2003 = vmatpush.xpose.msra.mxu0 0.0
    %2004 = vmatpush.xpose.msra.mxu0 0.0
    %2005 = vmatpush.xpose.msra.mxu0 0.0
    %2006 = vmatpush.xpose.msra.mxu0 %v1989
    %2007 = vmatmul.f32.gmra.mxu0 %v1987
    %v2008 = vpop.f32.mrf.mxu0
    %v2009 = vadd.f32 0.0, %v2008
    %2010 = vdwg.mxu0
    %v2011 = vsel %vm796, %v2009, -inf
    %2012 = vmax.xlane.f32.xlu0 %v2011
    %v2013 = vpop.xlane.xlu0 %2012
    %v2014 = vsub.f32 %v2009, %v2013
    %v2015 = vmul.f32 %v2014, 1.442695
    %v2016 = vpow.pop %v2015
    %v2017 = vsel %vm796, %v2016, 0.0
    %2018 = vadd.xlane.f32.xlu0 %v2017
    %v2019 = vpop.xlane.xlu0 %2018
    %v2020 = vrcp.pop %v2019
    %v2021 = vmul.f32 %v2016, %v2020
    %2022 = vrot.lane.b32.xlu0 %v1855, 96
    %v2023 = vpop.permute.xlu0 %2022
    %v2026 = vsel %vm796, %v2021, 0
    %2028 = vmatpush.msra.mxu0 0.0
    %2029 = vmatpush.msra.mxu0 0.0
    %2030 = vmatpush.msra.mxu0 0.0
    %2031 = vmatpush.msra.mxu0 0.0
    %2032 = vmatpush.msra.mxu0 0.0
    %2033 = vmatpush.msra.mxu0 0.0
    %2034 = vmatpush.msra.mxu0 0.0
    %2035 = vmatpush.msra.mxu0 0.0
    %2036 = vmatpush.msra.mxu0 0.0
    %2037 = vmatpush.msra.mxu0 0.0
    %2038 = vmatpush.msra.mxu0 0.0
    %2039 = vmatpush.msra.mxu0 0.0
    %2040 = vmatpush.msra.mxu0 0.0
    %2041 = vmatpush.msra.mxu0 0.0
    %2042 = vmatpush.msra.mxu0 0.0
    %2043 = vmatpush.msra.mxu0 %v2023
    %2044 = vmatmul.f32.gmra.mxu0 %v2026
    %v2045 = vpop.f32.mrf.mxu0
    %v2046 = vadd.f32 0.0, %v2045
    %2047 = vdwg.mxu0
    %2048 = vrot.lane.b32.xlu0 %v1815, 80
    %v2049 = vpop.permute.xlu0 %2048
    %2050 = vrot.lane.b32.xlu0 %v1835, 80
    %v2051 = vpop.permute.xlu0 %2050
    %v2052 = vsel %vm769, %v2049, 0
    %v2054 = vsel %vm769, %v2051, 0
    %2056 = vmatpush.xpose.msra.mxu0 0.0
    %2057 = vmatpush.xpose.msra.mxu0 0.0
    %2058 = vmatpush.xpose.msra.mxu0 0.0
    %2059 = vmatpush.xpose.msra.mxu0 0.0
    %2060 = vmatpush.xpose.msra.mxu0 0.0
    %2061 = vmatpush.xpose.msra.mxu0 0.0
    %2062 = vmatpush.xpose.msra.mxu0 0.0
    %2063 = vmatpush.xpose.msra.mxu0 0.0
    %2064 = vmatpush.xpose.msra.mxu0 0.0
    %2065 = vmatpush.xpose.msra.mxu0 0.0
    %2066 = vmatpush.xpose.msra.mxu0 0.0
    %2067 = vmatpush.xpose.msra.mxu0 0.0
    %2068 = vmatpush.xpose.msra.mxu0 0.0
    %2069 = vmatpush.xpose.msra.mxu0 0.0
    %2070 = vmatpush.xpose.msra.mxu0 0.0
    %2071 = vmatpush.xpose.msra.mxu0 %v2054
    %2072 = vmatmul.f32.gmra.mxu0 %v2052
    %v2073 = vpop.f32.mrf.mxu0
    %v2074 = vadd.f32 0.0, %v2073
    %2075 = vdwg.mxu0
    %v2076 = vsel %vm796, %v2074, -inf
    %2077 = vmax.xlane.f32.xlu0 %v2076
    %v2078 = vpop.xlane.xlu0 %2077
    %v2079 = vsub.f32 %v2074, %v2078
    %v2080 = vmul.f32 %v2079, 1.442695
    %v2081 = vpow.pop %v2080
    %v2082 = vsel %vm796, %v2081, 0.0
    %2083 = vadd.xlane.f32.xlu0 %v2082
    %v2084 = vpop.xlane.xlu0 %2083
    %v2085 = vrcp.pop %v2084
    %v2086 = vmul.f32 %v2081, %v2085
    %2087 = vrot.lane.b32.xlu0 %v1855, 80
    %v2088 = vpop.permute.xlu0 %2087
    %v2091 = vsel %vm796, %v2086, 0
    %2093 = vmatpush.msra.mxu0 0.0
    %2094 = vmatpush.msra.mxu0 0.0
    %2095 = vmatpush.msra.mxu0 0.0
    %2096 = vmatpush.msra.mxu0 0.0
    %2097 = vmatpush.msra.mxu0 0.0
    %2098 = vmatpush.msra.mxu0 0.0
    %2099 = vmatpush.msra.mxu0 0.0
    %2100 = vmatpush.msra.mxu0 0.0
    %2101 = vmatpush.msra.mxu0 0.0
    %2102 = vmatpush.msra.mxu0 0.0
    %2103 = vmatpush.msra.mxu0 0.0
    %2104 = vmatpush.msra.mxu0 0.0
    %2105 = vmatpush.msra.mxu0 0.0
    %2106 = vmatpush.msra.mxu0 0.0
    %2107 = vmatpush.msra.mxu0 0.0
    %2108 = vmatpush.msra.mxu0 %v2088
    %2109 = vmatmul.f32.gmra.mxu0 %v2091
    %v2110 = vpop.f32.mrf.mxu0
    %v2111 = vadd.f32 0.0, %v2110
    %2112 = vdwg.mxu0
    %2113 = vrot.lane.b32.xlu0 %v1815, 64
    %v2114 = vpop.permute.xlu0 %2113
    %2115 = vrot.lane.b32.xlu0 %v1835, 64
    %v2116 = vpop.permute.xlu0 %2115
    %v2117 = vsel %vm769, %v2114, 0
    %v2119 = vsel %vm769, %v2116, 0
    %2121 = vmatpush.xpose.msra.mxu0 0.0
    %2122 = vmatpush.xpose.msra.mxu0 0.0
    %2123 = vmatpush.xpose.msra.mxu0 0.0
    %2124 = vmatpush.xpose.msra.mxu0 0.0
    %2125 = vmatpush.xpose.msra.mxu0 0.0
    %2126 = vmatpush.xpose.msra.mxu0 0.0
    %2127 = vmatpush.xpose.msra.mxu0 0.0
    %2128 = vmatpush.xpose.msra.mxu0 0.0
    %2129 = vmatpush.xpose.msra.mxu0 0.0
    %2130 = vmatpush.xpose.msra.mxu0 0.0
    %2131 = vmatpush.xpose.msra.mxu0 0.0
    %2132 = vmatpush.xpose.msra.mxu0 0.0
    %2133 = vmatpush.xpose.msra.mxu0 0.0
    %2134 = vmatpush.xpose.msra.mxu0 0.0
    %2135 = vmatpush.xpose.msra.mxu0 0.0
    %2136 = vmatpush.xpose.msra.mxu0 %v2119
    %2137 = vmatmul.f32.gmra.mxu0 %v2117
    %v2138 = vpop.f32.mrf.mxu0
    %v2139 = vadd.f32 0.0, %v2138
    %2140 = vdwg.mxu0
    %v2141 = vsel %vm796, %v2139, -inf
    %2142 = vmax.xlane.f32.xlu0 %v2141
    %v2143 = vpop.xlane.xlu0 %2142
    %v2144 = vsub.f32 %v2139, %v2143
    %v2145 = vmul.f32 %v2144, 1.442695
    %v2146 = vpow.pop %v2145
    %v2147 = vsel %vm796, %v2146, 0.0
    %2148 = vadd.xlane.f32.xlu0 %v2147
    %v2149 = vpop.xlane.xlu0 %2148
    %v2150 = vrcp.pop %v2149
    %v2151 = vmul.f32 %v2146, %v2150
    %2152 = vrot.lane.b32.xlu0 %v1855, 64
    %v2153 = vpop.permute.xlu0 %2152
    %v2156 = vsel %vm796, %v2151, 0
    %2158 = vmatpush.msra.mxu0 0.0
    %2159 = vmatpush.msra.mxu0 0.0
    %2160 = vmatpush.msra.mxu0 0.0
    %2161 = vmatpush.msra.mxu0 0.0
    %2162 = vmatpush.msra.mxu0 0.0
    %2163 = vmatpush.msra.mxu0 0.0
    %2164 = vmatpush.msra.mxu0 0.0
    %2165 = vmatpush.msra.mxu0 0.0
    %2166 = vmatpush.msra.mxu0 0.0
    %2167 = vmatpush.msra.mxu0 0.0
    %2168 = vmatpush.msra.mxu0 0.0
    %2169 = vmatpush.msra.mxu0 0.0
    %2170 = vmatpush.msra.mxu0 0.0
    %2171 = vmatpush.msra.mxu0 0.0
    %2172 = vmatpush.msra.mxu0 0.0
    %2173 = vmatpush.msra.mxu0 %v2153
    %2174 = vmatmul.f32.gmra.mxu0 %v2156
    %v2175 = vpop.f32.mrf.mxu0
    %v2176 = vadd.f32 0.0, %v2175
    %2177 = vdwg.mxu0
    %2178 = vrot.lane.b32.xlu0 %v1815, 48
    %v2179 = vpop.permute.xlu0 %2178
    %2180 = vrot.lane.b32.xlu0 %v1835, 48
    %v2181 = vpop.permute.xlu0 %2180
    %v2182 = vsel %vm769, %v2179, 0
    %v2184 = vsel %vm769, %v2181, 0
    %2186 = vmatpush.xpose.msra.mxu0 0.0
    %2187 = vmatpush.xpose.msra.mxu0 0.0
    %2188 = vmatpush.xpose.msra.mxu0 0.0
    %2189 = vmatpush.xpose.msra.mxu0 0.0
    %2190 = vmatpush.xpose.msra.mxu0 0.0
    %2191 = vmatpush.xpose.msra.mxu0 0.0
    %2192 = vmatpush.xpose.msra.mxu0 0.0
    %2193 = vmatpush.xpose.msra.mxu0 0.0
    %2194 = vmatpush.xpose.msra.mxu0 0.0
    %2195 = vmatpush.xpose.msra.mxu0 0.0
    %2196 = vmatpush.xpose.msra.mxu0 0.0
    %2197 = vmatpush.xpose.msra.mxu0 0.0
    %2198 = vmatpush.xpose.msra.mxu0 0.0
    %2199 = vmatpush.xpose.msra.mxu0 0.0
    %2200 = vmatpush.xpose.msra.mxu0 0.0
    %2201 = vmatpush.xpose.msra.mxu0 %v2184
    %2202 = vmatmul.f32.gmra.mxu0 %v2182
    %v2203 = vpop.f32.mrf.mxu0
    %v2204 = vadd.f32 0.0, %v2203
    %2205 = vdwg.mxu0
    %v2206 = vsel %vm796, %v2204, -inf
    %2207 = vmax.xlane.f32.xlu0 %v2206
    %v2208 = vpop.xlane.xlu0 %2207
    %v2209 = vsub.f32 %v2204, %v2208
    %v2210 = vmul.f32 %v2209, 1.442695
    %v2211 = vpow.pop %v2210
    %v2212 = vsel %vm796, %v2211, 0.0
    %2213 = vadd.xlane.f32.xlu0 %v2212
    %v2214 = vpop.xlane.xlu0 %2213
    %v2215 = vrcp.pop %v2214
    %v2216 = vmul.f32 %v2211, %v2215
    %2217 = vrot.lane.b32.xlu0 %v1855, 48
    %v2218 = vpop.permute.xlu0 %2217
    %v2221 = vsel %vm796, %v2216, 0
    %2223 = vmatpush.msra.mxu0 0.0
    %2224 = vmatpush.msra.mxu0 0.0
    %2225 = vmatpush.msra.mxu0 0.0
    %2226 = vmatpush.msra.mxu0 0.0
    %2227 = vmatpush.msra.mxu0 0.0
    %2228 = vmatpush.msra.mxu0 0.0
    %2229 = vmatpush.msra.mxu0 0.0
    %2230 = vmatpush.msra.mxu0 0.0
    %2231 = vmatpush.msra.mxu0 0.0
    %2232 = vmatpush.msra.mxu0 0.0
    %2233 = vmatpush.msra.mxu0 0.0
    %2234 = vmatpush.msra.mxu0 0.0
    %2235 = vmatpush.msra.mxu0 0.0
    %2236 = vmatpush.msra.mxu0 0.0
    %2237 = vmatpush.msra.mxu0 0.0
    %2238 = vmatpush.msra.mxu0 %v2218
    %2239 = vmatmul.f32.gmra.mxu0 %v2221
    %v2240 = vpop.f32.mrf.mxu0
    %v2241 = vadd.f32 0.0, %v2240
    %2242 = vdwg.mxu0
    %2243 = vrot.lane.b32.xlu0 %v1815, 32
    %v2244 = vpop.permute.xlu0 %2243
    %2245 = vrot.lane.b32.xlu0 %v1835, 32
    %v2246 = vpop.permute.xlu0 %2245
    %v2247 = vsel %vm769, %v2244, 0
    %v2249 = vsel %vm769, %v2246, 0
    %2251 = vmatpush.xpose.msra.mxu0 0.0
    %2252 = vmatpush.xpose.msra.mxu0 0.0
    %2253 = vmatpush.xpose.msra.mxu0 0.0
    %2254 = vmatpush.xpose.msra.mxu0 0.0
    %2255 = vmatpush.xpose.msra.mxu0 0.0
    %2256 = vmatpush.xpose.msra.mxu0 0.0
    %2257 = vmatpush.xpose.msra.mxu0 0.0
    %2258 = vmatpush.xpose.msra.mxu0 0.0
    %2259 = vmatpush.xpose.msra.mxu0 0.0
    %2260 = vmatpush.xpose.msra.mxu0 0.0
    %2261 = vmatpush.xpose.msra.mxu0 0.0
    %2262 = vmatpush.xpose.msra.mxu0 0.0
    %2263 = vmatpush.xpose.msra.mxu0 0.0
    %2264 = vmatpush.xpose.msra.mxu0 0.0
    %2265 = vmatpush.xpose.msra.mxu0 0.0
    %2266 = vmatpush.xpose.msra.mxu0 %v2249
    %2267 = vmatmul.f32.gmra.mxu0 %v2247
    %v2268 = vpop.f32.mrf.mxu0
    %v2269 = vadd.f32 0.0, %v2268
    %2270 = vdwg.mxu0
    %v2271 = vsel %vm796, %v2269, -inf
    %2272 = vmax.xlane.f32.xlu0 %v2271
    %v2273 = vpop.xlane.xlu0 %2272
    %v2274 = vsub.f32 %v2269, %v2273
    %v2275 = vmul.f32 %v2274, 1.442695
    %v2276 = vpow.pop %v2275
    %v2277 = vsel %vm796, %v2276, 0.0
    %2278 = vadd.xlane.f32.xlu0 %v2277
    %v2279 = vpop.xlane.xlu0 %2278
    %v2280 = vrcp.pop %v2279
    %v2281 = vmul.f32 %v2276, %v2280
    %2282 = vrot.lane.b32.xlu0 %v1855, 32
    %v2283 = vpop.permute.xlu0 %2282
    %v2286 = vsel %vm796, %v2281, 0
    %2288 = vmatpush.msra.mxu0 0.0
    %2289 = vmatpush.msra.mxu0 0.0
    %2290 = vmatpush.msra.mxu0 0.0
    %2291 = vmatpush.msra.mxu0 0.0
    %2292 = vmatpush.msra.mxu0 0.0
    %2293 = vmatpush.msra.mxu0 0.0
    %2294 = vmatpush.msra.mxu0 0.0
    %2295 = vmatpush.msra.mxu0 0.0
    %2296 = vmatpush.msra.mxu0 0.0
    %2297 = vmatpush.msra.mxu0 0.0
    %2298 = vmatpush.msra.mxu0 0.0
    %2299 = vmatpush.msra.mxu0 0.0
    %2300 = vmatpush.msra.mxu0 0.0
    %2301 = vmatpush.msra.mxu0 0.0
    %2302 = vmatpush.msra.mxu0 0.0
    %2303 = vmatpush.msra.mxu0 %v2283
    %2304 = vmatmul.f32.gmra.mxu0 %v2286
    %v2305 = vpop.f32.mrf.mxu0
    %v2306 = vadd.f32 0.0, %v2305
    %2307 = vdwg.mxu0
    %2308 = vrot.lane.b32.xlu0 %v1815, 16
    %v2309 = vpop.permute.xlu0 %2308
    %2310 = vrot.lane.b32.xlu0 %v1835, 16
    %v2311 = vpop.permute.xlu0 %2310
    %v2312 = vsel %vm769, %v2309, 0
    %v2314 = vsel %vm769, %v2311, 0
    %2316 = vmatpush.xpose.msra.mxu0 0.0
    %2317 = vmatpush.xpose.msra.mxu0 0.0
    %2318 = vmatpush.xpose.msra.mxu0 0.0
    %2319 = vmatpush.xpose.msra.mxu0 0.0
    %2320 = vmatpush.xpose.msra.mxu0 0.0
    %2321 = vmatpush.xpose.msra.mxu0 0.0
    %2322 = vmatpush.xpose.msra.mxu0 0.0
    %2323 = vmatpush.xpose.msra.mxu0 0.0
    %2324 = vmatpush.xpose.msra.mxu0 0.0
    %2325 = vmatpush.xpose.msra.mxu0 0.0
    %2326 = vmatpush.xpose.msra.mxu0 0.0
    %2327 = vmatpush.xpose.msra.mxu0 0.0
    %2328 = vmatpush.xpose.msra.mxu0 0.0
    %2329 = vmatpush.xpose.msra.mxu0 0.0
    %2330 = vmatpush.xpose.msra.mxu0 0.0
    %2331 = vmatpush.xpose.msra.mxu0 %v2314
    %2332 = vmatmul.f32.gmra.mxu0 %v2312
    %v2333 = vpop.f32.mrf.mxu0
    %v2334 = vadd.f32 0.0, %v2333
    %2335 = vdwg.mxu0
    %v2336 = vsel %vm796, %v2334, -inf
    %2337 = vmax.xlane.f32.xlu0 %v2336
    %v2338 = vpop.xlane.xlu0 %2337
    %v2339 = vsub.f32 %v2334, %v2338
    %v2340 = vmul.f32 %v2339, 1.442695
    %v2341 = vpow.pop %v2340
    %v2342 = vsel %vm796, %v2341, 0.0
    %2343 = vadd.xlane.f32.xlu0 %v2342
    %v2344 = vpop.xlane.xlu0 %2343
    %v2345 = vrcp.pop %v2344
    %v2346 = vmul.f32 %v2341, %v2345
    %2347 = vrot.lane.b32.xlu0 %v1855, 16
    %v2348 = vpop.permute.xlu0 %2347
    %v2351 = vsel %vm796, %v2346, 0
    %2353 = vmatpush.msra.mxu0 0.0
    %2354 = vmatpush.msra.mxu0 0.0
    %2355 = vmatpush.msra.mxu0 0.0
    %2356 = vmatpush.msra.mxu0 0.0
    %2357 = vmatpush.msra.mxu0 0.0
    %2358 = vmatpush.msra.mxu0 0.0
    %2359 = vmatpush.msra.mxu0 0.0
    %2360 = vmatpush.msra.mxu0 0.0
    %2361 = vmatpush.msra.mxu0 0.0
    %2362 = vmatpush.msra.mxu0 0.0
    %2363 = vmatpush.msra.mxu0 0.0
    %2364 = vmatpush.msra.mxu0 0.0
    %2365 = vmatpush.msra.mxu0 0.0
    %2366 = vmatpush.msra.mxu0 0.0
    %2367 = vmatpush.msra.mxu0 0.0
    %2368 = vmatpush.msra.mxu0 %v2348
    %2369 = vmatmul.f32.gmra.mxu0 %v2351
    %v2370 = vpop.f32.mrf.mxu0
    %v2371 = vadd.f32 0.0, %v2370
    %2372 = vdwg.mxu0
    %2374 = vrot.lane.b32.xlu0 %v1981, 16
    %v2375 = vpop.permute.xlu0 %2374
    %2378 = vrot.lane.b32.xlu0 %v2046, 32
    %v2379 = vpop.permute.xlu0 %2378
    %2382 = vrot.lane.b32.xlu0 %v2111, 48
    %v2383 = vpop.permute.xlu0 %2382
    %2386 = vrot.lane.b32.xlu0 %v2176, 64
    %v2387 = vpop.permute.xlu0 %2386
    %2390 = vrot.lane.b32.xlu0 %v2241, 80
    %v2391 = vpop.permute.xlu0 %2390
    %2394 = vrot.lane.b32.xlu0 %v2306, 96
    %v2395 = vpop.permute.xlu0 %2394
    %2398 = vrot.lane.b32.xlu0 %v2371, 112
    %v2399 = vpop.permute.xlu0 %2398
    %v2401 = vsel %vm769, %v1915, %v2375
    %v2402 = vsel %vm1316, %v2401, %v2379
    %v2403 = vsel %vm1318, %v2402, %v2383
    %v2404 = vsel %vm1320, %v2403, %v2387
    %v2405 = vsel %vm1322, %v2404, %v2391
    %v2406 = vsel %vm1324, %v2405, %v2395
    %v2407 = vsel %vm1326, %v2406, %v2399
    %s2408 = scalar_lea.vmem [#allocation17], 128
    %v2409 = vld [vmem:[%s2408] sm:$0xff]
    %v2410 = vld [vmem:[%s2408 + $0x8] sm:$0xff]
    %v2411 = vld [vmem:[%s2408 + $0x10] sm:$0xff]
    %v2412 = vld [vmem:[%s2408 + $0x18] sm:$0xff]
    %v2413 = vld [vmem:[%s2408 + $0x20] sm:$0xff]
    %v2414 = vld [vmem:[%s2408 + $0x28] sm:$0xff]
    %v2415 = vld [vmem:[%s2408 + $0x30] sm:$0xff]
    %v2416 = vld [vmem:[%s2408 + $0x38] sm:$0xff]
    %v2417 = vld [vmem:[%s2408 + $0x40] sm:$0xff]
    %v2418 = vld [vmem:[%s2408 + $0x48] sm:$0xff]
    %v2419 = vld [vmem:[%s2408 + $0x50] sm:$0xff]
    %v2420 = vld [vmem:[%s2408 + $0x58] sm:$0xff]
    %v2421 = vld [vmem:[%s2408 + $0x60] sm:$0xff]
    %v2422 = vld [vmem:[%s2408 + $0x68] sm:$0xff]
    %v2423 = vld [vmem:[%s2408 + $0x70] sm:$0xff]
    %v2424 = vld [vmem:[%s2408 + $0x78] sm:$0xff]
    %s2425 = scalar_lea.vmem [#allocation19], 1
    %v2426 = vld [vmem:[%s2425] sm:$0x1]
    %v2428 = vperm.slane %v2426, 0
    %2430 = vmatpush.msra.mxu0 %v2424
    %2431 = vmatpush.msra.mxu0 %v2423
    %2432 = vmatpush.msra.mxu0 %v2422
    %2433 = vmatpush.msra.mxu0 %v2421
    %2434 = vmatpush.msra.mxu0 %v2420
    %2435 = vmatpush.msra.mxu0 %v2419
    %2436 = vmatpush.msra.mxu0 %v2418
    %2437 = vmatpush.msra.mxu0 %v2417
    %2438 = vmatpush.msra.mxu0 %v2416
    %2439 = vmatpush.msra.mxu0 %v2415
    %2440 = vmatpush.msra.mxu0 %v2414
    %2441 = vmatpush.msra.mxu0 %v2413
    %2442 = vmatpush.msra.mxu0 %v2412
    %2443 = vmatpush.msra.mxu0 %v2411
    %2444 = vmatpush.msra.mxu0 %v2410
    %2445 = vmatpush.msra.mxu0 %v2409
    %2446 = vmatmul.f32.gmra.mxu0 %v2407
    %v2447 = vpop.f32.mrf.mxu0
    %v2448 = vadd.f32 %v2428, %v2447
    %2449 = vdwg.mxu0
    %v2450 = vadd.f32 %v2448, %v1706
    %s2451 = scalar_lea.vmem [#allocation20], 1
    %v2452 = vld [vmem:[%s2451] sm:$0x1]
    %s2453 = scalar_lea.vmem [#allocation22], 1
    %v2454 = vld [vmem:[%s2453] sm:$0x1]
    %2455 = vadd.xlane.f32.xlu0 %v2450
    %v2456 = vpop.xlane.xlu0 %2455
    %v2457 = vmul.f32 %v2456, %v626
    %v2458 = vsub.f32 %v2450, %v2457
    %v2459 = vmul.f32 %v2458, %v2458
    %2460 = vadd.xlane.f32.xlu0 %v2459
    %v2461 = vpop.xlane.xlu0 %2460
    %v2462 = vmul.f32 %v2461, %v626
    %v2463 = vadd.f32 %v2462, 1e-05
    %v2464 = vrsqrt.pop %v2463
    %v2465 = vmul.f32 %v2464, %v2463
    %v2466 = vmul.f32 %v2465, %v2464
    %v2467 = vmul.f32 0.5, %v2466
    %v2468 = vsub.f32 1.5, %v2467
    %v2469 = vmul.f32 %v2464, %v2468
    %vm2470 = vweird.f32 %v2463
    %vm2471 = vweird.f32 %v2464
    %vm2472 = vmor %vm2470, %vm2471
    %v2473 = vsel %vm2472, %v2464, %v2469
    %v2474 = vmul.f32 %v2458, %v2473
    %v2476 = vperm.slane %v2452, 0
    %v2478 = vmul.f32 %v2474, %v2476
    %v2480 = vperm.slane %v2454, 0
    %v2482 = vadd.f32 %v2478, %v2480
    %s2483 = scalar_lea.vmem [#allocation23], 512
    %v2484 = vld [vmem:[%s2483] sm:$0xff]
    %v2485 = vld [vmem:[%s2483 + $0x8] sm:$0xff]
    %v2486 = vld [vmem:[%s2483 + $0x10] sm:$0xff]
    %v2487 = vld [vmem:[%s2483 + $0x18] sm:$0xff]
    %v2488 = vld [vmem:[%s2483 + $0x20] sm:$0xff]
    %v2489 = vld [vmem:[%s2483 + $0x28] sm:$0xff]
    %v2490 = vld [vmem:[%s2483 + $0x30] sm:$0xff]
    %v2491 = vld [vmem:[%s2483 + $0x38] sm:$0xff]
    %v2492 = vld [vmem:[%s2483 + $0x40] sm:$0xff]
    %v2493 = vld [vmem:[%s2483 + $0x48] sm:$0xff]
    %v2494 = vld [vmem:[%s2483 + $0x50] sm:$0xff]
    %v2495 = vld [vmem:[%s2483 + $0x58] sm:$0xff]
    %v2496 = vld [vmem:[%s2483 + $0x60] sm:$0xff]
    %v2497 = vld [vmem:[%s2483 + $0x68] sm:$0xff]
    %v2498 = vld [vmem:[%s2483 + $0x70] sm:$0xff]
    %v2499 = vld [vmem:[%s2483 + $0x78] sm:$0xff]
    %v2500 = vld [vmem:[%s2483 + $0x80] sm:$0xff]
    %v2501 = vld [vmem:[%s2483 + $0x88] sm:$0xff]
    %v2502 = vld [vmem:[%s2483 + $0x90] sm:$0xff]
    %v2503 = vld [vmem:[%s2483 + $0x98] sm:$0xff]
    %v2504 = vld [vmem:[%s2483 + $0xa0] sm:$0xff]
    %v2505 = vld [vmem:[%s2483 + $0xa8] sm:$0xff]
    %v2506 = vld [vmem:[%s2483 + $0xb0] sm:$0xff]
    %v2507 = vld [vmem:[%s2483 + $0xb8] sm:$0xff]
    %v2508 = vld [vmem:[%s2483 + $0xc0] sm:$0xff]
    %v2509 = vld [vmem:[%s2483 + $0xc8] sm:$0xff]
    %v2510 = vld [vmem:[%s2483 + $0xd0] sm:$0xff]
    %v2511 = vld [vmem:[%s2483 + $0xd8] sm:$0xff]
    %v2512 = vld [vmem:[%s2483 + $0xe0] sm:$0xff]
    %v2513 = vld [vmem:[%s2483 + $0xe8] sm:$0xff]
    %v2514 = vld [vmem:[%s2483 + $0xf0] sm:$0xff]
    %v2515 = vld [vmem:[%s2483 + $0xf8] sm:$0xff]
    %v2516 = vld [vmem:[%s2483 + $0x100] sm:$0xff]
    %v2517 = vld [vmem:[%s2483 + $0x108] sm:$0xff]
    %v2518 = vld [vmem:[%s2483 + $0x110] sm:$0xff]
    %v2519 = vld [vmem:[%s2483 + $0x118] sm:$0xff]
    %v2520 = vld [vmem:[%s2483 + $0x120] sm:$0xff]
    %v2521 = vld [vmem:[%s2483 + $0x128] sm:$0xff]
    %v2522 = vld [vmem:[%s2483 + $0x130] sm:$0xff]
    %v2523 = vld [vmem:[%s2483 + $0x138] sm:$0xff]
    %v2524 = vld [vmem:[%s2483 + $0x140] sm:$0xff]
    %v2525 = vld [vmem:[%s2483 + $0x148] sm:$0xff]
    %v2526 = vld [vmem:[%s2483 + $0x150] sm:$0xff]
    %v2527 = vld [vmem:[%s2483 + $0x158] sm:$0xff]
    %v2528 = vld [vmem:[%s2483 + $0x160] sm:$0xff]
    %v2529 = vld [vmem:[%s2483 + $0x168] sm:$0xff]
    %v2530 = vld [vmem:[%s2483 + $0x170] sm:$0xff]
    %v2531 = vld [vmem:[%s2483 + $0x178] sm:$0xff]
    %v2532 = vld [vmem:[%s2483 + $0x180] sm:$0xff]
    %v2533 = vld [vmem:[%s2483 + $0x188] sm:$0xff]
    %v2534 = vld [vmem:[%s2483 + $0x190] sm:$0xff]
    %v2535 = vld [vmem:[%s2483 + $0x198] sm:$0xff]
    %v2536 = vld [vmem:[%s2483 + $0x1a0] sm:$0xff]
    %v2537 = vld [vmem:[%s2483 + $0x1a8] sm:$0xff]
    %v2538 = vld [vmem:[%s2483 + $0x1b0] sm:$0xff]
    %v2539 = vld [vmem:[%s2483 + $0x1b8] sm:$0xff]
    %v2540 = vld [vmem:[%s2483 + $0x1c0] sm:$0xff]
    %v2541 = vld [vmem:[%s2483 + $0x1c8] sm:$0xff]
    %v2542 = vld [vmem:[%s2483 + $0x1d0] sm:$0xff]
    %v2543 = vld [vmem:[%s2483 + $0x1d8] sm:$0xff]
    %v2544 = vld [vmem:[%s2483 + $0x1e0] sm:$0xff]
    %v2545 = vld [vmem:[%s2483 + $0x1e8] sm:$0xff]
    %v2546 = vld [vmem:[%s2483 + $0x1f0] sm:$0xff]
    %v2547 = vld [vmem:[%s2483 + $0x1f8] sm:$0xff]
    %s2548 = scalar_lea.vmem [#allocation25], 4
    %v2549 = vld [vmem:[%s2548] sm:$0xf]
    %v2551 = vperm.slane %v2549, 0
    %v2552 = vperm.slane %v2549, 1
    %v2553 = vperm.slane %v2549, 2
    %v2554 = vperm.slane %v2549, 3
    %2559 = vmatpush.msra.mxu0 %v2544
    %2560 = vmatpush.msra.mxu0 %v2540
    %2561 = vmatpush.msra.mxu0 %v2536
    %2562 = vmatpush.msra.mxu0 %v2532
    %2563 = vmatpush.msra.mxu0 %v2528
    %2564 = vmatpush.msra.mxu0 %v2524
    %2565 = vmatpush.msra.mxu0 %v2520
    %2566 = vmatpush.msra.mxu0 %v2516
    %2567 = vmatpush.msra.mxu0 %v2512
    %2568 = vmatpush.msra.mxu0 %v2508
    %2569 = vmatpush.msra.mxu0 %v2504
    %2570 = vmatpush.msra.mxu0 %v2500
    %2571 = vmatpush.msra.mxu0 %v2496
    %2572 = vmatpush.msra.mxu0 %v2492
    %2573 = vmatpush.msra.mxu0 %v2488
    %2574 = vmatpush.msra.mxu0 %v2484
    %2575 = vmatmul.f32.gmra.mxu0 %v2482
    %v2576 = vpop.f32.mrf.mxu0
    %v2577 = vadd.f32 %v2551, %v2576
    %2578 = vdwg.mxu0
    %2579 = vmatpush.msra.mxu0 %v2545
    %2580 = vmatpush.msra.mxu0 %v2541
    %2581 = vmatpush.msra.mxu0 %v2537
    %2582 = vmatpush.msra.mxu0 %v2533
    %2583 = vmatpush.msra.mxu0 %v2529
    %2584 = vmatpush.msra.mxu0 %v2525
    %2585 = vmatpush.msra.mxu0 %v2521
    %2586 = vmatpush.msra.mxu0 %v2517
    %2587 = vmatpush.msra.mxu0 %v2513
    %2588 = vmatpush.msra.mxu0 %v2509
    %2589 = vmatpush.msra.mxu0 %v2505
    %2590 = vmatpush.msra.mxu0 %v2501
    %2591 = vmatpush.msra.mxu0 %v2497
    %2592 = vmatpush.msra.mxu0 %v2493
    %2593 = vmatpush.msra.mxu0 %v2489
    %2594 = vmatpush.msra.mxu0 %v2485
    %2595 = vmatmul.f32.gmra.mxu0 %v2482
    %v2596 = vpop.f32.mrf.mxu0
    %v2597 = vadd.f32 %v2552, %v2596
    %2598 = vdwg.mxu0
    %2599 = vmatpush.msra.mxu0 %v2546
    %2600 = vmatpush.msra.mxu0 %v2542
    %2601 = vmatpush.msra.mxu0 %v2538
    %2602 = vmatpush.msra.mxu0 %v2534
    %2603 = vmatpush.msra.mxu0 %v2530
    %2604 = vmatpush.msra.mxu0 %v2526
    %2605 = vmatpush.msra.mxu0 %v2522
    %2606 = vmatpush.msra.mxu0 %v2518
    %2607 = vmatpush.msra.mxu0 %v2514
    %2608 = vmatpush.msra.mxu0 %v2510
    %2609 = vmatpush.msra.mxu0 %v2506
    %2610 = vmatpush.msra.mxu0 %v2502
    %2611 = vmatpush.msra.mxu0 %v2498
    %2612 = vmatpush.msra.mxu0 %v2494
    %2613 = vmatpush.msra.mxu0 %v2490
    %2614 = vmatpush.msra.mxu0 %v2486
    %2615 = vmatmul.f32.gmra.mxu0 %v2482
    %v2616 = vpop.f32.mrf.mxu0
    %v2617 = vadd.f32 %v2553, %v2616
    %2618 = vdwg.mxu0
    %2619 = vmatpush.msra.mxu0 %v2547
    %2620 = vmatpush.msra.mxu0 %v2543
    %2621 = vmatpush.msra.mxu0 %v2539
    %2622 = vmatpush.msra.mxu0 %v2535
    %2623 = vmatpush.msra.mxu0 %v2531
    %2624 = vmatpush.msra.mxu0 %v2527
    %2625 = vmatpush.msra.mxu0 %v2523
    %2626 = vmatpush.msra.mxu0 %v2519
    %2627 = vmatpush.msra.mxu0 %v2515
    %2628 = vmatpush.msra.mxu0 %v2511
    %2629 = vmatpush.msra.mxu0 %v2507
    %2630 = vmatpush.msra.mxu0 %v2503
    %2631 = vmatpush.msra.mxu0 %v2499
    %2632 = vmatpush.msra.mxu0 %v2495
    %2633 = vmatpush.msra.mxu0 %v2491
    %2634 = vmatpush.msra.mxu0 %v2487
    %2635 = vmatmul.f32.gmra.mxu0 %v2482
    %v2636 = vpop.f32.mrf.mxu0
    %v2637 = vadd.f32 %v2554, %v2636
    %2638 = vdwg.mxu0
    %v2639 = vmax.f32 %v2577, 0.0
    %v2640 = vmax.f32 %v2597, 0.0
    %v2641 = vmax.f32 %v2617, 0.0
    %v2642 = vmax.f32 %v2637, 0.0
    %s2643 = scalar_lea.vmem [#allocation26], 512
    %v2644 = vld [vmem:[%s2643] sm:$0xff]
    %v2645 = vld [vmem:[%s2643 + $0x8] sm:$0xff]
    %v2646 = vld [vmem:[%s2643 + $0x10] sm:$0xff]
    %v2647 = vld [vmem:[%s2643 + $0x18] sm:$0xff]
    %v2648 = vld [vmem:[%s2643 + $0x20] sm:$0xff]
    %v2649 = vld [vmem:[%s2643 + $0x28] sm:$0xff]
    %v2650 = vld [vmem:[%s2643 + $0x30] sm:$0xff]
    %v2651 = vld [vmem:[%s2643 + $0x38] sm:$0xff]
    %v2652 = vld [vmem:[%s2643 + $0x40] sm:$0xff]
    %v2653 = vld [vmem:[%s2643 + $0x48] sm:$0xff]
    %v2654 = vld [vmem:[%s2643 + $0x50] sm:$0xff]
    %v2655 = vld [vmem:[%s2643 + $0x58] sm:$0xff]
    %v2656 = vld [vmem:[%s2643 + $0x60] sm:$0xff]
    %v2657 = vld [vmem:[%s2643 + $0x68] sm:$0xff]
    %v2658 = vld [vmem:[%s2643 + $0x70] sm:$0xff]
    %v2659 = vld [vmem:[%s2643 + $0x78] sm:$0xff]
    %v2660 = vld [vmem:[%s2643 + $0x80] sm:$0xff]
    %v2661 = vld [vmem:[%s2643 + $0x88] sm:$0xff]
    %v2662 = vld [vmem:[%s2643 + $0x90] sm:$0xff]
    %v2663 = vld [vmem:[%s2643 + $0x98] sm:$0xff]
    %v2664 = vld [vmem:[%s2643 + $0xa0] sm:$0xff]
    %v2665 = vld [vmem:[%s2643 + $0xa8] sm:$0xff]
    %v2666 = vld [vmem:[%s2643 + $0xb0] sm:$0xff]
    %v2667 = vld [vmem:[%s2643 + $0xb8] sm:$0xff]
    %v2668 = vld [vmem:[%s2643 + $0xc0] sm:$0xff]
    %v2669 = vld [vmem:[%s2643 + $0xc8] sm:$0xff]
    %v2670 = vld [vmem:[%s2643 + $0xd0] sm:$0xff]
    %v2671 = vld [vmem:[%s2643 + $0xd8] sm:$0xff]
    %v2672 = vld [vmem:[%s2643 + $0xe0] sm:$0xff]
    %v2673 = vld [vmem:[%s2643 + $0xe8] sm:$0xff]
    %v2674 = vld [vmem:[%s2643 + $0xf0] sm:$0xff]
    %v2675 = vld [vmem:[%s2643 + $0xf8] sm:$0xff]
    %v2676 = vld [vmem:[%s2643 + $0x100] sm:$0xff]
    %v2677 = vld [vmem:[%s2643 + $0x108] sm:$0xff]
    %v2678 = vld [vmem:[%s2643 + $0x110] sm:$0xff]
    %v2679 = vld [vmem:[%s2643 + $0x118] sm:$0xff]
    %v2680 = vld [vmem:[%s2643 + $0x120] sm:$0xff]
    %v2681 = vld [vmem:[%s2643 + $0x128] sm:$0xff]
    %v2682 = vld [vmem:[%s2643 + $0x130] sm:$0xff]
    %v2683 = vld [vmem:[%s2643 + $0x138] sm:$0xff]
    %v2684 = vld [vmem:[%s2643 + $0x140] sm:$0xff]
    %v2685 = vld [vmem:[%s2643 + $0x148] sm:$0xff]
    %v2686 = vld [vmem:[%s2643 + $0x150] sm:$0xff]
    %v2687 = vld [vmem:[%s2643 + $0x158] sm:$0xff]
    %v2688 = vld [vmem:[%s2643 + $0x160] sm:$0xff]
    %v2689 = vld [vmem:[%s2643 + $0x168] sm:$0xff]
    %v2690 = vld [vmem:[%s2643 + $0x170] sm:$0xff]
    %v2691 = vld [vmem:[%s2643 + $0x178] sm:$0xff]
    %v2692 = vld [vmem:[%s2643 + $0x180] sm:$0xff]
    %v2693 = vld [vmem:[%s2643 + $0x188] sm:$0xff]
    %v2694 = vld [vmem:[%s2643 + $0x190] sm:$0xff]
    %v2695 = vld [vmem:[%s2643 + $0x198] sm:$0xff]
    %v2696 = vld [vmem:[%s2643 + $0x1a0] sm:$0xff]
    %v2697 = vld [vmem:[%s2643 + $0x1a8] sm:$0xff]
    %v2698 = vld [vmem:[%s2643 + $0x1b0] sm:$0xff]
    %v2699 = vld [vmem:[%s2643 + $0x1b8] sm:$0xff]
    %v2700 = vld [vmem:[%s2643 + $0x1c0] sm:$0xff]
    %v2701 = vld [vmem:[%s2643 + $0x1c8] sm:$0xff]
    %v2702 = vld [vmem:[%s2643 + $0x1d0] sm:$0xff]
    %v2703 = vld [vmem:[%s2643 + $0x1d8] sm:$0xff]
    %v2704 = vld [vmem:[%s2643 + $0x1e0] sm:$0xff]
    %v2705 = vld [vmem:[%s2643 + $0x1e8] sm:$0xff]
    %v2706 = vld [vmem:[%s2643 + $0x1f0] sm:$0xff]
    %v2707 = vld [vmem:[%s2643 + $0x1f8] sm:$0xff]
    %2708 = vmatpush.msra.mxu0 %v2659
    %2709 = vmatpush.msra.mxu0 %v2658
    %2710 = vmatpush.msra.mxu0 %v2657
    %2711 = vmatpush.msra.mxu0 %v2656
    %2712 = vmatpush.msra.mxu0 %v2655
    %2713 = vmatpush.msra.mxu0 %v2654
    %2714 = vmatpush.msra.mxu0 %v2653
    %2715 = vmatpush.msra.mxu0 %v2652
    %2716 = vmatpush.msra.mxu0 %v2651
    %2717 = vmatpush.msra.mxu0 %v2650
    %2718 = vmatpush.msra.mxu0 %v2649
    %2719 = vmatpush.msra.mxu0 %v2648
    %2720 = vmatpush.msra.mxu0 %v2647
    %2721 = vmatpush.msra.mxu0 %v2646
    %2722 = vmatpush.msra.mxu0 %v2645
    %2723 = vmatpush.msra.mxu0 %v2644
    %2724 = vmatmul.f32.gmra.mxu0 %v2639
    %v2725 = vpop.f32.mrf.mxu0
    %v2726 = vadd.f32 0.0, %v2725
    %2727 = vdwg.mxu0
    %2728 = vmatpush.msra.mxu0 %v2675
    %2729 = vmatpush.msra.mxu0 %v2674
    %2730 = vmatpush.msra.mxu0 %v2673
    %2731 = vmatpush.msra.mxu0 %v2672
    %2732 = vmatpush.msra.mxu0 %v2671
    %2733 = vmatpush.msra.mxu0 %v2670
    %2734 = vmatpush.msra.mxu0 %v2669
    %2735 = vmatpush.msra.mxu0 %v2668
    %2736 = vmatpush.msra.mxu0 %v2667
    %2737 = vmatpush.msra.mxu0 %v2666
    %2738 = vmatpush.msra.mxu0 %v2665
    %2739 = vmatpush.msra.mxu0 %v2664
    %2740 = vmatpush.msra.mxu0 %v2663
    %2741 = vmatpush.msra.mxu0 %v2662
    %2742 = vmatpush.msra.mxu0 %v2661
    %2743 = vmatpush.msra.mxu0 %v2660
    %2744 = vmatmul.f32.gmra.mxu0 %v2640
    %v2745 = vpop.f32.mrf.mxu0
    %v2746 = vadd.f32 %v2726, %v2745
    %2747 = vdwg.mxu0
    %2748 = vmatpush.msra.mxu0 %v2691
    %2749 = vmatpush.msra.mxu0 %v2690
    %2750 = vmatpush.msra.mxu0 %v2689
    %2751 = vmatpush.msra.mxu0 %v2688
    %2752 = vmatpush.msra.mxu0 %v2687
    %2753 = vmatpush.msra.mxu0 %v2686
    %2754 = vmatpush.msra.mxu0 %v2685
    %2755 = vmatpush.msra.mxu0 %v2684
    %2756 = vmatpush.msra.mxu0 %v2683
    %2757 = vmatpush.msra.mxu0 %v2682
    %2758 = vmatpush.msra.mxu0 %v2681
    %2759 = vmatpush.msra.mxu0 %v2680
    %2760 = vmatpush.msra.mxu0 %v2679
    %2761 = vmatpush.msra.mxu0 %v2678
    %2762 = vmatpush.msra.mxu0 %v2677
    %2763 = vmatpush.msra.mxu0 %v2676
    %2764 = vmatmul.f32.gmra.mxu0 %v2641
    %v2765 = vpop.f32.mrf.mxu0
    %v2766 = vadd.f32 %v2746, %v2765
    %2767 = vdwg.mxu0
    %2768 = vmatpush.msra.mxu0 %v2707
    %2769 = vmatpush.msra.mxu0 %v2706
    %2770 = vmatpush.msra.mxu0 %v2705
    %2771 = vmatpush.msra.mxu0 %v2704
    %2772 = vmatpush.msra.mxu0 %v2703
    %2773 = vmatpush.msra.mxu0 %v2702
    %2774 = vmatpush.msra.mxu0 %v2701
    %2775 = vmatpush.msra.mxu0 %v2700
    %2776 = vmatpush.msra.mxu0 %v2699
    %2777 = vmatpush.msra.mxu0 %v2698
    %2778 = vmatpush.msra.mxu0 %v2697
    %2779 = vmatpush.msra.mxu0 %v2696
    %2780 = vmatpush.msra.mxu0 %v2695
    %2781 = vmatpush.msra.mxu0 %v2694
    %2782 = vmatpush.msra.mxu0 %v2693
    %2783 = vmatpush.msra.mxu0 %v2692
    %2784 = vmatmul.f32.gmra.mxu0 %v2642
    %v2785 = vpop.f32.mrf.mxu0
    %v2786 = vadd.f32 %v2766, %v2785
    %2787 = vdwg.mxu0
    %v2788 = vadd.f32 %v2450, %v2786
    %s2789 = scalar_lea.vmem [#allocation28], 1
    %v2790 = vld [vmem:[%s2789] sm:$0x1]
    %v2792 = vperm.slane %v2790, 0
    %v2794 = vadd.f32 %v2788, %v2792
    %v2795 = vld [vmem:[#allocation7] sm:$0x3]
    %v2796 = vld [vmem:[#allocation29] sm:$0xff]
    %v2797 = vld [vmem:[#allocation29 + $0x8] sm:$0xff]
    %v2798 = vld [vmem:[#allocation29 + $0x10] sm:$0xff]
    %v2799 = vld [vmem:[#allocation29 + $0x18] sm:$0xff]
    %v2800 = vld [vmem:[#allocation29 + $0x20] sm:$0xff]
    %v2801 = vld [vmem:[#allocation29 + $0x28] sm:$0xff]
    %v2802 = vld [vmem:[#allocation29 + $0x30] sm:$0xff]
    %v2803 = vld [vmem:[#allocation29 + $0x38] sm:$0xff]
    %v2804 = vld [vmem:[#allocation29 + $0x40] sm:$0xff]
    %v2805 = vld [vmem:[#allocation29 + $0x48] sm:$0xff]
    %v2806 = vld [vmem:[#allocation29 + $0x50] sm:$0xff]
    %v2807 = vld [vmem:[#allocation29 + $0x58] sm:$0xff]
    %v2808 = vld [vmem:[#allocation29 + $0x60] sm:$0xff]
    %v2809 = vld [vmem:[#allocation29 + $0x68] sm:$0xff]
    %v2810 = vld [vmem:[#allocation29 + $0x70] sm:$0xff]
    %v2811 = vld [vmem:[#allocation29 + $0x78] sm:$0xff]
    %v2812 = vld [vmem:[#allocation29 + $0x80] sm:$0xff]
    %v2813 = vld [vmem:[#allocation29 + $0x88] sm:$0xff]
    %v2814 = vld [vmem:[#allocation29 + $0x90] sm:$0xff]
    %v2815 = vld [vmem:[#allocation29 + $0x98] sm:$0xff]
    %v2816 = vld [vmem:[#allocation29 + $0xa0] sm:$0xff]
    %v2817 = vld [vmem:[#allocation29 + $0xa8] sm:$0xff]
    %v2818 = vld [vmem:[#allocation29 + $0xb0] sm:$0xff]
    %v2819 = vld [vmem:[#allocation29 + $0xb8] sm:$0xff]
    %v2820 = vld [vmem:[#allocation29 + $0xc0] sm:$0xff]
    %v2821 = vld [vmem:[#allocation29 + $0xc8] sm:$0xff]
    %v2822 = vld [vmem:[#allocation29 + $0xd0] sm:$0xff]
    %v2823 = vld [vmem:[#allocation29 + $0xd8] sm:$0xff]
    %v2824 = vld [vmem:[#allocation29 + $0xe0] sm:$0xff]
    %v2825 = vld [vmem:[#allocation29 + $0xe8] sm:$0xff]
    %v2826 = vld [vmem:[#allocation29 + $0xf0] sm:$0xff]
    %v2827 = vld [vmem:[#allocation29 + $0xf8] sm:$0xff]
    %v2828 = vld [vmem:[#allocation29 + $0x100] sm:$0xff]
    %v2829 = vld [vmem:[#allocation29 + $0x108] sm:$0xff]
    %v2830 = vld [vmem:[#allocation29 + $0x110] sm:$0xff]
    %v2831 = vld [vmem:[#allocation29 + $0x118] sm:$0xff]
    %v2832 = vld [vmem:[#allocation29 + $0x120] sm:$0xff]
    %v2833 = vld [vmem:[#allocation29 + $0x128] sm:$0xff]
    %v2834 = vld [vmem:[#allocation29 + $0x130] sm:$0xff]
    %v2835 = vld [vmem:[#allocation29 + $0x138] sm:$0xff]
    %v2836 = vld [vmem:[#allocation29 + $0x140] sm:$0xff]
    %v2837 = vld [vmem:[#allocation29 + $0x148] sm:$0xff]
    %v2838 = vld [vmem:[#allocation29 + $0x150] sm:$0xff]
    %v2839 = vld [vmem:[#allocation29 + $0x158] sm:$0xff]
    %v2840 = vld [vmem:[#allocation29 + $0x160] sm:$0xff]
    %v2841 = vld [vmem:[#allocation29 + $0x168] sm:$0xff]
    %v2842 = vld [vmem:[#allocation29 + $0x170] sm:$0xff]
    %v2843 = vld [vmem:[#allocation29 + $0x178] sm:$0xff]
    %v2844 = vld [vmem:[#allocation29 + $0x180] sm:$0xff]
    %v2845 = vld [vmem:[#allocation29 + $0x188] sm:$0xff]
    %v2846 = vld [vmem:[#allocation29 + $0x190] sm:$0xff]
    %v2847 = vld [vmem:[#allocation29 + $0x198] sm:$0xff]
    %v2848 = vld [vmem:[#allocation29 + $0x1a0] sm:$0xff]
    %v2849 = vld [vmem:[#allocation29 + $0x1a8] sm:$0xff]
    %v2850 = vld [vmem:[#allocation29 + $0x1b0] sm:$0xff]
    %v2851 = vld [vmem:[#allocation29 + $0x1b8] sm:$0xff]
    %v2852 = vld [vmem:[#allocation29 + $0x1c0] sm:$0xff]
    %v2853 = vld [vmem:[#allocation29 + $0x1c8] sm:$0xff]
    %v2854 = vld [vmem:[#allocation29 + $0x1d0] sm:$0xff]
    %v2855 = vld [vmem:[#allocation29 + $0x1d8] sm:$0xff]
    %v2856 = vld [vmem:[#allocation29 + $0x1e0] sm:$0xff]
    %v2857 = vld [vmem:[#allocation29 + $0x1e8] sm:$0xff]
    %v2858 = vld [vmem:[#allocation29 + $0x1f0] sm:$0xff]
    %v2859 = vld [vmem:[#allocation29 + $0x1f8] sm:$0xff]
    %v2860 = vld [vmem:[#allocation29 + $0x200] sm:$0xff]
    %v2861 = vld [vmem:[#allocation29 + $0x208] sm:$0xff]
    %v2862 = vld [vmem:[#allocation29 + $0x210] sm:$0xff]
    %v2863 = vld [vmem:[#allocation29 + $0x218] sm:$0xff]
    %v2864 = vld [vmem:[#allocation29 + $0x220] sm:$0xff]
    %v2865 = vld [vmem:[#allocation29 + $0x228] sm:$0xff]
    %v2866 = vld [vmem:[#allocation29 + $0x230] sm:$0xff]
    %v2867 = vld [vmem:[#allocation29 + $0x238] sm:$0xff]
    %v2868 = vld [vmem:[#allocation29 + $0x240] sm:$0xff]
    %v2869 = vld [vmem:[#allocation29 + $0x248] sm:$0xff]
    %v2870 = vld [vmem:[#allocation29 + $0x250] sm:$0xff]
    %v2871 = vld [vmem:[#allocation29 + $0x258] sm:$0xff]
    %v2872 = vld [vmem:[#allocation29 + $0x260] sm:$0xff]
    %v2873 = vld [vmem:[#allocation29 + $0x268] sm:$0xff]
    %v2874 = vld [vmem:[#allocation29 + $0x270] sm:$0xff]
    %v2875 = vld [vmem:[#allocation29 + $0x278] sm:$0xff]
    %v2876 = vld [vmem:[#allocation29 + $0x280] sm:$0xff]
    %v2877 = vld [vmem:[#allocation29 + $0x288] sm:$0xff]
    %v2878 = vld [vmem:[#allocation29 + $0x290] sm:$0xff]
    %v2879 = vld [vmem:[#allocation29 + $0x298] sm:$0xff]
    %v2880 = vld [vmem:[#allocation29 + $0x2a0] sm:$0xff]
    %v2881 = vld [vmem:[#allocation29 + $0x2a8] sm:$0xff]
    %v2882 = vld [vmem:[#allocation29 + $0x2b0] sm:$0xff]
    %v2883 = vld [vmem:[#allocation29 + $0x2b8] sm:$0xff]
    %v2884 = vld [vmem:[#allocation29 + $0x2c0] sm:$0xff]
    %v2885 = vld [vmem:[#allocation29 + $0x2c8] sm:$0xff]
    %v2886 = vld [vmem:[#allocation29 + $0x2d0] sm:$0xff]
    %v2887 = vld [vmem:[#allocation29 + $0x2d8] sm:$0xff]
    %v2888 = vld [vmem:[#allocation29 + $0x2e0] sm:$0xff]
    %v2889 = vld [vmem:[#allocation29 + $0x2e8] sm:$0xff]
    %v2890 = vld [vmem:[#allocation29 + $0x2f0] sm:$0xff]
    %v2891 = vld [vmem:[#allocation29 + $0x2f8] sm:$0xff]
    %v2892 = vld [vmem:[#allocation29 + $0x300] sm:$0xff]
    %v2893 = vld [vmem:[#allocation29 + $0x308] sm:$0xff]
    %v2894 = vld [vmem:[#allocation29 + $0x310] sm:$0xff]
    %v2895 = vld [vmem:[#allocation29 + $0x318] sm:$0xff]
    %v2896 = vld [vmem:[#allocation29 + $0x320] sm:$0xff]
    %v2897 = vld [vmem:[#allocation29 + $0x328] sm:$0xff]
    %v2898 = vld [vmem:[#allocation29 + $0x330] sm:$0xff]
    %v2899 = vld [vmem:[#allocation29 + $0x338] sm:$0xff]
    %v2900 = vld [vmem:[#allocation29 + $0x340] sm:$0xff]
    %v2901 = vld [vmem:[#allocation29 + $0x348] sm:$0xff]
    %v2902 = vld [vmem:[#allocation29 + $0x350] sm:$0xff]
    %v2903 = vld [vmem:[#allocation29 + $0x358] sm:$0xff]
    %v2904 = vld [vmem:[#allocation29 + $0x360] sm:$0xff]
    %v2905 = vld [vmem:[#allocation29 + $0x368] sm:$0xff]
    %v2906 = vld [vmem:[#allocation29 + $0x370] sm:$0xff]
    %v2907 = vld [vmem:[#allocation29 + $0x378] sm:$0xff]
    %v2908 = vld [vmem:[#allocation29 + $0x380] sm:$0xff]
    %v2909 = vld [vmem:[#allocation29 + $0x388] sm:$0xff]
    %v2910 = vld [vmem:[#allocation29 + $0x390] sm:$0xff]
    %v2911 = vld [vmem:[#allocation29 + $0x398] sm:$0xff]
    %v2912 = vld [vmem:[#allocation29 + $0x3a0] sm:$0xff]
    %v2913 = vld [vmem:[#allocation29 + $0x3a8] sm:$0xff]
    %v2914 = vld [vmem:[#allocation29 + $0x3b0] sm:$0xff]
    %v2915 = vld [vmem:[#allocation29 + $0x3b8] sm:$0xff]
    %v2916 = vld [vmem:[#allocation29 + $0x3c0] sm:$0xff]
    %v2917 = vld [vmem:[#allocation29 + $0x3c8] sm:$0xff]
    %v2918 = vld [vmem:[#allocation29 + $0x3d0] sm:$0xff]
    %v2919 = vld [vmem:[#allocation29 + $0x3d8] sm:$0xff]
    %v2920 = vld [vmem:[#allocation29 + $0x3e0] sm:$0xff]
    %v2921 = vld [vmem:[#allocation29 + $0x3e8] sm:$0xff]
    %v2922 = vld [vmem:[#allocation29 + $0x3f0] sm:$0xff]
    %v2923 = vld [vmem:[#allocation29 + $0x3f8] sm:$0xff]
    %v2924 = vld [vmem:[#allocation29 + $0x400] sm:$0xff]
    %v2925 = vld [vmem:[#allocation29 + $0x408] sm:$0xff]
    %v2926 = vld [vmem:[#allocation29 + $0x410] sm:$0xff]
    %v2927 = vld [vmem:[#allocation29 + $0x418] sm:$0xff]
    %v2928 = vld [vmem:[#allocation29 + $0x420] sm:$0xff]
    %v2929 = vld [vmem:[#allocation29 + $0x428] sm:$0xff]
    %v2930 = vld [vmem:[#allocation29 + $0x430] sm:$0xff]
    %v2931 = vld [vmem:[#allocation29 + $0x438] sm:$0xff]
    %v2932 = vld [vmem:[#allocation29 + $0x440] sm:$0xff]
    %v2933 = vld [vmem:[#allocation29 + $0x448] sm:$0xff]
    %v2934 = vld [vmem:[#allocation29 + $0x450] sm:$0xff]
    %v2935 = vld [vmem:[#allocation29 + $0x458] sm:$0xff]
    %v2936 = vld [vmem:[#allocation29 + $0x460] sm:$0xff]
    %v2937 = vld [vmem:[#allocation29 + $0x468] sm:$0xff]
    %v2938 = vld [vmem:[#allocation29 + $0x470] sm:$0xff]
    %v2939 = vld [vmem:[#allocation29 + $0x478] sm:$0xff]
    %v2940 = vld [vmem:[#allocation29 + $0x480] sm:$0xff]
    %v2941 = vld [vmem:[#allocation29 + $0x488] sm:$0xff]
    %v2942 = vld [vmem:[#allocation29 + $0x490] sm:$0xff]
    %v2943 = vld [vmem:[#allocation29 + $0x498] sm:$0xff]
    %v2944 = vld [vmem:[#allocation29 + $0x4a0] sm:$0xff]
    %v2945 = vld [vmem:[#allocation29 + $0x4a8] sm:$0xff]
    %v2946 = vld [vmem:[#allocation29 + $0x4b0] sm:$0xff]
    %v2947 = vld [vmem:[#allocation29 + $0x4b8] sm:$0xff]
    %v2948 = vld [vmem:[#allocation29 + $0x4c0] sm:$0xff]
    %v2949 = vld [vmem:[#allocation29 + $0x4c8] sm:$0xff]
    %v2950 = vld [vmem:[#allocation29 + $0x4d0] sm:$0xff]
    %v2951 = vld [vmem:[#allocation29 + $0x4d8] sm:$0xff]
    %v2952 = vld [vmem:[#allocation29 + $0x4e0] sm:$0xff]
    %v2953 = vld [vmem:[#allocation29 + $0x4e8] sm:$0xff]
    %v2954 = vld [vmem:[#allocation29 + $0x4f0] sm:$0xff]
    %v2955 = vld [vmem:[#allocation29 + $0x4f8] sm:$0xff]
    %v2956 = vld [vmem:[#allocation29 + $0x500] sm:$0xff]
    %v2957 = vld [vmem:[#allocation29 + $0x508] sm:$0xff]
    %v2958 = vld [vmem:[#allocation29 + $0x510] sm:$0xff]
    %v2959 = vld [vmem:[#allocation29 + $0x518] sm:$0xff]
    %v2960 = vld [vmem:[#allocation29 + $0x520] sm:$0xff]
    %v2961 = vld [vmem:[#allocation29 + $0x528] sm:$0xff]
    %v2962 = vld [vmem:[#allocation29 + $0x530] sm:$0xff]
    %v2963 = vld [vmem:[#allocation29 + $0x538] sm:$0xff]
    %v2964 = vld [vmem:[#allocation29 + $0x540] sm:$0xff]
    %v2965 = vld [vmem:[#allocation29 + $0x548] sm:$0xff]
    %v2966 = vld [vmem:[#allocation29 + $0x550] sm:$0xff]
    %v2967 = vld [vmem:[#allocation29 + $0x558] sm:$0xff]
    %v2968 = vld [vmem:[#allocation29 + $0x560] sm:$0xff]
    %v2969 = vld [vmem:[#allocation29 + $0x568] sm:$0xff]
    %v2970 = vld [vmem:[#allocation29 + $0x570] sm:$0xff]
    %v2971 = vld [vmem:[#allocation31] sm:$0x7f]
    %v2973 = vperm.slane %v2795, 0
    %v2974 = vperm.slane %v2795, 1
    %v2977 = vperm.slane %v2971, 0
    %v2978 = vperm.slane %v2971, 1
    %v2979 = vperm.slane %v2971, 2
    %v2980 = vperm.slane %v2971, 3
    %v2981 = vperm.slane %v2971, 4
    %v2982 = vperm.slane %v2971, 5
    %v2983 = vperm.slane %v2971, 6
    %vm2991 = vcmask 588800
    %v2992 = vsel %vm2991, %v2974, 0
    %2994 = vmatpush.msra.mxu0 %v2901
    %2995 = vmatpush.msra.mxu0 %v2894
    %2996 = vmatpush.msra.mxu0 %v2887
    %2997 = vmatpush.msra.mxu0 %v2880
    %2998 = vmatpush.msra.mxu0 %v2873
    %2999 = vmatpush.msra.mxu0 %v2866
    %3000 = vmatpush.msra.mxu0 %v2859
    %3001 = vmatpush.msra.mxu0 %v2852
    %3002 = vmatpush.msra.mxu0 %v2845
    %3003 = vmatpush.msra.mxu0 %v2838
    %3004 = vmatpush.msra.mxu0 %v2831
    %3005 = vmatpush.msra.mxu0 %v2824
    %3006 = vmatpush.msra.mxu0 %v2817
    %3007 = vmatpush.msra.mxu0 %v2810
    %3008 = vmatpush.msra.mxu0 %v2803
    %3009 = vmatpush.msra.mxu0 %v2796
    %3010 = vmatmul.f32.gmra.mxu0 %v2973
    %v3011 = vpop.f32.mrf.mxu0
    %v3012 = vadd.f32 %v2977, %v3011
    %3013 = vdwg.mxu0
    %3014 = vmatpush.msra.mxu0 0.0
    %3015 = vmatpush.msra.mxu0 0.0
    %3016 = vmatpush.msra.mxu0 0.0
    %3017 = vmatpush.msra.mxu0 0.0
    %3018 = vmatpush.msra.mxu0 0.0
    %3019 = vmatpush.msra.mxu0 0.0
    %3020 = vmatpush.msra.mxu0 0.0
    %3021 = vmatpush.msra.mxu0 %v2964
    %3022 = vmatpush.msra.mxu0 %v2957
    %3023 = vmatpush.msra.mxu0 %v2950
    %3024 = vmatpush.msra.mxu0 %v2943
    %3025 = vmatpush.msra.mxu0 %v2936
    %3026 = vmatpush.msra.mxu0 %v2929
    %3027 = vmatpush.msra.mxu0 %v2922
    %3028 = vmatpush.msra.mxu0 %v2915
    %3029 = vmatpush.msra.mxu0 %v2908
    %3030 = vmatmul.f32.gmra.mxu0 %v2992
    %v3031 = vpop.f32.mrf.mxu0
    %v3032 = vadd.f32 %v3012, %v3031
    %3033 = vdwg.mxu0
    %3034 = vmatpush.msra.mxu0 %v2902
    %3035 = vmatpush.msra.mxu0 %v2895
    %3036 = vmatpush.msra.mxu0 %v2888
    %3037 = vmatpush.msra.mxu0 %v2881
    %3038 = vmatpush.msra.mxu0 %v2874
    %3039 = vmatpush.msra.mxu0 %v2867
    %3040 = vmatpush.msra.mxu0 %v2860
    %3041 = vmatpush.msra.mxu0 %v2853
    %3042 = vmatpush.msra.mxu0 %v2846
    %3043 = vmatpush.msra.mxu0 %v2839
    %3044 = vmatpush.msra.mxu0 %v2832
    %3045 = vmatpush.msra.mxu0 %v2825
    %3046 = vmatpush.msra.mxu0 %v2818
    %3047 = vmatpush.msra.mxu0 %v2811
    %3048 = vmatpush.msra.mxu0 %v2804
    %3049 = vmatpush.msra.mxu0 %v2797
    %3050 = vmatmul.f32.gmra.mxu0 %v2973
    %v3051 = vpop.f32.mrf.mxu0
    %v3052 = vadd.f32 %v2978, %v3051
    %3053 = vdwg.mxu0
    %3054 = vmatpush.msra.mxu0 0.0
    %3055 = vmatpush.msra.mxu0 0.0
    %3056 = vmatpush.msra.mxu0 0.0
    %3057 = vmatpush.msra.mxu0 0.0
    %3058 = vmatpush.msra.mxu0 0.0
    %3059 = vmatpush.msra.mxu0 0.0
    %3060 = vmatpush.msra.mxu0 0.0
    %3061 = vmatpush.msra.mxu0 %v2965
    %3062 = vmatpush.msra.mxu0 %v2958
    %3063 = vmatpush.msra.mxu0 %v2951
    %3064 = vmatpush.msra.mxu0 %v2944
    %3065 = vmatpush.msra.mxu0 %v2937
    %3066 = vmatpush.msra.mxu0 %v2930
    %3067 = vmatpush.msra.mxu0 %v2923
    %3068 = vmatpush.msra.mxu0 %v2916
    %3069 = vmatpush.msra.mxu0 %v2909
    %3070 = vmatmul.f32.gmra.mxu0 %v2992
    %v3071 = vpop.f32.mrf.mxu0
    %v3072 = vadd.f32 %v3052, %v3071
    %3073 = vdwg.mxu0
    %3074 = vmatpush.msra.mxu0 %v2903
    %3075 = vmatpush.msra.mxu0 %v2896
    %3076 = vmatpush.msra.mxu0 %v2889
    %3077 = vmatpush.msra.mxu0 %v2882
    %3078 = vmatpush.msra.mxu0 %v2875
    %3079 = vmatpush.msra.mxu0 %v2868
    %3080 = vmatpush.msra.mxu0 %v2861
    %3081 = vmatpush.msra.mxu0 %v2854
    %3082 = vmatpush.msra.mxu0 %v2847
    %3083 = vmatpush.msra.mxu0 %v2840
    %3084 = vmatpush.msra.mxu0 %v2833
    %3085 = vmatpush.msra.mxu0 %v2826
    %3086 = vmatpush.msra.mxu0 %v2819
    %3087 = vmatpush.msra.mxu0 %v2812
    %3088 = vmatpush.msra.mxu0 %v2805
    %3089 = vmatpush.msra.mxu0 %v2798
    %3090 = vmatmul.f32.gmra.mxu0 %v2973
    %v3091 = vpop.f32.mrf.mxu0
    %v3092 = vadd.f32 %v2979, %v3091
    %3093 = vdwg.mxu0
    %3094 = vmatpush.msra.mxu0 0.0
    %3095 = vmatpush.msra.mxu0 0.0
    %3096 = vmatpush.msra.mxu0 0.0
    %3097 = vmatpush.msra.mxu0 0.0
    %3098 = vmatpush.msra.mxu0 0.0
    %3099 = vmatpush.msra.mxu0 0.0
    %3100 = vmatpush.msra.mxu0 0.0
    %3101 = vmatpush.msra.mxu0 %v2966
    %3102 = vmatpush.msra.mxu0 %v2959
    %3103 = vmatpush.msra.mxu0 %v2952
    %3104 = vmatpush.msra.mxu0 %v2945
    %3105 = vmatpush.msra.mxu0 %v2938
    %3106 = vmatpush.msra.mxu0 %v2931
    %3107 = vmatpush.msra.mxu0 %v2924
    %3108 = vmatpush.msra.mxu0 %v2917
    %3109 = vmatpush.msra.mxu0 %v2910
    %3110 = vmatmul.f32.gmra.mxu0 %v2992
    %v3111 = vpop.f32.mrf.mxu0
    %v3112 = vadd.f32 %v3092, %v3111
    %3113 = vdwg.mxu0
    %3114 = vmatpush.msra.mxu0 %v2904
    %3115 = vmatpush.msra.mxu0 %v2897
    %3116 = vmatpush.msra.mxu0 %v2890
    %3117 = vmatpush.msra.mxu0 %v2883
    %3118 = vmatpush.msra.mxu0 %v2876
    %3119 = vmatpush.msra.mxu0 %v2869
    %3120 = vmatpush.msra.mxu0 %v2862
    %3121 = vmatpush.msra.mxu0 %v2855
    %3122 = vmatpush.msra.mxu0 %v2848
    %3123 = vmatpush.msra.mxu0 %v2841
    %3124 = vmatpush.msra.mxu0 %v2834
    %3125 = vmatpush.msra.mxu0 %v2827
    %3126 = vmatpush.msra.mxu0 %v2820
    %3127 = vmatpush.msra.mxu0 %v2813
    %3128 = vmatpush.msra.mxu0 %v2806
    %3129 = vmatpush.msra.mxu0 %v2799
    %3130 = vmatmul.f32.gmra.mxu0 %v2973
    %v3131 = vpop.f32.mrf.mxu0
    %v3132 = vadd.f32 %v2980, %v3131
    %3133 = vdwg.mxu0
    %3134 = vmatpush.msra.mxu0 0.0
    %3135 = vmatpush.msra.mxu0 0.0
    %3136 = vmatpush.msra.mxu0 0.0
    %3137 = vmatpush.msra.mxu0 0.0
    %3138 = vmatpush.msra.mxu0 0.0
    %3139 = vmatpush.msra.mxu0 0.0
    %3140 = vmatpush.msra.mxu0 0.0
    %3141 = vmatpush.msra.mxu0 %v2967
    %3142 = vmatpush.msra.mxu0 %v2960
    %3143 = vmatpush.msra.mxu0 %v2953
    %3144 = vmatpush.msra.mxu0 %v2946
    %3145 = vmatpush.msra.mxu0 %v2939
    %3146 = vmatpush.msra.mxu0 %v2932
    %3147 = vmatpush.msra.mxu0 %v2925
    %3148 = vmatpush.msra.mxu0 %v2918
    %3149 = vmatpush.msra.mxu0 %v2911
    %3150 = vmatmul.f32.gmra.mxu0 %v2992
    %v3151 = vpop.f32.mrf.mxu0
    %v3152 = vadd.f32 %v3132, %v3151
    %3153 = vdwg.mxu0
    %3154 = vmatpush.msra.mxu0 %v2905
    %3155 = vmatpush.msra.mxu0 %v2898
    %3156 = vmatpush.msra.mxu0 %v2891
    %3157 = vmatpush.msra.mxu0 %v2884
    %3158 = vmatpush.msra.mxu0 %v2877
    %3159 = vmatpush.msra.mxu0 %v2870
    %3160 = vmatpush.msra.mxu0 %v2863
    %3161 = vmatpush.msra.mxu0 %v2856
    %3162 = vmatpush.msra.mxu0 %v2849
    %3163 = vmatpush.msra.mxu0 %v2842
    %3164 = vmatpush.msra.mxu0 %v2835
    %3165 = vmatpush.msra.mxu0 %v2828
    %3166 = vmatpush.msra.mxu0 %v2821
    %3167 = vmatpush.msra.mxu0 %v2814
    %3168 = vmatpush.msra.mxu0 %v2807
    %3169 = vmatpush.msra.mxu0 %v2800
    %3170 = vmatmul.f32.gmra.mxu0 %v2973
    %v3171 = vpop.f32.mrf.mxu0
    %v3172 = vadd.f32 %v2981, %v3171
    %3173 = vdwg.mxu0
    %3174 = vmatpush.msra.mxu0 0.0
    %3175 = vmatpush.msra.mxu0 0.0
    %3176 = vmatpush.msra.mxu0 0.0
    %3177 = vmatpush.msra.mxu0 0.0
    %3178 = vmatpush.msra.mxu0 0.0
    %3179 = vmatpush.msra.mxu0 0.0
    %3180 = vmatpush.msra.mxu0 0.0
    %3181 = vmatpush.msra.mxu0 %v2968
    %3182 = vmatpush.msra.mxu0 %v2961
    %3183 = vmatpush.msra.mxu0 %v2954
    %3184 = vmatpush.msra.mxu0 %v2947
    %3185 = vmatpush.msra.mxu0 %v2940
    %3186 = vmatpush.msra.mxu0 %v2933
    %3187 = vmatpush.msra.mxu0 %v2926
    %3188 = vmatpush.msra.mxu0 %v2919
    %3189 = vmatpush.msra.mxu0 %v2912
    %3190 = vmatmul.f32.gmra.mxu0 %v2992
    %v3191 = vpop.f32.mrf.mxu0
    %v3192 = vadd.f32 %v3172, %v3191
    %3193 = vdwg.mxu0
    %3194 = vmatpush.msra.mxu0 %v2906
    %3195 = vmatpush.msra.mxu0 %v2899
    %3196 = vmatpush.msra.mxu0 %v2892
    %3197 = vmatpush.msra.mxu0 %v2885
    %3198 = vmatpush.msra.mxu0 %v2878
    %3199 = vmatpush.msra.mxu0 %v2871
    %3200 = vmatpush.msra.mxu0 %v2864
    %3201 = vmatpush.msra.mxu0 %v2857
    %3202 = vmatpush.msra.mxu0 %v2850
    %3203 = vmatpush.msra.mxu0 %v2843
    %3204 = vmatpush.msra.mxu0 %v2836
    %3205 = vmatpush.msra.mxu0 %v2829
    %3206 = vmatpush.msra.mxu0 %v2822
    %3207 = vmatpush.msra.mxu0 %v2815
    %3208 = vmatpush.msra.mxu0 %v2808
    %3209 = vmatpush.msra.mxu0 %v2801
    %3210 = vmatmul.f32.gmra.mxu0 %v2973
    %v3211 = vpop.f32.mrf.mxu0
    %v3212 = vadd.f32 %v2982, %v3211
    %3213 = vdwg.mxu0
    %3214 = vmatpush.msra.mxu0 0.0
    %3215 = vmatpush.msra.mxu0 0.0
    %3216 = vmatpush.msra.mxu0 0.0
    %3217 = vmatpush.msra.mxu0 0.0
    %3218 = vmatpush.msra.mxu0 0.0
    %3219 = vmatpush.msra.mxu0 0.0
    %3220 = vmatpush.msra.mxu0 0.0
    %3221 = vmatpush.msra.mxu0 %v2969
    %3222 = vmatpush.msra.mxu0 %v2962
    %3223 = vmatpush.msra.mxu0 %v2955
    %3224 = vmatpush.msra.mxu0 %v2948
    %3225 = vmatpush.msra.mxu0 %v2941
    %3226 = vmatpush.msra.mxu0 %v2934
    %3227 = vmatpush.msra.mxu0 %v2927
    %3228 = vmatpush.msra.mxu0 %v2920
    %3229 = vmatpush.msra.mxu0 %v2913
    %3230 = vmatmul.f32.gmra.mxu0 %v2992
    %v3231 = vpop.f32.mrf.mxu0
    %v3232 = vadd.f32 %v3212, %v3231
    %3233 = vdwg.mxu0
    %3234 = vmatpush.msra.mxu0 %v2907
    %3235 = vmatpush.msra.mxu0 %v2900
    %3236 = vmatpush.msra.mxu0 %v2893
    %3237 = vmatpush.msra.mxu0 %v2886
    %3238 = vmatpush.msra.mxu0 %v2879
    %3239 = vmatpush.msra.mxu0 %v2872
    %3240 = vmatpush.msra.mxu0 %v2865
    %3241 = vmatpush.msra.mxu0 %v2858
    %3242 = vmatpush.msra.mxu0 %v2851
    %3243 = vmatpush.msra.mxu0 %v2844
    %3244 = vmatpush.msra.mxu0 %v2837
    %3245 = vmatpush.msra.mxu0 %v2830
    %3246 = vmatpush.msra.mxu0 %v2823
    %3247 = vmatpush.msra.mxu0 %v2816
    %3248 = vmatpush.msra.mxu0 %v2809
    %3249 = vmatpush.msra.mxu0 %v2802
    %3250 = vmatmul.f32.gmra.mxu0 %v2973
    %v3251 = vpop.f32.mrf.mxu0
    %v3252 = vadd.f32 %v2983, %v3251
    %3253 = vdwg.mxu0
    %3254 = vmatpush.msra.mxu0 0.0
    %3255 = vmatpush.msra.mxu0 0.0
    %3256 = vmatpush.msra.mxu0 0.0
    %3257 = vmatpush.msra.mxu0 0.0
    %3258 = vmatpush.msra.mxu0 0.0
    %3259 = vmatpush.msra.mxu0 0.0
    %3260 = vmatpush.msra.mxu0 0.0
    %3261 = vmatpush.msra.mxu0 %v2970
    %3262 = vmatpush.msra.mxu0 %v2963
    %3263 = vmatpush.msra.mxu0 %v2956
    %3264 = vmatpush.msra.mxu0 %v2949
    %3265 = vmatpush.msra.mxu0 %v2942
    %3266 = vmatpush.msra.mxu0 %v2935
    %3267 = vmatpush.msra.mxu0 %v2928
    %3268 = vmatpush.msra.mxu0 %v2921
    %3269 = vmatpush.msra.mxu0 %v2914
    %3270 = vmatmul.f32.gmra.mxu0 %v2992
    %v3271 = vpop.f32.mrf.mxu0
    %v3272 = vadd.f32 %v3252, %v3271
    %3273 = vdwg.mxu0
    %v3274 = vmax.f32 %v3032, 0.0
    %v3275 = vmax.f32 %v3072, 0.0
    %v3276 = vmax.f32 %v3112, 0.0
    %v3277 = vmax.f32 %v3152, 0.0
    %v3278 = vmax.f32 %v3192, 0.0
    %v3279 = vmax.f32 %v3232, 0.0
    %v3280 = vmax.f32 %v3272, 0.0
    %v3281 = vld [vmem:[#allocation32] sm:$0x7f]
    %v3282 = vld [vmem:[#allocation34] sm:$0x7f]
    %vm3283 = vcmask 1040384
    %v3284 = vsel %vm3283, %v3274, 0.0
    %v3285 = vsel %vm3283, %v3275, 0.0
    %v3286 = vadd.f32 %v3284, %v3285
    %v3287 = vsel %vm3283, %v3276, 0.0
    %v3288 = vadd.f32 %v3286, %v3287
    %v3289 = vsel %vm3283, %v3277, 0.0
    %v3290 = vadd.f32 %v3288, %v3289
    %v3291 = vsel %vm3283, %v3278, 0.0
    %v3292 = vadd.f32 %v3290, %v3291
    %v3293 = vsel %vm3283, %v3279, 0.0
    %v3294 = vadd.f32 %v3292, %v3293
    %vm3295 = vcmask 253952
    %v3296 = vsel %vm3295, %v3280, 0.0
    %v3297 = vadd.f32 %v3294, %v3296
    %3298 = vadd.xlane.f32.xlu0 %v3297
    %v3299 = vpop.xlane.xlu0 %3298
    %v3300 = vrcp.pop 800.0
    %v3301 = vmul.f32 800.0, %v3300
    %v3302 = vsub.f32 1.0, %v3301
    %v3303 = vmul.f32 %v3300, %v3302
    %v3304 = vadd.f32 %v3300, %v3303
    %vm3305 = vweird.f32 %v3300
    %v3306 = vsel %vm3305, %v3300, %v3304
    %v3307 = vmul.f32 %v3299, %v3306
    %v3308 = vsub.f32 %v3274, %v3307
    %v3309 = vsub.f32 %v3275, %v3307
    %v3310 = vsub.f32 %v3276, %v3307
    %v3311 = vsub.f32 %v3277, %v3307
    %v3312 = vsub.f32 %v3278, %v3307
    %v3313 = vsub.f32 %v3279, %v3307
    %v3314 = vsub.f32 %v3280, %v3307
    %v3315 = vmul.f32 %v3308, %v3308
    %v3316 = vmul.f32 %v3309, %v3309
    %v3317 = vmul.f32 %v3310, %v3310
    %v3318 = vmul.f32 %v3311, %v3311
    %v3319 = vmul.f32 %v3312, %v3312
    %v3320 = vmul.f32 %v3313, %v3313
    %v3321 = vmul.f32 %v3314, %v3314
    %v3322 = vsel %vm3283, %v3315, 0.0
    %v3323 = vsel %vm3283, %v3316, 0.0
    %v3324 = vadd.f32 %v3322, %v3323
    %v3325 = vsel %vm3283, %v3317, 0.0
    %v3326 = vadd.f32 %v3324, %v3325
    %v3327 = vsel %vm3283, %v3318, 0.0
    %v3328 = vadd.f32 %v3326, %v3327
    %v3329 = vsel %vm3283, %v3319, 0.0
    %v3330 = vadd.f32 %v3328, %v3329
    %v3331 = vsel %vm3283, %v3320, 0.0
    %v3332 = vadd.f32 %v3330, %v3331
    %v3333 = vsel %vm3295, %v3321, 0.0
    %v3334 = vadd.f32 %v3332, %v3333
    %3335 = vadd.xlane.f32.xlu0 %v3334
    %v3336 = vpop.xlane.xlu0 %3335
    %v3337 = vmul.f32 %v3336, %v3306
    %v3338 = vadd.f32 %v3337, 1e-05
    %v3339 = vrsqrt.pop %v3338
    %v3340 = vmul.f32 %v3339, %v3338
    %v3341 = vmul.f32 %v3340, %v3339
    %v3342 = vmul.f32 0.5, %v3341
    %v3343 = vsub.f32 1.5, %v3342
    %v3344 = vmul.f32 %v3339, %v3343
    %vm3345 = vweird.f32 %v3338
    %vm3346 = vweird.f32 %v3339
    %vm3347 = vmor %vm3345, %vm3346
    %v3348 = vsel %vm3347, %v3339, %v3344
    %v3349 = vmul.f32 %v3308, %v3348
    %v3350 = vmul.f32 %v3309, %v3348
    %v3351 = vmul.f32 %v3310, %v3348
    %v3352 = vmul.f32 %v3311, %v3348
    %v3353 = vmul.f32 %v3312, %v3348
    %v3354 = vmul.f32 %v3313, %v3348
    %v3355 = vmul.f32 %v3314, %v3348
    %v3357 = vperm.slane %v3281, 0
    %v3358 = vperm.slane %v3281, 1
    %v3359 = vperm.slane %v3281, 2
    %v3360 = vperm.slane %v3281, 3
    %v3361 = vperm.slane %v3281, 4
    %v3362 = vperm.slane %v3281, 5
    %v3363 = vperm.slane %v3281, 6
    %v3371 = vmul.f32 %v3349, %v3357
    %v3372 = vmul.f32 %v3350, %v3358
    %v3373 = vmul.f32 %v3351, %v3359
    %v3374 = vmul.f32 %v3352, %v3360
    %v3375 = vmul.f32 %v3353, %v3361
    %v3376 = vmul.f32 %v3354, %v3362
    %v3377 = vmul.f32 %v3355, %v3363
    %v3379 = vperm.slane %v3282, 0
    %v3380 = vperm.slane %v3282, 1
    %v3381 = vperm.slane %v3282, 2
    %v3382 = vperm.slane %v3282, 3
    %v3383 = vperm.slane %v3282, 4
    %v3384 = vperm.slane %v3282, 5
    %v3385 = vperm.slane %v3282, 6
    %v3393 = vadd.f32 %v3371, %v3379
    %v3394 = vadd.f32 %v3372, %v3380
    %v3395 = vadd.f32 %v3373, %v3381
    %v3396 = vadd.f32 %v3374, %v3382
    %v3397 = vadd.f32 %v3375, %v3383
    %v3398 = vadd.f32 %v3376, %v3384
    %v3399 = vadd.f32 %v3377, %v3385
    %v3400 = vld [vmem:[#allocation35] sm:$0xff]
    %v3401 = vld [vmem:[#allocation35 + $0x8] sm:$0xff]
    %v3402 = vld [vmem:[#allocation35 + $0x10] sm:$0xff]
    %v3403 = vld [vmem:[#allocation35 + $0x18] sm:$0xff]
    %v3404 = vld [vmem:[#allocation35 + $0x20] sm:$0xff]
    %v3405 = vld [vmem:[#allocation35 + $0x28] sm:$0xff]
    %v3406 = vld [vmem:[#allocation35 + $0x30] sm:$0xff]
    %v3407 = vld [vmem:[#allocation35 + $0x38] sm:$0xff]
    %v3408 = vld [vmem:[#allocation35 + $0x40] sm:$0xff]
    %v3409 = vld [vmem:[#allocation35 + $0x48] sm:$0xff]
    %v3410 = vld [vmem:[#allocation35 + $0x50] sm:$0xff]
    %v3411 = vld [vmem:[#allocation35 + $0x58] sm:$0xff]
    %v3412 = vld [vmem:[#allocation35 + $0x60] sm:$0xff]
    %v3413 = vld [vmem:[#allocation35 + $0x68] sm:$0xff]
    %v3414 = vld [vmem:[#allocation35 + $0x70] sm:$0xff]
    %v3415 = vld [vmem:[#allocation35 + $0x78] sm:$0xff]
    %v3416 = vld [vmem:[#allocation35 + $0x80] sm:$0xff]
    %v3417 = vld [vmem:[#allocation35 + $0x88] sm:$0xff]
    %v3418 = vld [vmem:[#allocation35 + $0x90] sm:$0xff]
    %v3419 = vld [vmem:[#allocation35 + $0x98] sm:$0xff]
    %v3420 = vld [vmem:[#allocation35 + $0xa0] sm:$0xff]
    %v3421 = vld [vmem:[#allocation35 + $0xa8] sm:$0xff]
    %v3422 = vld [vmem:[#allocation35 + $0xb0] sm:$0xff]
    %v3423 = vld [vmem:[#allocation35 + $0xb8] sm:$0xff]
    %v3424 = vld [vmem:[#allocation35 + $0xc0] sm:$0xff]
    %v3425 = vld [vmem:[#allocation35 + $0xc8] sm:$0xff]
    %v3426 = vld [vmem:[#allocation35 + $0xd0] sm:$0xff]
    %v3427 = vld [vmem:[#allocation35 + $0xd8] sm:$0xff]
    %v3428 = vld [vmem:[#allocation35 + $0xe0] sm:$0xff]
    %v3429 = vld [vmem:[#allocation35 + $0xe8] sm:$0xff]
    %v3430 = vld [vmem:[#allocation35 + $0xf0] sm:$0xff]
    %v3431 = vld [vmem:[#allocation35 + $0xf8] sm:$0xff]
    %v3432 = vld [vmem:[#allocation35 + $0x100] sm:$0xff]
    %v3433 = vld [vmem:[#allocation35 + $0x108] sm:$0xff]
    %v3434 = vld [vmem:[#allocation35 + $0x110] sm:$0xff]
    %v3435 = vld [vmem:[#allocation35 + $0x118] sm:$0xff]
    %v3436 = vld [vmem:[#allocation35 + $0x120] sm:$0xff]
    %v3437 = vld [vmem:[#allocation35 + $0x128] sm:$0xff]
    %v3438 = vld [vmem:[#allocation35 + $0x130] sm:$0xff]
    %v3439 = vld [vmem:[#allocation35 + $0x138] sm:$0xff]
    %v3440 = vld [vmem:[#allocation35 + $0x140] sm:$0xff]
    %v3441 = vld [vmem:[#allocation35 + $0x148] sm:$0xff]
    %v3442 = vld [vmem:[#allocation35 + $0x150] sm:$0xff]
    %v3443 = vld [vmem:[#allocation35 + $0x158] sm:$0xff]
    %v3444 = vld [vmem:[#allocation35 + $0x160] sm:$0xff]
    %v3445 = vld [vmem:[#allocation35 + $0x168] sm:$0xff]
    %v3446 = vld [vmem:[#allocation35 + $0x170] sm:$0xff]
    %v3447 = vld [vmem:[#allocation35 + $0x178] sm:$0xff]
    %v3448 = vld [vmem:[#allocation35 + $0x180] sm:$0xff]
    %v3449 = vld [vmem:[#allocation35 + $0x188] sm:$0xff]
    %v3450 = vld [vmem:[#allocation35 + $0x190] sm:$0xff]
    %v3451 = vld [vmem:[#allocation35 + $0x198] sm:$0xff]
    %v3452 = vld [vmem:[#allocation35 + $0x1a0] sm:$0xff]
    %v3453 = vld [vmem:[#allocation35 + $0x1a8] sm:$0xff]
    %v3454 = vld [vmem:[#allocation35 + $0x1b0] sm:$0xff]
    %v3455 = vld [vmem:[#allocation35 + $0x1b8] sm:$0xff]
    %v3456 = vld [vmem:[#allocation35 + $0x1c0] sm:$0xff]
    %v3457 = vld [vmem:[#allocation35 + $0x1c8] sm:$0xff]
    %v3458 = vld [vmem:[#allocation35 + $0x1d0] sm:$0xff]
    %v3459 = vld [vmem:[#allocation35 + $0x1d8] sm:$0xff]
    %v3460 = vld [vmem:[#allocation35 + $0x1e0] sm:$0xff]
    %v3461 = vld [vmem:[#allocation35 + $0x1e8] sm:$0xff]
    %v3462 = vld [vmem:[#allocation35 + $0x1f0] sm:$0xff]
    %v3463 = vld [vmem:[#allocation35 + $0x1f8] sm:$0xff]
    %v3464 = vld [vmem:[#allocation35 + $0x200] sm:$0xff]
    %v3465 = vld [vmem:[#allocation35 + $0x208] sm:$0xff]
    %v3466 = vld [vmem:[#allocation35 + $0x210] sm:$0xff]
    %v3467 = vld [vmem:[#allocation35 + $0x218] sm:$0xff]
    %v3468 = vld [vmem:[#allocation35 + $0x220] sm:$0xff]
    %v3469 = vld [vmem:[#allocation35 + $0x228] sm:$0xff]
    %v3470 = vld [vmem:[#allocation35 + $0x230] sm:$0xff]
    %v3471 = vld [vmem:[#allocation35 + $0x238] sm:$0xff]
    %v3472 = vld [vmem:[#allocation35 + $0x240] sm:$0xff]
    %v3473 = vld [vmem:[#allocation35 + $0x248] sm:$0xff]
    %v3474 = vld [vmem:[#allocation35 + $0x250] sm:$0xff]
    %v3475 = vld [vmem:[#allocation35 + $0x258] sm:$0xff]
    %v3476 = vld [vmem:[#allocation35 + $0x260] sm:$0xff]
    %v3477 = vld [vmem:[#allocation35 + $0x268] sm:$0xff]
    %v3478 = vld [vmem:[#allocation35 + $0x270] sm:$0xff]
    %v3479 = vld [vmem:[#allocation35 + $0x278] sm:$0xff]
    %v3480 = vld [vmem:[#allocation35 + $0x280] sm:$0xff]
    %v3481 = vld [vmem:[#allocation35 + $0x288] sm:$0xff]
    %v3482 = vld [vmem:[#allocation35 + $0x290] sm:$0xff]
    %v3483 = vld [vmem:[#allocation35 + $0x298] sm:$0xff]
    %v3484 = vld [vmem:[#allocation35 + $0x2a0] sm:$0xff]
    %v3485 = vld [vmem:[#allocation35 + $0x2a8] sm:$0xff]
    %v3486 = vld [vmem:[#allocation35 + $0x2b0] sm:$0xff]
    %v3487 = vld [vmem:[#allocation35 + $0x2b8] sm:$0xff]
    %v3488 = vld [vmem:[#allocation35 + $0x2c0] sm:$0xff]
    %v3489 = vld [vmem:[#allocation35 + $0x2c8] sm:$0xff]
    %v3490 = vld [vmem:[#allocation35 + $0x2d0] sm:$0xff]
    %v3491 = vld [vmem:[#allocation35 + $0x2d8] sm:$0xff]
    %v3492 = vld [vmem:[#allocation35 + $0x2e0] sm:$0xff]
    %v3493 = vld [vmem:[#allocation35 + $0x2e8] sm:$0xff]
    %v3494 = vld [vmem:[#allocation35 + $0x2f0] sm:$0xff]
    %v3495 = vld [vmem:[#allocation35 + $0x2f8] sm:$0xff]
    %v3496 = vld [vmem:[#allocation35 + $0x300] sm:$0xff]
    %v3497 = vld [vmem:[#allocation35 + $0x308] sm:$0xff]
    %v3498 = vld [vmem:[#allocation35 + $0x310] sm:$0xff]
    %v3499 = vld [vmem:[#allocation35 + $0x318] sm:$0xff]
    %v3500 = vld [vmem:[#allocation35 + $0x320] sm:$0xff]
    %v3501 = vld [vmem:[#allocation35 + $0x328] sm:$0xff]
    %v3502 = vld [vmem:[#allocation35 + $0x330] sm:$0xff]
    %v3503 = vld [vmem:[#allocation35 + $0x338] sm:$0xff]
    %v3504 = vld [vmem:[#allocation35 + $0x340] sm:$0xff]
    %v3505 = vld [vmem:[#allocation35 + $0x348] sm:$0xff]
    %v3506 = vld [vmem:[#allocation35 + $0x350] sm:$0xff]
    %v3507 = vld [vmem:[#allocation35 + $0x358] sm:$0xff]
    %v3508 = vld [vmem:[#allocation35 + $0x360] sm:$0xff]
    %v3509 = vld [vmem:[#allocation35 + $0x368] sm:$0xff]
    %v3510 = vld [vmem:[#allocation35 + $0x370] sm:$0xff]
    %v3511 = vld [vmem:[#allocation35 + $0x378] sm:$0xff]
    %v3512 = vld [vmem:[#allocation35 + $0x380] sm:$0xff]
    %v3513 = vld [vmem:[#allocation35 + $0x388] sm:$0xff]
    %v3514 = vld [vmem:[#allocation35 + $0x390] sm:$0xff]
    %v3515 = vld [vmem:[#allocation35 + $0x398] sm:$0xff]
    %v3516 = vld [vmem:[#allocation35 + $0x3a0] sm:$0xff]
    %v3517 = vld [vmem:[#allocation35 + $0x3a8] sm:$0xff]
    %v3518 = vld [vmem:[#allocation35 + $0x3b0] sm:$0xff]
    %v3519 = vld [vmem:[#allocation35 + $0x3b8] sm:$0xff]
    %v3520 = vld [vmem:[#allocation35 + $0x3c0] sm:$0xff]
    %v3521 = vld [vmem:[#allocation35 + $0x3c8] sm:$0xff]
    %v3522 = vld [vmem:[#allocation35 + $0x3d0] sm:$0xff]
    %v3523 = vld [vmem:[#allocation35 + $0x3d8] sm:$0xff]
    %v3524 = vld [vmem:[#allocation35 + $0x3e0] sm:$0xff]
    %v3525 = vld [vmem:[#allocation35 + $0x3e8] sm:$0xff]
    %v3526 = vld [vmem:[#allocation35 + $0x3f0] sm:$0xff]
    %v3527 = vld [vmem:[#allocation35 + $0x3f8] sm:$0xff]
    %v3528 = vld [vmem:[#allocation35 + $0x400] sm:$0xff]
    %v3529 = vld [vmem:[#allocation35 + $0x408] sm:$0xff]
    %v3530 = vld [vmem:[#allocation35 + $0x410] sm:$0xff]
    %v3531 = vld [vmem:[#allocation35 + $0x418] sm:$0xff]
    %v3532 = vld [vmem:[#allocation35 + $0x420] sm:$0xff]
    %v3533 = vld [vmem:[#allocation35 + $0x428] sm:$0xff]
    %v3534 = vld [vmem:[#allocation35 + $0x430] sm:$0xff]
    %v3535 = vld [vmem:[#allocation35 + $0x438] sm:$0xff]
    %v3536 = vld [vmem:[#allocation35 + $0x440] sm:$0xff]
    %v3537 = vld [vmem:[#allocation35 + $0x448] sm:$0xff]
    %v3538 = vld [vmem:[#allocation35 + $0x450] sm:$0xff]
    %v3539 = vld [vmem:[#allocation35 + $0x458] sm:$0xff]
    %v3540 = vld [vmem:[#allocation35 + $0x460] sm:$0xff]
    %v3541 = vld [vmem:[#allocation35 + $0x468] sm:$0xff]
    %v3542 = vld [vmem:[#allocation35 + $0x470] sm:$0xff]
    %v3543 = vld [vmem:[#allocation35 + $0x478] sm:$0xff]
    %v3544 = vld [vmem:[#allocation35 + $0x480] sm:$0xff]
    %v3545 = vld [vmem:[#allocation35 + $0x488] sm:$0xff]
    %v3546 = vld [vmem:[#allocation35 + $0x490] sm:$0xff]
    %v3547 = vld [vmem:[#allocation35 + $0x498] sm:$0xff]
    %v3548 = vld [vmem:[#allocation35 + $0x4a0] sm:$0xff]
    %v3549 = vld [vmem:[#allocation35 + $0x4a8] sm:$0xff]
    %v3550 = vld [vmem:[#allocation35 + $0x4b0] sm:$0xff]
    %v3551 = vld [vmem:[#allocation35 + $0x4b8] sm:$0xff]
    %v3552 = vld [vmem:[#allocation35 + $0x4c0] sm:$0xff]
    %v3553 = vld [vmem:[#allocation35 + $0x4c8] sm:$0xff]
    %v3554 = vld [vmem:[#allocation35 + $0x4d0] sm:$0xff]
    %v3555 = vld [vmem:[#allocation35 + $0x4d8] sm:$0xff]
    %v3556 = vld [vmem:[#allocation35 + $0x4e0] sm:$0xff]
    %v3557 = vld [vmem:[#allocation35 + $0x4e8] sm:$0xff]
    %v3558 = vld [vmem:[#allocation35 + $0x4f0] sm:$0xff]
    %v3559 = vld [vmem:[#allocation35 + $0x4f8] sm:$0xff]
    %v3560 = vld [vmem:[#allocation35 + $0x500] sm:$0xff]
    %v3561 = vld [vmem:[#allocation35 + $0x508] sm:$0xff]
    %v3562 = vld [vmem:[#allocation35 + $0x510] sm:$0xff]
    %v3563 = vld [vmem:[#allocation35 + $0x518] sm:$0xff]
    %v3564 = vld [vmem:[#allocation35 + $0x520] sm:$0xff]
    %v3565 = vld [vmem:[#allocation35 + $0x528] sm:$0xff]
    %v3566 = vld [vmem:[#allocation35 + $0x530] sm:$0xff]
    %v3567 = vld [vmem:[#allocation35 + $0x538] sm:$0xff]
    %v3568 = vld [vmem:[#allocation35 + $0x540] sm:$0xff]
    %v3569 = vld [vmem:[#allocation35 + $0x548] sm:$0xff]
    %v3570 = vld [vmem:[#allocation35 + $0x550] sm:$0xff]
    %v3571 = vld [vmem:[#allocation35 + $0x558] sm:$0xff]
    %v3572 = vld [vmem:[#allocation35 + $0x560] sm:$0xff]
    %v3573 = vld [vmem:[#allocation35 + $0x568] sm:$0xff]
    %v3574 = vld [vmem:[#allocation35 + $0x570] sm:$0xff]
    %v3575 = vld [vmem:[#allocation35 + $0x578] sm:$0xff]
    %v3576 = vld [vmem:[#allocation35 + $0x580] sm:$0xff]
    %v3577 = vld [vmem:[#allocation35 + $0x588] sm:$0xff]
    %v3578 = vld [vmem:[#allocation35 + $0x590] sm:$0xff]
    %v3579 = vld [vmem:[#allocation35 + $0x598] sm:$0xff]
    %v3580 = vld [vmem:[#allocation35 + $0x5a0] sm:$0xff]
    %v3581 = vld [vmem:[#allocation35 + $0x5a8] sm:$0xff]
    %v3582 = vld [vmem:[#allocation35 + $0x5b0] sm:$0xff]
    %v3583 = vld [vmem:[#allocation35 + $0x5b8] sm:$0xff]
    %v3584 = vld [vmem:[#allocation35 + $0x5c0] sm:$0xff]
    %v3585 = vld [vmem:[#allocation35 + $0x5c8] sm:$0xff]
    %v3586 = vld [vmem:[#allocation35 + $0x5d0] sm:$0xff]
    %v3587 = vld [vmem:[#allocation35 + $0x5d8] sm:$0xff]
    %v3588 = vld [vmem:[#allocation35 + $0x5e0] sm:$0xff]
    %v3589 = vld [vmem:[#allocation35 + $0x5e8] sm:$0xff]
    %v3590 = vld [vmem:[#allocation35 + $0x5f0] sm:$0xff]
    %v3591 = vld [vmem:[#allocation35 + $0x5f8] sm:$0xff]
    %v3592 = vld [vmem:[#allocation35 + $0x600] sm:$0xff]
    %v3593 = vld [vmem:[#allocation35 + $0x608] sm:$0xff]
    %v3594 = vld [vmem:[#allocation35 + $0x610] sm:$0xff]
    %v3595 = vld [vmem:[#allocation35 + $0x618] sm:$0xff]
    %v3596 = vld [vmem:[#allocation35 + $0x620] sm:$0xff]
    %v3597 = vld [vmem:[#allocation35 + $0x628] sm:$0xff]
    %v3598 = vld [vmem:[#allocation35 + $0x630] sm:$0xff]
    %v3599 = vld [vmem:[#allocation35 + $0x638] sm:$0xff]
    %v3600 = vld [vmem:[#allocation35 + $0x640] sm:$0xff]
    %v3601 = vld [vmem:[#allocation35 + $0x648] sm:$0xff]
    %v3602 = vld [vmem:[#allocation35 + $0x650] sm:$0xff]
    %v3603 = vld [vmem:[#allocation35 + $0x658] sm:$0xff]
    %v3604 = vld [vmem:[#allocation35 + $0x660] sm:$0xff]
    %v3605 = vld [vmem:[#allocation35 + $0x668] sm:$0xff]
    %v3606 = vld [vmem:[#allocation35 + $0x670] sm:$0xff]
    %v3607 = vld [vmem:[#allocation35 + $0x678] sm:$0xff]
    %v3608 = vld [vmem:[#allocation35 + $0x680] sm:$0xff]
    %v3609 = vld [vmem:[#allocation35 + $0x688] sm:$0xff]
    %v3610 = vld [vmem:[#allocation35 + $0x690] sm:$0xff]
    %v3611 = vld [vmem:[#allocation35 + $0x698] sm:$0xff]
    %v3612 = vld [vmem:[#allocation35 + $0x6a0] sm:$0xff]
    %v3613 = vld [vmem:[#allocation35 + $0x6a8] sm:$0xff]
    %v3614 = vld [vmem:[#allocation35 + $0x6b0] sm:$0xff]
    %v3615 = vld [vmem:[#allocation35 + $0x6b8] sm:$0xff]
    %v3616 = vld [vmem:[#allocation35 + $0x6c0] sm:$0xff]
    %v3617 = vld [vmem:[#allocation35 + $0x6c8] sm:$0xff]
    %v3618 = vld [vmem:[#allocation35 + $0x6d0] sm:$0xff]
    %v3619 = vld [vmem:[#allocation35 + $0x6d8] sm:$0xff]
    %v3620 = vld [vmem:[#allocation35 + $0x6e0] sm:$0xff]
    %v3621 = vld [vmem:[#allocation35 + $0x6e8] sm:$0xff]
    %v3622 = vld [vmem:[#allocation35 + $0x6f0] sm:$0xff]
    %v3623 = vld [vmem:[#allocation35 + $0x6f8] sm:$0xff]
    %v3624 = vld [vmem:[#allocation35 + $0x700] sm:$0xff]
    %v3625 = vld [vmem:[#allocation35 + $0x708] sm:$0xff]
    %v3626 = vld [vmem:[#allocation35 + $0x710] sm:$0xff]
    %v3627 = vld [vmem:[#allocation35 + $0x718] sm:$0xff]
    %v3628 = vld [vmem:[#allocation35 + $0x720] sm:$0xff]
    %v3629 = vld [vmem:[#allocation35 + $0x728] sm:$0xff]
    %v3630 = vld [vmem:[#allocation35 + $0x730] sm:$0xff]
    %v3631 = vld [vmem:[#allocation35 + $0x738] sm:$0xff]
    %v3632 = vld [vmem:[#allocation35 + $0x740] sm:$0xff]
    %v3633 = vld [vmem:[#allocation35 + $0x748] sm:$0xff]
    %v3634 = vld [vmem:[#allocation35 + $0x750] sm:$0xff]
    %v3635 = vld [vmem:[#allocation35 + $0x758] sm:$0xff]
    %v3636 = vld [vmem:[#allocation35 + $0x760] sm:$0xff]
    %v3637 = vld [vmem:[#allocation35 + $0x768] sm:$0xff]
    %v3638 = vld [vmem:[#allocation35 + $0x770] sm:$0xff]
    %v3639 = vld [vmem:[#allocation35 + $0x778] sm:$0xff]
    %v3640 = vld [vmem:[#allocation35 + $0x780] sm:$0xff]
    %v3641 = vld [vmem:[#allocation35 + $0x788] sm:$0xff]
    %v3642 = vld [vmem:[#allocation35 + $0x790] sm:$0xff]
    %v3643 = vld [vmem:[#allocation35 + $0x798] sm:$0xff]
    %v3644 = vld [vmem:[#allocation35 + $0x7a0] sm:$0xff]
    %v3645 = vld [vmem:[#allocation35 + $0x7a8] sm:$0xff]
    %v3646 = vld [vmem:[#allocation35 + $0x7b0] sm:$0xff]
    %v3647 = vld [vmem:[#allocation35 + $0x7b8] sm:$0xff]
    %v3648 = vld [vmem:[#allocation35 + $0x7c0] sm:$0xff]
    %v3649 = vld [vmem:[#allocation35 + $0x7c8] sm:$0xff]
    %v3650 = vld [vmem:[#allocation35 + $0x7d0] sm:$0xff]
    %v3651 = vld [vmem:[#allocation35 + $0x7d8] sm:$0xff]
    %v3652 = vld [vmem:[#allocation35 + $0x7e0] sm:$0xff]
    %v3653 = vld [vmem:[#allocation35 + $0x7e8] sm:$0xff]
    %v3654 = vld [vmem:[#allocation35 + $0x7f0] sm:$0xff]
    %v3655 = vld [vmem:[#allocation35 + $0x7f8] sm:$0xff]
    %v3656 = vld [vmem:[#allocation35 + $0x800] sm:$0xff]
    %v3657 = vld [vmem:[#allocation35 + $0x808] sm:$0xff]
    %v3658 = vld [vmem:[#allocation35 + $0x810] sm:$0xff]
    %v3659 = vld [vmem:[#allocation35 + $0x818] sm:$0xff]
    %v3660 = vld [vmem:[#allocation35 + $0x820] sm:$0xff]
    %v3661 = vld [vmem:[#allocation35 + $0x828] sm:$0xff]
    %v3662 = vld [vmem:[#allocation35 + $0x830] sm:$0xff]
    %v3663 = vld [vmem:[#allocation35 + $0x838] sm:$0xff]
    %v3664 = vld [vmem:[#allocation35 + $0x840] sm:$0xff]
    %v3665 = vld [vmem:[#allocation35 + $0x848] sm:$0xff]
    %v3666 = vld [vmem:[#allocation35 + $0x850] sm:$0xff]
    %v3667 = vld [vmem:[#allocation35 + $0x858] sm:$0xff]
    %v3668 = vld [vmem:[#allocation35 + $0x860] sm:$0xff]
    %v3669 = vld [vmem:[#allocation35 + $0x868] sm:$0xff]
    %v3670 = vld [vmem:[#allocation35 + $0x870] sm:$0xff]
    %v3671 = vld [vmem:[#allocation35 + $0x878] sm:$0xff]
    %v3672 = vld [vmem:[#allocation35 + $0x880] sm:$0xff]
    %v3673 = vld [vmem:[#allocation35 + $0x888] sm:$0xff]
    %v3674 = vld [vmem:[#allocation35 + $0x890] sm:$0xff]
    %v3675 = vld [vmem:[#allocation35 + $0x898] sm:$0xff]
    %v3676 = vld [vmem:[#allocation35 + $0x8a0] sm:$0xff]
    %v3677 = vld [vmem:[#allocation35 + $0x8a8] sm:$0xff]
    %v3678 = vld [vmem:[#allocation35 + $0x8b0] sm:$0xff]
    %v3679 = vld [vmem:[#allocation35 + $0x8b8] sm:$0xff]
    %v3680 = vld [vmem:[#allocation35 + $0x8c0] sm:$0xff]
    %v3681 = vld [vmem:[#allocation35 + $0x8c8] sm:$0xff]
    %v3682 = vld [vmem:[#allocation35 + $0x8d0] sm:$0xff]
    %v3683 = vld [vmem:[#allocation35 + $0x8d8] sm:$0xff]
    %v3684 = vld [vmem:[#allocation35 + $0x8e0] sm:$0xff]
    %v3685 = vld [vmem:[#allocation35 + $0x8e8] sm:$0xff]
    %v3686 = vld [vmem:[#allocation35 + $0x8f0] sm:$0xff]
    %v3687 = vld [vmem:[#allocation35 + $0x8f8] sm:$0xff]
    %v3688 = vld [vmem:[#allocation35 + $0x900] sm:$0xff]
    %v3689 = vld [vmem:[#allocation35 + $0x908] sm:$0xff]
    %v3690 = vld [vmem:[#allocation35 + $0x910] sm:$0xff]
    %v3691 = vld [vmem:[#allocation35 + $0x918] sm:$0xff]
    %v3692 = vld [vmem:[#allocation35 + $0x920] sm:$0xff]
    %v3693 = vld [vmem:[#allocation35 + $0x928] sm:$0xff]
    %v3694 = vld [vmem:[#allocation35 + $0x930] sm:$0xff]
    %v3695 = vld [vmem:[#allocation35 + $0x938] sm:$0xff]
    %v3696 = vld [vmem:[#allocation35 + $0x940] sm:$0xff]
    %v3697 = vld [vmem:[#allocation35 + $0x948] sm:$0xff]
    %v3698 = vld [vmem:[#allocation35 + $0x950] sm:$0xff]
    %v3699 = vld [vmem:[#allocation35 + $0x958] sm:$0xff]
    %v3700 = vld [vmem:[#allocation35 + $0x960] sm:$0xff]
    %v3701 = vld [vmem:[#allocation35 + $0x968] sm:$0xff]
    %v3702 = vld [vmem:[#allocation35 + $0x970] sm:$0xff]
    %v3703 = vld [vmem:[#allocation35 + $0x978] sm:$0xff]
    %v3704 = vld [vmem:[#allocation35 + $0x980] sm:$0xff]
    %v3705 = vld [vmem:[#allocation35 + $0x988] sm:$0xff]
    %v3706 = vld [vmem:[#allocation35 + $0x990] sm:$0xff]
    %v3707 = vld [vmem:[#allocation35 + $0x998] sm:$0xff]
    %v3708 = vld [vmem:[#allocation35 + $0x9a0] sm:$0xff]
    %v3709 = vld [vmem:[#allocation35 + $0x9a8] sm:$0xff]
    %v3710 = vld [vmem:[#allocation35 + $0x9b0] sm:$0xff]
    %v3711 = vld [vmem:[#allocation35 + $0x9b8] sm:$0xff]
    %v3712 = vld [vmem:[#allocation35 + $0x9c0] sm:$0xff]
    %v3713 = vld [vmem:[#allocation35 + $0x9c8] sm:$0xff]
    %v3714 = vld [vmem:[#allocation35 + $0x9d0] sm:$0xff]
    %v3715 = vld [vmem:[#allocation35 + $0x9d8] sm:$0xff]
    %v3716 = vld [vmem:[#allocation35 + $0x9e0] sm:$0xff]
    %v3717 = vld [vmem:[#allocation35 + $0x9e8] sm:$0xff]
    %v3718 = vld [vmem:[#allocation35 + $0x9f0] sm:$0xff]
    %v3719 = vld [vmem:[#allocation35 + $0x9f8] sm:$0xff]
    %v3720 = vld [vmem:[#allocation35 + $0xa00] sm:$0xff]
    %v3721 = vld [vmem:[#allocation35 + $0xa08] sm:$0xff]
    %v3722 = vld [vmem:[#allocation35 + $0xa10] sm:$0xff]
    %v3723 = vld [vmem:[#allocation35 + $0xa18] sm:$0xff]
    %v3724 = vld [vmem:[#allocation35 + $0xa20] sm:$0xff]
    %v3725 = vld [vmem:[#allocation35 + $0xa28] sm:$0xff]
    %v3726 = vld [vmem:[#allocation35 + $0xa30] sm:$0xff]
    %v3727 = vld [vmem:[#allocation35 + $0xa38] sm:$0xff]
    %v3728 = vld [vmem:[#allocation35 + $0xa40] sm:$0xff]
    %v3729 = vld [vmem:[#allocation35 + $0xa48] sm:$0xff]
    %v3730 = vld [vmem:[#allocation35 + $0xa50] sm:$0xff]
    %v3731 = vld [vmem:[#allocation35 + $0xa58] sm:$0xff]
    %v3732 = vld [vmem:[#allocation35 + $0xa60] sm:$0xff]
    %v3733 = vld [vmem:[#allocation35 + $0xa68] sm:$0xff]
    %v3734 = vld [vmem:[#allocation35 + $0xa70] sm:$0xff]
    %v3735 = vld [vmem:[#allocation35 + $0xa78] sm:$0xff]
    %v3736 = vld [vmem:[#allocation35 + $0xa80] sm:$0xff]
    %v3737 = vld [vmem:[#allocation35 + $0xa88] sm:$0xff]
    %v3738 = vld [vmem:[#allocation35 + $0xa90] sm:$0xff]
    %v3739 = vld [vmem:[#allocation35 + $0xa98] sm:$0xff]
    %v3740 = vld [vmem:[#allocation35 + $0xaa0] sm:$0xff]
    %v3741 = vld [vmem:[#allocation35 + $0xaa8] sm:$0xff]
    %v3742 = vld [vmem:[#allocation35 + $0xab0] sm:$0xff]
    %v3743 = vld [vmem:[#allocation35 + $0xab8] sm:$0xff]
    %v3744 = vld [vmem:[#allocation35 + $0xac0] sm:$0xff]
    %v3745 = vld [vmem:[#allocation35 + $0xac8] sm:$0xff]
    %v3746 = vld [vmem:[#allocation35 + $0xad0] sm:$0xff]
    %v3747 = vld [vmem:[#allocation35 + $0xad8] sm:$0xff]
    %v3748 = vld [vmem:[#allocation35 + $0xae0] sm:$0xff]
    %v3749 = vld [vmem:[#allocation35 + $0xae8] sm:$0xff]
    %v3750 = vld [vmem:[#allocation35 + $0xaf0] sm:$0xff]
    %v3751 = vld [vmem:[#allocation35 + $0xaf8] sm:$0xff]
    %v3752 = vld [vmem:[#allocation35 + $0xb00] sm:$0xff]
    %v3753 = vld [vmem:[#allocation35 + $0xb08] sm:$0xff]
    %v3754 = vld [vmem:[#allocation35 + $0xb10] sm:$0xff]
    %v3755 = vld [vmem:[#allocation35 + $0xb18] sm:$0xff]
    %v3756 = vld [vmem:[#allocation35 + $0xb20] sm:$0xff]
    %v3757 = vld [vmem:[#allocation35 + $0xb28] sm:$0xff]
    %v3758 = vld [vmem:[#allocation35 + $0xb30] sm:$0xff]
    %v3759 = vld [vmem:[#allocation35 + $0xb38] sm:$0xff]
    %v3760 = vld [vmem:[#allocation35 + $0xb40] sm:$0xff]
    %v3761 = vld [vmem:[#allocation35 + $0xb48] sm:$0xff]
    %v3762 = vld [vmem:[#allocation35 + $0xb50] sm:$0xff]
    %v3763 = vld [vmem:[#allocation35 + $0xb58] sm:$0xff]
    %v3764 = vld [vmem:[#allocation35 + $0xb60] sm:$0xff]
    %v3765 = vld [vmem:[#allocation35 + $0xb68] sm:$0xff]
    %v3766 = vld [vmem:[#allocation35 + $0xb70] sm:$0xff]
    %v3767 = vld [vmem:[#allocation35 + $0xb78] sm:$0xff]
    %v3768 = vld [vmem:[#allocation35 + $0xb80] sm:$0xff]
    %v3769 = vld [vmem:[#allocation35 + $0xb88] sm:$0xff]
    %v3770 = vld [vmem:[#allocation35 + $0xb90] sm:$0xff]
    %v3771 = vld [vmem:[#allocation35 + $0xb98] sm:$0xff]
    %v3772 = vld [vmem:[#allocation35 + $0xba0] sm:$0xff]
    %v3773 = vld [vmem:[#allocation35 + $0xba8] sm:$0xff]
    %v3774 = vld [vmem:[#allocation35 + $0xbb0] sm:$0xff]
    %v3775 = vld [vmem:[#allocation35 + $0xbb8] sm:$0xff]
    %v3776 = vld [vmem:[#allocation35 + $0xbc0] sm:$0xff]
    %v3777 = vld [vmem:[#allocation35 + $0xbc8] sm:$0xff]
    %v3778 = vld [vmem:[#allocation35 + $0xbd0] sm:$0xff]
    %v3779 = vld [vmem:[#allocation35 + $0xbd8] sm:$0xff]
    %v3780 = vld [vmem:[#allocation35 + $0xbe0] sm:$0xff]
    %v3781 = vld [vmem:[#allocation35 + $0xbe8] sm:$0xff]
    %v3782 = vld [vmem:[#allocation35 + $0xbf0] sm:$0xff]
    %v3783 = vld [vmem:[#allocation35 + $0xbf8] sm:$0xff]
    %v3784 = vld [vmem:[#allocation35 + $0xc00] sm:$0xff]
    %v3785 = vld [vmem:[#allocation35 + $0xc08] sm:$0xff]
    %v3786 = vld [vmem:[#allocation35 + $0xc10] sm:$0xff]
    %v3787 = vld [vmem:[#allocation35 + $0xc18] sm:$0xff]
    %v3788 = vld [vmem:[#allocation35 + $0xc20] sm:$0xff]
    %v3789 = vld [vmem:[#allocation35 + $0xc28] sm:$0xff]
    %v3790 = vld [vmem:[#allocation35 + $0xc30] sm:$0xff]
    %v3791 = vld [vmem:[#allocation35 + $0xc38] sm:$0xff]
    %v3792 = vld [vmem:[#allocation35 + $0xc40] sm:$0xff]
    %v3793 = vld [vmem:[#allocation35 + $0xc48] sm:$0xff]
    %v3794 = vld [vmem:[#allocation35 + $0xc50] sm:$0xff]
    %v3795 = vld [vmem:[#allocation35 + $0xc58] sm:$0xff]
    %v3796 = vld [vmem:[#allocation35 + $0xc60] sm:$0xff]
    %v3797 = vld [vmem:[#allocation35 + $0xc68] sm:$0xff]
    %v3798 = vld [vmem:[#allocation35 + $0xc70] sm:$0xff]
    %v3799 = vld [vmem:[#allocation35 + $0xc78] sm:$0xff]
    %v3800 = vld [vmem:[#allocation37] sm:$0xf]
    %v3802 = vperm.slane %v3800, 0
    %v3803 = vperm.slane %v3800, 1
    %v3804 = vperm.slane %v3800, 2
    %v3805 = vperm.slane %v3800, 3
    %v3811 = vsel %vm1316, %v3399, 0
    %3813 = vmatpush.msra.mxu0 %v3460
    %3814 = vmatpush.msra.mxu0 %v3456
    %3815 = vmatpush.msra.mxu0 %v3452
    %3816 = vmatpush.msra.mxu0 %v3448
    %3817 = vmatpush.msra.mxu0 %v3444
    %3818 = vmatpush.msra.mxu0 %v3440
    %3819 = vmatpush.msra.mxu0 %v3436
    %3820 = vmatpush.msra.mxu0 %v3432
    %3821 = vmatpush.msra.mxu0 %v3428
    %3822 = vmatpush.msra.mxu0 %v3424
    %3823 = vmatpush.msra.mxu0 %v3420
    %3824 = vmatpush.msra.mxu0 %v3416
    %3825 = vmatpush.msra.mxu0 %v3412
    %3826 = vmatpush.msra.mxu0 %v3408
    %3827 = vmatpush.msra.mxu0 %v3404
    %3828 = vmatpush.msra.mxu0 %v3400
    %3829 = vmatmul.f32.gmra.mxu0 %v3393
    %v3830 = vpop.f32.mrf.mxu0
    %v3831 = vadd.f32 %v3802, %v3830
    %3832 = vdwg.mxu0
    %3833 = vmatpush.msra.mxu0 %v3524
    %3834 = vmatpush.msra.mxu0 %v3520
    %3835 = vmatpush.msra.mxu0 %v3516
    %3836 = vmatpush.msra.mxu0 %v3512
    %3837 = vmatpush.msra.mxu0 %v3508
    %3838 = vmatpush.msra.mxu0 %v3504
    %3839 = vmatpush.msra.mxu0 %v3500
    %3840 = vmatpush.msra.mxu0 %v3496
    %3841 = vmatpush.msra.mxu0 %v3492
    %3842 = vmatpush.msra.mxu0 %v3488
    %3843 = vmatpush.msra.mxu0 %v3484
    %3844 = vmatpush.msra.mxu0 %v3480
    %3845 = vmatpush.msra.mxu0 %v3476
    %3846 = vmatpush.msra.mxu0 %v3472
    %3847 = vmatpush.msra.mxu0 %v3468
    %3848 = vmatpush.msra.mxu0 %v3464
    %3849 = vmatmul.f32.gmra.mxu0 %v3394
    %v3850 = vpop.f32.mrf.mxu0
    %v3851 = vadd.f32 %v3831, %v3850
    %3852 = vdwg.mxu0
    %3853 = vmatpush.msra.mxu0 %v3588
    %3854 = vmatpush.msra.mxu0 %v3584
    %3855 = vmatpush.msra.mxu0 %v3580
    %3856 = vmatpush.msra.mxu0 %v3576
    %3857 = vmatpush.msra.mxu0 %v3572
    %3858 = vmatpush.msra.mxu0 %v3568
    %3859 = vmatpush.msra.mxu0 %v3564
    %3860 = vmatpush.msra.mxu0 %v3560
    %3861 = vmatpush.msra.mxu0 %v3556
    %3862 = vmatpush.msra.mxu0 %v3552
    %3863 = vmatpush.msra.mxu0 %v3548
    %3864 = vmatpush.msra.mxu0 %v3544
    %3865 = vmatpush.msra.mxu0 %v3540
    %3866 = vmatpush.msra.mxu0 %v3536
    %3867 = vmatpush.msra.mxu0 %v3532
    %3868 = vmatpush.msra.mxu0 %v3528
    %3869 = vmatmul.f32.gmra.mxu0 %v3395
    %v3870 = vpop.f32.mrf.mxu0
    %v3871 = vadd.f32 %v3851, %v3870
    %3872 = vdwg.mxu0
    %3873 = vmatpush.msra.mxu0 %v3652
    %3874 = vmatpush.msra.mxu0 %v3648
    %3875 = vmatpush.msra.mxu0 %v3644
    %3876 = vmatpush.msra.mxu0 %v3640
    %3877 = vmatpush.msra.mxu0 %v3636
    %3878 = vmatpush.msra.mxu0 %v3632
    %3879 = vmatpush.msra.mxu0 %v3628
    %3880 = vmatpush.msra.mxu0 %v3624
    %3881 = vmatpush.msra.mxu0 %v3620
    %3882 = vmatpush.msra.mxu0 %v3616
    %3883 = vmatpush.msra.mxu0 %v3612
    %3884 = vmatpush.msra.mxu0 %v3608
    %3885 = vmatpush.msra.mxu0 %v3604
    %3886 = vmatpush.msra.mxu0 %v3600
    %3887 = vmatpush.msra.mxu0 %v3596
    %3888 = vmatpush.msra.mxu0 %v3592
    %3889 = vmatmul.f32.gmra.mxu0 %v3396
    %v3890 = vpop.f32.mrf.mxu0
    %v3891 = vadd.f32 %v3871, %v3890
    %3892 = vdwg.mxu0
    %3893 = vmatpush.msra.mxu0 %v3716
    %3894 = vmatpush.msra.mxu0 %v3712
    %3895 = vmatpush.msra.mxu0 %v3708
    %3896 = vmatpush.msra.mxu0 %v3704
    %3897 = vmatpush.msra.mxu0 %v3700
    %3898 = vmatpush.msra.mxu0 %v3696
    %3899 = vmatpush.msra.mxu0 %v3692
    %3900 = vmatpush.msra.mxu0 %v3688
    %3901 = vmatpush.msra.mxu0 %v3684
    %3902 = vmatpush.msra.mxu0 %v3680
    %3903 = vmatpush.msra.mxu0 %v3676
    %3904 = vmatpush.msra.mxu0 %v3672
    %3905 = vmatpush.msra.mxu0 %v3668
    %3906 = vmatpush.msra.mxu0 %v3664
    %3907 = vmatpush.msra.mxu0 %v3660
    %3908 = vmatpush.msra.mxu0 %v3656
    %3909 = vmatmul.f32.gmra.mxu0 %v3397
    %v3910 = vpop.f32.mrf.mxu0
    %v3911 = vadd.f32 %v3891, %v3910
    %3912 = vdwg.mxu0
    %3913 = vmatpush.msra.mxu0 %v3780
    %3914 = vmatpush.msra.mxu0 %v3776
    %3915 = vmatpush.msra.mxu0 %v3772
    %3916 = vmatpush.msra.mxu0 %v3768
    %3917 = vmatpush.msra.mxu0 %v3764
    %3918 = vmatpush.msra.mxu0 %v3760
    %3919 = vmatpush.msra.mxu0 %v3756
    %3920 = vmatpush.msra.mxu0 %v3752
    %3921 = vmatpush.msra.mxu0 %v3748
    %3922 = vmatpush.msra.mxu0 %v3744
    %3923 = vmatpush.msra.mxu0 %v3740
    %3924 = vmatpush.msra.mxu0 %v3736
    %3925 = vmatpush.msra.mxu0 %v3732
    %3926 = vmatpush.msra.mxu0 %v3728
    %3927 = vmatpush.msra.mxu0 %v3724
    %3928 = vmatpush.msra.mxu0 %v3720
    %3929 = vmatmul.f32.gmra.mxu0 %v3398
    %v3930 = vpop.f32.mrf.mxu0
    %v3931 = vadd.f32 %v3911, %v3930
    %3932 = vdwg.mxu0
    %3933 = vmatpush.msra.mxu0 0.0
    %3934 = vmatpush.msra.mxu0 0.0
    %3935 = vmatpush.msra.mxu0 0.0
    %3936 = vmatpush.msra.mxu0 0.0
    %3937 = vmatpush.msra.mxu0 0.0
    %3938 = vmatpush.msra.mxu0 0.0
    %3939 = vmatpush.msra.mxu0 0.0
    %3940 = vmatpush.msra.mxu0 0.0
    %3941 = vmatpush.msra.mxu0 0.0
    %3942 = vmatpush.msra.mxu0 0.0
    %3943 = vmatpush.msra.mxu0 0.0
    %3944 = vmatpush.msra.mxu0 0.0
    %3945 = vmatpush.msra.mxu0 %v3796
    %3946 = vmatpush.msra.mxu0 %v3792
    %3947 = vmatpush.msra.mxu0 %v3788
    %3948 = vmatpush.msra.mxu0 %v3784
    %3949 = vmatmul.f32.gmra.mxu0 %v3811
    %v3950 = vpop.f32.mrf.mxu0
    %v3951 = vadd.f32 %v3931, %v3950
    %3952 = vdwg.mxu0
    %3953 = vmatpush.msra.mxu0 %v3461
    %3954 = vmatpush.msra.mxu0 %v3457
    %3955 = vmatpush.msra.mxu0 %v3453
    %3956 = vmatpush.msra.mxu0 %v3449
    %3957 = vmatpush.msra.mxu0 %v3445
    %3958 = vmatpush.msra.mxu0 %v3441
    %3959 = vmatpush.msra.mxu0 %v3437
    %3960 = vmatpush.msra.mxu0 %v3433
    %3961 = vmatpush.msra.mxu0 %v3429
    %3962 = vmatpush.msra.mxu0 %v3425
    %3963 = vmatpush.msra.mxu0 %v3421
    %3964 = vmatpush.msra.mxu0 %v3417
    %3965 = vmatpush.msra.mxu0 %v3413
    %3966 = vmatpush.msra.mxu0 %v3409
    %3967 = vmatpush.msra.mxu0 %v3405
    %3968 = vmatpush.msra.mxu0 %v3401
    %3969 = vmatmul.f32.gmra.mxu0 %v3393
    %v3970 = vpop.f32.mrf.mxu0
    %v3971 = vadd.f32 %v3803, %v3970
    %3972 = vdwg.mxu0
    %3973 = vmatpush.msra.mxu0 %v3525
    %3974 = vmatpush.msra.mxu0 %v3521
    %3975 = vmatpush.msra.mxu0 %v3517
    %3976 = vmatpush.msra.mxu0 %v3513
    %3977 = vmatpush.msra.mxu0 %v3509
    %3978 = vmatpush.msra.mxu0 %v3505
    %3979 = vmatpush.msra.mxu0 %v3501
    %3980 = vmatpush.msra.mxu0 %v3497
    %3981 = vmatpush.msra.mxu0 %v3493
    %3982 = vmatpush.msra.mxu0 %v3489
    %3983 = vmatpush.msra.mxu0 %v3485
    %3984 = vmatpush.msra.mxu0 %v3481
    %3985 = vmatpush.msra.mxu0 %v3477
    %3986 = vmatpush.msra.mxu0 %v3473
    %3987 = vmatpush.msra.mxu0 %v3469
    %3988 = vmatpush.msra.mxu0 %v3465
    %3989 = vmatmul.f32.gmra.mxu0 %v3394
    %v3990 = vpop.f32.mrf.mxu0
    %v3991 = vadd.f32 %v3971, %v3990
    %3992 = vdwg.mxu0
    %3993 = vmatpush.msra.mxu0 %v3589
    %3994 = vmatpush.msra.mxu0 %v3585
    %3995 = vmatpush.msra.mxu0 %v3581
    %3996 = vmatpush.msra.mxu0 %v3577
    %3997 = vmatpush.msra.mxu0 %v3573
    %3998 = vmatpush.msra.mxu0 %v3569
    %3999 = vmatpush.msra.mxu0 %v3565
    %4000 = vmatpush.msra.mxu0 %v3561
    %4001 = vmatpush.msra.mxu0 %v3557
    %4002 = vmatpush.msra.mxu0 %v3553
    %4003 = vmatpush.msra.mxu0 %v3549
    %4004 = vmatpush.msra.mxu0 %v3545
    %4005 = vmatpush.msra.mxu0 %v3541
    %4006 = vmatpush.msra.mxu0 %v3537
    %4007 = vmatpush.msra.mxu0 %v3533
    %4008 = vmatpush.msra.mxu0 %v3529
    %4009 = vmatmul.f32.gmra.mxu0 %v3395
    %v4010 = vpop.f32.mrf.mxu0
    %v4011 = vadd.f32 %v3991, %v4010
    %4012 = vdwg.mxu0
    %4013 = vmatpush.msra.mxu0 %v3653
    %4014 = vmatpush.msra.mxu0 %v3649
    %4015 = vmatpush.msra.mxu0 %v3645
    %4016 = vmatpush.msra.mxu0 %v3641
    %4017 = vmatpush.msra.mxu0 %v3637
    %4018 = vmatpush.msra.mxu0 %v3633
    %4019 = vmatpush.msra.mxu0 %v3629
    %4020 = vmatpush.msra.mxu0 %v3625
    %4021 = vmatpush.msra.mxu0 %v3621
    %4022 = vmatpush.msra.mxu0 %v3617
    %4023 = vmatpush.msra.mxu0 %v3613
    %4024 = vmatpush.msra.mxu0 %v3609
    %4025 = vmatpush.msra.mxu0 %v3605
    %4026 = vmatpush.msra.mxu0 %v3601
    %4027 = vmatpush.msra.mxu0 %v3597
    %4028 = vmatpush.msra.mxu0 %v3593
    %4029 = vmatmul.f32.gmra.mxu0 %v3396
    %v4030 = vpop.f32.mrf.mxu0
    %v4031 = vadd.f32 %v4011, %v4030
    %4032 = vdwg.mxu0
    %4033 = vmatpush.msra.mxu0 %v3717
    %4034 = vmatpush.msra.mxu0 %v3713
    %4035 = vmatpush.msra.mxu0 %v3709
    %4036 = vmatpush.msra.mxu0 %v3705
    %4037 = vmatpush.msra.mxu0 %v3701
    %4038 = vmatpush.msra.mxu0 %v3697
    %4039 = vmatpush.msra.mxu0 %v3693
    %4040 = vmatpush.msra.mxu0 %v3689
    %4041 = vmatpush.msra.mxu0 %v3685
    %4042 = vmatpush.msra.mxu0 %v3681
    %4043 = vmatpush.msra.mxu0 %v3677
    %4044 = vmatpush.msra.mxu0 %v3673
    %4045 = vmatpush.msra.mxu0 %v3669
    %4046 = vmatpush.msra.mxu0 %v3665
    %4047 = vmatpush.msra.mxu0 %v3661
    %4048 = vmatpush.msra.mxu0 %v3657
    %4049 = vmatmul.f32.gmra.mxu0 %v3397
    %v4050 = vpop.f32.mrf.mxu0
    %v4051 = vadd.f32 %v4031, %v4050
    %4052 = vdwg.mxu0
    %4053 = vmatpush.msra.mxu0 %v3781
    %4054 = vmatpush.msra.mxu0 %v3777
    %4055 = vmatpush.msra.mxu0 %v3773
    %4056 = vmatpush.msra.mxu0 %v3769
    %4057 = vmatpush.msra.mxu0 %v3765
    %4058 = vmatpush.msra.mxu0 %v3761
    %4059 = vmatpush.msra.mxu0 %v3757
    %4060 = vmatpush.msra.mxu0 %v3753
    %4061 = vmatpush.msra.mxu0 %v3749
    %4062 = vmatpush.msra.mxu0 %v3745
    %4063 = vmatpush.msra.mxu0 %v3741
    %4064 = vmatpush.msra.mxu0 %v3737
    %4065 = vmatpush.msra.mxu0 %v3733
    %4066 = vmatpush.msra.mxu0 %v3729
    %4067 = vmatpush.msra.mxu0 %v3725
    %4068 = vmatpush.msra.mxu0 %v3721
    %4069 = vmatmul.f32.gmra.mxu0 %v3398
    %v4070 = vpop.f32.mrf.mxu0
    %v4071 = vadd.f32 %v4051, %v4070
    %4072 = vdwg.mxu0
    %4073 = vmatpush.msra.mxu0 0.0
    %4074 = vmatpush.msra.mxu0 0.0
    %4075 = vmatpush.msra.mxu0 0.0
    %4076 = vmatpush.msra.mxu0 0.0
    %4077 = vmatpush.msra.mxu0 0.0
    %4078 = vmatpush.msra.mxu0 0.0
    %4079 = vmatpush.msra.mxu0 0.0
    %4080 = vmatpush.msra.mxu0 0.0
    %4081 = vmatpush.msra.mxu0 0.0
    %4082 = vmatpush.msra.mxu0 0.0
    %4083 = vmatpush.msra.mxu0 0.0
    %4084 = vmatpush.msra.mxu0 0.0
    %4085 = vmatpush.msra.mxu0 %v3797
    %4086 = vmatpush.msra.mxu0 %v3793
    %4087 = vmatpush.msra.mxu0 %v3789
    %4088 = vmatpush.msra.mxu0 %v3785
    %4089 = vmatmul.f32.gmra.mxu0 %v3811
    %v4090 = vpop.f32.mrf.mxu0
    %v4091 = vadd.f32 %v4071, %v4090
    %4092 = vdwg.mxu0
    %4093 = vmatpush.msra.mxu0 %v3462
    %4094 = vmatpush.msra.mxu0 %v3458
    %4095 = vmatpush.msra.mxu0 %v3454
    %4096 = vmatpush.msra.mxu0 %v3450
    %4097 = vmatpush.msra.mxu0 %v3446
    %4098 = vmatpush.msra.mxu0 %v3442
    %4099 = vmatpush.msra.mxu0 %v3438
    %4100 = vmatpush.msra.mxu0 %v3434
    %4101 = vmatpush.msra.mxu0 %v3430
    %4102 = vmatpush.msra.mxu0 %v3426
    %4103 = vmatpush.msra.mxu0 %v3422
    %4104 = vmatpush.msra.mxu0 %v3418
    %4105 = vmatpush.msra.mxu0 %v3414
    %4106 = vmatpush.msra.mxu0 %v3410
    %4107 = vmatpush.msra.mxu0 %v3406
    %4108 = vmatpush.msra.mxu0 %v3402
    %4109 = vmatmul.f32.gmra.mxu0 %v3393
    %v4110 = vpop.f32.mrf.mxu0
    %v4111 = vadd.f32 %v3804, %v4110
    %4112 = vdwg.mxu0
    %4113 = vmatpush.msra.mxu0 %v3526
    %4114 = vmatpush.msra.mxu0 %v3522
    %4115 = vmatpush.msra.mxu0 %v3518
    %4116 = vmatpush.msra.mxu0 %v3514
    %4117 = vmatpush.msra.mxu0 %v3510
    %4118 = vmatpush.msra.mxu0 %v3506
    %4119 = vmatpush.msra.mxu0 %v3502
    %4120 = vmatpush.msra.mxu0 %v3498
    %4121 = vmatpush.msra.mxu0 %v3494
    %4122 = vmatpush.msra.mxu0 %v3490
    %4123 = vmatpush.msra.mxu0 %v3486
    %4124 = vmatpush.msra.mxu0 %v3482
    %4125 = vmatpush.msra.mxu0 %v3478
    %4126 = vmatpush.msra.mxu0 %v3474
    %4127 = vmatpush.msra.mxu0 %v3470
    %4128 = vmatpush.msra.mxu0 %v3466
    %4129 = vmatmul.f32.gmra.mxu0 %v3394
    %v4130 = vpop.f32.mrf.mxu0
    %v4131 = vadd.f32 %v4111, %v4130
    %4132 = vdwg.mxu0
    %4133 = vmatpush.msra.mxu0 %v3590
    %4134 = vmatpush.msra.mxu0 %v3586
    %4135 = vmatpush.msra.mxu0 %v3582
    %4136 = vmatpush.msra.mxu0 %v3578
    %4137 = vmatpush.msra.mxu0 %v3574
    %4138 = vmatpush.msra.mxu0 %v3570
    %4139 = vmatpush.msra.mxu0 %v3566
    %4140 = vmatpush.msra.mxu0 %v3562
    %4141 = vmatpush.msra.mxu0 %v3558
    %4142 = vmatpush.msra.mxu0 %v3554
    %4143 = vmatpush.msra.mxu0 %v3550
    %4144 = vmatpush.msra.mxu0 %v3546
    %4145 = vmatpush.msra.mxu0 %v3542
    %4146 = vmatpush.msra.mxu0 %v3538
    %4147 = vmatpush.msra.mxu0 %v3534
    %4148 = vmatpush.msra.mxu0 %v3530
    %4149 = vmatmul.f32.gmra.mxu0 %v3395
    %v4150 = vpop.f32.mrf.mxu0
    %v4151 = vadd.f32 %v4131, %v4150
    %4152 = vdwg.mxu0
    %4153 = vmatpush.msra.mxu0 %v3654
    %4154 = vmatpush.msra.mxu0 %v3650
    %4155 = vmatpush.msra.mxu0 %v3646
    %4156 = vmatpush.msra.mxu0 %v3642
    %4157 = vmatpush.msra.mxu0 %v3638
    %4158 = vmatpush.msra.mxu0 %v3634
    %4159 = vmatpush.msra.mxu0 %v3630
    %4160 = vmatpush.msra.mxu0 %v3626
    %4161 = vmatpush.msra.mxu0 %v3622
    %4162 = vmatpush.msra.mxu0 %v3618
    %4163 = vmatpush.msra.mxu0 %v3614
    %4164 = vmatpush.msra.mxu0 %v3610
    %4165 = vmatpush.msra.mxu0 %v3606
    %4166 = vmatpush.msra.mxu0 %v3602
    %4167 = vmatpush.msra.mxu0 %v3598
    %4168 = vmatpush.msra.mxu0 %v3594
    %4169 = vmatmul.f32.gmra.mxu0 %v3396
    %v4170 = vpop.f32.mrf.mxu0
    %v4171 = vadd.f32 %v4151, %v4170
    %4172 = vdwg.mxu0
    %4173 = vmatpush.msra.mxu0 %v3718
    %4174 = vmatpush.msra.mxu0 %v3714
    %4175 = vmatpush.msra.mxu0 %v3710
    %4176 = vmatpush.msra.mxu0 %v3706
    %4177 = vmatpush.msra.mxu0 %v3702
    %4178 = vmatpush.msra.mxu0 %v3698
    %4179 = vmatpush.msra.mxu0 %v3694
    %4180 = vmatpush.msra.mxu0 %v3690
    %4181 = vmatpush.msra.mxu0 %v3686
    %4182 = vmatpush.msra.mxu0 %v3682
    %4183 = vmatpush.msra.mxu0 %v3678
    %4184 = vmatpush.msra.mxu0 %v3674
    %4185 = vmatpush.msra.mxu0 %v3670
    %4186 = vmatpush.msra.mxu0 %v3666
    %4187 = vmatpush.msra.mxu0 %v3662
    %4188 = vmatpush.msra.mxu0 %v3658
    %4189 = vmatmul.f32.gmra.mxu0 %v3397
    %v4190 = vpop.f32.mrf.mxu0
    %v4191 = vadd.f32 %v4171, %v4190
    %4192 = vdwg.mxu0
    %4193 = vmatpush.msra.mxu0 %v3782
    %4194 = vmatpush.msra.mxu0 %v3778
    %4195 = vmatpush.msra.mxu0 %v3774
    %4196 = vmatpush.msra.mxu0 %v3770
    %4197 = vmatpush.msra.mxu0 %v3766
    %4198 = vmatpush.msra.mxu0 %v3762
    %4199 = vmatpush.msra.mxu0 %v3758
    %4200 = vmatpush.msra.mxu0 %v3754
    %4201 = vmatpush.msra.mxu0 %v3750
    %4202 = vmatpush.msra.mxu0 %v3746
    %4203 = vmatpush.msra.mxu0 %v3742
    %4204 = vmatpush.msra.mxu0 %v3738
    %4205 = vmatpush.msra.mxu0 %v3734
    %4206 = vmatpush.msra.mxu0 %v3730
    %4207 = vmatpush.msra.mxu0 %v3726
    %4208 = vmatpush.msra.mxu0 %v3722
    %4209 = vmatmul.f32.gmra.mxu0 %v3398
    %v4210 = vpop.f32.mrf.mxu0
    %v4211 = vadd.f32 %v4191, %v4210
    %4212 = vdwg.mxu0
    %4213 = vmatpush.msra.mxu0 0.0
    %4214 = vmatpush.msra.mxu0 0.0
    %4215 = vmatpush.msra.mxu0 0.0
    %4216 = vmatpush.msra.mxu0 0.0
    %4217 = vmatpush.msra.mxu0 0.0
    %4218 = vmatpush.msra.mxu0 0.0
    %4219 = vmatpush.msra.mxu0 0.0
    %4220 = vmatpush.msra.mxu0 0.0
    %4221 = vmatpush.msra.mxu0 0.0
    %4222 = vmatpush.msra.mxu0 0.0
    %4223 = vmatpush.msra.mxu0 0.0
    %4224 = vmatpush.msra.mxu0 0.0
    %4225 = vmatpush.msra.mxu0 %v3798
    %4226 = vmatpush.msra.mxu0 %v3794
    %4227 = vmatpush.msra.mxu0 %v3790
    %4228 = vmatpush.msra.mxu0 %v3786
    %4229 = vmatmul.f32.gmra.mxu0 %v3811
    %v4230 = vpop.f32.mrf.mxu0
    %v4231 = vadd.f32 %v4211, %v4230
    %4232 = vdwg.mxu0
    %4233 = vmatpush.msra.mxu0 %v3463
    %4234 = vmatpush.msra.mxu0 %v3459
    %4235 = vmatpush.msra.mxu0 %v3455
    %4236 = vmatpush.msra.mxu0 %v3451
    %4237 = vmatpush.msra.mxu0 %v3447
    %4238 = vmatpush.msra.mxu0 %v3443
    %4239 = vmatpush.msra.mxu0 %v3439
    %4240 = vmatpush.msra.mxu0 %v3435
    %4241 = vmatpush.msra.mxu0 %v3431
    %4242 = vmatpush.msra.mxu0 %v3427
    %4243 = vmatpush.msra.mxu0 %v3423
    %4244 = vmatpush.msra.mxu0 %v3419
    %4245 = vmatpush.msra.mxu0 %v3415
    %4246 = vmatpush.msra.mxu0 %v3411
    %4247 = vmatpush.msra.mxu0 %v3407
    %4248 = vmatpush.msra.mxu0 %v3403
    %4249 = vmatmul.f32.gmra.mxu0 %v3393
    %v4250 = vpop.f32.mrf.mxu0
    %v4251 = vadd.f32 %v3805, %v4250
    %4252 = vdwg.mxu0
    %4253 = vmatpush.msra.mxu0 %v3527
    %4254 = vmatpush.msra.mxu0 %v3523
    %4255 = vmatpush.msra.mxu0 %v3519
    %4256 = vmatpush.msra.mxu0 %v3515
    %4257 = vmatpush.msra.mxu0 %v3511
    %4258 = vmatpush.msra.mxu0 %v3507
    %4259 = vmatpush.msra.mxu0 %v3503
    %4260 = vmatpush.msra.mxu0 %v3499
    %4261 = vmatpush.msra.mxu0 %v3495
    %4262 = vmatpush.msra.mxu0 %v3491
    %4263 = vmatpush.msra.mxu0 %v3487
    %4264 = vmatpush.msra.mxu0 %v3483
    %4265 = vmatpush.msra.mxu0 %v3479
    %4266 = vmatpush.msra.mxu0 %v3475
    %4267 = vmatpush.msra.mxu0 %v3471
    %4268 = vmatpush.msra.mxu0 %v3467
    %4269 = vmatmul.f32.gmra.mxu0 %v3394
    %v4270 = vpop.f32.mrf.mxu0
    %v4271 = vadd.f32 %v4251, %v4270
    %4272 = vdwg.mxu0
    %4273 = vmatpush.msra.mxu0 %v3591
    %4274 = vmatpush.msra.mxu0 %v3587
    %4275 = vmatpush.msra.mxu0 %v3583
    %4276 = vmatpush.msra.mxu0 %v3579
    %4277 = vmatpush.msra.mxu0 %v3575
    %4278 = vmatpush.msra.mxu0 %v3571
    %4279 = vmatpush.msra.mxu0 %v3567
    %4280 = vmatpush.msra.mxu0 %v3563
    %4281 = vmatpush.msra.mxu0 %v3559
    %4282 = vmatpush.msra.mxu0 %v3555
    %4283 = vmatpush.msra.mxu0 %v3551
    %4284 = vmatpush.msra.mxu0 %v3547
    %4285 = vmatpush.msra.mxu0 %v3543
    %4286 = vmatpush.msra.mxu0 %v3539
    %4287 = vmatpush.msra.mxu0 %v3535
    %4288 = vmatpush.msra.mxu0 %v3531
    %4289 = vmatmul.f32.gmra.mxu0 %v3395
    %v4290 = vpop.f32.mrf.mxu0
    %v4291 = vadd.f32 %v4271, %v4290
    %4292 = vdwg.mxu0
    %4293 = vmatpush.msra.mxu0 %v3655
    %4294 = vmatpush.msra.mxu0 %v3651
    %4295 = vmatpush.msra.mxu0 %v3647
    %4296 = vmatpush.msra.mxu0 %v3643
    %4297 = vmatpush.msra.mxu0 %v3639
    %4298 = vmatpush.msra.mxu0 %v3635
    %4299 = vmatpush.msra.mxu0 %v3631
    %4300 = vmatpush.msra.mxu0 %v3627
    %4301 = vmatpush.msra.mxu0 %v3623
    %4302 = vmatpush.msra.mxu0 %v3619
    %4303 = vmatpush.msra.mxu0 %v3615
    %4304 = vmatpush.msra.mxu0 %v3611
    %4305 = vmatpush.msra.mxu0 %v3607
    %4306 = vmatpush.msra.mxu0 %v3603
    %4307 = vmatpush.msra.mxu0 %v3599
    %4308 = vmatpush.msra.mxu0 %v3595
    %4309 = vmatmul.f32.gmra.mxu0 %v3396
    %v4310 = vpop.f32.mrf.mxu0
    %v4311 = vadd.f32 %v4291, %v4310
    %4312 = vdwg.mxu0
    %4313 = vmatpush.msra.mxu0 %v3719
    %4314 = vmatpush.msra.mxu0 %v3715
    %4315 = vmatpush.msra.mxu0 %v3711
    %4316 = vmatpush.msra.mxu0 %v3707
    %4317 = vmatpush.msra.mxu0 %v3703
    %4318 = vmatpush.msra.mxu0 %v3699
    %4319 = vmatpush.msra.mxu0 %v3695
    %4320 = vmatpush.msra.mxu0 %v3691
    %4321 = vmatpush.msra.mxu0 %v3687
    %4322 = vmatpush.msra.mxu0 %v3683
    %4323 = vmatpush.msra.mxu0 %v3679
    %4324 = vmatpush.msra.mxu0 %v3675
    %4325 = vmatpush.msra.mxu0 %v3671
    %4326 = vmatpush.msra.mxu0 %v3667
    %4327 = vmatpush.msra.mxu0 %v3663
    %4328 = vmatpush.msra.mxu0 %v3659
    %4329 = vmatmul.f32.gmra.mxu0 %v3397
    %v4330 = vpop.f32.mrf.mxu0
    %v4331 = vadd.f32 %v4311, %v4330
    %4332 = vdwg.mxu0
    %4333 = vmatpush.msra.mxu0 %v3783
    %4334 = vmatpush.msra.mxu0 %v3779
    %4335 = vmatpush.msra.mxu0 %v3775
    %4336 = vmatpush.msra.mxu0 %v3771
    %4337 = vmatpush.msra.mxu0 %v3767
    %4338 = vmatpush.msra.mxu0 %v3763
    %4339 = vmatpush.msra.mxu0 %v3759
    %4340 = vmatpush.msra.mxu0 %v3755
    %4341 = vmatpush.msra.mxu0 %v3751
    %4342 = vmatpush.msra.mxu0 %v3747
    %4343 = vmatpush.msra.mxu0 %v3743
    %4344 = vmatpush.msra.mxu0 %v3739
    %4345 = vmatpush.msra.mxu0 %v3735
    %4346 = vmatpush.msra.mxu0 %v3731
    %4347 = vmatpush.msra.mxu0 %v3727
    %4348 = vmatpush.msra.mxu0 %v3723
    %4349 = vmatmul.f32.gmra.mxu0 %v3398
    %v4350 = vpop.f32.mrf.mxu0
    %v4351 = vadd.f32 %v4331, %v4350
    %4352 = vdwg.mxu0
    %4353 = vmatpush.msra.mxu0 0.0
    %4354 = vmatpush.msra.mxu0 0.0
    %4355 = vmatpush.msra.mxu0 0.0
    %4356 = vmatpush.msra.mxu0 0.0
    %4357 = vmatpush.msra.mxu0 0.0
    %4358 = vmatpush.msra.mxu0 0.0
    %4359 = vmatpush.msra.mxu0 0.0
    %4360 = vmatpush.msra.mxu0 0.0
    %4361 = vmatpush.msra.mxu0 0.0
    %4362 = vmatpush.msra.mxu0 0.0
    %4363 = vmatpush.msra.mxu0 0.0
    %4364 = vmatpush.msra.mxu0 0.0
    %4365 = vmatpush.msra.mxu0 %v3799
    %4366 = vmatpush.msra.mxu0 %v3795
    %4367 = vmatpush.msra.mxu0 %v3791
    %4368 = vmatpush.msra.mxu0 %v3787
    %4369 = vmatmul.f32.gmra.mxu0 %v3811
    %v4370 = vpop.f32.mrf.mxu0
    %v4371 = vadd.f32 %v4351, %v4370
    %4372 = vdwg.mxu0
    %v4373 = vmax.f32 %v3951, 0.0
    %v4374 = vmax.f32 %v4091, 0.0
    %v4375 = vmax.f32 %v4231, 0.0
    %v4376 = vmax.f32 %v4371, 0.0
    %v4377 = vld [vmem:[#allocation38] sm:$0xf]
    %v4378 = vld [vmem:[#allocation40] sm:$0xf]
    %v4379 = vsel %vm3283, %v4373, 0.0
    %v4380 = vsel %vm3283, %v4374, 0.0
    %v4381 = vadd.f32 %v4379, %v4380
    %v4382 = vsel %vm3283, %v4375, 0.0
    %v4383 = vadd.f32 %v4381, %v4382
    %v4384 = vsel %vm3283, %v4376, 0.0
    %v4385 = vadd.f32 %v4383, %v4384
    %4386 = vadd.xlane.f32.xlu0 %v4385
    %v4387 = vpop.xlane.xlu0 %4386
    %v4388 = vrcp.pop 512.0
    %v4389 = vmul.f32 512.0, %v4388
    %v4390 = vsub.f32 1.0, %v4389
    %v4391 = vmul.f32 %v4388, %v4390
    %v4392 = vadd.f32 %v4388, %v4391
    %vm4393 = vweird.f32 %v4388
    %v4394 = vsel %vm4393, %v4388, %v4392
    %v4395 = vmul.f32 %v4387, %v4394
    %v4396 = vsub.f32 %v4373, %v4395
    %v4397 = vsub.f32 %v4374, %v4395
    %v4398 = vsub.f32 %v4375, %v4395
    %v4399 = vsub.f32 %v4376, %v4395
    %v4400 = vmul.f32 %v4396, %v4396
    %v4401 = vmul.f32 %v4397, %v4397
    %v4402 = vmul.f32 %v4398, %v4398
    %v4403 = vmul.f32 %v4399, %v4399
    %v4404 = vsel %vm3283, %v4400, 0.0
    %v4405 = vsel %vm3283, %v4401, 0.0
    %v4406 = vadd.f32 %v4404, %v4405
    %v4407 = vsel %vm3283, %v4402, 0.0
    %v4408 = vadd.f32 %v4406, %v4407
    %v4409 = vsel %vm3283, %v4403, 0.0
    %v4410 = vadd.f32 %v4408, %v4409
    %4411 = vadd.xlane.f32.xlu0 %v4410
    %v4412 = vpop.xlane.xlu0 %4411
    %v4413 = vmul.f32 %v4412, %v4394
    %v4414 = vadd.f32 %v4413, 1e-05
    %v4415 = vrsqrt.pop %v4414
    %v4416 = vmul.f32 %v4415, %v4414
    %v4417 = vmul.f32 %v4416, %v4415
    %v4418 = vmul.f32 0.5, %v4417
    %v4419 = vsub.f32 1.5, %v4418
    %v4420 = vmul.f32 %v4415, %v4419
    %vm4421 = vweird.f32 %v4414
    %vm4422 = vweird.f32 %v4415
    %vm4423 = vmor %vm4421, %vm4422
    %v4424 = vsel %vm4423, %v4415, %v4420
    %v4425 = vmul.f32 %v4396, %v4424
    %v4426 = vmul.f32 %v4397, %v4424
    %v4427 = vmul.f32 %v4398, %v4424
    %v4428 = vmul.f32 %v4399, %v4424
    %v4430 = vperm.slane %v4377, 0
    %v4431 = vperm.slane %v4377, 1
    %v4432 = vperm.slane %v4377, 2
    %v4433 = vperm.slane %v4377, 3
    %v4438 = vmul.f32 %v4425, %v4430
    %v4439 = vmul.f32 %v4426, %v4431
    %v4440 = vmul.f32 %v4427, %v4432
    %v4441 = vmul.f32 %v4428, %v4433
    %v4443 = vperm.slane %v4378, 0
    %v4444 = vperm.slane %v4378, 1
    %v4445 = vperm.slane %v4378, 2
    %v4446 = vperm.slane %v4378, 3
    %v4451 = vadd.f32 %v4438, %v4443
    %v4452 = vadd.f32 %v4439, %v4444
    %v4453 = vadd.f32 %v4440, %v4445
    %v4454 = vadd.f32 %v4441, %v4446
    %v4455 = vld [vmem:[#allocation41] sm:$0xff]
    %v4456 = vld [vmem:[#allocation41 + $0x8] sm:$0xff]
    %v4457 = vld [vmem:[#allocation41 + $0x10] sm:$0xff]
    %v4458 = vld [vmem:[#allocation41 + $0x18] sm:$0xff]
    %v4459 = vld [vmem:[#allocation41 + $0x20] sm:$0xff]
    %v4460 = vld [vmem:[#allocation41 + $0x28] sm:$0xff]
    %v4461 = vld [vmem:[#allocation41 + $0x30] sm:$0xff]
    %v4462 = vld [vmem:[#allocation41 + $0x38] sm:$0xff]
    %v4463 = vld [vmem:[#allocation41 + $0x40] sm:$0xff]
    %v4464 = vld [vmem:[#allocation41 + $0x48] sm:$0xff]
    %v4465 = vld [vmem:[#allocation41 + $0x50] sm:$0xff]
    %v4466 = vld [vmem:[#allocation41 + $0x58] sm:$0xff]
    %v4467 = vld [vmem:[#allocation41 + $0x60] sm:$0xff]
    %v4468 = vld [vmem:[#allocation41 + $0x68] sm:$0xff]
    %v4469 = vld [vmem:[#allocation41 + $0x70] sm:$0xff]
    %v4470 = vld [vmem:[#allocation41 + $0x78] sm:$0xff]
    %v4471 = vld [vmem:[#allocation41 + $0x80] sm:$0xff]
    %v4472 = vld [vmem:[#allocation41 + $0x88] sm:$0xff]
    %v4473 = vld [vmem:[#allocation41 + $0x90] sm:$0xff]
    %v4474 = vld [vmem:[#allocation41 + $0x98] sm:$0xff]
    %v4475 = vld [vmem:[#allocation41 + $0xa0] sm:$0xff]
    %v4476 = vld [vmem:[#allocation41 + $0xa8] sm:$0xff]
    %v4477 = vld [vmem:[#allocation41 + $0xb0] sm:$0xff]
    %v4478 = vld [vmem:[#allocation41 + $0xb8] sm:$0xff]
    %v4479 = vld [vmem:[#allocation41 + $0xc0] sm:$0xff]
    %v4480 = vld [vmem:[#allocation41 + $0xc8] sm:$0xff]
    %v4481 = vld [vmem:[#allocation41 + $0xd0] sm:$0xff]
    %v4482 = vld [vmem:[#allocation41 + $0xd8] sm:$0xff]
    %v4483 = vld [vmem:[#allocation41 + $0xe0] sm:$0xff]
    %v4484 = vld [vmem:[#allocation41 + $0xe8] sm:$0xff]
    %v4485 = vld [vmem:[#allocation41 + $0xf0] sm:$0xff]
    %v4486 = vld [vmem:[#allocation41 + $0xf8] sm:$0xff]
    %v4487 = vld [vmem:[#allocation41 + $0x100] sm:$0xff]
    %v4488 = vld [vmem:[#allocation41 + $0x108] sm:$0xff]
    %v4489 = vld [vmem:[#allocation41 + $0x110] sm:$0xff]
    %v4490 = vld [vmem:[#allocation41 + $0x118] sm:$0xff]
    %v4491 = vld [vmem:[#allocation41 + $0x120] sm:$0xff]
    %v4492 = vld [vmem:[#allocation41 + $0x128] sm:$0xff]
    %v4493 = vld [vmem:[#allocation41 + $0x130] sm:$0xff]
    %v4494 = vld [vmem:[#allocation41 + $0x138] sm:$0xff]
    %v4495 = vld [vmem:[#allocation41 + $0x140] sm:$0xff]
    %v4496 = vld [vmem:[#allocation41 + $0x148] sm:$0xff]
    %v4497 = vld [vmem:[#allocation41 + $0x150] sm:$0xff]
    %v4498 = vld [vmem:[#allocation41 + $0x158] sm:$0xff]
    %v4499 = vld [vmem:[#allocation41 + $0x160] sm:$0xff]
    %v4500 = vld [vmem:[#allocation41 + $0x168] sm:$0xff]
    %v4501 = vld [vmem:[#allocation41 + $0x170] sm:$0xff]
    %v4502 = vld [vmem:[#allocation41 + $0x178] sm:$0xff]
    %v4503 = vld [vmem:[#allocation41 + $0x180] sm:$0xff]
    %v4504 = vld [vmem:[#allocation41 + $0x188] sm:$0xff]
    %v4505 = vld [vmem:[#allocation41 + $0x190] sm:$0xff]
    %v4506 = vld [vmem:[#allocation41 + $0x198] sm:$0xff]
    %v4507 = vld [vmem:[#allocation41 + $0x1a0] sm:$0xff]
    %v4508 = vld [vmem:[#allocation41 + $0x1a8] sm:$0xff]
    %v4509 = vld [vmem:[#allocation41 + $0x1b0] sm:$0xff]
    %v4510 = vld [vmem:[#allocation41 + $0x1b8] sm:$0xff]
    %v4511 = vld [vmem:[#allocation41 + $0x1c0] sm:$0xff]
    %v4512 = vld [vmem:[#allocation41 + $0x1c8] sm:$0xff]
    %v4513 = vld [vmem:[#allocation41 + $0x1d0] sm:$0xff]
    %v4514 = vld [vmem:[#allocation41 + $0x1d8] sm:$0xff]
    %v4515 = vld [vmem:[#allocation41 + $0x1e0] sm:$0xff]
    %v4516 = vld [vmem:[#allocation41 + $0x1e8] sm:$0xff]
    %v4517 = vld [vmem:[#allocation41 + $0x1f0] sm:$0xff]
    %v4518 = vld [vmem:[#allocation41 + $0x1f8] sm:$0xff]
    %v4519 = vld [vmem:[#allocation43] sm:$0x1]
    %4520 = vmatpush.msra.mxu0 %v4470
    %4521 = vmatpush.msra.mxu0 %v4469
    %4522 = vmatpush.msra.mxu0 %v4468
    %4523 = vmatpush.msra.mxu0 %v4467
    %4524 = vmatpush.msra.mxu0 %v4466
    %4525 = vmatpush.msra.mxu0 %v4465
    %4526 = vmatpush.msra.mxu0 %v4464
    %4527 = vmatpush.msra.mxu0 %v4463
    %4528 = vmatpush.msra.mxu0 %v4462
    %4529 = vmatpush.msra.mxu0 %v4461
    %4530 = vmatpush.msra.mxu0 %v4460
    %4531 = vmatpush.msra.mxu0 %v4459
    %4532 = vmatpush.msra.mxu0 %v4458
    %4533 = vmatpush.msra.mxu0 %v4457
    %4534 = vmatpush.msra.mxu0 %v4456
    %4535 = vmatpush.msra.mxu0 %v4455
    %4536 = vmatmul.f32.gmra.mxu0 %v4451
    %v4537 = vpop.f32.mrf.mxu0
    %v4538 = vadd.f32 %v4519, %v4537
    %4539 = vdwg.mxu0
    %4540 = vmatpush.msra.mxu0 %v4486
    %4541 = vmatpush.msra.mxu0 %v4485
    %4542 = vmatpush.msra.mxu0 %v4484
    %4543 = vmatpush.msra.mxu0 %v4483
    %4544 = vmatpush.msra.mxu0 %v4482
    %4545 = vmatpush.msra.mxu0 %v4481
    %4546 = vmatpush.msra.mxu0 %v4480
    %4547 = vmatpush.msra.mxu0 %v4479
    %4548 = vmatpush.msra.mxu0 %v4478
    %4549 = vmatpush.msra.mxu0 %v4477
    %4550 = vmatpush.msra.mxu0 %v4476
    %4551 = vmatpush.msra.mxu0 %v4475
    %4552 = vmatpush.msra.mxu0 %v4474
    %4553 = vmatpush.msra.mxu0 %v4473
    %4554 = vmatpush.msra.mxu0 %v4472
    %4555 = vmatpush.msra.mxu0 %v4471
    %4556 = vmatmul.f32.gmra.mxu0 %v4452
    %v4557 = vpop.f32.mrf.mxu0
    %v4558 = vadd.f32 %v4538, %v4557
    %4559 = vdwg.mxu0
    %4560 = vmatpush.msra.mxu0 %v4502
    %4561 = vmatpush.msra.mxu0 %v4501
    %4562 = vmatpush.msra.mxu0 %v4500
    %4563 = vmatpush.msra.mxu0 %v4499
    %4564 = vmatpush.msra.mxu0 %v4498
    %4565 = vmatpush.msra.mxu0 %v4497
    %4566 = vmatpush.msra.mxu0 %v4496
    %4567 = vmatpush.msra.mxu0 %v4495
    %4568 = vmatpush.msra.mxu0 %v4494
    %4569 = vmatpush.msra.mxu0 %v4493
    %4570 = vmatpush.msra.mxu0 %v4492
    %4571 = vmatpush.msra.mxu0 %v4491
    %4572 = vmatpush.msra.mxu0 %v4490
    %4573 = vmatpush.msra.mxu0 %v4489
    %4574 = vmatpush.msra.mxu0 %v4488
    %4575 = vmatpush.msra.mxu0 %v4487
    %4576 = vmatmul.f32.gmra.mxu0 %v4453
    %v4577 = vpop.f32.mrf.mxu0
    %v4578 = vadd.f32 %v4558, %v4577
    %4579 = vdwg.mxu0
    %4580 = vmatpush.msra.mxu0 %v4518
    %4581 = vmatpush.msra.mxu0 %v4517
    %4582 = vmatpush.msra.mxu0 %v4516
    %4583 = vmatpush.msra.mxu0 %v4515
    %4584 = vmatpush.msra.mxu0 %v4514
    %4585 = vmatpush.msra.mxu0 %v4513
    %4586 = vmatpush.msra.mxu0 %v4512
    %4587 = vmatpush.msra.mxu0 %v4511
    %4588 = vmatpush.msra.mxu0 %v4510
    %4589 = vmatpush.msra.mxu0 %v4509
    %4590 = vmatpush.msra.mxu0 %v4508
    %4591 = vmatpush.msra.mxu0 %v4507
    %4592 = vmatpush.msra.mxu0 %v4506
    %4593 = vmatpush.msra.mxu0 %v4505
    %4594 = vmatpush.msra.mxu0 %v4504
    %4595 = vmatpush.msra.mxu0 %v4503
    %4596 = vmatmul.f32.gmra.mxu0 %v4454
    %v4597 = vpop.f32.mrf.mxu0
    %v4598 = vadd.f32 %v4578, %v4597
    %4599 = vdwg.mxu0
    %v4600 = vmax.f32 %v4598, 0.0
    %v4601 = vld [vmem:[#allocation44] sm:$0x1]
    %v4602 = vld [vmem:[#allocation46] sm:$0x1]
    %v4603 = vsel %vm3283, %v4600, 0.0
    %4604 = vadd.xlane.f32.xlu0 %v4603
    %v4605 = vpop.xlane.xlu0 %4604
    %v4606 = vmul.f32 %v4605, %v626
    %v4607 = vsub.f32 %v4600, %v4606
    %v4608 = vmul.f32 %v4607, %v4607
    %v4609 = vsel %vm3283, %v4608, 0.0
    %4610 = vadd.xlane.f32.xlu0 %v4609
    %v4611 = vpop.xlane.xlu0 %4610
    %v4612 = vmul.f32 %v4611, %v626
    %v4613 = vadd.f32 %v4612, 1e-05
    %v4614 = vrsqrt.pop %v4613
    %v4615 = vmul.f32 %v4614, %v4613
    %v4616 = vmul.f32 %v4615, %v4614
    %v4617 = vmul.f32 0.5, %v4616
    %v4618 = vsub.f32 1.5, %v4617
    %v4619 = vmul.f32 %v4614, %v4618
    %vm4620 = vweird.f32 %v4613
    %vm4621 = vweird.f32 %v4614
    %vm4622 = vmor %vm4620, %vm4621
    %v4623 = vsel %vm4622, %v4614, %v4619
    %v4624 = vmul.f32 %v4607, %v4623
    %v4625 = vmul.f32 %v4624, %v4601
    %v4626 = vadd.f32 %v4625, %v4602
    %v4627 = vrot.slane %v2794, 4
    %v4628 = vadd.f32 %v2794, %v4627
    %v4629 = vrot.slane %v4628, 2
    %v4630 = vadd.f32 %v4628, %v4629
    %v4631 = vrot.slane %v4630, 1
    %v4632 = vadd.f32 %v4630, %v4631
    %v4633 = vrcp.pop 8.0
    %v4634 = vmul.f32 8.0, %v4633
    %v4635 = vsub.f32 1.0, %v4634
    %v4636 = vmul.f32 %v4633, %v4635
    %v4637 = vadd.f32 %v4633, %v4636
    %vm4638 = vweird.f32 %v4633
    %v4639 = vsel %vm4638, %v4633, %v4637
    %v4640 = vmul.f32 %v4632, %v4639
    %v4641 = vadd.f32 %v4640, %v4626
    %v4642 = vmul.f32 %v4641, 0.5
    %v4643 = vld [vmem:[#allocation47] sm:$0xff]
    %v4644 = vld [vmem:[#allocation47 + $0x8] sm:$0xff]
    %v4645 = vld [vmem:[#allocation47 + $0x10] sm:$0xff]
    %v4646 = vld [vmem:[#allocation47 + $0x18] sm:$0xff]
    %v4647 = vld [vmem:[#allocation47 + $0x20] sm:$0xff]
    %v4648 = vld [vmem:[#allocation47 + $0x28] sm:$0xff]
    %v4649 = vld [vmem:[#allocation47 + $0x30] sm:$0xff]
    %v4650 = vld [vmem:[#allocation47 + $0x38] sm:$0xff]
    %v4651 = vld [vmem:[#allocation47 + $0x40] sm:$0xff]
    %v4652 = vld [vmem:[#allocation47 + $0x48] sm:$0xff]
    %v4653 = vld [vmem:[#allocation47 + $0x50] sm:$0xff]
    %v4654 = vld [vmem:[#allocation47 + $0x58] sm:$0xff]
    %v4655 = vld [vmem:[#allocation47 + $0x60] sm:$0xff]
    %v4656 = vld [vmem:[#allocation47 + $0x68] sm:$0xff]
    %v4657 = vld [vmem:[#allocation47 + $0x70] sm:$0xff]
    %v4658 = vld [vmem:[#allocation47 + $0x78] sm:$0xff]
    %4659 = vmatpush.msra.mxu0 %v4658
    %4660 = vmatpush.msra.mxu0 %v4657
    %4661 = vmatpush.msra.mxu0 %v4656
    %4662 = vmatpush.msra.mxu0 %v4655
    %4663 = vmatpush.msra.mxu0 %v4654
    %4664 = vmatpush.msra.mxu0 %v4653
    %4665 = vmatpush.msra.mxu0 %v4652
    %4666 = vmatpush.msra.mxu0 %v4651
    %4667 = vmatpush.msra.mxu0 %v4650
    %4668 = vmatpush.msra.mxu0 %v4649
    %4669 = vmatpush.msra.mxu0 %v4648
    %4670 = vmatpush.msra.mxu0 %v4647
    %4671 = vmatpush.msra.mxu0 %v4646
    %4672 = vmatpush.msra.mxu0 %v4645
    %4673 = vmatpush.msra.mxu0 %v4644
    %4674 = vmatpush.msra.mxu0 %v4643
    %4675 = vmatmul.f32.gmra.mxu0 %v4642
    %v4676 = vpop.f32.mrf.mxu0
    %v4677 = vadd.f32 0.0, %v4676
    %4678 = vdwg.mxu0
    %4679 = vmatpush.xpose.msra.mxu0 0.0
    %4680 = vmatpush.xpose.msra.mxu0 0.0
    %4681 = vmatpush.xpose.msra.mxu0 0.0
    %4682 = vmatpush.xpose.msra.mxu0 0.0
    %4683 = vmatpush.xpose.msra.mxu0 0.0
    %4684 = vmatpush.xpose.msra.mxu0 0.0
    %4685 = vmatpush.xpose.msra.mxu0 0.0
    %4686 = vmatpush.xpose.msra.mxu0 0.0
    %4687 = vmatpush.xpose.msra.mxu0 0.0
    %4688 = vmatpush.xpose.msra.mxu0 0.0
    %4689 = vmatpush.xpose.msra.mxu0 0.0
    %4690 = vmatpush.xpose.msra.mxu0 0.0
    %4691 = vmatpush.xpose.msra.mxu0 0.0
    %4692 = vmatpush.xpose.msra.mxu0 0.0
    %4693 = vmatpush.xpose.msra.mxu0 0.0
    %4694 = vmatpush.xpose.msra.mxu0 %v2794
    %4695 = vmatmul.f32.gmra.mxu0 %v4677
    %v4696 = vpop.f32.mrf.mxu0
    %v4697 = vadd.f32 0.0, %v4696
    %4698 = vdwg.mxu0
    %v4699 = vld [vmem:[#allocation5] sm:$0x1]
    %vm4700 = vcmp.eq.f32.partialorder %v4699, 0.0
    %v4701 = vsel %vm4700, -1e+30, %v4697
    %vm4702 = vcmask 57344
    %v4703 = vsel %vm4702, %v4701, -inf
    %4704 = vmax.xlane.f32.xlu0 %v4703
    %v4705 = vpop.xlane.xlu0 %4704
    %v4706 = vsub.f32 %v4701, %v4705
    %v4707 = vmul.f32 %v4706, 1.442695
    %v4708 = vpow.pop %v4707
    %v4709 = vsel %vm4702, %v4708, 0.0
    %4710 = vadd.xlane.f32.xlu0 %v4709
    %v4711 = vpop.xlane.xlu0 %4710
    %v4712 = vrcp.pop %v4711
    %v4713 = vmul.f32 %v4708, %v4712
    %v4714 = vld [vmem:[#allocation49] sm:$0x1]
    %4715 = vmatpush.xpose.msra.mxu0 0.0
    %4716 = vmatpush.xpose.msra.mxu0 0.0
    %4717 = vmatpush.xpose.msra.mxu0 0.0
    %4718 = vmatpush.xpose.msra.mxu0 0.0
    %4719 = vmatpush.xpose.msra.mxu0 0.0
    %4720 = vmatpush.xpose.msra.mxu0 0.0
    %4721 = vmatpush.xpose.msra.mxu0 0.0
    %4722 = vmatpush.xpose.msra.mxu0 0.0
    %4723 = vmatpush.xpose.msra.mxu0 0.0
    %4724 = vmatpush.xpose.msra.mxu0 0.0
    %4725 = vmatpush.xpose.msra.mxu0 0.0
    %4726 = vmatpush.xpose.msra.mxu0 0.0
    %4727 = vmatpush.xpose.msra.mxu0 0.0
    %4728 = vmatpush.xpose.msra.mxu0 0.0
    %4729 = vmatpush.xpose.msra.mxu0 0.0
    %4730 = vmatpush.xpose.msra.mxu0 %v2794
    %4731 = vmatmul.f32.gmra.mxu0 %v4714
    %v4732 = vpop.f32.mrf.mxu0
    %v4733 = vadd.f32 0.0, %v4732
    %4734 = vdwg.mxu0
    %v4735 = vmul.f32 %v4713, %v4733
    %v4736 = vtanh.pop %v4735
    %v4737 = vmul.f32 %v4736, 10.0
    %4738 = vst.msk [vmem:[#allocation50] sm:$0x1] %vm4702, %v4737
    // Predicated region
    $region250: #{tpu_custom_call.1} parent=1 // pred_check
      _
    $region251: #{tpu_custom_call.1} parent=1 // pred_check_branch
      %4740 = sbr.rel (0) target = $region253
    $region252: #{tpu_custom_call.1} parent=1 // pred_region
      %4742 = vsyncadd [#allocation4], 0
      %s4744 = sshll.u32 [#allocation50], 4
      %s4745 = int_to_ptr.vmem [resolvable:$true] %s4744
      %s4746 = sshll.u32 %s63, 4
      %s4747 = int_to_ptr.hbm [resolvable:$true] %s4746
      %4749 = dma.vmem_to_hbm [thread:$0]  %s4745, 16, %s4747, [#allocation4]
    $region253: #{tpu_custom_call.1} parent=1 // pred_fallthru
      _
    // Predicated region
    $region254: #{tpu_custom_call.1} parent=1 // pred_check
      _
    $region255: #{tpu_custom_call.1} parent=1 // pred_check_branch
      %4751 = sbr.rel (0) target = $region257
    $region256: #{tpu_custom_call.1} parent=1 // pred_region
      %4753 = dma.done [#allocation4], 16
    $region257: #{tpu_custom_call.1} parent=1 // pred_fallthru
      _
    %4754 = vsyncpa [#allocation3], 1
    %4755 = vsyncpa [#allocation6], 1
    %4756 = vsyncpa [#allocation9], 1
    %4757 = vsyncpa [#allocation12], 1
    %4758 = vsyncpa [#allocation15], 1
    %4759 = vsyncpa [#allocation18], 1
    %4760 = vsyncpa [#allocation21], 1
    %4761 = vsyncpa [#allocation24], 1
    %4762 = vsyncpa [#allocation27], 1
    %4763 = vsyncpa [#allocation30], 1
    %4764 = vsyncpa [#allocation33], 1
    %4765 = vsyncpa [#allocation36], 1
    %4766 = vsyncpa [#allocation39], 1
    %4767 = vsyncpa [#allocation42], 1
    %4768 = vsyncpa [#allocation45], 1
    %4769 = vsyncpa [#allocation48], 1
    %4770 = vsyncpa [#allocation4], 1

</llo_original>
